<compile_context>
chip_gen: v7x
topology: tpu7x:2x2x1
jax: 0.10.0
libtpu: 0.0.40
codegen_flags: <defaults>
</compile_context>

<pallas_src>
import functools
import math

import jax
import jax.numpy as jnp
from jax import lax
from jax.experimental import pallas as pl
from jax.experimental.pallas import tpu as pltpu

IN_FEATURES = 7      # hard-coded in the PyTorch module
FEAT_PAD = 8         # per-head feature padding (lane alignment)


def _linear_attention_kernel(x_ref, w_ref, b_ref, out_ref, *,
                             out_heads, feat_pad, mxu_dtype):
    # x_ref   : (b_tile, C, L, 7)         native-layout batch tile of the input
    # w_ref   : (C, 7, 3*H*feat_pad)      fused [Wq*scale | Wk | Wv], head-padded (resident)
    # b_ref   : (1, 3*H*feat_pad)         fused [bq*scale | bk | bv] (f32, resident)
    # out_ref : (b_tile, L, H*feat_pad)   lane-dense output slab
    b_tile, C, L, d_in = x_ref.shape
    out_pad = out_heads * feat_pad
    rows = b_tile * L

    x = x_ref[...]
    w = w_ref[...]

    # ---- fused QKV projection: contract over (C, 7) without any wrapper-side
    # transpose of x.  One shallow (K=7) MXU matmul per input head, accumulated
    # in f32; rows = b_tile*L >= ~256 keeps MXU row-utilization high.
    qkv = None
    for c in range(C):
        xc = x[:, c].reshape(rows, d_in)            # layout-free collapse (L % 8 == 0)
        if mxu_dtype is not None:
            xc = xc.astype(mxu_dtype)
        part = jnp.dot(xc, w[c], preferred_element_type=jnp.float32)
        qkv = part if qkv is None else qkv + part
    qkv = qkv + b_ref[...]                          # (rows, 3*out_pad) f32, bias broadcast
    qkv = qkv.reshape(b_tile, L, 3 * out_pad)

    # ---- head split: 8-lane-aligned lane-group slices, stacked head-major so
    # the attention below is a single batched matmul over (H * b_tile).
    def gather_heads(base):
        parts = [qkv[:, :, base + h * feat_pad:base + (h + 1) * feat_pad]
                 for h in range(out_heads)]
        return jnp.concatenate(parts, axis=0)       # (H*b_tile, L, feat_pad) f32

    q = gather_heads(0)
    k = gather_heads(out_pad)
    v = gather_heads(2 * out_pad)
    if mxu_dtype is not None:                       # one cast per batched tensor
        q = q.astype(mxu_dtype)
        k = k.astype(mxu_dtype)
        v = v.astype(mxu_dtype)

    # scores = q @ k^T per (head, batch); scale already folded into Q weights.
    s = lax.dot_general(q, k, (((2,), (2,)), ((0,), (0,))),
                        preferred_element_type=jnp.float32)      # (H*b_tile, L, L)

    # softmax over keys in f32 (max-subtracted); reciprocal runs on the EUP.
    m = jnp.max(s, axis=-1, keepdims=True)
    e = jnp.exp(s - m)
    denom = jnp.sum(e, axis=-1, keepdims=True)
    p = e * pl.reciprocal(denom, approx=True)
    # TODO(synk): F.dropout(p=0.5, training=True) is stochastic; eval-mode
    # (identity) semantics are implemented here.

    if mxu_dtype is not None:
        p = p.astype(mxu_dtype)
    att = lax.dot_general(p, v, (((2,), (1,)), ((0,), (0,))),
                          preferred_element_type=jnp.float32)    # (H*b_tile, L, feat_pad)

    # ---- merge heads back into one lane-dense slab and store once.
    att = att.reshape(out_heads, b_tile, L, feat_pad)
    slab = jnp.concatenate([att[h] for h in range(out_heads)], axis=-1)
    out_ref[...] = slab.astype(out_ref.dtype)       # (b_tile, L, H*feat_pad)


def _fuse_qkv_params(params, in_heads, out_heads, L, w_dtype):
    """Fuse [Wq*scale | Wk | Wv] into a (C, 7, 3*H*8) tensor (+ fused bias),
    with 7->8 per-head feature padding and 1/sqrt(L) folded into Q."""
    Wq, bq, Wk, bk, Wv, bv = params
    F, Fp, C, H = IN_FEATURES, FEAT_PAD, in_heads, out_heads
    scale = 1.0 / math.sqrt(L)        # PyTorch divides scores by sqrt(L) (seq length)

    def prep(W, b, s):
        # W: (H*F, C*F) PyTorch Linear weight; rows = h*F + f, cols = c*F + d.
        W = W.reshape(H, F, C, F).astype(jnp.float32) * s
        W = jnp.pad(W, ((0, 0), (0, Fp - F), (0, 0), (0, 0)))      # pad features
        W = jnp.transpose(W, (2, 3, 0, 1)).reshape(C, F, H * Fp)   # (C, 7, H*8)
        b = jnp.pad((b.astype(jnp.float32) * s).reshape(H, F),
                    ((0, 0), (0, Fp - F))).reshape(H * Fp)
        return W, b

    Wqp, bqp = prep(Wq, bq, scale)
    Wkp, bkp = prep(Wk, bk, 1.0)
    Wvp, bvp = prep(Wv, bv, 1.0)
    w = jnp.concatenate([Wqp, Wkp, Wvp], axis=-1).astype(w_dtype)  # (C, 7, 3*H*8)
    b = jnp.concatenate([bqp, bkp, bvp]).reshape(1, 3 * H * Fp)    # (1, 3*H*8) f32
    return w, b


def _pick_b_tile(N, L):
    """Largest divisor of N giving ~256 MXU rows per grid step while keeping
    >=2 grid steps (so v7x's two TensorCores both get batch tiles)."""
    bt = max(1, min(N, 256 // max(L, 1)))
    if N >= 2:
        bt = max(1, min(bt, N // 2))
    while N % bt:
        bt -= 1
    return bt


def _padded_vmem_bytes(shape, dtype):
    """(sublane, 128)-tile-padded VMEM footprint of one block."""
    itemsize = jnp.dtype(dtype).itemsize
    sublane = 8 if itemsize >= 4 else 8 * (4 // itemsize)
    lead = 1
    for d in shape[:-2]:
        lead *= d
    rows = -(-shape[-2] // sublane) * sublane
    lanes = -(-shape[-1] // 128) * 128
    return lead * rows * lanes * itemsize


def linear_attention_pallas(x, params, out_heads, *, b_tile=None,
                            mxu_dtype=jnp.bfloat16):
    """x: (N, C, L, 7) with C == in_heads.  Returns (N, out_heads, L, 7)."""
    N, C, L, D = x.shape
    assert D == IN_FEATURES
    # TODO(synk): lift the L % 8 restriction (needed so the in-kernel
    # (b_tile, L, 7) -> (b_tile*L, 7) collapse is layout-free).
    assert L % 8 == 0, "sequence length must be a multiple of 8"
    F, Fp = IN_FEATURES, FEAT_PAD
    out_pad = out_heads * Fp
    out_dtype = x.dtype

    if b_tile is None:
        b_tile = _pick_b_tile(N, L)
    assert N % b_tile == 0, "b_tile must divide the batch size"

    w_dtype = mxu_dtype if mxu_dtype is not None else jnp.float32
    w_qkv, b_qkv = _fuse_qkv_params(params, C, out_heads, L, w_dtype)

    kernel = functools.partial(_linear_attention_kernel, out_heads=out_heads,
                               feat_pad=Fp, mxu_dtype=mxu_dtype)

    # Rough per-step VMEM need (double-buffered in/out blocks + resident
    # weights + main f32 intermediates).  Only raise the scoped-VMEM limit when
    # the defaults (16 MiB v5e / 32 MiB v6e,v7x) would be tight, and stay well
    # under v7x's 64 MiB physical VMEM.
    rows = b_tile * L
    est = (2 * (_padded_vmem_bytes((b_tile, C, L, D), x.dtype)
                + _padded_vmem_bytes((b_tile, L, out_pad), out_dtype))
           + _padded_vmem_bytes((C, D, 3 * out_pad), w_dtype)
           + _padded_vmem_bytes((rows, 3 * out_pad), jnp.float32)
           + 2 * _padded_vmem_bytes((out_heads * b_tile, L, L), jnp.float32))
    cparams = {"dimension_semantics": ("parallel",)}
    if est > 24 * 1024 * 1024:
        cparams["vmem_limit_bytes"] = int(min(2 * est, 56 * 1024 * 1024))

    # TODO(synk): for large L, add a flash-style KV-block grid axis (online
    # softmax) so the (L, L) score tiles stay inside VMEM (esp. v7x's 64 MiB).
    out_slab = pl.pallas_call(
        kernel,
        out_shape=jax.ShapeDtypeStruct((N, L, out_pad), out_dtype),
        grid_spec=pltpu.PrefetchScalarGridSpec(
            num_scalar_prefetch=0,
            grid=(N // b_tile,),
            in_specs=[
                pl.BlockSpec((b_tile, C, L, D), lambda i: (i, 0, 0, 0)),
                # fused weights/bias: single resident block, never re-fetched
                pl.BlockSpec((C, D, 3 * out_pad), lambda i: (0, 0, 0)),
                pl.BlockSpec((1, 3 * out_pad), lambda i: (0, 0)),
            ],
            out_specs=pl.BlockSpec((b_tile, L, out_pad), lambda i: (i, 0, 0)),
        ),
        compiler_params=pltpu.CompilerParams(**cparams),
    )(x, w_qkv, b_qkv)

    # (N, L, H*8) slab -> module's (N, H, L, 7) layout; XLA fuses the reshape,
    # transpose and pad-strip into a single copy over the (small) output.
    out = out_slab.reshape(N, L, out_heads, Fp).transpose(0, 2, 1, 3)
    return out[..., :F]


def linear_attention_reference(x, params, out_heads):
    """Plain-JAX replica of the PyTorch forward (eval-mode dropout)."""
    N, C, L, D = x.shape
    Wq, bq, Wk, bk, Wv, bv = params
    x2 = jnp.transpose(x, (0, 2, 1, 3)).reshape(N, L, C * D)
    q = x2 @ Wq.T + bq
    k = x2 @ Wk.T + bk
    v = x2 @ Wv.T + bv

    def split(t):
        return jnp.transpose(t.reshape(N, L, out_heads, -1), (0, 2, 1, 3))

    q, k, v = split(q), split(k), split(v)
    scores = jnp.einsum('bnqd,bnkd->bnqk', q, k)
    scores = scores / math.sqrt(scores.shape[-1])
    weights = jax.nn.softmax(scores.astype(jnp.float32), axis=-1).astype(scores.dtype)
    return jnp.einsum('bnqk,bnkd->bnqd', weights, v)


if __name__ == "__main__":
    # in_heads = 4 -> in_sz = 28, out_heads = 4 -> out_sz = 28
    in_heads, out_heads = 4, 4
    N, L = 32, 16                 # auto b_tile = 16 -> 2 grid steps, 256 rows/step
    in_sz = IN_FEATURES * in_heads
    out_sz = IN_FEATURES * out_heads

    key = jax.random.PRNGKey(0)
    kx, kwq, kbq, kwk, kbk, kwv, kbv = jax.random.split(key, 7)
    x = jax.random.normal(kx, (N, in_heads, L, IN_FEATURES), dtype=jnp.float32)

    init = 1.0 / math.sqrt(in_sz)  # PyTorch Linear-style init scale
    Wq = jax.random.uniform(kwq, (out_sz, in_sz), jnp.float32, -init, init)
    bq = jax.random.uniform(kbq, (out_sz,), jnp.float32, -init, init)
    Wk = jax.random.uniform(kwk, (out_sz, in_sz), jnp.float32, -init, init)
    bk = jax.random.uniform(kbk, (out_sz,), jnp.float32, -init, init)
    Wv = jax.random.uniform(kwv, (out_sz, in_sz), jnp.float32, -init, init)
    bv = jax.random.uniform(kbv, (out_sz,), jnp.float32, -init, init)
    params = (Wq, bq, Wk, bk, Wv, bv)

    ref = linear_attention_reference(x, params, out_heads)

    # default path: bf16 MXU operands, f32 accumulation (fast on v5e/v6e/v7x)
    out_bf16 = jax.block_until_ready(linear_attention_pallas(x, params, out_heads))
    # exact-dtype path for a tight numerical comparison
    out_f32 = jax.block_until_ready(
        linear_attention_pallas(x, params, out_heads, mxu_dtype=None))

    assert out_bf16.shape == (N, out_heads, L, IN_FEATURES)
    assert out_f32.shape == (N, out_heads, L, IN_FEATURES)
    # f32 tolerance covers the EUP approx reciprocal; bf16 tolerance also covers
    # the bf16 MXU operands.
    assert jnp.allclose(out_f32, ref, atol=5e-3, rtol=5e-3), "f32 path mismatch"
    assert jnp.allclose(out_bf16, ref, atol=2.5e-2, rtol=2.5e-2), "bf16 path mismatch"

    print("KERNEL_OK")
</pallas_src>

<mosaic_0001>
module attributes {stable_mosaic.version = 11 : i64} {
  func.func @_linear_attention_kernel(%arg0: i32, %arg1: memref<16x4x16x7xf32, #tpu.memory_space<vmem>>, %arg2: memref<4x7x96xbf16, #tpu.memory_space<vmem>>, %arg3: memref<1x96xf32, #tpu.memory_space<vmem>>, %arg4: memref<16x16x32xf32, #tpu.memory_space<vmem>>) attributes {dimension_semantics = [#tpu.dimension_semantics<parallel>], iteration_bounds = array<i64: 2>, scalar_prefetch = 0 : i64, scratch_operands = 0 : i64, tpu.core_type = #tpu.core_type<tc>, window_params = [{transform_indices = @transform_0, window_bounds = array<i64: 16, 4, 16, 7>}, {pipeline_mode = #tpu.pipeline_mode<synchronous>, transform_indices = @transform_1, window_bounds = array<i64: 4, 7, 96>}, {pipeline_mode = #tpu.pipeline_mode<synchronous>, transform_indices = @transform_2, window_bounds = array<i64: 1, 96>}, {transform_indices = @transform_3, window_bounds = array<i64: 16, 16, 32>}]} {
    %c0 = arith.constant 0 : index
    %c0_0 = arith.constant 0 : index
    %c0_1 = arith.constant 0 : index
    %c0_2 = arith.constant 0 : index
    %0 = vector.load %arg1[%c0, %c0_0, %c0_1, %c0_2] : memref<16x4x16x7xf32, #tpu.memory_space<vmem>>, vector<16x4x16x7xf32>
    %c0_3 = arith.constant 0 : index
    %c0_4 = arith.constant 0 : index
    %c0_5 = arith.constant 0 : index
    %1 = vector.load %arg2[%c0_3, %c0_4, %c0_5] : memref<4x7x96xbf16, #tpu.memory_space<vmem>>, vector<4x7x96xbf16>
    %2 = vector.extract_strided_slice %0 {offsets = [0, 0, 0, 0], sizes = [16, 1, 16, 7], strides = [1, 1, 1, 1]} : vector<16x4x16x7xf32> to vector<16x1x16x7xf32>
    %3 = vector.shape_cast %2 : vector<16x1x16x7xf32> to vector<16x16x7xf32>
    %4 = vector.shape_cast %3 : vector<16x16x7xf32> to vector<256x7xf32>
    %5 = arith.truncf %4 : vector<256x7xf32> to vector<256x7xbf16>
    %6 = vector.extract_strided_slice %1 {offsets = [0, 0, 0], sizes = [1, 7, 96], strides = [1, 1, 1]} : vector<4x7x96xbf16> to vector<1x7x96xbf16>
    %7 = vector.shape_cast %6 : vector<1x7x96xbf16> to vector<7x96xbf16>
    %cst = arith.constant dense<0.000000e+00> : vector<256x96xf32>
    %8 = tpu.matmul %5, %7, %cst {dimension_numbers = #tpu.dot_dimension_numbers<[1], [0], [0], [1], [0, 0, 1, 1], [], []>} : vector<256x7xbf16>, vector<7x96xbf16>, vector<256x96xf32> -> vector<256x96xf32>
    %9 = vector.extract_strided_slice %0 {offsets = [0, 1, 0, 0], sizes = [16, 1, 16, 7], strides = [1, 1, 1, 1]} : vector<16x4x16x7xf32> to vector<16x1x16x7xf32>
    %10 = vector.shape_cast %9 : vector<16x1x16x7xf32> to vector<16x16x7xf32>
    %11 = vector.shape_cast %10 : vector<16x16x7xf32> to vector<256x7xf32>
    %12 = arith.truncf %11 : vector<256x7xf32> to vector<256x7xbf16>
    %13 = vector.extract_strided_slice %1 {offsets = [1, 0, 0], sizes = [1, 7, 96], strides = [1, 1, 1]} : vector<4x7x96xbf16> to vector<1x7x96xbf16>
    %14 = vector.shape_cast %13 : vector<1x7x96xbf16> to vector<7x96xbf16>
    %cst_6 = arith.constant dense<0.000000e+00> : vector<256x96xf32>
    %15 = tpu.matmul %12, %14, %cst_6 {dimension_numbers = #tpu.dot_dimension_numbers<[1], [0], [0], [1], [0, 0, 1, 1], [], []>} : vector<256x7xbf16>, vector<7x96xbf16>, vector<256x96xf32> -> vector<256x96xf32>
    %16 = arith.addf %8, %15 : vector<256x96xf32>
    %17 = vector.extract_strided_slice %0 {offsets = [0, 2, 0, 0], sizes = [16, 1, 16, 7], strides = [1, 1, 1, 1]} : vector<16x4x16x7xf32> to vector<16x1x16x7xf32>
    %18 = vector.shape_cast %17 : vector<16x1x16x7xf32> to vector<16x16x7xf32>
    %19 = vector.shape_cast %18 : vector<16x16x7xf32> to vector<256x7xf32>
    %20 = arith.truncf %19 : vector<256x7xf32> to vector<256x7xbf16>
    %21 = vector.extract_strided_slice %1 {offsets = [2, 0, 0], sizes = [1, 7, 96], strides = [1, 1, 1]} : vector<4x7x96xbf16> to vector<1x7x96xbf16>
    %22 = vector.shape_cast %21 : vector<1x7x96xbf16> to vector<7x96xbf16>
    %cst_7 = arith.constant dense<0.000000e+00> : vector<256x96xf32>
    %23 = tpu.matmul %20, %22, %cst_7 {dimension_numbers = #tpu.dot_dimension_numbers<[1], [0], [0], [1], [0, 0, 1, 1], [], []>} : vector<256x7xbf16>, vector<7x96xbf16>, vector<256x96xf32> -> vector<256x96xf32>
    %24 = arith.addf %16, %23 : vector<256x96xf32>
    %25 = vector.extract_strided_slice %0 {offsets = [0, 3, 0, 0], sizes = [16, 1, 16, 7], strides = [1, 1, 1, 1]} : vector<16x4x16x7xf32> to vector<16x1x16x7xf32>
    %26 = vector.shape_cast %25 : vector<16x1x16x7xf32> to vector<16x16x7xf32>
    %27 = vector.shape_cast %26 : vector<16x16x7xf32> to vector<256x7xf32>
    %28 = arith.truncf %27 : vector<256x7xf32> to vector<256x7xbf16>
    %29 = vector.extract_strided_slice %1 {offsets = [3, 0, 0], sizes = [1, 7, 96], strides = [1, 1, 1]} : vector<4x7x96xbf16> to vector<1x7x96xbf16>
    %30 = vector.shape_cast %29 : vector<1x7x96xbf16> to vector<7x96xbf16>
    %cst_8 = arith.constant dense<0.000000e+00> : vector<256x96xf32>
    %31 = tpu.matmul %28, %30, %cst_8 {dimension_numbers = #tpu.dot_dimension_numbers<[1], [0], [0], [1], [0, 0, 1, 1], [], []>} : vector<256x7xbf16>, vector<7x96xbf16>, vector<256x96xf32> -> vector<256x96xf32>
    %32 = arith.addf %24, %31 : vector<256x96xf32>
    %c0_9 = arith.constant 0 : index
    %c0_10 = arith.constant 0 : index
    %33 = vector.load %arg3[%c0_9, %c0_10] : memref<1x96xf32, #tpu.memory_space<vmem>>, vector<1x96xf32>
    %34 = vector.broadcast %33 : vector<1x96xf32> to vector<256x96xf32>
    %35 = arith.addf %32, %34 : vector<256x96xf32>
    %36 = vector.shape_cast %35 : vector<256x96xf32> to vector<16x16x96xf32>
    %37 = vector.extract_strided_slice %36 {offsets = [0, 0, 0], sizes = [16, 16, 8], strides = [1, 1, 1]} : vector<16x16x96xf32> to vector<16x16x8xf32>
    %38 = vector.extract_strided_slice %36 {offsets = [0, 0, 8], sizes = [16, 16, 8], strides = [1, 1, 1]} : vector<16x16x96xf32> to vector<16x16x8xf32>
    %39 = vector.extract_strided_slice %36 {offsets = [0, 0, 16], sizes = [16, 16, 8], strides = [1, 1, 1]} : vector<16x16x96xf32> to vector<16x16x8xf32>
    %40 = vector.extract_strided_slice %36 {offsets = [0, 0, 24], sizes = [16, 16, 8], strides = [1, 1, 1]} : vector<16x16x96xf32> to vector<16x16x8xf32>
    %41 = tpu.concatenate %37, %38, %39, %40 in 0 : vector<16x16x8xf32>, vector<16x16x8xf32>, vector<16x16x8xf32>, vector<16x16x8xf32> -> vector<64x16x8xf32>
    %42 = vector.extract_strided_slice %36 {offsets = [0, 0, 32], sizes = [16, 16, 8], strides = [1, 1, 1]} : vector<16x16x96xf32> to vector<16x16x8xf32>
    %43 = vector.extract_strided_slice %36 {offsets = [0, 0, 40], sizes = [16, 16, 8], strides = [1, 1, 1]} : vector<16x16x96xf32> to vector<16x16x8xf32>
    %44 = vector.extract_strided_slice %36 {offsets = [0, 0, 48], sizes = [16, 16, 8], strides = [1, 1, 1]} : vector<16x16x96xf32> to vector<16x16x8xf32>
    %45 = vector.extract_strided_slice %36 {offsets = [0, 0, 56], sizes = [16, 16, 8], strides = [1, 1, 1]} : vector<16x16x96xf32> to vector<16x16x8xf32>
    %46 = tpu.concatenate %42, %43, %44, %45 in 0 : vector<16x16x8xf32>, vector<16x16x8xf32>, vector<16x16x8xf32>, vector<16x16x8xf32> -> vector<64x16x8xf32>
    %47 = vector.extract_strided_slice %36 {offsets = [0, 0, 64], sizes = [16, 16, 8], strides = [1, 1, 1]} : vector<16x16x96xf32> to vector<16x16x8xf32>
    %48 = vector.extract_strided_slice %36 {offsets = [0, 0, 72], sizes = [16, 16, 8], strides = [1, 1, 1]} : vector<16x16x96xf32> to vector<16x16x8xf32>
    %49 = vector.extract_strided_slice %36 {offsets = [0, 0, 80], sizes = [16, 16, 8], strides = [1, 1, 1]} : vector<16x16x96xf32> to vector<16x16x8xf32>
    %50 = vector.extract_strided_slice %36 {offsets = [0, 0, 88], sizes = [16, 16, 8], strides = [1, 1, 1]} : vector<16x16x96xf32> to vector<16x16x8xf32>
    %51 = tpu.concatenate %47, %48, %49, %50 in 0 : vector<16x16x8xf32>, vector<16x16x8xf32>, vector<16x16x8xf32>, vector<16x16x8xf32> -> vector<64x16x8xf32>
    %52 = arith.truncf %41 : vector<64x16x8xf32> to vector<64x16x8xbf16>
    %53 = arith.truncf %46 : vector<64x16x8xf32> to vector<64x16x8xbf16>
    %54 = arith.truncf %51 : vector<64x16x8xf32> to vector<64x16x8xbf16>
    %cst_11 = arith.constant dense<0.000000e+00> : vector<64x16x16xf32>
    %55 = tpu.matmul %52, %53, %cst_11 {dimension_numbers = #tpu.dot_dimension_numbers<[2], [2], [1], [1], [0, 0, 0, 1, 1, 1], [0], [0]>} : vector<64x16x8xbf16>, vector<64x16x8xbf16>, vector<64x16x16xf32> -> vector<64x16x16xf32>
    %cst_12 = arith.constant dense<0xFF800000> : vector<64x16xf32>
    %56 = vector.multi_reduction <maximumf>, %55, %cst_12 [2] : vector<64x16x16xf32> to vector<64x16xf32>
    %57 = vector.shape_cast %56 : vector<64x16xf32> to vector<64x16x1xf32>
    %58 = vector.broadcast %57 : vector<64x16x1xf32> to vector<64x16x16xf32>
    %59 = arith.subf %55, %58 : vector<64x16x16xf32>
    %60 = math.exp %59 : vector<64x16x16xf32>
    %cst_13 = arith.constant dense<0.000000e+00> : vector<64x16xf32>
    %61 = vector.multi_reduction <add>, %60, %cst_13 [2] : vector<64x16x16xf32> to vector<64x16xf32>
    %62 = vector.shape_cast %61 : vector<64x16xf32> to vector<64x16x1xf32>
    %63 = tpu.reciprocal %62 {approx = true} : vector<64x16x1xf32> -> vector<64x16x1xf32>
    %64 = vector.broadcast %63 : vector<64x16x1xf32> to vector<64x16x16xf32>
    %65 = arith.mulf %60, %64 : vector<64x16x16xf32>
    %66 = arith.truncf %65 : vector<64x16x16xf32> to vector<64x16x16xbf16>
    %cst_14 = arith.constant dense<0.000000e+00> : vector<64x16x8xf32>
    %67 = tpu.matmul %66, %54, %cst_14 {dimension_numbers = #tpu.dot_dimension_numbers<[2], [1], [1], [2], [0, 0, 0, 1, 1, 2], [0], [0]>} : vector<64x16x16xbf16>, vector<64x16x8xbf16>, vector<64x16x8xf32> -> vector<64x16x8xf32>
    %68 = vector.shape_cast %67 : vector<64x16x8xf32> to vector<4x16x16x8xf32>
    %69 = vector.extract_strided_slice %68 {offsets = [0, 0, 0, 0], sizes = [1, 16, 16, 8], strides = [1, 1, 1, 1]} : vector<4x16x16x8xf32> to vector<1x16x16x8xf32>
    %70 = vector.shape_cast %69 : vector<1x16x16x8xf32> to vector<16x16x8xf32>
    %71 = vector.extract_strided_slice %68 {offsets = [1, 0, 0, 0], sizes = [1, 16, 16, 8], strides = [1, 1, 1, 1]} : vector<4x16x16x8xf32> to vector<1x16x16x8xf32>
    %72 = vector.shape_cast %71 : vector<1x16x16x8xf32> to vector<16x16x8xf32>
    %73 = vector.extract_strided_slice %68 {offsets = [2, 0, 0, 0], sizes = [1, 16, 16, 8], strides = [1, 1, 1, 1]} : vector<4x16x16x8xf32> to vector<1x16x16x8xf32>
    %74 = vector.shape_cast %73 : vector<1x16x16x8xf32> to vector<16x16x8xf32>
    %75 = vector.extract_strided_slice %68 {offsets = [3, 0, 0, 0], sizes = [1, 16, 16, 8], strides = [1, 1, 1, 1]} : vector<4x16x16x8xf32> to vector<1x16x16x8xf32>
    %76 = vector.shape_cast %75 : vector<1x16x16x8xf32> to vector<16x16x8xf32>
    %77 = tpu.concatenate %70, %72, %74, %76 in 2 : vector<16x16x8xf32>, vector<16x16x8xf32>, vector<16x16x8xf32>, vector<16x16x8xf32> -> vector<16x16x32xf32>
    %c0_15 = arith.constant 0 : index
    %c0_16 = arith.constant 0 : index
    %c0_17 = arith.constant 0 : index
    %78 = vector.load %arg4[%c0_15, %c0_16, %c0_17] : memref<16x16x32xf32, #tpu.memory_space<vmem>>, vector<16x16x32xf32>
    tpu.vector_store %arg4[%c0_15, %c0_16, %c0_17], %77 {strides = array<i32>} : memref<16x16x32xf32, #tpu.memory_space<vmem>>, vector<16x16x32xf32>,
    return
  }
  func.func @transform_0(%arg0: i32) -> (i32, i32, i32, i32) {
    %c0_i32 = arith.constant 0 : i32
    %c0_i32_0 = arith.constant 0 : i32
    %c0_i32_1 = arith.constant 0 : i32
    %c0_i32_2 = arith.constant 0 : i32
    return %arg0, %c0_i32, %c0_i32_0, %c0_i32_1 : i32, i32, i32, i32
  }
  func.func @transform_1(%arg0: i32) -> (i32, i32, i32) {
    %c0_i32 = arith.constant 0 : i32
    %c0_i32_0 = arith.constant 0 : i32
    %c0_i32_1 = arith.constant 0 : i32
    %c0_i32_2 = arith.constant 0 : i32
    return %c0_i32, %c0_i32_0, %c0_i32_1 : i32, i32, i32
  }
  func.func @transform_2(%arg0: i32) -> (i32, i32) {
    %c0_i32 = arith.constant 0 : i32
    %c0_i32_0 = arith.constant 0 : i32
    %c0_i32_1 = arith.constant 0 : i32
    return %c0_i32, %c0_i32_0 : i32, i32
  }
  func.func @transform_3(%arg0: i32) -> (i32, i32, i32) {
    %c0_i32 = arith.constant 0 : i32
    %c0_i32_0 = arith.constant 0 : i32
    %c0_i32_1 = arith.constant 0 : i32
    return %arg0, %c0_i32, %c0_i32_0 : i32, i32, i32
  }
}

</mosaic_0001>

<llo_original>
// kernel: tpu_custom_call.1
$region0: #{tpu_custom_call.1}
  #allocation0 [shape = 'u32[]', space=smem, size = 0x4, offset = 0x4, fixed_abs, tag = 'smem constant byte address 0x4 - core index']
  #allocation1 [shape = 'u32[144,128]{1,0:T(1,128)}', space=vmem, size = 0x12000, scoped, tag = 'internal scratch']
  %s0 = inlined_call_operand.vmem [shape: f32[32,4,16,7], index: 0, kind: input, shape index: {}]
  %s1 = inlined_call_operand.vmem [shape: bf16[4,7,96], index: 1, kind: input, shape index: {}]
  %s2 = inlined_call_operand.vmem [shape: f32[1,96], index: 2, kind: input, shape index: {}]
  %s3 = inlined_call_operand.hbm [shape: f32[32,16,32], index: 3, kind: output, shape index: {}]
  %s4 = sld [smem:[#allocation0]]
  $region45: #{tpu_custom_call.1} parent=0
    _
  %s6 = ssub.s32 1, %s4
  %s7 = scalar_select 0, %s6, %s4
  $region1: #{tpu_custom_call.1} parent=0
    #allocation2 [shape = 'u8[262144]{0}', space=vmem, size = 0x40000, scoped, tag = 'output window, operand 0']
    #allocation3 [shape = 's32[2]{0}', space=sflag, size = 0x8, scoped, tag = 'scoped memory for tpu_custom_call.1']
    %8 = vsyncpa [#allocation3], 0
    %s9 = scalar_lea.sflag [#allocation3], 1
    %10 = vsyncpa %s9, 0
    loop: start=0, step=1, limit=4
    $region2: #{tpu_custom_call.1} parent=1 // loop_pre_header
      _
    $region3: #{tpu_custom_call.1} parent=1 // loop_header
      %s12 = sphi 0, %s16
      %p13 = scmp.ge.s32.totalorder %s12, 4
      %s22 = sphi 0, %s24
      %s25 = sphi 0, %s22
      %s26 = sphi 0, %s25
      %s42 = sphi 0, %s26
      %s46 = sphi 0, %s46
      %s48 = sphi 0, %s46
      %s49 = sphi 0, %s48
      %s63 = sphi 0, %s49
      %s67 = sphi 0, %s67
      %s69 = sphi 0, %s67
      %s70 = sphi 0, %s69
      %s84 = sphi 0, %s70
      %s90 = sphi 0, %s92
      %s93 = sphi 0, %s90
      %s94 = sphi 0, %s93
      %s110 = sphi 0, %s94
    $region4: #{tpu_custom_call.1} parent=1 // loop_header_branch
      %15 = sbr.rel (%p13) target = $region8
    $region5: #{tpu_custom_call.1} parent=1 // loop_body
      %s17 = ssub.s32 %s12, 1
      %s18 = ssub.s32 %s12, 2
      %s19 = sadd.s32 %s12, 1
      %s20 = ssub.s32 %s12, %s19
      %p21 = scmp.eq.s32.totalorder %s20, 0
      %s23 = sadd.s32 %s22, 1
      %s24 = scalar_select %p21, %s22, %s23
      %p27 = pneg %p21
      %p28 = scmp.eq.s32.totalorder %s12, 1
      %p29 = por %p27, %p28
      %p30 = scmp.ne.s32.totalorder %s22, %s25
      %p31 = scmp.eq.s32.totalorder %s12, 0
      %p32 = por %p30, %p31
      %p33 = scmp.ne.s32.totalorder %s22, %s25
      %p34 = scmp.eq.s32.totalorder %s17, 1
      %p35 = por %p33, %p34
      %p36 = scmp.ne.s32.totalorder %s25, %s26
      %p37 = scmp.eq.s32.totalorder %s17, 0
      %p38 = por %p36, %p37
      %p39 = scmp.ne.s32.totalorder %s25, %s26
      %p40 = scmp.eq.s32.totalorder %s18, 1
      %p41 = por %p39, %p40
      %p43 = scmp.ne.s32.totalorder %s26, %s42
      %p44 = scmp.eq.s32.totalorder %s18, 0
      %p45 = por %p43, %p44
      %s47 = sadd.s32 %s46, 1
      %p50 = scmp.eq.s32.totalorder %s12, 1
      %p51 = scmp.ne.s32.totalorder %s46, %s48
      %p52 = scmp.eq.s32.totalorder %s12, 0
      %p53 = por %p51, %p52
      %p54 = scmp.ne.s32.totalorder %s46, %s48
      %p55 = scmp.eq.s32.totalorder %s17, 1
      %p56 = por %p54, %p55
      %p57 = scmp.ne.s32.totalorder %s48, %s49
      %p58 = scmp.eq.s32.totalorder %s17, 0
      %p59 = por %p57, %p58
      %p60 = scmp.ne.s32.totalorder %s48, %s49
      %p61 = scmp.eq.s32.totalorder %s18, 1
      %p62 = por %p60, %p61
      %p64 = scmp.ne.s32.totalorder %s49, %s63
      %p65 = scmp.eq.s32.totalorder %s18, 0
      %p66 = por %p64, %p65
      %s68 = sadd.s32 %s67, 1
      %p71 = scmp.eq.s32.totalorder %s12, 1
      %p72 = scmp.ne.s32.totalorder %s67, %s69
      %p73 = scmp.eq.s32.totalorder %s12, 0
      %p74 = por %p72, %p73
      %p75 = scmp.ne.s32.totalorder %s67, %s69
      %p76 = scmp.eq.s32.totalorder %s17, 1
      %p77 = por %p75, %p76
      %p78 = scmp.ne.s32.totalorder %s69, %s70
      %p79 = scmp.eq.s32.totalorder %s17, 0
      %p80 = por %p78, %p79
      %p81 = scmp.ne.s32.totalorder %s69, %s70
      %p82 = scmp.eq.s32.totalorder %s18, 1
      %p83 = por %p81, %p82
      %p85 = scmp.ne.s32.totalorder %s70, %s84
      %p86 = scmp.eq.s32.totalorder %s18, 0
      %p87 = por %p85, %p86
      %s88 = ssub.s32 %s12, %s19
      %p89 = scmp.eq.s32.totalorder %s88, 0
      %s91 = sadd.s32 %s90, 1
      %s92 = scalar_select %p89, %s90, %s91
      %p95 = pneg %p89
      %p96 = scmp.eq.s32.totalorder %s12, 1
      %p97 = por %p95, %p96
      %p98 = scmp.ne.s32.totalorder %s90, %s93
      %p99 = scmp.eq.s32.totalorder %s12, 0
      %p100 = por %p98, %p99
      %p101 = scmp.ne.s32.totalorder %s90, %s93
      %p102 = scmp.eq.s32.totalorder %s17, 1
      %p103 = por %p101, %p102
      %p104 = scmp.ne.s32.totalorder %s93, %s94
      %p105 = scmp.eq.s32.totalorder %s17, 0
      %p106 = por %p104, %p105
      %p107 = scmp.ne.s32.totalorder %s93, %s94
      %p108 = scmp.eq.s32.totalorder %s18, 1
      %p109 = por %p107, %p108
      %p111 = scmp.ne.s32.totalorder %s94, %s110
      %p112 = scmp.eq.s32.totalorder %s18, 0
      %p113 = por %p111, %p112
      %p114 = scmp.le.s32.totalorder 1, %s12
      %p115 = scmp.lt.s32.totalorder %s12, 3
      %p116 = pnand %p114, %p115
      %p117 = pneg %p116
      // Predicated region
      $region9: #{tpu_custom_call.1} parent=5 // pred_check
        _
      $region10: #{tpu_custom_call.1} parent=5 // pred_check_branch
        %119 = sbr.rel (%p116) target = $region12
      $region11: #{tpu_custom_call.1} parent=5 // pred_region
        %s120 = ssub.s32 %s12, 1
        // Predicated region
        $region13: #{tpu_custom_call.1} parent=11 // pred_check
          %p121 = pneg %p59
        $region14: #{tpu_custom_call.1} parent=11 // pred_check_branch
          %123 = sbr.rel (%p121) target = $region16
        $region15: #{tpu_custom_call.1} parent=11 // pred_region
          _
        $region16: #{tpu_custom_call.1} parent=11 // pred_fallthru
          _
        // Predicated region
        $region17: #{tpu_custom_call.1} parent=11 // pred_check
          %p124 = pneg %p80
        $region18: #{tpu_custom_call.1} parent=11 // pred_check_branch
          %126 = sbr.rel (%p124) target = $region20
        $region19: #{tpu_custom_call.1} parent=11 // pred_region
          _
        $region20: #{tpu_custom_call.1} parent=11 // pred_fallthru
          _
      $region12: #{tpu_custom_call.1} parent=5 // pred_fallthru
        _
      %p127 = scmp.lt.s32.totalorder %s12, 2
      // Predicated region
      $region21: #{tpu_custom_call.1} parent=5 // pred_check
        %p128 = pneg %p127
      $region22: #{tpu_custom_call.1} parent=5 // pred_check_branch
        %130 = sbr.rel (%p128) target = $region24
      $region23: #{tpu_custom_call.1} parent=5 // pred_region
        // Predicated region
        $region25: #{tpu_custom_call.1} parent=23 // pred_check
          %p131 = pneg %p32
        $region26: #{tpu_custom_call.1} parent=23 // pred_check_branch
          %133 = sbr.rel (%p131) target = $region28
        $region27: #{tpu_custom_call.1} parent=23 // pred_region
          %s134 = smul.u32 16, %s12
          %p135 = scmp.lt.s32.totalorder %s134, 31
          %s136 = scalar_select %p135, %s134, 31
          %s137 = smul.addr %s136, 8
          %s138 = smul.addr %s137, 8
          %s139 = scalar_lea.vmem %s0, %s138
          %s140 = smul.u32 16, %s12
        $region28: #{tpu_custom_call.1} parent=23 // pred_fallthru
          _
      $region24: #{tpu_custom_call.1} parent=5 // pred_fallthru
        _
      %p141 = scmp.le.s32.totalorder 1, %s12
      %p142 = scmp.lt.s32.totalorder %s12, 3
      %p143 = pnand %p141, %p142
      %p144 = pneg %p143
      // Predicated region
      $region29: #{tpu_custom_call.1} parent=5 // pred_check
        _
      $region30: #{tpu_custom_call.1} parent=5 // pred_check_branch
        %146 = sbr.rel (%p143) target = $region32
      $region31: #{tpu_custom_call.1} parent=5 // pred_region
        %s147 = ssub.s32 %s12, 1
        %s148 = smul.u32 16, %s17
        %p149 = scmp.lt.s32.totalorder %s148, 31
        %s150 = scalar_select %p149, %s148, 31
        %s151 = smul.addr %s150, 8
        %s152 = smul.addr %s151, 8
        %s153 = scalar_lea.vmem %s0, %s152
        %p154 = pneg %p38
        %p155 = pneg %p35
        %p156 = pneg %p59
        %p157 = pneg %p56
        %p158 = pneg %p80
        %p159 = pneg %p77
        %p160 = pneg %p106
        %p161 = pneg %p103
        %s162 = sand.u32 %s93, 1
        %s163 = scalar_lea.sflag [#allocation3], %s162
        %s164 = sand.u32 %s93, 1
        %s165 = smul.addr %s164, 256
        %s166 = scalar_lea.vmem [#allocation2], %s165
        %s167 = smul.u32 16, %s17
        %p168 = scmp.lt.s32.totalorder %s167, 31
        %s169 = scalar_select %p168, %s167, 31
        %s170 = smul.addr %s169, 8
        %s171 = smul.addr %s170, 8
        %s172 = scalar_lea.vmem %s0, %s171
        %s173 = smul.u32 16, %s17
        %s174 = smul.u32 16, %s17
        %v176 = vld [vmem:[%s172] sm:$0xff]
        %v177 = vld [vmem:[%s172 + $0x8] sm:$0xff]
        %v178 = vld [vmem:[%s172 + $0x10] sm:$0xff]
        %v179 = vld [vmem:[%s172 + $0x18] sm:$0xff]
        %v180 = vld [vmem:[%s172 + $0x20] sm:$0xff]
        %v181 = vld [vmem:[%s172 + $0x28] sm:$0xff]
        %v182 = vld [vmem:[%s172 + $0x30] sm:$0xff]
        %v183 = vld [vmem:[%s172 + $0x38] sm:$0xff]
        %v184 = vld [vmem:[%s172 + $0x40] sm:$0xff]
        %v185 = vld [vmem:[%s172 + $0x48] sm:$0xff]
        %v186 = vld [vmem:[%s172 + $0x50] sm:$0xff]
        %v187 = vld [vmem:[%s172 + $0x58] sm:$0xff]
        %v188 = vld [vmem:[%s172 + $0x60] sm:$0xff]
        %v189 = vld [vmem:[%s172 + $0x68] sm:$0xff]
        %v190 = vld [vmem:[%s172 + $0x70] sm:$0xff]
        %v191 = vld [vmem:[%s172 + $0x78] sm:$0xff]
        %v192 = vld [vmem:[%s172 + $0x80] sm:$0xff]
        %v193 = vld [vmem:[%s172 + $0x88] sm:$0xff]
        %v194 = vld [vmem:[%s172 + $0x90] sm:$0xff]
        %v195 = vld [vmem:[%s172 + $0x98] sm:$0xff]
        %v196 = vld [vmem:[%s172 + $0xa0] sm:$0xff]
        %v197 = vld [vmem:[%s172 + $0xa8] sm:$0xff]
        %v198 = vld [vmem:[%s172 + $0xb0] sm:$0xff]
        %v199 = vld [vmem:[%s172 + $0xb8] sm:$0xff]
        %v200 = vld [vmem:[%s172 + $0xc0] sm:$0xff]
        %v201 = vld [vmem:[%s172 + $0xc8] sm:$0xff]
        %v202 = vld [vmem:[%s172 + $0xd0] sm:$0xff]
        %v203 = vld [vmem:[%s172 + $0xd8] sm:$0xff]
        %v204 = vld [vmem:[%s172 + $0xe0] sm:$0xff]
        %v205 = vld [vmem:[%s172 + $0xe8] sm:$0xff]
        %v206 = vld [vmem:[%s172 + $0xf0] sm:$0xff]
        %v207 = vld [vmem:[%s172 + $0xf8] sm:$0xff]
        %v208 = vld [vmem:[%s172 + $0x100] sm:$0xff]
        %v209 = vld [vmem:[%s172 + $0x108] sm:$0xff]
        %v210 = vld [vmem:[%s172 + $0x110] sm:$0xff]
        %v211 = vld [vmem:[%s172 + $0x118] sm:$0xff]
        %v212 = vld [vmem:[%s172 + $0x120] sm:$0xff]
        %v213 = vld [vmem:[%s172 + $0x128] sm:$0xff]
        %v214 = vld [vmem:[%s172 + $0x130] sm:$0xff]
        %v215 = vld [vmem:[%s172 + $0x138] sm:$0xff]
        %v216 = vld [vmem:[%s172 + $0x140] sm:$0xff]
        %v217 = vld [vmem:[%s172 + $0x148] sm:$0xff]
        %v218 = vld [vmem:[%s172 + $0x150] sm:$0xff]
        %v219 = vld [vmem:[%s172 + $0x158] sm:$0xff]
        %v220 = vld [vmem:[%s172 + $0x160] sm:$0xff]
        %v221 = vld [vmem:[%s172 + $0x168] sm:$0xff]
        %v222 = vld [vmem:[%s172 + $0x170] sm:$0xff]
        %v223 = vld [vmem:[%s172 + $0x178] sm:$0xff]
        %v224 = vld [vmem:[%s172 + $0x180] sm:$0xff]
        %v225 = vld [vmem:[%s172 + $0x188] sm:$0xff]
        %v226 = vld [vmem:[%s172 + $0x190] sm:$0xff]
        %v227 = vld [vmem:[%s172 + $0x198] sm:$0xff]
        %v228 = vld [vmem:[%s172 + $0x1a0] sm:$0xff]
        %v229 = vld [vmem:[%s172 + $0x1a8] sm:$0xff]
        %v230 = vld [vmem:[%s172 + $0x1b0] sm:$0xff]
        %v231 = vld [vmem:[%s172 + $0x1b8] sm:$0xff]
        %v232 = vld [vmem:[%s172 + $0x1c0] sm:$0xff]
        %v233 = vld [vmem:[%s172 + $0x1c8] sm:$0xff]
        %v234 = vld [vmem:[%s172 + $0x1d0] sm:$0xff]
        %v235 = vld [vmem:[%s172 + $0x1d8] sm:$0xff]
        %v236 = vld [vmem:[%s172 + $0x1e0] sm:$0xff]
        %v237 = vld [vmem:[%s172 + $0x1e8] sm:$0xff]
        %v238 = vld [vmem:[%s172 + $0x1f0] sm:$0xff]
        %v239 = vld [vmem:[%s172 + $0x1f8] sm:$0xff]
        %v240 = vld [vmem:[%s172 + $0x200] sm:$0xff]
        %v241 = vld [vmem:[%s172 + $0x208] sm:$0xff]
        %v242 = vld [vmem:[%s172 + $0x210] sm:$0xff]
        %v243 = vld [vmem:[%s172 + $0x218] sm:$0xff]
        %v244 = vld [vmem:[%s172 + $0x220] sm:$0xff]
        %v245 = vld [vmem:[%s172 + $0x228] sm:$0xff]
        %v246 = vld [vmem:[%s172 + $0x230] sm:$0xff]
        %v247 = vld [vmem:[%s172 + $0x238] sm:$0xff]
        %v248 = vld [vmem:[%s172 + $0x240] sm:$0xff]
        %v249 = vld [vmem:[%s172 + $0x248] sm:$0xff]
        %v250 = vld [vmem:[%s172 + $0x250] sm:$0xff]
        %v251 = vld [vmem:[%s172 + $0x258] sm:$0xff]
        %v252 = vld [vmem:[%s172 + $0x260] sm:$0xff]
        %v253 = vld [vmem:[%s172 + $0x268] sm:$0xff]
        %v254 = vld [vmem:[%s172 + $0x270] sm:$0xff]
        %v255 = vld [vmem:[%s172 + $0x278] sm:$0xff]
        %v256 = vld [vmem:[%s172 + $0x280] sm:$0xff]
        %v257 = vld [vmem:[%s172 + $0x288] sm:$0xff]
        %v258 = vld [vmem:[%s172 + $0x290] sm:$0xff]
        %v259 = vld [vmem:[%s172 + $0x298] sm:$0xff]
        %v260 = vld [vmem:[%s172 + $0x2a0] sm:$0xff]
        %v261 = vld [vmem:[%s172 + $0x2a8] sm:$0xff]
        %v262 = vld [vmem:[%s172 + $0x2b0] sm:$0xff]
        %v263 = vld [vmem:[%s172 + $0x2b8] sm:$0xff]
        %v264 = vld [vmem:[%s172 + $0x2c0] sm:$0xff]
        %v265 = vld [vmem:[%s172 + $0x2c8] sm:$0xff]
        %v266 = vld [vmem:[%s172 + $0x2d0] sm:$0xff]
        %v267 = vld [vmem:[%s172 + $0x2d8] sm:$0xff]
        %v268 = vld [vmem:[%s172 + $0x2e0] sm:$0xff]
        %v269 = vld [vmem:[%s172 + $0x2e8] sm:$0xff]
        %v270 = vld [vmem:[%s172 + $0x2f0] sm:$0xff]
        %v271 = vld [vmem:[%s172 + $0x2f8] sm:$0xff]
        %v272 = vld [vmem:[%s172 + $0x300] sm:$0xff]
        %v273 = vld [vmem:[%s172 + $0x308] sm:$0xff]
        %v274 = vld [vmem:[%s172 + $0x310] sm:$0xff]
        %v275 = vld [vmem:[%s172 + $0x318] sm:$0xff]
        %v276 = vld [vmem:[%s172 + $0x320] sm:$0xff]
        %v277 = vld [vmem:[%s172 + $0x328] sm:$0xff]
        %v278 = vld [vmem:[%s172 + $0x330] sm:$0xff]
        %v279 = vld [vmem:[%s172 + $0x338] sm:$0xff]
        %v280 = vld [vmem:[%s172 + $0x340] sm:$0xff]
        %v281 = vld [vmem:[%s172 + $0x348] sm:$0xff]
        %v282 = vld [vmem:[%s172 + $0x350] sm:$0xff]
        %v283 = vld [vmem:[%s172 + $0x358] sm:$0xff]
        %v284 = vld [vmem:[%s172 + $0x360] sm:$0xff]
        %v285 = vld [vmem:[%s172 + $0x368] sm:$0xff]
        %v286 = vld [vmem:[%s172 + $0x370] sm:$0xff]
        %v287 = vld [vmem:[%s172 + $0x378] sm:$0xff]
        %v288 = vld [vmem:[%s172 + $0x380] sm:$0xff]
        %v289 = vld [vmem:[%s172 + $0x388] sm:$0xff]
        %v290 = vld [vmem:[%s172 + $0x390] sm:$0xff]
        %v291 = vld [vmem:[%s172 + $0x398] sm:$0xff]
        %v292 = vld [vmem:[%s172 + $0x3a0] sm:$0xff]
        %v293 = vld [vmem:[%s172 + $0x3a8] sm:$0xff]
        %v294 = vld [vmem:[%s172 + $0x3b0] sm:$0xff]
        %v295 = vld [vmem:[%s172 + $0x3b8] sm:$0xff]
        %v296 = vld [vmem:[%s172 + $0x3c0] sm:$0xff]
        %v297 = vld [vmem:[%s172 + $0x3c8] sm:$0xff]
        %v298 = vld [vmem:[%s172 + $0x3d0] sm:$0xff]
        %v299 = vld [vmem:[%s172 + $0x3d8] sm:$0xff]
        %v300 = vld [vmem:[%s172 + $0x3e0] sm:$0xff]
        %v301 = vld [vmem:[%s172 + $0x3e8] sm:$0xff]
        %v302 = vld [vmem:[%s172 + $0x3f0] sm:$0xff]
        %v303 = vld [vmem:[%s172 + $0x3f8] sm:$0xff]
        %v304 = vld [vmem:[%s1] sm:$0xf]
        %v305 = vld [vmem:[%s1 + $0x4] sm:$0xf]
        %v306 = vld [vmem:[%s1 + $0x8] sm:$0xf]
        %v307 = vld [vmem:[%s1 + $0xc] sm:$0xf]
        %v308 = vpack.c.bf16 %v177, %v176
        %v309 = vpack.c.bf16 %v185, %v184
        %v310 = vpack.c.bf16 %v193, %v192
        %v311 = vpack.c.bf16 %v201, %v200
        %v312 = vpack.c.bf16 %v209, %v208
        %v313 = vpack.c.bf16 %v217, %v216
        %v314 = vpack.c.bf16 %v225, %v224
        %v315 = vpack.c.bf16 %v233, %v232
        %v316 = vpack.c.bf16 %v241, %v240
        %v317 = vpack.c.bf16 %v249, %v248
        %v318 = vpack.c.bf16 %v257, %v256
        %v319 = vpack.c.bf16 %v265, %v264
        %v320 = vpack.c.bf16 %v273, %v272
        %v321 = vpack.c.bf16 %v281, %v280
        %v322 = vpack.c.bf16 %v289, %v288
        %v323 = vpack.c.bf16 %v297, %v296
        %v324 = vpack.c.bf16 %v179, %v178
        %v325 = vpack.c.bf16 %v187, %v186
        %v326 = vpack.c.bf16 %v195, %v194
        %v327 = vpack.c.bf16 %v203, %v202
        %v328 = vpack.c.bf16 %v211, %v210
        %v329 = vpack.c.bf16 %v219, %v218
        %v330 = vpack.c.bf16 %v227, %v226
        %v331 = vpack.c.bf16 %v235, %v234
        %v332 = vpack.c.bf16 %v243, %v242
        %v333 = vpack.c.bf16 %v251, %v250
        %v334 = vpack.c.bf16 %v259, %v258
        %v335 = vpack.c.bf16 %v267, %v266
        %v336 = vpack.c.bf16 %v275, %v274
        %v337 = vpack.c.bf16 %v283, %v282
        %v338 = vpack.c.bf16 %v291, %v290
        %v339 = vpack.c.bf16 %v299, %v298
        %vm340 = vcmask 56320
        %v342 = vsel %vm340, %v324, 0
        %v345 = vsel %vm340, %v325, 0
        %v348 = vsel %vm340, %v326, 0
        %v351 = vsel %vm340, %v327, 0
        %v354 = vsel %vm340, %v328, 0
        %v357 = vsel %vm340, %v329, 0
        %v360 = vsel %vm340, %v330, 0
        %v363 = vsel %vm340, %v331, 0
        %v366 = vsel %vm340, %v332, 0
        %v369 = vsel %vm340, %v333, 0
        %v372 = vsel %vm340, %v334, 0
        %v375 = vsel %vm340, %v335, 0
        %v378 = vsel %vm340, %v336, 0
        %v381 = vsel %vm340, %v337, 0
        %v384 = vsel %vm340, %v338, 0
        %v387 = vsel %vm340, %v339, 0
        %vm389 = vcmask 1042432
        %vm390 = vcmask 1043456
        %v391 = vsel %vm389, 4294967295, 65535
        %v392 = vsel %vm390, %v391, 0
        %v394 = vand.u32 %v305, %v392
        %396 = vmatprep.subr.bf16.mxu0 0
        %397 = vmatpush1.bf16.msra.mxu0 %v394
        %398 = vmatprep.subr.bf16.mxu0 0
        %399 = vmatpush1.bf16.msra.mxu0 0
        %400 = vmatprep.subr.bf16.mxu0 0
        %401 = vmatpush1.bf16.msra.mxu0 0
        %402 = vmatprep.subr.bf16.mxu0 0
        %403 = vmatpush1.bf16.msra.mxu0 0
        %404 = vmatprep.subr.bf16.mxu0 0
        %405 = vmatpush1.bf16.msra.mxu0 0
        %406 = vmatprep.subr.bf16.mxu0 0
        %407 = vmatpush1.bf16.msra.mxu0 0
        %408 = vmatprep.subr.bf16.mxu0 0
        %409 = vmatpush1.bf16.msra.mxu0 0
        %410 = vmatprep.subr.bf16.mxu0 0
        %411 = vmatpush1.bf16.msra.mxu0 0
        %412 = vmatprep.subr.bf16.mxu0 0
        %413 = vmatpush1.bf16.msra.mxu0 0
        %414 = vmatprep.subr.bf16.mxu0 0
        %415 = vmatpush1.bf16.msra.mxu0 0
        %416 = vmatprep.subr.bf16.mxu0 0
        %417 = vmatpush1.bf16.msra.mxu0 0
        %418 = vmatprep.subr.bf16.mxu0 0
        %419 = vmatpush1.bf16.msra.mxu0 0
        %420 = vmatprep.subr.bf16.mxu0 0
        %421 = vmatpush1.bf16.msra.mxu0 0
        %422 = vmatprep.subr.bf16.mxu0 0
        %423 = vmatpush1.bf16.msra.mxu0 0
        %424 = vmatprep.subr.bf16.mxu0 0
        %425 = vmatpush1.bf16.msra.mxu0 0
        %426 = vmatprep.subr.bf16.mxu0 0
        %427 = vmatpush1.bf16.msra.mxu0 0
        %428 = vmatprep.mubr.bf16.mxu0 0
        %429 = vmatmul.mubr.bf16.gmra.mrb[0].mxu0 %v342
        %v430 = vpop.f32.mrb[0].mxu0
        %v431 = vadd.f32 0.0, %v430
        %v432 = vpop.f32.mrb[0].mxu0
        %v433 = vpop.f32.mrb[0].mxu0
        %v434 = vadd.f32 0.0, %v433
        %v435 = vpop.f32.mrb[0].mxu0
        %436 = vmatprep.mubr.bf16.mxu0 0
        %437 = vmatmul.mubr.bf16.gmra.mrb[0].mxu0 %v345
        %v438 = vpop.f32.mrb[0].mxu0
        %v439 = vadd.f32 0.0, %v438
        %v440 = vpop.f32.mrb[0].mxu0
        %v441 = vpop.f32.mrb[0].mxu0
        %v442 = vadd.f32 0.0, %v441
        %v443 = vpop.f32.mrb[0].mxu0
        %444 = vmatprep.mubr.bf16.mxu0 0
        %445 = vmatmul.mubr.bf16.gmra.mrb[0].mxu0 %v348
        %v446 = vpop.f32.mrb[0].mxu0
        %v447 = vadd.f32 0.0, %v446
        %v448 = vpop.f32.mrb[0].mxu0
        %v449 = vpop.f32.mrb[0].mxu0
        %v450 = vadd.f32 0.0, %v449
        %v451 = vpop.f32.mrb[0].mxu0
        %452 = vmatprep.mubr.bf16.mxu0 0
        %453 = vmatmul.mubr.bf16.gmra.mrb[0].mxu0 %v351
        %v454 = vpop.f32.mrb[0].mxu0
        %v455 = vadd.f32 0.0, %v454
        %v456 = vpop.f32.mrb[0].mxu0
        %v457 = vpop.f32.mrb[0].mxu0
        %v458 = vadd.f32 0.0, %v457
        %v459 = vpop.f32.mrb[0].mxu0
        %460 = vmatprep.mubr.bf16.mxu0 0
        %461 = vmatmul.mubr.bf16.gmra.mrb[0].mxu0 %v354
        %v462 = vpop.f32.mrb[0].mxu0
        %v463 = vadd.f32 0.0, %v462
        %v464 = vpop.f32.mrb[0].mxu0
        %v465 = vpop.f32.mrb[0].mxu0
        %v466 = vadd.f32 0.0, %v465
        %v467 = vpop.f32.mrb[0].mxu0
        %468 = vmatprep.mubr.bf16.mxu0 0
        %469 = vmatmul.mubr.bf16.gmra.mrb[0].mxu0 %v357
        %v470 = vpop.f32.mrb[0].mxu0
        %v471 = vadd.f32 0.0, %v470
        %v472 = vpop.f32.mrb[0].mxu0
        %v473 = vpop.f32.mrb[0].mxu0
        %v474 = vadd.f32 0.0, %v473
        %v475 = vpop.f32.mrb[0].mxu0
        %476 = vmatprep.mubr.bf16.mxu0 0
        %477 = vmatmul.mubr.bf16.gmra.mrb[0].mxu0 %v360
        %v478 = vpop.f32.mrb[0].mxu0
        %v479 = vadd.f32 0.0, %v478
        %v480 = vpop.f32.mrb[0].mxu0
        %v481 = vpop.f32.mrb[0].mxu0
        %v482 = vadd.f32 0.0, %v481
        %v483 = vpop.f32.mrb[0].mxu0
        %484 = vmatprep.mubr.bf16.mxu0 0
        %485 = vmatmul.mubr.bf16.gmra.mrb[0].mxu0 %v363
        %v486 = vpop.f32.mrb[0].mxu0
        %v487 = vadd.f32 0.0, %v486
        %v488 = vpop.f32.mrb[0].mxu0
        %v489 = vpop.f32.mrb[0].mxu0
        %v490 = vadd.f32 0.0, %v489
        %v491 = vpop.f32.mrb[0].mxu0
        %492 = vmatprep.mubr.bf16.mxu0 0
        %493 = vmatmul.mubr.bf16.gmra.mrb[0].mxu0 %v366
        %v494 = vpop.f32.mrb[0].mxu0
        %v495 = vadd.f32 0.0, %v494
        %v496 = vpop.f32.mrb[0].mxu0
        %v497 = vpop.f32.mrb[0].mxu0
        %v498 = vadd.f32 0.0, %v497
        %v499 = vpop.f32.mrb[0].mxu0
        %500 = vmatprep.mubr.bf16.mxu0 0
        %501 = vmatmul.mubr.bf16.gmra.mrb[0].mxu0 %v369
        %v502 = vpop.f32.mrb[0].mxu0
        %v503 = vadd.f32 0.0, %v502
        %v504 = vpop.f32.mrb[0].mxu0
        %v505 = vpop.f32.mrb[0].mxu0
        %v506 = vadd.f32 0.0, %v505
        %v507 = vpop.f32.mrb[0].mxu0
        %508 = vmatprep.mubr.bf16.mxu0 0
        %509 = vmatmul.mubr.bf16.gmra.mrb[0].mxu0 %v372
        %v510 = vpop.f32.mrb[0].mxu0
        %v511 = vadd.f32 0.0, %v510
        %v512 = vpop.f32.mrb[0].mxu0
        %v513 = vpop.f32.mrb[0].mxu0
        %v514 = vadd.f32 0.0, %v513
        %v515 = vpop.f32.mrb[0].mxu0
        %516 = vmatprep.mubr.bf16.mxu0 0
        %517 = vmatmul.mubr.bf16.gmra.mrb[0].mxu0 %v375
        %v518 = vpop.f32.mrb[0].mxu0
        %v519 = vadd.f32 0.0, %v518
        %v520 = vpop.f32.mrb[0].mxu0
        %v521 = vpop.f32.mrb[0].mxu0
        %v522 = vadd.f32 0.0, %v521
        %v523 = vpop.f32.mrb[0].mxu0
        %524 = vmatprep.mubr.bf16.mxu0 0
        %525 = vmatmul.mubr.bf16.gmra.mrb[0].mxu0 %v378
        %v526 = vpop.f32.mrb[0].mxu0
        %v527 = vadd.f32 0.0, %v526
        %v528 = vpop.f32.mrb[0].mxu0
        %v529 = vpop.f32.mrb[0].mxu0
        %v530 = vadd.f32 0.0, %v529
        %v531 = vpop.f32.mrb[0].mxu0
        %532 = vmatprep.mubr.bf16.mxu0 0
        %533 = vmatmul.mubr.bf16.gmra.mrb[0].mxu0 %v381
        %v534 = vpop.f32.mrb[0].mxu0
        %v535 = vadd.f32 0.0, %v534
        %v536 = vpop.f32.mrb[0].mxu0
        %v537 = vpop.f32.mrb[0].mxu0
        %v538 = vadd.f32 0.0, %v537
        %v539 = vpop.f32.mrb[0].mxu0
        %540 = vmatprep.mubr.bf16.mxu0 0
        %541 = vmatmul.mubr.bf16.gmra.mrb[0].mxu0 %v384
        %v542 = vpop.f32.mrb[0].mxu0
        %v543 = vadd.f32 0.0, %v542
        %v544 = vpop.f32.mrb[0].mxu0
        %v545 = vpop.f32.mrb[0].mxu0
        %v546 = vadd.f32 0.0, %v545
        %v547 = vpop.f32.mrb[0].mxu0
        %548 = vmatprep.mubr.bf16.mxu0 0
        %549 = vmatmul.mubr.bf16.gmra.mrb[0].mxu0 %v387
        %v550 = vpop.f32.mrb[0].mxu0
        %v551 = vadd.f32 0.0, %v550
        %v552 = vpop.f32.mrb[0].mxu0
        %v553 = vpop.f32.mrb[0].mxu0
        %v554 = vadd.f32 0.0, %v553
        %v555 = vpop.f32.mrb[0].mxu0
        %556 = vdwg.mxu0
        %v558 = vsel %vm340, %v308, 0
        %v561 = vsel %vm340, %v309, 0
        %v564 = vsel %vm340, %v310, 0
        %v567 = vsel %vm340, %v311, 0
        %v570 = vsel %vm340, %v312, 0
        %v573 = vsel %vm340, %v313, 0
        %v576 = vsel %vm340, %v314, 0
        %v579 = vsel %vm340, %v315, 0
        %v582 = vsel %vm340, %v316, 0
        %v585 = vsel %vm340, %v317, 0
        %v588 = vsel %vm340, %v318, 0
        %v591 = vsel %vm340, %v319, 0
        %v594 = vsel %vm340, %v320, 0
        %v597 = vsel %vm340, %v321, 0
        %v600 = vsel %vm340, %v322, 0
        %v603 = vsel %vm340, %v323, 0
        %v606 = vand.u32 %v304, %v392
        %608 = vmatprep.subr.bf16.mxu0 0
        %609 = vmatpush1.bf16.msra.mxu0 %v606
        %610 = vmatprep.subr.bf16.mxu0 0
        %611 = vmatpush1.bf16.msra.mxu0 0
        %612 = vmatprep.subr.bf16.mxu0 0
        %613 = vmatpush1.bf16.msra.mxu0 0
        %614 = vmatprep.subr.bf16.mxu0 0
        %615 = vmatpush1.bf16.msra.mxu0 0
        %616 = vmatprep.subr.bf16.mxu0 0
        %617 = vmatpush1.bf16.msra.mxu0 0
        %618 = vmatprep.subr.bf16.mxu0 0
        %619 = vmatpush1.bf16.msra.mxu0 0
        %620 = vmatprep.subr.bf16.mxu0 0
        %621 = vmatpush1.bf16.msra.mxu0 0
        %622 = vmatprep.subr.bf16.mxu0 0
        %623 = vmatpush1.bf16.msra.mxu0 0
        %624 = vmatprep.subr.bf16.mxu0 0
        %625 = vmatpush1.bf16.msra.mxu0 0
        %626 = vmatprep.subr.bf16.mxu0 0
        %627 = vmatpush1.bf16.msra.mxu0 0
        %628 = vmatprep.subr.bf16.mxu0 0
        %629 = vmatpush1.bf16.msra.mxu0 0
        %630 = vmatprep.subr.bf16.mxu0 0
        %631 = vmatpush1.bf16.msra.mxu0 0
        %632 = vmatprep.subr.bf16.mxu0 0
        %633 = vmatpush1.bf16.msra.mxu0 0
        %634 = vmatprep.subr.bf16.mxu0 0
        %635 = vmatpush1.bf16.msra.mxu0 0
        %636 = vmatprep.subr.bf16.mxu0 0
        %637 = vmatpush1.bf16.msra.mxu0 0
        %638 = vmatprep.subr.bf16.mxu0 0
        %639 = vmatpush1.bf16.msra.mxu0 0
        %640 = vmatprep.mubr.bf16.mxu0 0
        %641 = vmatmul.mubr.bf16.gmra.mrb[0].mxu0 %v558
        %v642 = vpop.f32.mrb[0].mxu0
        %v643 = vadd.f32 %v431, %v642
        %v644 = vpop.f32.mrb[0].mxu0
        %v645 = vpop.f32.mrb[0].mxu0
        %v646 = vadd.f32 %v434, %v645
        %v647 = vpop.f32.mrb[0].mxu0
        %648 = vmatprep.mubr.bf16.mxu0 0
        %649 = vmatmul.mubr.bf16.gmra.mrb[0].mxu0 %v561
        %v650 = vpop.f32.mrb[0].mxu0
        %v651 = vadd.f32 %v439, %v650
        %v652 = vpop.f32.mrb[0].mxu0
        %v653 = vpop.f32.mrb[0].mxu0
        %v654 = vadd.f32 %v442, %v653
        %v655 = vpop.f32.mrb[0].mxu0
        %656 = vmatprep.mubr.bf16.mxu0 0
        %657 = vmatmul.mubr.bf16.gmra.mrb[0].mxu0 %v564
        %v658 = vpop.f32.mrb[0].mxu0
        %v659 = vadd.f32 %v447, %v658
        %v660 = vpop.f32.mrb[0].mxu0
        %v661 = vpop.f32.mrb[0].mxu0
        %v662 = vadd.f32 %v450, %v661
        %v663 = vpop.f32.mrb[0].mxu0
        %664 = vmatprep.mubr.bf16.mxu0 0
        %665 = vmatmul.mubr.bf16.gmra.mrb[0].mxu0 %v567
        %v666 = vpop.f32.mrb[0].mxu0
        %v667 = vadd.f32 %v455, %v666
        %v668 = vpop.f32.mrb[0].mxu0
        %v669 = vpop.f32.mrb[0].mxu0
        %v670 = vadd.f32 %v458, %v669
        %v671 = vpop.f32.mrb[0].mxu0
        %672 = vmatprep.mubr.bf16.mxu0 0
        %673 = vmatmul.mubr.bf16.gmra.mrb[0].mxu0 %v570
        %v674 = vpop.f32.mrb[0].mxu0
        %v675 = vadd.f32 %v463, %v674
        %v676 = vpop.f32.mrb[0].mxu0
        %v677 = vpop.f32.mrb[0].mxu0
        %v678 = vadd.f32 %v466, %v677
        %v679 = vpop.f32.mrb[0].mxu0
        %680 = vmatprep.mubr.bf16.mxu0 0
        %681 = vmatmul.mubr.bf16.gmra.mrb[0].mxu0 %v573
        %v682 = vpop.f32.mrb[0].mxu0
        %v683 = vadd.f32 %v471, %v682
        %v684 = vpop.f32.mrb[0].mxu0
        %v685 = vpop.f32.mrb[0].mxu0
        %v686 = vadd.f32 %v474, %v685
        %v687 = vpop.f32.mrb[0].mxu0
        %688 = vmatprep.mubr.bf16.mxu0 0
        %689 = vmatmul.mubr.bf16.gmra.mrb[0].mxu0 %v576
        %v690 = vpop.f32.mrb[0].mxu0
        %v691 = vadd.f32 %v479, %v690
        %v692 = vpop.f32.mrb[0].mxu0
        %v693 = vpop.f32.mrb[0].mxu0
        %v694 = vadd.f32 %v482, %v693
        %v695 = vpop.f32.mrb[0].mxu0
        %696 = vmatprep.mubr.bf16.mxu0 0
        %697 = vmatmul.mubr.bf16.gmra.mrb[0].mxu0 %v579
        %v698 = vpop.f32.mrb[0].mxu0
        %v699 = vadd.f32 %v487, %v698
        %v700 = vpop.f32.mrb[0].mxu0
        %v701 = vpop.f32.mrb[0].mxu0
        %v702 = vadd.f32 %v490, %v701
        %v703 = vpop.f32.mrb[0].mxu0
        %704 = vmatprep.mubr.bf16.mxu0 0
        %705 = vmatmul.mubr.bf16.gmra.mrb[0].mxu0 %v582
        %v706 = vpop.f32.mrb[0].mxu0
        %v707 = vadd.f32 %v495, %v706
        %v708 = vpop.f32.mrb[0].mxu0
        %v709 = vpop.f32.mrb[0].mxu0
        %v710 = vadd.f32 %v498, %v709
        %v711 = vpop.f32.mrb[0].mxu0
        %712 = vmatprep.mubr.bf16.mxu0 0
        %713 = vmatmul.mubr.bf16.gmra.mrb[0].mxu0 %v585
        %v714 = vpop.f32.mrb[0].mxu0
        %v715 = vadd.f32 %v503, %v714
        %v716 = vpop.f32.mrb[0].mxu0
        %v717 = vpop.f32.mrb[0].mxu0
        %v718 = vadd.f32 %v506, %v717
        %v719 = vpop.f32.mrb[0].mxu0
        %720 = vmatprep.mubr.bf16.mxu0 0
        %721 = vmatmul.mubr.bf16.gmra.mrb[0].mxu0 %v588
        %v722 = vpop.f32.mrb[0].mxu0
        %v723 = vadd.f32 %v511, %v722
        %v724 = vpop.f32.mrb[0].mxu0
        %v725 = vpop.f32.mrb[0].mxu0
        %v726 = vadd.f32 %v514, %v725
        %v727 = vpop.f32.mrb[0].mxu0
        %728 = vmatprep.mubr.bf16.mxu0 0
        %729 = vmatmul.mubr.bf16.gmra.mrb[0].mxu0 %v591
        %v730 = vpop.f32.mrb[0].mxu0
        %v731 = vadd.f32 %v519, %v730
        %v732 = vpop.f32.mrb[0].mxu0
        %v733 = vpop.f32.mrb[0].mxu0
        %v734 = vadd.f32 %v522, %v733
        %v735 = vpop.f32.mrb[0].mxu0
        %736 = vmatprep.mubr.bf16.mxu0 0
        %737 = vmatmul.mubr.bf16.gmra.mrb[0].mxu0 %v594
        %v738 = vpop.f32.mrb[0].mxu0
        %v739 = vadd.f32 %v527, %v738
        %v740 = vpop.f32.mrb[0].mxu0
        %v741 = vpop.f32.mrb[0].mxu0
        %v742 = vadd.f32 %v530, %v741
        %v743 = vpop.f32.mrb[0].mxu0
        %744 = vmatprep.mubr.bf16.mxu0 0
        %745 = vmatmul.mubr.bf16.gmra.mrb[0].mxu0 %v597
        %v746 = vpop.f32.mrb[0].mxu0
        %v747 = vadd.f32 %v535, %v746
        %v748 = vpop.f32.mrb[0].mxu0
        %v749 = vpop.f32.mrb[0].mxu0
        %v750 = vadd.f32 %v538, %v749
        %v751 = vpop.f32.mrb[0].mxu0
        %752 = vmatprep.mubr.bf16.mxu0 0
        %753 = vmatmul.mubr.bf16.gmra.mrb[0].mxu0 %v600
        %v754 = vpop.f32.mrb[0].mxu0
        %v755 = vadd.f32 %v543, %v754
        %v756 = vpop.f32.mrb[0].mxu0
        %v757 = vpop.f32.mrb[0].mxu0
        %v758 = vadd.f32 %v546, %v757
        %v759 = vpop.f32.mrb[0].mxu0
        %760 = vmatprep.mubr.bf16.mxu0 0
        %761 = vmatmul.mubr.bf16.gmra.mrb[0].mxu0 %v603
        %v762 = vpop.f32.mrb[0].mxu0
        %v763 = vadd.f32 %v551, %v762
        %v764 = vpop.f32.mrb[0].mxu0
        %v765 = vpop.f32.mrb[0].mxu0
        %v766 = vadd.f32 %v554, %v765
        %v767 = vpop.f32.mrb[0].mxu0
        %768 = vdwg.mxu0
        %v769 = vpack.c.bf16 %v181, %v180
        %v770 = vpack.c.bf16 %v189, %v188
        %v771 = vpack.c.bf16 %v197, %v196
        %v772 = vpack.c.bf16 %v205, %v204
        %v773 = vpack.c.bf16 %v213, %v212
        %v774 = vpack.c.bf16 %v221, %v220
        %v775 = vpack.c.bf16 %v229, %v228
        %v776 = vpack.c.bf16 %v237, %v236
        %v777 = vpack.c.bf16 %v245, %v244
        %v778 = vpack.c.bf16 %v253, %v252
        %v779 = vpack.c.bf16 %v261, %v260
        %v780 = vpack.c.bf16 %v269, %v268
        %v781 = vpack.c.bf16 %v277, %v276
        %v782 = vpack.c.bf16 %v285, %v284
        %v783 = vpack.c.bf16 %v293, %v292
        %v784 = vpack.c.bf16 %v301, %v300
        %v786 = vsel %vm340, %v769, 0
        %v789 = vsel %vm340, %v770, 0
        %v792 = vsel %vm340, %v771, 0
        %v795 = vsel %vm340, %v772, 0
        %v798 = vsel %vm340, %v773, 0
        %v801 = vsel %vm340, %v774, 0
        %v804 = vsel %vm340, %v775, 0
        %v807 = vsel %vm340, %v776, 0
        %v810 = vsel %vm340, %v777, 0
        %v813 = vsel %vm340, %v778, 0
        %v816 = vsel %vm340, %v779, 0
        %v819 = vsel %vm340, %v780, 0
        %v822 = vsel %vm340, %v781, 0
        %v825 = vsel %vm340, %v782, 0
        %v828 = vsel %vm340, %v783, 0
        %v831 = vsel %vm340, %v784, 0
        %v834 = vand.u32 %v306, %v392
        %836 = vmatprep.subr.bf16.mxu0 0
        %837 = vmatpush1.bf16.msra.mxu0 %v834
        %838 = vmatprep.subr.bf16.mxu0 0
        %839 = vmatpush1.bf16.msra.mxu0 0
        %840 = vmatprep.subr.bf16.mxu0 0
        %841 = vmatpush1.bf16.msra.mxu0 0
        %842 = vmatprep.subr.bf16.mxu0 0
        %843 = vmatpush1.bf16.msra.mxu0 0
        %844 = vmatprep.subr.bf16.mxu0 0
        %845 = vmatpush1.bf16.msra.mxu0 0
        %846 = vmatprep.subr.bf16.mxu0 0
        %847 = vmatpush1.bf16.msra.mxu0 0
        %848 = vmatprep.subr.bf16.mxu0 0
        %849 = vmatpush1.bf16.msra.mxu0 0
        %850 = vmatprep.subr.bf16.mxu0 0
        %851 = vmatpush1.bf16.msra.mxu0 0
        %852 = vmatprep.subr.bf16.mxu0 0
        %853 = vmatpush1.bf16.msra.mxu0 0
        %854 = vmatprep.subr.bf16.mxu0 0
        %855 = vmatpush1.bf16.msra.mxu0 0
        %856 = vmatprep.subr.bf16.mxu0 0
        %857 = vmatpush1.bf16.msra.mxu0 0
        %858 = vmatprep.subr.bf16.mxu0 0
        %859 = vmatpush1.bf16.msra.mxu0 0
        %860 = vmatprep.subr.bf16.mxu0 0
        %861 = vmatpush1.bf16.msra.mxu0 0
        %862 = vmatprep.subr.bf16.mxu0 0
        %863 = vmatpush1.bf16.msra.mxu0 0
        %864 = vmatprep.subr.bf16.mxu0 0
        %865 = vmatpush1.bf16.msra.mxu0 0
        %866 = vmatprep.subr.bf16.mxu0 0
        %867 = vmatpush1.bf16.msra.mxu0 0
        %868 = vmatprep.mubr.bf16.mxu0 0
        %869 = vmatmul.mubr.bf16.gmra.mrb[0].mxu0 %v786
        %v870 = vpop.f32.mrb[0].mxu0
        %v871 = vadd.f32 0.0, %v870
        %v872 = vpop.f32.mrb[0].mxu0
        %v873 = vpop.f32.mrb[0].mxu0
        %v874 = vadd.f32 0.0, %v873
        %v875 = vpop.f32.mrb[0].mxu0
        %876 = vmatprep.mubr.bf16.mxu0 0
        %877 = vmatmul.mubr.bf16.gmra.mrb[0].mxu0 %v789
        %v878 = vpop.f32.mrb[0].mxu0
        %v879 = vadd.f32 0.0, %v878
        %v880 = vpop.f32.mrb[0].mxu0
        %v881 = vpop.f32.mrb[0].mxu0
        %v882 = vadd.f32 0.0, %v881
        %v883 = vpop.f32.mrb[0].mxu0
        %884 = vmatprep.mubr.bf16.mxu0 0
        %885 = vmatmul.mubr.bf16.gmra.mrb[0].mxu0 %v792
        %v886 = vpop.f32.mrb[0].mxu0
        %v887 = vadd.f32 0.0, %v886
        %v888 = vpop.f32.mrb[0].mxu0
        %v889 = vpop.f32.mrb[0].mxu0
        %v890 = vadd.f32 0.0, %v889
        %v891 = vpop.f32.mrb[0].mxu0
        %892 = vmatprep.mubr.bf16.mxu0 0
        %893 = vmatmul.mubr.bf16.gmra.mrb[0].mxu0 %v795
        %v894 = vpop.f32.mrb[0].mxu0
        %v895 = vadd.f32 0.0, %v894
        %v896 = vpop.f32.mrb[0].mxu0
        %v897 = vpop.f32.mrb[0].mxu0
        %v898 = vadd.f32 0.0, %v897
        %v899 = vpop.f32.mrb[0].mxu0
        %900 = vmatprep.mubr.bf16.mxu0 0
        %901 = vmatmul.mubr.bf16.gmra.mrb[0].mxu0 %v798
        %v902 = vpop.f32.mrb[0].mxu0
        %v903 = vadd.f32 0.0, %v902
        %v904 = vpop.f32.mrb[0].mxu0
        %v905 = vpop.f32.mrb[0].mxu0
        %v906 = vadd.f32 0.0, %v905
        %v907 = vpop.f32.mrb[0].mxu0
        %908 = vmatprep.mubr.bf16.mxu0 0
        %909 = vmatmul.mubr.bf16.gmra.mrb[0].mxu0 %v801
        %v910 = vpop.f32.mrb[0].mxu0
        %v911 = vadd.f32 0.0, %v910
        %v912 = vpop.f32.mrb[0].mxu0
        %v913 = vpop.f32.mrb[0].mxu0
        %v914 = vadd.f32 0.0, %v913
        %v915 = vpop.f32.mrb[0].mxu0
        %916 = vmatprep.mubr.bf16.mxu0 0
        %917 = vmatmul.mubr.bf16.gmra.mrb[0].mxu0 %v804
        %v918 = vpop.f32.mrb[0].mxu0
        %v919 = vadd.f32 0.0, %v918
        %v920 = vpop.f32.mrb[0].mxu0
        %v921 = vpop.f32.mrb[0].mxu0
        %v922 = vadd.f32 0.0, %v921
        %v923 = vpop.f32.mrb[0].mxu0
        %924 = vmatprep.mubr.bf16.mxu0 0
        %925 = vmatmul.mubr.bf16.gmra.mrb[0].mxu0 %v807
        %v926 = vpop.f32.mrb[0].mxu0
        %v927 = vadd.f32 0.0, %v926
        %v928 = vpop.f32.mrb[0].mxu0
        %v929 = vpop.f32.mrb[0].mxu0
        %v930 = vadd.f32 0.0, %v929
        %v931 = vpop.f32.mrb[0].mxu0
        %932 = vmatprep.mubr.bf16.mxu0 0
        %933 = vmatmul.mubr.bf16.gmra.mrb[0].mxu0 %v810
        %v934 = vpop.f32.mrb[0].mxu0
        %v935 = vadd.f32 0.0, %v934
        %v936 = vpop.f32.mrb[0].mxu0
        %v937 = vpop.f32.mrb[0].mxu0
        %v938 = vadd.f32 0.0, %v937
        %v939 = vpop.f32.mrb[0].mxu0
        %940 = vmatprep.mubr.bf16.mxu0 0
        %941 = vmatmul.mubr.bf16.gmra.mrb[0].mxu0 %v813
        %v942 = vpop.f32.mrb[0].mxu0
        %v943 = vadd.f32 0.0, %v942
        %v944 = vpop.f32.mrb[0].mxu0
        %v945 = vpop.f32.mrb[0].mxu0
        %v946 = vadd.f32 0.0, %v945
        %v947 = vpop.f32.mrb[0].mxu0
        %948 = vmatprep.mubr.bf16.mxu0 0
        %949 = vmatmul.mubr.bf16.gmra.mrb[0].mxu0 %v816
        %v950 = vpop.f32.mrb[0].mxu0
        %v951 = vadd.f32 0.0, %v950
        %v952 = vpop.f32.mrb[0].mxu0
        %v953 = vpop.f32.mrb[0].mxu0
        %v954 = vadd.f32 0.0, %v953
        %v955 = vpop.f32.mrb[0].mxu0
        %956 = vmatprep.mubr.bf16.mxu0 0
        %957 = vmatmul.mubr.bf16.gmra.mrb[0].mxu0 %v819
        %v958 = vpop.f32.mrb[0].mxu0
        %v959 = vadd.f32 0.0, %v958
        %v960 = vpop.f32.mrb[0].mxu0
        %v961 = vpop.f32.mrb[0].mxu0
        %v962 = vadd.f32 0.0, %v961
        %v963 = vpop.f32.mrb[0].mxu0
        %964 = vmatprep.mubr.bf16.mxu0 0
        %965 = vmatmul.mubr.bf16.gmra.mrb[0].mxu0 %v822
        %v966 = vpop.f32.mrb[0].mxu0
        %v967 = vadd.f32 0.0, %v966
        %v968 = vpop.f32.mrb[0].mxu0
        %v969 = vpop.f32.mrb[0].mxu0
        %v970 = vadd.f32 0.0, %v969
        %v971 = vpop.f32.mrb[0].mxu0
        %972 = vmatprep.mubr.bf16.mxu0 0
        %973 = vmatmul.mubr.bf16.gmra.mrb[0].mxu0 %v825
        %v974 = vpop.f32.mrb[0].mxu0
        %v975 = vadd.f32 0.0, %v974
        %v976 = vpop.f32.mrb[0].mxu0
        %v977 = vpop.f32.mrb[0].mxu0
        %v978 = vadd.f32 0.0, %v977
        %v979 = vpop.f32.mrb[0].mxu0
        %980 = vmatprep.mubr.bf16.mxu0 0
        %981 = vmatmul.mubr.bf16.gmra.mrb[0].mxu0 %v828
        %v982 = vpop.f32.mrb[0].mxu0
        %v983 = vadd.f32 0.0, %v982
        %v984 = vpop.f32.mrb[0].mxu0
        %v985 = vpop.f32.mrb[0].mxu0
        %v986 = vadd.f32 0.0, %v985
        %v987 = vpop.f32.mrb[0].mxu0
        %988 = vmatprep.mubr.bf16.mxu0 0
        %989 = vmatmul.mubr.bf16.gmra.mrb[0].mxu0 %v831
        %v990 = vpop.f32.mrb[0].mxu0
        %v991 = vadd.f32 0.0, %v990
        %v992 = vpop.f32.mrb[0].mxu0
        %v993 = vpop.f32.mrb[0].mxu0
        %v994 = vadd.f32 0.0, %v993
        %v995 = vpop.f32.mrb[0].mxu0
        %996 = vdwg.mxu0
        %v997 = vadd.f32 %v643, %v871
        %v998 = vadd.f32 %v646, %v874
        %v999 = vadd.f32 %v651, %v879
        %v1000 = vadd.f32 %v654, %v882
        %v1001 = vadd.f32 %v659, %v887
        %v1002 = vadd.f32 %v662, %v890
        %v1003 = vadd.f32 %v667, %v895
        %v1004 = vadd.f32 %v670, %v898
        %v1005 = vadd.f32 %v675, %v903
        %v1006 = vadd.f32 %v678, %v906
        %v1007 = vadd.f32 %v683, %v911
        %v1008 = vadd.f32 %v686, %v914
        %v1009 = vadd.f32 %v691, %v919
        %v1010 = vadd.f32 %v694, %v922
        %v1011 = vadd.f32 %v699, %v927
        %v1012 = vadd.f32 %v702, %v930
        %v1013 = vadd.f32 %v707, %v935
        %v1014 = vadd.f32 %v710, %v938
        %v1015 = vadd.f32 %v715, %v943
        %v1016 = vadd.f32 %v718, %v946
        %v1017 = vadd.f32 %v723, %v951
        %v1018 = vadd.f32 %v726, %v954
        %v1019 = vadd.f32 %v731, %v959
        %v1020 = vadd.f32 %v734, %v962
        %v1021 = vadd.f32 %v739, %v967
        %v1022 = vadd.f32 %v742, %v970
        %v1023 = vadd.f32 %v747, %v975
        %v1024 = vadd.f32 %v750, %v978
        %v1025 = vadd.f32 %v755, %v983
        %v1026 = vadd.f32 %v758, %v986
        %v1027 = vadd.f32 %v763, %v991
        %v1028 = vadd.f32 %v766, %v994
        %v1029 = vpack.c.bf16 %v183, %v182
        %v1030 = vpack.c.bf16 %v191, %v190
        %v1031 = vpack.c.bf16 %v199, %v198
        %v1032 = vpack.c.bf16 %v207, %v206
        %v1033 = vpack.c.bf16 %v215, %v214
        %v1034 = vpack.c.bf16 %v223, %v222
        %v1035 = vpack.c.bf16 %v231, %v230
        %v1036 = vpack.c.bf16 %v239, %v238
        %v1037 = vpack.c.bf16 %v247, %v246
        %v1038 = vpack.c.bf16 %v255, %v254
        %v1039 = vpack.c.bf16 %v263, %v262
        %v1040 = vpack.c.bf16 %v271, %v270
        %v1041 = vpack.c.bf16 %v279, %v278
        %v1042 = vpack.c.bf16 %v287, %v286
        %v1043 = vpack.c.bf16 %v295, %v294
        %v1044 = vpack.c.bf16 %v303, %v302
        %v1046 = vsel %vm340, %v1029, 0
        %v1049 = vsel %vm340, %v1030, 0
        %v1052 = vsel %vm340, %v1031, 0
        %v1055 = vsel %vm340, %v1032, 0
        %v1058 = vsel %vm340, %v1033, 0
        %v1061 = vsel %vm340, %v1034, 0
        %v1064 = vsel %vm340, %v1035, 0
        %v1067 = vsel %vm340, %v1036, 0
        %v1070 = vsel %vm340, %v1037, 0
        %v1073 = vsel %vm340, %v1038, 0
        %v1076 = vsel %vm340, %v1039, 0
        %v1079 = vsel %vm340, %v1040, 0
        %v1082 = vsel %vm340, %v1041, 0
        %v1085 = vsel %vm340, %v1042, 0
        %v1088 = vsel %vm340, %v1043, 0
        %v1091 = vsel %vm340, %v1044, 0
        %v1094 = vand.u32 %v307, %v392
        %1096 = vmatprep.subr.bf16.mxu0 0
        %1097 = vmatpush1.bf16.msra.mxu0 %v1094
        %1098 = vmatprep.subr.bf16.mxu0 0
        %1099 = vmatpush1.bf16.msra.mxu0 0
        %1100 = vmatprep.subr.bf16.mxu0 0
        %1101 = vmatpush1.bf16.msra.mxu0 0
        %1102 = vmatprep.subr.bf16.mxu0 0
        %1103 = vmatpush1.bf16.msra.mxu0 0
        %1104 = vmatprep.subr.bf16.mxu0 0
        %1105 = vmatpush1.bf16.msra.mxu0 0
        %1106 = vmatprep.subr.bf16.mxu0 0
        %1107 = vmatpush1.bf16.msra.mxu0 0
        %1108 = vmatprep.subr.bf16.mxu0 0
        %1109 = vmatpush1.bf16.msra.mxu0 0
        %1110 = vmatprep.subr.bf16.mxu0 0
        %1111 = vmatpush1.bf16.msra.mxu0 0
        %1112 = vmatprep.subr.bf16.mxu0 0
        %1113 = vmatpush1.bf16.msra.mxu0 0
        %1114 = vmatprep.subr.bf16.mxu0 0
        %1115 = vmatpush1.bf16.msra.mxu0 0
        %1116 = vmatprep.subr.bf16.mxu0 0
        %1117 = vmatpush1.bf16.msra.mxu0 0
        %1118 = vmatprep.subr.bf16.mxu0 0
        %1119 = vmatpush1.bf16.msra.mxu0 0
        %1120 = vmatprep.subr.bf16.mxu0 0
        %1121 = vmatpush1.bf16.msra.mxu0 0
        %1122 = vmatprep.subr.bf16.mxu0 0
        %1123 = vmatpush1.bf16.msra.mxu0 0
        %1124 = vmatprep.subr.bf16.mxu0 0
        %1125 = vmatpush1.bf16.msra.mxu0 0
        %1126 = vmatprep.subr.bf16.mxu0 0
        %1127 = vmatpush1.bf16.msra.mxu0 0
        %1128 = vmatprep.mubr.bf16.mxu0 0
        %1129 = vmatmul.mubr.bf16.gmra.mrb[0].mxu0 %v1046
        %v1130 = vpop.f32.mrb[0].mxu0
        %v1131 = vadd.f32 0.0, %v1130
        %v1132 = vpop.f32.mrb[0].mxu0
        %v1133 = vpop.f32.mrb[0].mxu0
        %v1134 = vadd.f32 0.0, %v1133
        %v1135 = vpop.f32.mrb[0].mxu0
        %1136 = vmatprep.mubr.bf16.mxu0 0
        %1137 = vmatmul.mubr.bf16.gmra.mrb[0].mxu0 %v1049
        %v1138 = vpop.f32.mrb[0].mxu0
        %v1139 = vadd.f32 0.0, %v1138
        %v1140 = vpop.f32.mrb[0].mxu0
        %v1141 = vpop.f32.mrb[0].mxu0
        %v1142 = vadd.f32 0.0, %v1141
        %v1143 = vpop.f32.mrb[0].mxu0
        %1144 = vmatprep.mubr.bf16.mxu0 0
        %1145 = vmatmul.mubr.bf16.gmra.mrb[0].mxu0 %v1052
        %v1146 = vpop.f32.mrb[0].mxu0
        %v1147 = vadd.f32 0.0, %v1146
        %v1148 = vpop.f32.mrb[0].mxu0
        %v1149 = vpop.f32.mrb[0].mxu0
        %v1150 = vadd.f32 0.0, %v1149
        %v1151 = vpop.f32.mrb[0].mxu0
        %1152 = vmatprep.mubr.bf16.mxu0 0
        %1153 = vmatmul.mubr.bf16.gmra.mrb[0].mxu0 %v1055
        %v1154 = vpop.f32.mrb[0].mxu0
        %v1155 = vadd.f32 0.0, %v1154
        %v1156 = vpop.f32.mrb[0].mxu0
        %v1157 = vpop.f32.mrb[0].mxu0
        %v1158 = vadd.f32 0.0, %v1157
        %v1159 = vpop.f32.mrb[0].mxu0
        %1160 = vmatprep.mubr.bf16.mxu0 0
        %1161 = vmatmul.mubr.bf16.gmra.mrb[0].mxu0 %v1058
        %v1162 = vpop.f32.mrb[0].mxu0
        %v1163 = vadd.f32 0.0, %v1162
        %v1164 = vpop.f32.mrb[0].mxu0
        %v1165 = vpop.f32.mrb[0].mxu0
        %v1166 = vadd.f32 0.0, %v1165
        %v1167 = vpop.f32.mrb[0].mxu0
        %1168 = vmatprep.mubr.bf16.mxu0 0
        %1169 = vmatmul.mubr.bf16.gmra.mrb[0].mxu0 %v1061
        %v1170 = vpop.f32.mrb[0].mxu0
        %v1171 = vadd.f32 0.0, %v1170
        %v1172 = vpop.f32.mrb[0].mxu0
        %v1173 = vpop.f32.mrb[0].mxu0
        %v1174 = vadd.f32 0.0, %v1173
        %v1175 = vpop.f32.mrb[0].mxu0
        %1176 = vmatprep.mubr.bf16.mxu0 0
        %1177 = vmatmul.mubr.bf16.gmra.mrb[0].mxu0 %v1064
        %v1178 = vpop.f32.mrb[0].mxu0
        %v1179 = vadd.f32 0.0, %v1178
        %v1180 = vpop.f32.mrb[0].mxu0
        %v1181 = vpop.f32.mrb[0].mxu0
        %v1182 = vadd.f32 0.0, %v1181
        %v1183 = vpop.f32.mrb[0].mxu0
        %1184 = vmatprep.mubr.bf16.mxu0 0
        %1185 = vmatmul.mubr.bf16.gmra.mrb[0].mxu0 %v1067
        %v1186 = vpop.f32.mrb[0].mxu0
        %v1187 = vadd.f32 0.0, %v1186
        %v1188 = vpop.f32.mrb[0].mxu0
        %v1189 = vpop.f32.mrb[0].mxu0
        %v1190 = vadd.f32 0.0, %v1189
        %v1191 = vpop.f32.mrb[0].mxu0
        %1192 = vmatprep.mubr.bf16.mxu0 0
        %1193 = vmatmul.mubr.bf16.gmra.mrb[0].mxu0 %v1070
        %v1194 = vpop.f32.mrb[0].mxu0
        %v1195 = vadd.f32 0.0, %v1194
        %v1196 = vpop.f32.mrb[0].mxu0
        %v1197 = vpop.f32.mrb[0].mxu0
        %v1198 = vadd.f32 0.0, %v1197
        %v1199 = vpop.f32.mrb[0].mxu0
        %1200 = vmatprep.mubr.bf16.mxu0 0
        %1201 = vmatmul.mubr.bf16.gmra.mrb[0].mxu0 %v1073
        %v1202 = vpop.f32.mrb[0].mxu0
        %v1203 = vadd.f32 0.0, %v1202
        %v1204 = vpop.f32.mrb[0].mxu0
        %v1205 = vpop.f32.mrb[0].mxu0
        %v1206 = vadd.f32 0.0, %v1205
        %v1207 = vpop.f32.mrb[0].mxu0
        %1208 = vmatprep.mubr.bf16.mxu0 0
        %1209 = vmatmul.mubr.bf16.gmra.mrb[0].mxu0 %v1076
        %v1210 = vpop.f32.mrb[0].mxu0
        %v1211 = vadd.f32 0.0, %v1210
        %v1212 = vpop.f32.mrb[0].mxu0
        %v1213 = vpop.f32.mrb[0].mxu0
        %v1214 = vadd.f32 0.0, %v1213
        %v1215 = vpop.f32.mrb[0].mxu0
        %1216 = vmatprep.mubr.bf16.mxu0 0
        %1217 = vmatmul.mubr.bf16.gmra.mrb[0].mxu0 %v1079
        %v1218 = vpop.f32.mrb[0].mxu0
        %v1219 = vadd.f32 0.0, %v1218
        %v1220 = vpop.f32.mrb[0].mxu0
        %v1221 = vpop.f32.mrb[0].mxu0
        %v1222 = vadd.f32 0.0, %v1221
        %v1223 = vpop.f32.mrb[0].mxu0
        %1224 = vmatprep.mubr.bf16.mxu0 0
        %1225 = vmatmul.mubr.bf16.gmra.mrb[0].mxu0 %v1082
        %v1226 = vpop.f32.mrb[0].mxu0
        %v1227 = vadd.f32 0.0, %v1226
        %v1228 = vpop.f32.mrb[0].mxu0
        %v1229 = vpop.f32.mrb[0].mxu0
        %v1230 = vadd.f32 0.0, %v1229
        %v1231 = vpop.f32.mrb[0].mxu0
        %1232 = vmatprep.mubr.bf16.mxu0 0
        %1233 = vmatmul.mubr.bf16.gmra.mrb[0].mxu0 %v1085
        %v1234 = vpop.f32.mrb[0].mxu0
        %v1235 = vadd.f32 0.0, %v1234
        %v1236 = vpop.f32.mrb[0].mxu0
        %v1237 = vpop.f32.mrb[0].mxu0
        %v1238 = vadd.f32 0.0, %v1237
        %v1239 = vpop.f32.mrb[0].mxu0
        %1240 = vmatprep.mubr.bf16.mxu0 0
        %1241 = vmatmul.mubr.bf16.gmra.mrb[0].mxu0 %v1088
        %v1242 = vpop.f32.mrb[0].mxu0
        %v1243 = vadd.f32 0.0, %v1242
        %v1244 = vpop.f32.mrb[0].mxu0
        %v1245 = vpop.f32.mrb[0].mxu0
        %v1246 = vadd.f32 0.0, %v1245
        %v1247 = vpop.f32.mrb[0].mxu0
        %1248 = vmatprep.mubr.bf16.mxu0 0
        %1249 = vmatmul.mubr.bf16.gmra.mrb[0].mxu0 %v1091
        %v1250 = vpop.f32.mrb[0].mxu0
        %v1251 = vadd.f32 0.0, %v1250
        %v1252 = vpop.f32.mrb[0].mxu0
        %v1253 = vpop.f32.mrb[0].mxu0
        %v1254 = vadd.f32 0.0, %v1253
        %v1255 = vpop.f32.mrb[0].mxu0
        %1256 = vdwg.mxu0
        %v1257 = vadd.f32 %v997, %v1131
        %v1258 = vadd.f32 %v998, %v1134
        %v1259 = vadd.f32 %v999, %v1139
        %v1260 = vadd.f32 %v1000, %v1142
        %v1261 = vadd.f32 %v1001, %v1147
        %v1262 = vadd.f32 %v1002, %v1150
        %v1263 = vadd.f32 %v1003, %v1155
        %v1264 = vadd.f32 %v1004, %v1158
        %v1265 = vadd.f32 %v1005, %v1163
        %v1266 = vadd.f32 %v1006, %v1166
        %v1267 = vadd.f32 %v1007, %v1171
        %v1268 = vadd.f32 %v1008, %v1174
        %v1269 = vadd.f32 %v1009, %v1179
        %v1270 = vadd.f32 %v1010, %v1182
        %v1271 = vadd.f32 %v1011, %v1187
        %v1272 = vadd.f32 %v1012, %v1190
        %v1273 = vadd.f32 %v1013, %v1195
        %v1274 = vadd.f32 %v1014, %v1198
        %v1275 = vadd.f32 %v1015, %v1203
        %v1276 = vadd.f32 %v1016, %v1206
        %v1277 = vadd.f32 %v1017, %v1211
        %v1278 = vadd.f32 %v1018, %v1214
        %v1279 = vadd.f32 %v1019, %v1219
        %v1280 = vadd.f32 %v1020, %v1222
        %v1281 = vadd.f32 %v1021, %v1227
        %v1282 = vadd.f32 %v1022, %v1230
        %v1283 = vadd.f32 %v1023, %v1235
        %v1284 = vadd.f32 %v1024, %v1238
        %v1285 = vadd.f32 %v1025, %v1243
        %v1286 = vadd.f32 %v1026, %v1246
        %v1287 = vadd.f32 %v1027, %v1251
        %v1288 = vadd.f32 %v1028, %v1254
        %v1289 = vld [vmem:[%s2] sm:$0x1]
        %v1291 = vlaneseq
        %v1292 = vshrl.u32 %v1291, 7
        %v1293 = vsub.s32 0, %v1292
        %v1294 = vrot.slane %v1289, %v1293
        %v1296 = vadd.f32 %v1257, %v1294
        %v1297 = vadd.f32 %v1258, %v1294
        %v1298 = vadd.f32 %v1259, %v1294
        %v1299 = vadd.f32 %v1260, %v1294
        %v1300 = vadd.f32 %v1261, %v1294
        %v1301 = vadd.f32 %v1262, %v1294
        %v1302 = vadd.f32 %v1263, %v1294
        %v1303 = vadd.f32 %v1264, %v1294
        %v1304 = vadd.f32 %v1265, %v1294
        %v1305 = vadd.f32 %v1266, %v1294
        %v1306 = vadd.f32 %v1267, %v1294
        %v1307 = vadd.f32 %v1268, %v1294
        %v1308 = vadd.f32 %v1269, %v1294
        %v1309 = vadd.f32 %v1270, %v1294
        %v1310 = vadd.f32 %v1271, %v1294
        %v1311 = vadd.f32 %v1272, %v1294
        %v1312 = vadd.f32 %v1273, %v1294
        %v1313 = vadd.f32 %v1274, %v1294
        %v1314 = vadd.f32 %v1275, %v1294
        %v1315 = vadd.f32 %v1276, %v1294
        %v1316 = vadd.f32 %v1277, %v1294
        %v1317 = vadd.f32 %v1278, %v1294
        %v1318 = vadd.f32 %v1279, %v1294
        %v1319 = vadd.f32 %v1280, %v1294
        %v1320 = vadd.f32 %v1281, %v1294
        %v1321 = vadd.f32 %v1282, %v1294
        %v1322 = vadd.f32 %v1283, %v1294
        %v1323 = vadd.f32 %v1284, %v1294
        %v1324 = vadd.f32 %v1285, %v1294
        %v1325 = vadd.f32 %v1286, %v1294
        %v1326 = vadd.f32 %v1287, %v1294
        %v1327 = vadd.f32 %v1288, %v1294
        %1360 = vrot.lane.b32.xlu0 %v1296, 120
        %v1361 = vpop.permute.xlu0 %1360
        %1362 = vrot.lane.b32.xlu0 %v1297, 120
        %v1363 = vpop.permute.xlu0 %1362
        %1364 = vrot.lane.b32.xlu0 %v1298, 120
        %v1365 = vpop.permute.xlu0 %1364
        %1366 = vrot.lane.b32.xlu0 %v1299, 120
        %v1367 = vpop.permute.xlu0 %1366
        %1368 = vrot.lane.b32.xlu0 %v1300, 120
        %v1369 = vpop.permute.xlu0 %1368
        %1370 = vrot.lane.b32.xlu0 %v1301, 120
        %v1371 = vpop.permute.xlu0 %1370
        %1372 = vrot.lane.b32.xlu0 %v1302, 120
        %v1373 = vpop.permute.xlu0 %1372
        %1374 = vrot.lane.b32.xlu0 %v1303, 120
        %v1375 = vpop.permute.xlu0 %1374
        %1376 = vrot.lane.b32.xlu0 %v1304, 120
        %v1377 = vpop.permute.xlu0 %1376
        %1378 = vrot.lane.b32.xlu0 %v1305, 120
        %v1379 = vpop.permute.xlu0 %1378
        %1380 = vrot.lane.b32.xlu0 %v1306, 120
        %v1381 = vpop.permute.xlu0 %1380
        %1382 = vrot.lane.b32.xlu0 %v1307, 120
        %v1383 = vpop.permute.xlu0 %1382
        %1384 = vrot.lane.b32.xlu0 %v1308, 120
        %v1385 = vpop.permute.xlu0 %1384
        %1386 = vrot.lane.b32.xlu0 %v1309, 120
        %v1387 = vpop.permute.xlu0 %1386
        %1388 = vrot.lane.b32.xlu0 %v1310, 120
        %v1389 = vpop.permute.xlu0 %1388
        %1390 = vrot.lane.b32.xlu0 %v1311, 120
        %v1391 = vpop.permute.xlu0 %1390
        %1392 = vrot.lane.b32.xlu0 %v1312, 120
        %v1393 = vpop.permute.xlu0 %1392
        %1394 = vrot.lane.b32.xlu0 %v1313, 120
        %v1395 = vpop.permute.xlu0 %1394
        %1396 = vrot.lane.b32.xlu0 %v1314, 120
        %v1397 = vpop.permute.xlu0 %1396
        %1398 = vrot.lane.b32.xlu0 %v1315, 120
        %v1399 = vpop.permute.xlu0 %1398
        %1400 = vrot.lane.b32.xlu0 %v1316, 120
        %v1401 = vpop.permute.xlu0 %1400
        %1402 = vrot.lane.b32.xlu0 %v1317, 120
        %v1403 = vpop.permute.xlu0 %1402
        %1404 = vrot.lane.b32.xlu0 %v1318, 120
        %v1405 = vpop.permute.xlu0 %1404
        %1406 = vrot.lane.b32.xlu0 %v1319, 120
        %v1407 = vpop.permute.xlu0 %1406
        %1408 = vrot.lane.b32.xlu0 %v1320, 120
        %v1409 = vpop.permute.xlu0 %1408
        %1410 = vrot.lane.b32.xlu0 %v1321, 120
        %v1411 = vpop.permute.xlu0 %1410
        %1412 = vrot.lane.b32.xlu0 %v1322, 120
        %v1413 = vpop.permute.xlu0 %1412
        %1414 = vrot.lane.b32.xlu0 %v1323, 120
        %v1415 = vpop.permute.xlu0 %1414
        %1416 = vrot.lane.b32.xlu0 %v1324, 120
        %v1417 = vpop.permute.xlu0 %1416
        %1418 = vrot.lane.b32.xlu0 %v1325, 120
        %v1419 = vpop.permute.xlu0 %1418
        %1420 = vrot.lane.b32.xlu0 %v1326, 120
        %v1421 = vpop.permute.xlu0 %1420
        %1422 = vrot.lane.b32.xlu0 %v1327, 120
        %v1423 = vpop.permute.xlu0 %1422
        %1456 = vrot.lane.b32.xlu0 %v1296, 112
        %v1457 = vpop.permute.xlu0 %1456
        %1458 = vrot.lane.b32.xlu0 %v1297, 112
        %v1459 = vpop.permute.xlu0 %1458
        %1460 = vrot.lane.b32.xlu0 %v1298, 112
        %v1461 = vpop.permute.xlu0 %1460
        %1462 = vrot.lane.b32.xlu0 %v1299, 112
        %v1463 = vpop.permute.xlu0 %1462
        %1464 = vrot.lane.b32.xlu0 %v1300, 112
        %v1465 = vpop.permute.xlu0 %1464
        %1466 = vrot.lane.b32.xlu0 %v1301, 112
        %v1467 = vpop.permute.xlu0 %1466
        %1468 = vrot.lane.b32.xlu0 %v1302, 112
        %v1469 = vpop.permute.xlu0 %1468
        %1470 = vrot.lane.b32.xlu0 %v1303, 112
        %v1471 = vpop.permute.xlu0 %1470
        %1472 = vrot.lane.b32.xlu0 %v1304, 112
        %v1473 = vpop.permute.xlu0 %1472
        %1474 = vrot.lane.b32.xlu0 %v1305, 112
        %v1475 = vpop.permute.xlu0 %1474
        %1476 = vrot.lane.b32.xlu0 %v1306, 112
        %v1477 = vpop.permute.xlu0 %1476
        %1478 = vrot.lane.b32.xlu0 %v1307, 112
        %v1479 = vpop.permute.xlu0 %1478
        %1480 = vrot.lane.b32.xlu0 %v1308, 112
        %v1481 = vpop.permute.xlu0 %1480
        %1482 = vrot.lane.b32.xlu0 %v1309, 112
        %v1483 = vpop.permute.xlu0 %1482
        %1484 = vrot.lane.b32.xlu0 %v1310, 112
        %v1485 = vpop.permute.xlu0 %1484
        %1486 = vrot.lane.b32.xlu0 %v1311, 112
        %v1487 = vpop.permute.xlu0 %1486
        %1488 = vrot.lane.b32.xlu0 %v1312, 112
        %v1489 = vpop.permute.xlu0 %1488
        %1490 = vrot.lane.b32.xlu0 %v1313, 112
        %v1491 = vpop.permute.xlu0 %1490
        %1492 = vrot.lane.b32.xlu0 %v1314, 112
        %v1493 = vpop.permute.xlu0 %1492
        %1494 = vrot.lane.b32.xlu0 %v1315, 112
        %v1495 = vpop.permute.xlu0 %1494
        %1496 = vrot.lane.b32.xlu0 %v1316, 112
        %v1497 = vpop.permute.xlu0 %1496
        %1498 = vrot.lane.b32.xlu0 %v1317, 112
        %v1499 = vpop.permute.xlu0 %1498
        %1500 = vrot.lane.b32.xlu0 %v1318, 112
        %v1501 = vpop.permute.xlu0 %1500
        %1502 = vrot.lane.b32.xlu0 %v1319, 112
        %v1503 = vpop.permute.xlu0 %1502
        %1504 = vrot.lane.b32.xlu0 %v1320, 112
        %v1505 = vpop.permute.xlu0 %1504
        %1506 = vrot.lane.b32.xlu0 %v1321, 112
        %v1507 = vpop.permute.xlu0 %1506
        %1508 = vrot.lane.b32.xlu0 %v1322, 112
        %v1509 = vpop.permute.xlu0 %1508
        %1510 = vrot.lane.b32.xlu0 %v1323, 112
        %v1511 = vpop.permute.xlu0 %1510
        %1512 = vrot.lane.b32.xlu0 %v1324, 112
        %v1513 = vpop.permute.xlu0 %1512
        %1514 = vrot.lane.b32.xlu0 %v1325, 112
        %v1515 = vpop.permute.xlu0 %1514
        %1516 = vrot.lane.b32.xlu0 %v1326, 112
        %v1517 = vpop.permute.xlu0 %1516
        %1518 = vrot.lane.b32.xlu0 %v1327, 112
        %v1519 = vpop.permute.xlu0 %1518
        %1552 = vrot.lane.b32.xlu0 %v1296, 104
        %v1553 = vpop.permute.xlu0 %1552
        %1554 = vrot.lane.b32.xlu0 %v1297, 104
        %v1555 = vpop.permute.xlu0 %1554
        %1556 = vrot.lane.b32.xlu0 %v1298, 104
        %v1557 = vpop.permute.xlu0 %1556
        %1558 = vrot.lane.b32.xlu0 %v1299, 104
        %v1559 = vpop.permute.xlu0 %1558
        %1560 = vrot.lane.b32.xlu0 %v1300, 104
        %v1561 = vpop.permute.xlu0 %1560
        %1562 = vrot.lane.b32.xlu0 %v1301, 104
        %v1563 = vpop.permute.xlu0 %1562
        %1564 = vrot.lane.b32.xlu0 %v1302, 104
        %v1565 = vpop.permute.xlu0 %1564
        %1566 = vrot.lane.b32.xlu0 %v1303, 104
        %v1567 = vpop.permute.xlu0 %1566
        %1568 = vrot.lane.b32.xlu0 %v1304, 104
        %v1569 = vpop.permute.xlu0 %1568
        %1570 = vrot.lane.b32.xlu0 %v1305, 104
        %v1571 = vpop.permute.xlu0 %1570
        %1572 = vrot.lane.b32.xlu0 %v1306, 104
        %v1573 = vpop.permute.xlu0 %1572
        %1574 = vrot.lane.b32.xlu0 %v1307, 104
        %v1575 = vpop.permute.xlu0 %1574
        %1576 = vrot.lane.b32.xlu0 %v1308, 104
        %v1577 = vpop.permute.xlu0 %1576
        %1578 = vrot.lane.b32.xlu0 %v1309, 104
        %v1579 = vpop.permute.xlu0 %1578
        %1580 = vrot.lane.b32.xlu0 %v1310, 104
        %v1581 = vpop.permute.xlu0 %1580
        %1582 = vrot.lane.b32.xlu0 %v1311, 104
        %v1583 = vpop.permute.xlu0 %1582
        %1584 = vrot.lane.b32.xlu0 %v1312, 104
        %v1585 = vpop.permute.xlu0 %1584
        %1586 = vrot.lane.b32.xlu0 %v1313, 104
        %v1587 = vpop.permute.xlu0 %1586
        %1588 = vrot.lane.b32.xlu0 %v1314, 104
        %v1589 = vpop.permute.xlu0 %1588
        %1590 = vrot.lane.b32.xlu0 %v1315, 104
        %v1591 = vpop.permute.xlu0 %1590
        %1592 = vrot.lane.b32.xlu0 %v1316, 104
        %v1593 = vpop.permute.xlu0 %1592
        %1594 = vrot.lane.b32.xlu0 %v1317, 104
        %v1595 = vpop.permute.xlu0 %1594
        %1596 = vrot.lane.b32.xlu0 %v1318, 104
        %v1597 = vpop.permute.xlu0 %1596
        %1598 = vrot.lane.b32.xlu0 %v1319, 104
        %v1599 = vpop.permute.xlu0 %1598
        %1600 = vrot.lane.b32.xlu0 %v1320, 104
        %v1601 = vpop.permute.xlu0 %1600
        %1602 = vrot.lane.b32.xlu0 %v1321, 104
        %v1603 = vpop.permute.xlu0 %1602
        %1604 = vrot.lane.b32.xlu0 %v1322, 104
        %v1605 = vpop.permute.xlu0 %1604
        %1606 = vrot.lane.b32.xlu0 %v1323, 104
        %v1607 = vpop.permute.xlu0 %1606
        %1608 = vrot.lane.b32.xlu0 %v1324, 104
        %v1609 = vpop.permute.xlu0 %1608
        %1610 = vrot.lane.b32.xlu0 %v1325, 104
        %v1611 = vpop.permute.xlu0 %1610
        %1612 = vrot.lane.b32.xlu0 %v1326, 104
        %v1613 = vpop.permute.xlu0 %1612
        %1614 = vrot.lane.b32.xlu0 %v1327, 104
        %v1615 = vpop.permute.xlu0 %1614
        %v1648 = vpack.c.bf16 %v1297, %v1296
        %v1649 = vpack.c.bf16 %v1299, %v1298
        %v1650 = vpack.c.bf16 %v1301, %v1300
        %v1651 = vpack.c.bf16 %v1303, %v1302
        %v1652 = vpack.c.bf16 %v1305, %v1304
        %v1653 = vpack.c.bf16 %v1307, %v1306
        %v1654 = vpack.c.bf16 %v1309, %v1308
        %v1655 = vpack.c.bf16 %v1311, %v1310
        %v1656 = vpack.c.bf16 %v1313, %v1312
        %v1657 = vpack.c.bf16 %v1315, %v1314
        %v1658 = vpack.c.bf16 %v1317, %v1316
        %v1659 = vpack.c.bf16 %v1319, %v1318
        %v1660 = vpack.c.bf16 %v1321, %v1320
        %v1661 = vpack.c.bf16 %v1323, %v1322
        %v1662 = vpack.c.bf16 %v1325, %v1324
        %v1663 = vpack.c.bf16 %v1327, %v1326
        %v1664 = vpack.c.bf16 %v1363, %v1361
        %v1665 = vpack.c.bf16 %v1367, %v1365
        %v1666 = vpack.c.bf16 %v1371, %v1369
        %v1667 = vpack.c.bf16 %v1375, %v1373
        %v1668 = vpack.c.bf16 %v1379, %v1377
        %v1669 = vpack.c.bf16 %v1383, %v1381
        %v1670 = vpack.c.bf16 %v1387, %v1385
        %v1671 = vpack.c.bf16 %v1391, %v1389
        %v1672 = vpack.c.bf16 %v1395, %v1393
        %v1673 = vpack.c.bf16 %v1399, %v1397
        %v1674 = vpack.c.bf16 %v1403, %v1401
        %v1675 = vpack.c.bf16 %v1407, %v1405
        %v1676 = vpack.c.bf16 %v1411, %v1409
        %v1677 = vpack.c.bf16 %v1415, %v1413
        %v1678 = vpack.c.bf16 %v1419, %v1417
        %v1679 = vpack.c.bf16 %v1423, %v1421
        %v1680 = vpack.c.bf16 %v1459, %v1457
        %v1681 = vpack.c.bf16 %v1463, %v1461
        %v1682 = vpack.c.bf16 %v1467, %v1465
        %v1683 = vpack.c.bf16 %v1471, %v1469
        %v1684 = vpack.c.bf16 %v1475, %v1473
        %v1685 = vpack.c.bf16 %v1479, %v1477
        %v1686 = vpack.c.bf16 %v1483, %v1481
        %v1687 = vpack.c.bf16 %v1487, %v1485
        %v1688 = vpack.c.bf16 %v1491, %v1489
        %v1689 = vpack.c.bf16 %v1495, %v1493
        %v1690 = vpack.c.bf16 %v1499, %v1497
        %v1691 = vpack.c.bf16 %v1503, %v1501
        %v1692 = vpack.c.bf16 %v1507, %v1505
        %v1693 = vpack.c.bf16 %v1511, %v1509
        %v1694 = vpack.c.bf16 %v1515, %v1513
        %v1695 = vpack.c.bf16 %v1519, %v1517
        %v1696 = vpack.c.bf16 %v1555, %v1553
        %v1697 = vpack.c.bf16 %v1559, %v1557
        %v1698 = vpack.c.bf16 %v1563, %v1561
        %v1699 = vpack.c.bf16 %v1567, %v1565
        %v1700 = vpack.c.bf16 %v1571, %v1569
        %v1701 = vpack.c.bf16 %v1575, %v1573
        %v1702 = vpack.c.bf16 %v1579, %v1577
        %v1703 = vpack.c.bf16 %v1583, %v1581
        %v1704 = vpack.c.bf16 %v1587, %v1585
        %v1705 = vpack.c.bf16 %v1591, %v1589
        %v1706 = vpack.c.bf16 %v1595, %v1593
        %v1707 = vpack.c.bf16 %v1599, %v1597
        %v1708 = vpack.c.bf16 %v1603, %v1601
        %v1709 = vpack.c.bf16 %v1607, %v1605
        %v1710 = vpack.c.bf16 %v1611, %v1609
        %v1711 = vpack.c.bf16 %v1615, %v1613
        %1713 = vrot.lane.b32.xlu0 %v1648, 96
        %v1714 = vpop.permute.xlu0 %1713
        %vm1715 = vcmask 64512
        %v1717 = vsel %vm1715, %v1648, 0
        %v1720 = vsel %vm1715, %v1714, 0
        %1722 = vmatprep.subr.bf16.mxu0 0
        %1723 = vmatpush1.bf16.xpose.msra.mxu0 %v1720
        %1724 = vmatprep.subr.bf16.mxu0 0
        %1725 = vmatpush1.bf16.xpose.msra.mxu0 0
        %1726 = vmatprep.subr.bf16.mxu0 0
        %1727 = vmatpush1.bf16.xpose.msra.mxu0 0
        %1728 = vmatprep.subr.bf16.mxu0 0
        %1729 = vmatpush1.bf16.xpose.msra.mxu0 0
        %1730 = vmatprep.subr.bf16.mxu0 0
        %1731 = vmatpush1.bf16.xpose.msra.mxu0 0
        %1732 = vmatprep.subr.bf16.mxu0 0
        %1733 = vmatpush1.bf16.xpose.msra.mxu0 0
        %1734 = vmatprep.subr.bf16.mxu0 0
        %1735 = vmatpush1.bf16.xpose.msra.mxu0 0
        %1736 = vmatprep.subr.bf16.mxu0 0
        %1737 = vmatpush1.bf16.xpose.msra.mxu0 0
        %1738 = vmatprep.subr.bf16.mxu0 0
        %1739 = vmatpush1.bf16.xpose.msra.mxu0 0
        %1740 = vmatprep.subr.bf16.mxu0 0
        %1741 = vmatpush1.bf16.xpose.msra.mxu0 0
        %1742 = vmatprep.subr.bf16.mxu0 0
        %1743 = vmatpush1.bf16.xpose.msra.mxu0 0
        %1744 = vmatprep.subr.bf16.mxu0 0
        %1745 = vmatpush1.bf16.xpose.msra.mxu0 0
        %1746 = vmatprep.subr.bf16.mxu0 0
        %1747 = vmatpush1.bf16.xpose.msra.mxu0 0
        %1748 = vmatprep.subr.bf16.mxu0 0
        %1749 = vmatpush1.bf16.xpose.msra.mxu0 0
        %1750 = vmatprep.subr.bf16.mxu0 0
        %1751 = vmatpush1.bf16.xpose.msra.mxu0 0
        %1752 = vmatprep.subr.bf16.mxu0 0
        %1753 = vmatpush1.bf16.xpose.msra.mxu0 0
        %1754 = vmatprep.mubr.bf16.mxu0 0
        %1755 = vmatmul.mubr.bf16.gmra.mrb[0].mxu0 %v1717
        %v1756 = vpop.f32.mrb[0].mxu0
        %v1757 = vadd.f32 0.0, %v1756
        %v1758 = vpop.f32.mrb[0].mxu0
        %v1759 = vpop.f32.mrb[0].mxu0
        %v1760 = vadd.f32 0.0, %v1759
        %v1761 = vpop.f32.mrb[0].mxu0
        %1762 = vdwg.mxu0
        %1764 = vrot.lane.b32.xlu0 %v1649, 96
        %v1765 = vpop.permute.xlu0 %1764
        %v1767 = vsel %vm1715, %v1649, 0
        %v1770 = vsel %vm1715, %v1765, 0
        %1772 = vmatprep.subr.bf16.mxu0 0
        %1773 = vmatpush1.bf16.xpose.msra.mxu0 %v1770
        %1774 = vmatprep.subr.bf16.mxu0 0
        %1775 = vmatpush1.bf16.xpose.msra.mxu0 0
        %1776 = vmatprep.subr.bf16.mxu0 0
        %1777 = vmatpush1.bf16.xpose.msra.mxu0 0
        %1778 = vmatprep.subr.bf16.mxu0 0
        %1779 = vmatpush1.bf16.xpose.msra.mxu0 0
        %1780 = vmatprep.subr.bf16.mxu0 0
        %1781 = vmatpush1.bf16.xpose.msra.mxu0 0
        %1782 = vmatprep.subr.bf16.mxu0 0
        %1783 = vmatpush1.bf16.xpose.msra.mxu0 0
        %1784 = vmatprep.subr.bf16.mxu0 0
        %1785 = vmatpush1.bf16.xpose.msra.mxu0 0
        %1786 = vmatprep.subr.bf16.mxu0 0
        %1787 = vmatpush1.bf16.xpose.msra.mxu0 0
        %1788 = vmatprep.subr.bf16.mxu0 0
        %1789 = vmatpush1.bf16.xpose.msra.mxu0 0
        %1790 = vmatprep.subr.bf16.mxu0 0
        %1791 = vmatpush1.bf16.xpose.msra.mxu0 0
        %1792 = vmatprep.subr.bf16.mxu0 0
        %1793 = vmatpush1.bf16.xpose.msra.mxu0 0
        %1794 = vmatprep.subr.bf16.mxu0 0
        %1795 = vmatpush1.bf16.xpose.msra.mxu0 0
        %1796 = vmatprep.subr.bf16.mxu0 0
        %1797 = vmatpush1.bf16.xpose.msra.mxu0 0
        %1798 = vmatprep.subr.bf16.mxu0 0
        %1799 = vmatpush1.bf16.xpose.msra.mxu0 0
        %1800 = vmatprep.subr.bf16.mxu0 0
        %1801 = vmatpush1.bf16.xpose.msra.mxu0 0
        %1802 = vmatprep.subr.bf16.mxu0 0
        %1803 = vmatpush1.bf16.xpose.msra.mxu0 0
        %1804 = vmatprep.mubr.bf16.mxu0 0
        %1805 = vmatmul.mubr.bf16.gmra.mrb[0].mxu0 %v1767
        %v1806 = vpop.f32.mrb[0].mxu0
        %v1807 = vadd.f32 0.0, %v1806
        %v1808 = vpop.f32.mrb[0].mxu0
        %v1809 = vpop.f32.mrb[0].mxu0
        %v1810 = vadd.f32 0.0, %v1809
        %v1811 = vpop.f32.mrb[0].mxu0
        %1812 = vdwg.mxu0
        %1814 = vrot.lane.b32.xlu0 %v1650, 96
        %v1815 = vpop.permute.xlu0 %1814
        %v1817 = vsel %vm1715, %v1650, 0
        %v1820 = vsel %vm1715, %v1815, 0
        %1822 = vmatprep.subr.bf16.mxu0 0
        %1823 = vmatpush1.bf16.xpose.msra.mxu0 %v1820
        %1824 = vmatprep.subr.bf16.mxu0 0
        %1825 = vmatpush1.bf16.xpose.msra.mxu0 0
        %1826 = vmatprep.subr.bf16.mxu0 0
        %1827 = vmatpush1.bf16.xpose.msra.mxu0 0
        %1828 = vmatprep.subr.bf16.mxu0 0
        %1829 = vmatpush1.bf16.xpose.msra.mxu0 0
        %1830 = vmatprep.subr.bf16.mxu0 0
        %1831 = vmatpush1.bf16.xpose.msra.mxu0 0
        %1832 = vmatprep.subr.bf16.mxu0 0
        %1833 = vmatpush1.bf16.xpose.msra.mxu0 0
        %1834 = vmatprep.subr.bf16.mxu0 0
        %1835 = vmatpush1.bf16.xpose.msra.mxu0 0
        %1836 = vmatprep.subr.bf16.mxu0 0
        %1837 = vmatpush1.bf16.xpose.msra.mxu0 0
        %1838 = vmatprep.subr.bf16.mxu0 0
        %1839 = vmatpush1.bf16.xpose.msra.mxu0 0
        %1840 = vmatprep.subr.bf16.mxu0 0
        %1841 = vmatpush1.bf16.xpose.msra.mxu0 0
        %1842 = vmatprep.subr.bf16.mxu0 0
        %1843 = vmatpush1.bf16.xpose.msra.mxu0 0
        %1844 = vmatprep.subr.bf16.mxu0 0
        %1845 = vmatpush1.bf16.xpose.msra.mxu0 0
        %1846 = vmatprep.subr.bf16.mxu0 0
        %1847 = vmatpush1.bf16.xpose.msra.mxu0 0
        %1848 = vmatprep.subr.bf16.mxu0 0
        %1849 = vmatpush1.bf16.xpose.msra.mxu0 0
        %1850 = vmatprep.subr.bf16.mxu0 0
        %1851 = vmatpush1.bf16.xpose.msra.mxu0 0
        %1852 = vmatprep.subr.bf16.mxu0 0
        %1853 = vmatpush1.bf16.xpose.msra.mxu0 0
        %1854 = vmatprep.mubr.bf16.mxu0 0
        %1855 = vmatmul.mubr.bf16.gmra.mrb[0].mxu0 %v1817
        %v1856 = vpop.f32.mrb[0].mxu0
        %v1857 = vadd.f32 0.0, %v1856
        %v1858 = vpop.f32.mrb[0].mxu0
        %v1859 = vpop.f32.mrb[0].mxu0
        %v1860 = vadd.f32 0.0, %v1859
        %v1861 = vpop.f32.mrb[0].mxu0
        %1862 = vdwg.mxu0
        %1864 = vrot.lane.b32.xlu0 %v1651, 96
        %v1865 = vpop.permute.xlu0 %1864
        %v1867 = vsel %vm1715, %v1651, 0
        %v1870 = vsel %vm1715, %v1865, 0
        %1872 = vmatprep.subr.bf16.mxu0 0
        %1873 = vmatpush1.bf16.xpose.msra.mxu0 %v1870
        %1874 = vmatprep.subr.bf16.mxu0 0
        %1875 = vmatpush1.bf16.xpose.msra.mxu0 0
        %1876 = vmatprep.subr.bf16.mxu0 0
        %1877 = vmatpush1.bf16.xpose.msra.mxu0 0
        %1878 = vmatprep.subr.bf16.mxu0 0
        %1879 = vmatpush1.bf16.xpose.msra.mxu0 0
        %1880 = vmatprep.subr.bf16.mxu0 0
        %1881 = vmatpush1.bf16.xpose.msra.mxu0 0
        %1882 = vmatprep.subr.bf16.mxu0 0
        %1883 = vmatpush1.bf16.xpose.msra.mxu0 0
        %1884 = vmatprep.subr.bf16.mxu0 0
        %1885 = vmatpush1.bf16.xpose.msra.mxu0 0
        %1886 = vmatprep.subr.bf16.mxu0 0
        %1887 = vmatpush1.bf16.xpose.msra.mxu0 0
        %1888 = vmatprep.subr.bf16.mxu0 0
        %1889 = vmatpush1.bf16.xpose.msra.mxu0 0
        %1890 = vmatprep.subr.bf16.mxu0 0
        %1891 = vmatpush1.bf16.xpose.msra.mxu0 0
        %1892 = vmatprep.subr.bf16.mxu0 0
        %1893 = vmatpush1.bf16.xpose.msra.mxu0 0
        %1894 = vmatprep.subr.bf16.mxu0 0
        %1895 = vmatpush1.bf16.xpose.msra.mxu0 0
        %1896 = vmatprep.subr.bf16.mxu0 0
        %1897 = vmatpush1.bf16.xpose.msra.mxu0 0
        %1898 = vmatprep.subr.bf16.mxu0 0
        %1899 = vmatpush1.bf16.xpose.msra.mxu0 0
        %1900 = vmatprep.subr.bf16.mxu0 0
        %1901 = vmatpush1.bf16.xpose.msra.mxu0 0
        %1902 = vmatprep.subr.bf16.mxu0 0
        %1903 = vmatpush1.bf16.xpose.msra.mxu0 0
        %1904 = vmatprep.mubr.bf16.mxu0 0
        %1905 = vmatmul.mubr.bf16.gmra.mrb[0].mxu0 %v1867
        %v1906 = vpop.f32.mrb[0].mxu0
        %v1907 = vadd.f32 0.0, %v1906
        %v1908 = vpop.f32.mrb[0].mxu0
        %v1909 = vpop.f32.mrb[0].mxu0
        %v1910 = vadd.f32 0.0, %v1909
        %v1911 = vpop.f32.mrb[0].mxu0
        %1912 = vdwg.mxu0
        %1914 = vrot.lane.b32.xlu0 %v1652, 96
        %v1915 = vpop.permute.xlu0 %1914
        %v1917 = vsel %vm1715, %v1652, 0
        %v1920 = vsel %vm1715, %v1915, 0
        %1922 = vmatprep.subr.bf16.mxu0 0
        %1923 = vmatpush1.bf16.xpose.msra.mxu0 %v1920
        %1924 = vmatprep.subr.bf16.mxu0 0
        %1925 = vmatpush1.bf16.xpose.msra.mxu0 0
        %1926 = vmatprep.subr.bf16.mxu0 0
        %1927 = vmatpush1.bf16.xpose.msra.mxu0 0
        %1928 = vmatprep.subr.bf16.mxu0 0
        %1929 = vmatpush1.bf16.xpose.msra.mxu0 0
        %1930 = vmatprep.subr.bf16.mxu0 0
        %1931 = vmatpush1.bf16.xpose.msra.mxu0 0
        %1932 = vmatprep.subr.bf16.mxu0 0
        %1933 = vmatpush1.bf16.xpose.msra.mxu0 0
        %1934 = vmatprep.subr.bf16.mxu0 0
        %1935 = vmatpush1.bf16.xpose.msra.mxu0 0
        %1936 = vmatprep.subr.bf16.mxu0 0
        %1937 = vmatpush1.bf16.xpose.msra.mxu0 0
        %1938 = vmatprep.subr.bf16.mxu0 0
        %1939 = vmatpush1.bf16.xpose.msra.mxu0 0
        %1940 = vmatprep.subr.bf16.mxu0 0
        %1941 = vmatpush1.bf16.xpose.msra.mxu0 0
        %1942 = vmatprep.subr.bf16.mxu0 0
        %1943 = vmatpush1.bf16.xpose.msra.mxu0 0
        %1944 = vmatprep.subr.bf16.mxu0 0
        %1945 = vmatpush1.bf16.xpose.msra.mxu0 0
        %1946 = vmatprep.subr.bf16.mxu0 0
        %1947 = vmatpush1.bf16.xpose.msra.mxu0 0
        %1948 = vmatprep.subr.bf16.mxu0 0
        %1949 = vmatpush1.bf16.xpose.msra.mxu0 0
        %1950 = vmatprep.subr.bf16.mxu0 0
        %1951 = vmatpush1.bf16.xpose.msra.mxu0 0
        %1952 = vmatprep.subr.bf16.mxu0 0
        %1953 = vmatpush1.bf16.xpose.msra.mxu0 0
        %1954 = vmatprep.mubr.bf16.mxu0 0
        %1955 = vmatmul.mubr.bf16.gmra.mrb[0].mxu0 %v1917
        %v1956 = vpop.f32.mrb[0].mxu0
        %v1957 = vadd.f32 0.0, %v1956
        %v1958 = vpop.f32.mrb[0].mxu0
        %v1959 = vpop.f32.mrb[0].mxu0
        %v1960 = vadd.f32 0.0, %v1959
        %v1961 = vpop.f32.mrb[0].mxu0
        %1962 = vdwg.mxu0
        %1964 = vrot.lane.b32.xlu0 %v1653, 96
        %v1965 = vpop.permute.xlu0 %1964
        %v1967 = vsel %vm1715, %v1653, 0
        %v1970 = vsel %vm1715, %v1965, 0
        %1972 = vmatprep.subr.bf16.mxu0 0
        %1973 = vmatpush1.bf16.xpose.msra.mxu0 %v1970
        %1974 = vmatprep.subr.bf16.mxu0 0
        %1975 = vmatpush1.bf16.xpose.msra.mxu0 0
        %1976 = vmatprep.subr.bf16.mxu0 0
        %1977 = vmatpush1.bf16.xpose.msra.mxu0 0
        %1978 = vmatprep.subr.bf16.mxu0 0
        %1979 = vmatpush1.bf16.xpose.msra.mxu0 0
        %1980 = vmatprep.subr.bf16.mxu0 0
        %1981 = vmatpush1.bf16.xpose.msra.mxu0 0
        %1982 = vmatprep.subr.bf16.mxu0 0
        %1983 = vmatpush1.bf16.xpose.msra.mxu0 0
        %1984 = vmatprep.subr.bf16.mxu0 0
        %1985 = vmatpush1.bf16.xpose.msra.mxu0 0
        %1986 = vmatprep.subr.bf16.mxu0 0
        %1987 = vmatpush1.bf16.xpose.msra.mxu0 0
        %1988 = vmatprep.subr.bf16.mxu0 0
        %1989 = vmatpush1.bf16.xpose.msra.mxu0 0
        %1990 = vmatprep.subr.bf16.mxu0 0
        %1991 = vmatpush1.bf16.xpose.msra.mxu0 0
        %1992 = vmatprep.subr.bf16.mxu0 0
        %1993 = vmatpush1.bf16.xpose.msra.mxu0 0
        %1994 = vmatprep.subr.bf16.mxu0 0
        %1995 = vmatpush1.bf16.xpose.msra.mxu0 0
        %1996 = vmatprep.subr.bf16.mxu0 0
        %1997 = vmatpush1.bf16.xpose.msra.mxu0 0
        %1998 = vmatprep.subr.bf16.mxu0 0
        %1999 = vmatpush1.bf16.xpose.msra.mxu0 0
        %2000 = vmatprep.subr.bf16.mxu0 0
        %2001 = vmatpush1.bf16.xpose.msra.mxu0 0
        %2002 = vmatprep.subr.bf16.mxu0 0
        %2003 = vmatpush1.bf16.xpose.msra.mxu0 0
        %2004 = vmatprep.mubr.bf16.mxu0 0
        %2005 = vmatmul.mubr.bf16.gmra.mrb[0].mxu0 %v1967
        %v2006 = vpop.f32.mrb[0].mxu0
        %v2007 = vadd.f32 0.0, %v2006
        %v2008 = vpop.f32.mrb[0].mxu0
        %v2009 = vpop.f32.mrb[0].mxu0
        %v2010 = vadd.f32 0.0, %v2009
        %v2011 = vpop.f32.mrb[0].mxu0
        %2012 = vdwg.mxu0
        %2014 = vrot.lane.b32.xlu0 %v1654, 96
        %v2015 = vpop.permute.xlu0 %2014
        %v2017 = vsel %vm1715, %v1654, 0
        %v2020 = vsel %vm1715, %v2015, 0
        %2022 = vmatprep.subr.bf16.mxu0 0
        %2023 = vmatpush1.bf16.xpose.msra.mxu0 %v2020
        %2024 = vmatprep.subr.bf16.mxu0 0
        %2025 = vmatpush1.bf16.xpose.msra.mxu0 0
        %2026 = vmatprep.subr.bf16.mxu0 0
        %2027 = vmatpush1.bf16.xpose.msra.mxu0 0
        %2028 = vmatprep.subr.bf16.mxu0 0
        %2029 = vmatpush1.bf16.xpose.msra.mxu0 0
        %2030 = vmatprep.subr.bf16.mxu0 0
        %2031 = vmatpush1.bf16.xpose.msra.mxu0 0
        %2032 = vmatprep.subr.bf16.mxu0 0
        %2033 = vmatpush1.bf16.xpose.msra.mxu0 0
        %2034 = vmatprep.subr.bf16.mxu0 0
        %2035 = vmatpush1.bf16.xpose.msra.mxu0 0
        %2036 = vmatprep.subr.bf16.mxu0 0
        %2037 = vmatpush1.bf16.xpose.msra.mxu0 0
        %2038 = vmatprep.subr.bf16.mxu0 0
        %2039 = vmatpush1.bf16.xpose.msra.mxu0 0
        %2040 = vmatprep.subr.bf16.mxu0 0
        %2041 = vmatpush1.bf16.xpose.msra.mxu0 0
        %2042 = vmatprep.subr.bf16.mxu0 0
        %2043 = vmatpush1.bf16.xpose.msra.mxu0 0
        %2044 = vmatprep.subr.bf16.mxu0 0
        %2045 = vmatpush1.bf16.xpose.msra.mxu0 0
        %2046 = vmatprep.subr.bf16.mxu0 0
        %2047 = vmatpush1.bf16.xpose.msra.mxu0 0
        %2048 = vmatprep.subr.bf16.mxu0 0
        %2049 = vmatpush1.bf16.xpose.msra.mxu0 0
        %2050 = vmatprep.subr.bf16.mxu0 0
        %2051 = vmatpush1.bf16.xpose.msra.mxu0 0
        %2052 = vmatprep.subr.bf16.mxu0 0
        %2053 = vmatpush1.bf16.xpose.msra.mxu0 0
        %2054 = vmatprep.mubr.bf16.mxu0 0
        %2055 = vmatmul.mubr.bf16.gmra.mrb[0].mxu0 %v2017
        %v2056 = vpop.f32.mrb[0].mxu0
        %v2057 = vadd.f32 0.0, %v2056
        %v2058 = vpop.f32.mrb[0].mxu0
        %v2059 = vpop.f32.mrb[0].mxu0
        %v2060 = vadd.f32 0.0, %v2059
        %v2061 = vpop.f32.mrb[0].mxu0
        %2062 = vdwg.mxu0
        %2064 = vrot.lane.b32.xlu0 %v1655, 96
        %v2065 = vpop.permute.xlu0 %2064
        %v2067 = vsel %vm1715, %v1655, 0
        %v2070 = vsel %vm1715, %v2065, 0
        %2072 = vmatprep.subr.bf16.mxu0 0
        %2073 = vmatpush1.bf16.xpose.msra.mxu0 %v2070
        %2074 = vmatprep.subr.bf16.mxu0 0
        %2075 = vmatpush1.bf16.xpose.msra.mxu0 0
        %2076 = vmatprep.subr.bf16.mxu0 0
        %2077 = vmatpush1.bf16.xpose.msra.mxu0 0
        %2078 = vmatprep.subr.bf16.mxu0 0
        %2079 = vmatpush1.bf16.xpose.msra.mxu0 0
        %2080 = vmatprep.subr.bf16.mxu0 0
        %2081 = vmatpush1.bf16.xpose.msra.mxu0 0
        %2082 = vmatprep.subr.bf16.mxu0 0
        %2083 = vmatpush1.bf16.xpose.msra.mxu0 0
        %2084 = vmatprep.subr.bf16.mxu0 0
        %2085 = vmatpush1.bf16.xpose.msra.mxu0 0
        %2086 = vmatprep.subr.bf16.mxu0 0
        %2087 = vmatpush1.bf16.xpose.msra.mxu0 0
        %2088 = vmatprep.subr.bf16.mxu0 0
        %2089 = vmatpush1.bf16.xpose.msra.mxu0 0
        %2090 = vmatprep.subr.bf16.mxu0 0
        %2091 = vmatpush1.bf16.xpose.msra.mxu0 0
        %2092 = vmatprep.subr.bf16.mxu0 0
        %2093 = vmatpush1.bf16.xpose.msra.mxu0 0
        %2094 = vmatprep.subr.bf16.mxu0 0
        %2095 = vmatpush1.bf16.xpose.msra.mxu0 0
        %2096 = vmatprep.subr.bf16.mxu0 0
        %2097 = vmatpush1.bf16.xpose.msra.mxu0 0
        %2098 = vmatprep.subr.bf16.mxu0 0
        %2099 = vmatpush1.bf16.xpose.msra.mxu0 0
        %2100 = vmatprep.subr.bf16.mxu0 0
        %2101 = vmatpush1.bf16.xpose.msra.mxu0 0
        %2102 = vmatprep.subr.bf16.mxu0 0
        %2103 = vmatpush1.bf16.xpose.msra.mxu0 0
        %2104 = vmatprep.mubr.bf16.mxu0 0
        %2105 = vmatmul.mubr.bf16.gmra.mrb[0].mxu0 %v2067
        %v2106 = vpop.f32.mrb[0].mxu0
        %v2107 = vadd.f32 0.0, %v2106
        %v2108 = vpop.f32.mrb[0].mxu0
        %v2109 = vpop.f32.mrb[0].mxu0
        %v2110 = vadd.f32 0.0, %v2109
        %v2111 = vpop.f32.mrb[0].mxu0
        %2112 = vdwg.mxu0
        %2114 = vrot.lane.b32.xlu0 %v1656, 96
        %v2115 = vpop.permute.xlu0 %2114
        %v2117 = vsel %vm1715, %v1656, 0
        %v2120 = vsel %vm1715, %v2115, 0
        %2122 = vmatprep.subr.bf16.mxu0 0
        %2123 = vmatpush1.bf16.xpose.msra.mxu0 %v2120
        %2124 = vmatprep.subr.bf16.mxu0 0
        %2125 = vmatpush1.bf16.xpose.msra.mxu0 0
        %2126 = vmatprep.subr.bf16.mxu0 0
        %2127 = vmatpush1.bf16.xpose.msra.mxu0 0
        %2128 = vmatprep.subr.bf16.mxu0 0
        %2129 = vmatpush1.bf16.xpose.msra.mxu0 0
        %2130 = vmatprep.subr.bf16.mxu0 0
        %2131 = vmatpush1.bf16.xpose.msra.mxu0 0
        %2132 = vmatprep.subr.bf16.mxu0 0
        %2133 = vmatpush1.bf16.xpose.msra.mxu0 0
        %2134 = vmatprep.subr.bf16.mxu0 0
        %2135 = vmatpush1.bf16.xpose.msra.mxu0 0
        %2136 = vmatprep.subr.bf16.mxu0 0
        %2137 = vmatpush1.bf16.xpose.msra.mxu0 0
        %2138 = vmatprep.subr.bf16.mxu0 0
        %2139 = vmatpush1.bf16.xpose.msra.mxu0 0
        %2140 = vmatprep.subr.bf16.mxu0 0
        %2141 = vmatpush1.bf16.xpose.msra.mxu0 0
        %2142 = vmatprep.subr.bf16.mxu0 0
        %2143 = vmatpush1.bf16.xpose.msra.mxu0 0
        %2144 = vmatprep.subr.bf16.mxu0 0
        %2145 = vmatpush1.bf16.xpose.msra.mxu0 0
        %2146 = vmatprep.subr.bf16.mxu0 0
        %2147 = vmatpush1.bf16.xpose.msra.mxu0 0
        %2148 = vmatprep.subr.bf16.mxu0 0
        %2149 = vmatpush1.bf16.xpose.msra.mxu0 0
        %2150 = vmatprep.subr.bf16.mxu0 0
        %2151 = vmatpush1.bf16.xpose.msra.mxu0 0
        %2152 = vmatprep.subr.bf16.mxu0 0
        %2153 = vmatpush1.bf16.xpose.msra.mxu0 0
        %2154 = vmatprep.mubr.bf16.mxu0 0
        %2155 = vmatmul.mubr.bf16.gmra.mrb[0].mxu0 %v2117
        %v2156 = vpop.f32.mrb[0].mxu0
        %v2157 = vadd.f32 0.0, %v2156
        %v2158 = vpop.f32.mrb[0].mxu0
        %v2159 = vpop.f32.mrb[0].mxu0
        %v2160 = vadd.f32 0.0, %v2159
        %v2161 = vpop.f32.mrb[0].mxu0
        %2162 = vdwg.mxu0
        %2164 = vrot.lane.b32.xlu0 %v1657, 96
        %v2165 = vpop.permute.xlu0 %2164
        %v2167 = vsel %vm1715, %v1657, 0
        %v2170 = vsel %vm1715, %v2165, 0
        %2172 = vmatprep.subr.bf16.mxu0 0
        %2173 = vmatpush1.bf16.xpose.msra.mxu0 %v2170
        %2174 = vmatprep.subr.bf16.mxu0 0
        %2175 = vmatpush1.bf16.xpose.msra.mxu0 0
        %2176 = vmatprep.subr.bf16.mxu0 0
        %2177 = vmatpush1.bf16.xpose.msra.mxu0 0
        %2178 = vmatprep.subr.bf16.mxu0 0
        %2179 = vmatpush1.bf16.xpose.msra.mxu0 0
        %2180 = vmatprep.subr.bf16.mxu0 0
        %2181 = vmatpush1.bf16.xpose.msra.mxu0 0
        %2182 = vmatprep.subr.bf16.mxu0 0
        %2183 = vmatpush1.bf16.xpose.msra.mxu0 0
        %2184 = vmatprep.subr.bf16.mxu0 0
        %2185 = vmatpush1.bf16.xpose.msra.mxu0 0
        %2186 = vmatprep.subr.bf16.mxu0 0
        %2187 = vmatpush1.bf16.xpose.msra.mxu0 0
        %2188 = vmatprep.subr.bf16.mxu0 0
        %2189 = vmatpush1.bf16.xpose.msra.mxu0 0
        %2190 = vmatprep.subr.bf16.mxu0 0
        %2191 = vmatpush1.bf16.xpose.msra.mxu0 0
        %2192 = vmatprep.subr.bf16.mxu0 0
        %2193 = vmatpush1.bf16.xpose.msra.mxu0 0
        %2194 = vmatprep.subr.bf16.mxu0 0
        %2195 = vmatpush1.bf16.xpose.msra.mxu0 0
        %2196 = vmatprep.subr.bf16.mxu0 0
        %2197 = vmatpush1.bf16.xpose.msra.mxu0 0
        %2198 = vmatprep.subr.bf16.mxu0 0
        %2199 = vmatpush1.bf16.xpose.msra.mxu0 0
        %2200 = vmatprep.subr.bf16.mxu0 0
        %2201 = vmatpush1.bf16.xpose.msra.mxu0 0
        %2202 = vmatprep.subr.bf16.mxu0 0
        %2203 = vmatpush1.bf16.xpose.msra.mxu0 0
        %2204 = vmatprep.mubr.bf16.mxu0 0
        %2205 = vmatmul.mubr.bf16.gmra.mrb[0].mxu0 %v2167
        %v2206 = vpop.f32.mrb[0].mxu0
        %v2207 = vadd.f32 0.0, %v2206
        %v2208 = vpop.f32.mrb[0].mxu0
        %v2209 = vpop.f32.mrb[0].mxu0
        %v2210 = vadd.f32 0.0, %v2209
        %v2211 = vpop.f32.mrb[0].mxu0
        %2212 = vdwg.mxu0
        %2214 = vrot.lane.b32.xlu0 %v1658, 96
        %v2215 = vpop.permute.xlu0 %2214
        %v2217 = vsel %vm1715, %v1658, 0
        %v2220 = vsel %vm1715, %v2215, 0
        %2222 = vmatprep.subr.bf16.mxu0 0
        %2223 = vmatpush1.bf16.xpose.msra.mxu0 %v2220
        %2224 = vmatprep.subr.bf16.mxu0 0
        %2225 = vmatpush1.bf16.xpose.msra.mxu0 0
        %2226 = vmatprep.subr.bf16.mxu0 0
        %2227 = vmatpush1.bf16.xpose.msra.mxu0 0
        %2228 = vmatprep.subr.bf16.mxu0 0
        %2229 = vmatpush1.bf16.xpose.msra.mxu0 0
        %2230 = vmatprep.subr.bf16.mxu0 0
        %2231 = vmatpush1.bf16.xpose.msra.mxu0 0
        %2232 = vmatprep.subr.bf16.mxu0 0
        %2233 = vmatpush1.bf16.xpose.msra.mxu0 0
        %2234 = vmatprep.subr.bf16.mxu0 0
        %2235 = vmatpush1.bf16.xpose.msra.mxu0 0
        %2236 = vmatprep.subr.bf16.mxu0 0
        %2237 = vmatpush1.bf16.xpose.msra.mxu0 0
        %2238 = vmatprep.subr.bf16.mxu0 0
        %2239 = vmatpush1.bf16.xpose.msra.mxu0 0
        %2240 = vmatprep.subr.bf16.mxu0 0
        %2241 = vmatpush1.bf16.xpose.msra.mxu0 0
        %2242 = vmatprep.subr.bf16.mxu0 0
        %2243 = vmatpush1.bf16.xpose.msra.mxu0 0
        %2244 = vmatprep.subr.bf16.mxu0 0
        %2245 = vmatpush1.bf16.xpose.msra.mxu0 0
        %2246 = vmatprep.subr.bf16.mxu0 0
        %2247 = vmatpush1.bf16.xpose.msra.mxu0 0
        %2248 = vmatprep.subr.bf16.mxu0 0
        %2249 = vmatpush1.bf16.xpose.msra.mxu0 0
        %2250 = vmatprep.subr.bf16.mxu0 0
        %2251 = vmatpush1.bf16.xpose.msra.mxu0 0
        %2252 = vmatprep.subr.bf16.mxu0 0
        %2253 = vmatpush1.bf16.xpose.msra.mxu0 0
        %2254 = vmatprep.mubr.bf16.mxu0 0
        %2255 = vmatmul.mubr.bf16.gmra.mrb[0].mxu0 %v2217
        %v2256 = vpop.f32.mrb[0].mxu0
        %v2257 = vadd.f32 0.0, %v2256
        %v2258 = vpop.f32.mrb[0].mxu0
        %v2259 = vpop.f32.mrb[0].mxu0
        %v2260 = vadd.f32 0.0, %v2259
        %v2261 = vpop.f32.mrb[0].mxu0
        %2262 = vdwg.mxu0
        %2264 = vrot.lane.b32.xlu0 %v1659, 96
        %v2265 = vpop.permute.xlu0 %2264
        %v2267 = vsel %vm1715, %v1659, 0
        %v2270 = vsel %vm1715, %v2265, 0
        %2272 = vmatprep.subr.bf16.mxu0 0
        %2273 = vmatpush1.bf16.xpose.msra.mxu0 %v2270
        %2274 = vmatprep.subr.bf16.mxu0 0
        %2275 = vmatpush1.bf16.xpose.msra.mxu0 0
        %2276 = vmatprep.subr.bf16.mxu0 0
        %2277 = vmatpush1.bf16.xpose.msra.mxu0 0
        %2278 = vmatprep.subr.bf16.mxu0 0
        %2279 = vmatpush1.bf16.xpose.msra.mxu0 0
        %2280 = vmatprep.subr.bf16.mxu0 0
        %2281 = vmatpush1.bf16.xpose.msra.mxu0 0
        %2282 = vmatprep.subr.bf16.mxu0 0
        %2283 = vmatpush1.bf16.xpose.msra.mxu0 0
        %2284 = vmatprep.subr.bf16.mxu0 0
        %2285 = vmatpush1.bf16.xpose.msra.mxu0 0
        %2286 = vmatprep.subr.bf16.mxu0 0
        %2287 = vmatpush1.bf16.xpose.msra.mxu0 0
        %2288 = vmatprep.subr.bf16.mxu0 0
        %2289 = vmatpush1.bf16.xpose.msra.mxu0 0
        %2290 = vmatprep.subr.bf16.mxu0 0
        %2291 = vmatpush1.bf16.xpose.msra.mxu0 0
        %2292 = vmatprep.subr.bf16.mxu0 0
        %2293 = vmatpush1.bf16.xpose.msra.mxu0 0
        %2294 = vmatprep.subr.bf16.mxu0 0
        %2295 = vmatpush1.bf16.xpose.msra.mxu0 0
        %2296 = vmatprep.subr.bf16.mxu0 0
        %2297 = vmatpush1.bf16.xpose.msra.mxu0 0
        %2298 = vmatprep.subr.bf16.mxu0 0
        %2299 = vmatpush1.bf16.xpose.msra.mxu0 0
        %2300 = vmatprep.subr.bf16.mxu0 0
        %2301 = vmatpush1.bf16.xpose.msra.mxu0 0
        %2302 = vmatprep.subr.bf16.mxu0 0
        %2303 = vmatpush1.bf16.xpose.msra.mxu0 0
        %2304 = vmatprep.mubr.bf16.mxu0 0
        %2305 = vmatmul.mubr.bf16.gmra.mrb[0].mxu0 %v2267
        %v2306 = vpop.f32.mrb[0].mxu0
        %v2307 = vadd.f32 0.0, %v2306
        %v2308 = vpop.f32.mrb[0].mxu0
        %v2309 = vpop.f32.mrb[0].mxu0
        %v2310 = vadd.f32 0.0, %v2309
        %v2311 = vpop.f32.mrb[0].mxu0
        %2312 = vdwg.mxu0
        %2314 = vrot.lane.b32.xlu0 %v1660, 96
        %v2315 = vpop.permute.xlu0 %2314
        %v2317 = vsel %vm1715, %v1660, 0
        %v2320 = vsel %vm1715, %v2315, 0
        %2322 = vmatprep.subr.bf16.mxu0 0
        %2323 = vmatpush1.bf16.xpose.msra.mxu0 %v2320
        %2324 = vmatprep.subr.bf16.mxu0 0
        %2325 = vmatpush1.bf16.xpose.msra.mxu0 0
        %2326 = vmatprep.subr.bf16.mxu0 0
        %2327 = vmatpush1.bf16.xpose.msra.mxu0 0
        %2328 = vmatprep.subr.bf16.mxu0 0
        %2329 = vmatpush1.bf16.xpose.msra.mxu0 0
        %2330 = vmatprep.subr.bf16.mxu0 0
        %2331 = vmatpush1.bf16.xpose.msra.mxu0 0
        %2332 = vmatprep.subr.bf16.mxu0 0
        %2333 = vmatpush1.bf16.xpose.msra.mxu0 0
        %2334 = vmatprep.subr.bf16.mxu0 0
        %2335 = vmatpush1.bf16.xpose.msra.mxu0 0
        %2336 = vmatprep.subr.bf16.mxu0 0
        %2337 = vmatpush1.bf16.xpose.msra.mxu0 0
        %2338 = vmatprep.subr.bf16.mxu0 0
        %2339 = vmatpush1.bf16.xpose.msra.mxu0 0
        %2340 = vmatprep.subr.bf16.mxu0 0
        %2341 = vmatpush1.bf16.xpose.msra.mxu0 0
        %2342 = vmatprep.subr.bf16.mxu0 0
        %2343 = vmatpush1.bf16.xpose.msra.mxu0 0
        %2344 = vmatprep.subr.bf16.mxu0 0
        %2345 = vmatpush1.bf16.xpose.msra.mxu0 0
        %2346 = vmatprep.subr.bf16.mxu0 0
        %2347 = vmatpush1.bf16.xpose.msra.mxu0 0
        %2348 = vmatprep.subr.bf16.mxu0 0
        %2349 = vmatpush1.bf16.xpose.msra.mxu0 0
        %2350 = vmatprep.subr.bf16.mxu0 0
        %2351 = vmatpush1.bf16.xpose.msra.mxu0 0
        %2352 = vmatprep.subr.bf16.mxu0 0
        %2353 = vmatpush1.bf16.xpose.msra.mxu0 0
        %2354 = vmatprep.mubr.bf16.mxu0 0
        %2355 = vmatmul.mubr.bf16.gmra.mrb[0].mxu0 %v2317
        %v2356 = vpop.f32.mrb[0].mxu0
        %v2357 = vadd.f32 0.0, %v2356
        %v2358 = vpop.f32.mrb[0].mxu0
        %v2359 = vpop.f32.mrb[0].mxu0
        %v2360 = vadd.f32 0.0, %v2359
        %v2361 = vpop.f32.mrb[0].mxu0
        %2362 = vdwg.mxu0
        %2364 = vrot.lane.b32.xlu0 %v1661, 96
        %v2365 = vpop.permute.xlu0 %2364
        %v2367 = vsel %vm1715, %v1661, 0
        %v2370 = vsel %vm1715, %v2365, 0
        %2372 = vmatprep.subr.bf16.mxu0 0
        %2373 = vmatpush1.bf16.xpose.msra.mxu0 %v2370
        %2374 = vmatprep.subr.bf16.mxu0 0
        %2375 = vmatpush1.bf16.xpose.msra.mxu0 0
        %2376 = vmatprep.subr.bf16.mxu0 0
        %2377 = vmatpush1.bf16.xpose.msra.mxu0 0
        %2378 = vmatprep.subr.bf16.mxu0 0
        %2379 = vmatpush1.bf16.xpose.msra.mxu0 0
        %2380 = vmatprep.subr.bf16.mxu0 0
        %2381 = vmatpush1.bf16.xpose.msra.mxu0 0
        %2382 = vmatprep.subr.bf16.mxu0 0
        %2383 = vmatpush1.bf16.xpose.msra.mxu0 0
        %2384 = vmatprep.subr.bf16.mxu0 0
        %2385 = vmatpush1.bf16.xpose.msra.mxu0 0
        %2386 = vmatprep.subr.bf16.mxu0 0
        %2387 = vmatpush1.bf16.xpose.msra.mxu0 0
        %2388 = vmatprep.subr.bf16.mxu0 0
        %2389 = vmatpush1.bf16.xpose.msra.mxu0 0
        %2390 = vmatprep.subr.bf16.mxu0 0
        %2391 = vmatpush1.bf16.xpose.msra.mxu0 0
        %2392 = vmatprep.subr.bf16.mxu0 0
        %2393 = vmatpush1.bf16.xpose.msra.mxu0 0
        %2394 = vmatprep.subr.bf16.mxu0 0
        %2395 = vmatpush1.bf16.xpose.msra.mxu0 0
        %2396 = vmatprep.subr.bf16.mxu0 0
        %2397 = vmatpush1.bf16.xpose.msra.mxu0 0
        %2398 = vmatprep.subr.bf16.mxu0 0
        %2399 = vmatpush1.bf16.xpose.msra.mxu0 0
        %2400 = vmatprep.subr.bf16.mxu0 0
        %2401 = vmatpush1.bf16.xpose.msra.mxu0 0
        %2402 = vmatprep.subr.bf16.mxu0 0
        %2403 = vmatpush1.bf16.xpose.msra.mxu0 0
        %2404 = vmatprep.mubr.bf16.mxu0 0
        %2405 = vmatmul.mubr.bf16.gmra.mrb[0].mxu0 %v2367
        %v2406 = vpop.f32.mrb[0].mxu0
        %v2407 = vadd.f32 0.0, %v2406
        %v2408 = vpop.f32.mrb[0].mxu0
        %v2409 = vpop.f32.mrb[0].mxu0
        %v2410 = vadd.f32 0.0, %v2409
        %v2411 = vpop.f32.mrb[0].mxu0
        %2412 = vdwg.mxu0
        %2414 = vrot.lane.b32.xlu0 %v1662, 96
        %v2415 = vpop.permute.xlu0 %2414
        %v2417 = vsel %vm1715, %v1662, 0
        %v2420 = vsel %vm1715, %v2415, 0
        %2422 = vmatprep.subr.bf16.mxu0 0
        %2423 = vmatpush1.bf16.xpose.msra.mxu0 %v2420
        %2424 = vmatprep.subr.bf16.mxu0 0
        %2425 = vmatpush1.bf16.xpose.msra.mxu0 0
        %2426 = vmatprep.subr.bf16.mxu0 0
        %2427 = vmatpush1.bf16.xpose.msra.mxu0 0
        %2428 = vmatprep.subr.bf16.mxu0 0
        %2429 = vmatpush1.bf16.xpose.msra.mxu0 0
        %2430 = vmatprep.subr.bf16.mxu0 0
        %2431 = vmatpush1.bf16.xpose.msra.mxu0 0
        %2432 = vmatprep.subr.bf16.mxu0 0
        %2433 = vmatpush1.bf16.xpose.msra.mxu0 0
        %2434 = vmatprep.subr.bf16.mxu0 0
        %2435 = vmatpush1.bf16.xpose.msra.mxu0 0
        %2436 = vmatprep.subr.bf16.mxu0 0
        %2437 = vmatpush1.bf16.xpose.msra.mxu0 0
        %2438 = vmatprep.subr.bf16.mxu0 0
        %2439 = vmatpush1.bf16.xpose.msra.mxu0 0
        %2440 = vmatprep.subr.bf16.mxu0 0
        %2441 = vmatpush1.bf16.xpose.msra.mxu0 0
        %2442 = vmatprep.subr.bf16.mxu0 0
        %2443 = vmatpush1.bf16.xpose.msra.mxu0 0
        %2444 = vmatprep.subr.bf16.mxu0 0
        %2445 = vmatpush1.bf16.xpose.msra.mxu0 0
        %2446 = vmatprep.subr.bf16.mxu0 0
        %2447 = vmatpush1.bf16.xpose.msra.mxu0 0
        %2448 = vmatprep.subr.bf16.mxu0 0
        %2449 = vmatpush1.bf16.xpose.msra.mxu0 0
        %2450 = vmatprep.subr.bf16.mxu0 0
        %2451 = vmatpush1.bf16.xpose.msra.mxu0 0
        %2452 = vmatprep.subr.bf16.mxu0 0
        %2453 = vmatpush1.bf16.xpose.msra.mxu0 0
        %2454 = vmatprep.mubr.bf16.mxu0 0
        %2455 = vmatmul.mubr.bf16.gmra.mrb[0].mxu0 %v2417
        %v2456 = vpop.f32.mrb[0].mxu0
        %v2457 = vadd.f32 0.0, %v2456
        %v2458 = vpop.f32.mrb[0].mxu0
        %v2459 = vpop.f32.mrb[0].mxu0
        %v2460 = vadd.f32 0.0, %v2459
        %v2461 = vpop.f32.mrb[0].mxu0
        %2462 = vdwg.mxu0
        %2464 = vrot.lane.b32.xlu0 %v1663, 96
        %v2465 = vpop.permute.xlu0 %2464
        %v2467 = vsel %vm1715, %v1663, 0
        %v2470 = vsel %vm1715, %v2465, 0
        %2472 = vmatprep.subr.bf16.mxu0 0
        %2473 = vmatpush1.bf16.xpose.msra.mxu0 %v2470
        %2474 = vmatprep.subr.bf16.mxu0 0
        %2475 = vmatpush1.bf16.xpose.msra.mxu0 0
        %2476 = vmatprep.subr.bf16.mxu0 0
        %2477 = vmatpush1.bf16.xpose.msra.mxu0 0
        %2478 = vmatprep.subr.bf16.mxu0 0
        %2479 = vmatpush1.bf16.xpose.msra.mxu0 0
        %2480 = vmatprep.subr.bf16.mxu0 0
        %2481 = vmatpush1.bf16.xpose.msra.mxu0 0
        %2482 = vmatprep.subr.bf16.mxu0 0
        %2483 = vmatpush1.bf16.xpose.msra.mxu0 0
        %2484 = vmatprep.subr.bf16.mxu0 0
        %2485 = vmatpush1.bf16.xpose.msra.mxu0 0
        %2486 = vmatprep.subr.bf16.mxu0 0
        %2487 = vmatpush1.bf16.xpose.msra.mxu0 0
        %2488 = vmatprep.subr.bf16.mxu0 0
        %2489 = vmatpush1.bf16.xpose.msra.mxu0 0
        %2490 = vmatprep.subr.bf16.mxu0 0
        %2491 = vmatpush1.bf16.xpose.msra.mxu0 0
        %2492 = vmatprep.subr.bf16.mxu0 0
        %2493 = vmatpush1.bf16.xpose.msra.mxu0 0
        %2494 = vmatprep.subr.bf16.mxu0 0
        %2495 = vmatpush1.bf16.xpose.msra.mxu0 0
        %2496 = vmatprep.subr.bf16.mxu0 0
        %2497 = vmatpush1.bf16.xpose.msra.mxu0 0
        %2498 = vmatprep.subr.bf16.mxu0 0
        %2499 = vmatpush1.bf16.xpose.msra.mxu0 0
        %2500 = vmatprep.subr.bf16.mxu0 0
        %2501 = vmatpush1.bf16.xpose.msra.mxu0 0
        %2502 = vmatprep.subr.bf16.mxu0 0
        %2503 = vmatpush1.bf16.xpose.msra.mxu0 0
        %2504 = vmatprep.mubr.bf16.mxu0 0
        %2505 = vmatmul.mubr.bf16.gmra.mrb[0].mxu0 %v2467
        %v2506 = vpop.f32.mrb[0].mxu0
        %v2507 = vadd.f32 0.0, %v2506
        %v2508 = vpop.f32.mrb[0].mxu0
        %v2509 = vpop.f32.mrb[0].mxu0
        %v2510 = vadd.f32 0.0, %v2509
        %v2511 = vpop.f32.mrb[0].mxu0
        %2512 = vdwg.mxu0
        %2514 = vrot.lane.b32.xlu0 %v1664, 96
        %v2515 = vpop.permute.xlu0 %2514
        %v2517 = vsel %vm1715, %v1664, 0
        %v2520 = vsel %vm1715, %v2515, 0
        %2522 = vmatprep.subr.bf16.mxu0 0
        %2523 = vmatpush1.bf16.xpose.msra.mxu0 %v2520
        %2524 = vmatprep.subr.bf16.mxu0 0
        %2525 = vmatpush1.bf16.xpose.msra.mxu0 0
        %2526 = vmatprep.subr.bf16.mxu0 0
        %2527 = vmatpush1.bf16.xpose.msra.mxu0 0
        %2528 = vmatprep.subr.bf16.mxu0 0
        %2529 = vmatpush1.bf16.xpose.msra.mxu0 0
        %2530 = vmatprep.subr.bf16.mxu0 0
        %2531 = vmatpush1.bf16.xpose.msra.mxu0 0
        %2532 = vmatprep.subr.bf16.mxu0 0
        %2533 = vmatpush1.bf16.xpose.msra.mxu0 0
        %2534 = vmatprep.subr.bf16.mxu0 0
        %2535 = vmatpush1.bf16.xpose.msra.mxu0 0
        %2536 = vmatprep.subr.bf16.mxu0 0
        %2537 = vmatpush1.bf16.xpose.msra.mxu0 0
        %2538 = vmatprep.subr.bf16.mxu0 0
        %2539 = vmatpush1.bf16.xpose.msra.mxu0 0
        %2540 = vmatprep.subr.bf16.mxu0 0
        %2541 = vmatpush1.bf16.xpose.msra.mxu0 0
        %2542 = vmatprep.subr.bf16.mxu0 0
        %2543 = vmatpush1.bf16.xpose.msra.mxu0 0
        %2544 = vmatprep.subr.bf16.mxu0 0
        %2545 = vmatpush1.bf16.xpose.msra.mxu0 0
        %2546 = vmatprep.subr.bf16.mxu0 0
        %2547 = vmatpush1.bf16.xpose.msra.mxu0 0
        %2548 = vmatprep.subr.bf16.mxu0 0
        %2549 = vmatpush1.bf16.xpose.msra.mxu0 0
        %2550 = vmatprep.subr.bf16.mxu0 0
        %2551 = vmatpush1.bf16.xpose.msra.mxu0 0
        %2552 = vmatprep.subr.bf16.mxu0 0
        %2553 = vmatpush1.bf16.xpose.msra.mxu0 0
        %2554 = vmatprep.mubr.bf16.mxu0 0
        %2555 = vmatmul.mubr.bf16.gmra.mrb[0].mxu0 %v2517
        %v2556 = vpop.f32.mrb[0].mxu0
        %v2557 = vadd.f32 0.0, %v2556
        %v2558 = vpop.f32.mrb[0].mxu0
        %v2559 = vpop.f32.mrb[0].mxu0
        %v2560 = vadd.f32 0.0, %v2559
        %v2561 = vpop.f32.mrb[0].mxu0
        %2562 = vdwg.mxu0
        %2564 = vrot.lane.b32.xlu0 %v1665, 96
        %v2565 = vpop.permute.xlu0 %2564
        %v2567 = vsel %vm1715, %v1665, 0
        %v2570 = vsel %vm1715, %v2565, 0
        %2572 = vmatprep.subr.bf16.mxu0 0
        %2573 = vmatpush1.bf16.xpose.msra.mxu0 %v2570
        %2574 = vmatprep.subr.bf16.mxu0 0
        %2575 = vmatpush1.bf16.xpose.msra.mxu0 0
        %2576 = vmatprep.subr.bf16.mxu0 0
        %2577 = vmatpush1.bf16.xpose.msra.mxu0 0
        %2578 = vmatprep.subr.bf16.mxu0 0
        %2579 = vmatpush1.bf16.xpose.msra.mxu0 0
        %2580 = vmatprep.subr.bf16.mxu0 0
        %2581 = vmatpush1.bf16.xpose.msra.mxu0 0
        %2582 = vmatprep.subr.bf16.mxu0 0
        %2583 = vmatpush1.bf16.xpose.msra.mxu0 0
        %2584 = vmatprep.subr.bf16.mxu0 0
        %2585 = vmatpush1.bf16.xpose.msra.mxu0 0
        %2586 = vmatprep.subr.bf16.mxu0 0
        %2587 = vmatpush1.bf16.xpose.msra.mxu0 0
        %2588 = vmatprep.subr.bf16.mxu0 0
        %2589 = vmatpush1.bf16.xpose.msra.mxu0 0
        %2590 = vmatprep.subr.bf16.mxu0 0
        %2591 = vmatpush1.bf16.xpose.msra.mxu0 0
        %2592 = vmatprep.subr.bf16.mxu0 0
        %2593 = vmatpush1.bf16.xpose.msra.mxu0 0
        %2594 = vmatprep.subr.bf16.mxu0 0
        %2595 = vmatpush1.bf16.xpose.msra.mxu0 0
        %2596 = vmatprep.subr.bf16.mxu0 0
        %2597 = vmatpush1.bf16.xpose.msra.mxu0 0
        %2598 = vmatprep.subr.bf16.mxu0 0
        %2599 = vmatpush1.bf16.xpose.msra.mxu0 0
        %2600 = vmatprep.subr.bf16.mxu0 0
        %2601 = vmatpush1.bf16.xpose.msra.mxu0 0
        %2602 = vmatprep.subr.bf16.mxu0 0
        %2603 = vmatpush1.bf16.xpose.msra.mxu0 0
        %2604 = vmatprep.mubr.bf16.mxu0 0
        %2605 = vmatmul.mubr.bf16.gmra.mrb[0].mxu0 %v2567
        %v2606 = vpop.f32.mrb[0].mxu0
        %v2607 = vadd.f32 0.0, %v2606
        %v2608 = vpop.f32.mrb[0].mxu0
        %v2609 = vpop.f32.mrb[0].mxu0
        %v2610 = vadd.f32 0.0, %v2609
        %v2611 = vpop.f32.mrb[0].mxu0
        %2612 = vdwg.mxu0
        %2614 = vrot.lane.b32.xlu0 %v1666, 96
        %v2615 = vpop.permute.xlu0 %2614
        %v2617 = vsel %vm1715, %v1666, 0
        %v2620 = vsel %vm1715, %v2615, 0
        %2622 = vmatprep.subr.bf16.mxu0 0
        %2623 = vmatpush1.bf16.xpose.msra.mxu0 %v2620
        %2624 = vmatprep.subr.bf16.mxu0 0
        %2625 = vmatpush1.bf16.xpose.msra.mxu0 0
        %2626 = vmatprep.subr.bf16.mxu0 0
        %2627 = vmatpush1.bf16.xpose.msra.mxu0 0
        %2628 = vmatprep.subr.bf16.mxu0 0
        %2629 = vmatpush1.bf16.xpose.msra.mxu0 0
        %2630 = vmatprep.subr.bf16.mxu0 0
        %2631 = vmatpush1.bf16.xpose.msra.mxu0 0
        %2632 = vmatprep.subr.bf16.mxu0 0
        %2633 = vmatpush1.bf16.xpose.msra.mxu0 0
        %2634 = vmatprep.subr.bf16.mxu0 0
        %2635 = vmatpush1.bf16.xpose.msra.mxu0 0
        %2636 = vmatprep.subr.bf16.mxu0 0
        %2637 = vmatpush1.bf16.xpose.msra.mxu0 0
        %2638 = vmatprep.subr.bf16.mxu0 0
        %2639 = vmatpush1.bf16.xpose.msra.mxu0 0
        %2640 = vmatprep.subr.bf16.mxu0 0
        %2641 = vmatpush1.bf16.xpose.msra.mxu0 0
        %2642 = vmatprep.subr.bf16.mxu0 0
        %2643 = vmatpush1.bf16.xpose.msra.mxu0 0
        %2644 = vmatprep.subr.bf16.mxu0 0
        %2645 = vmatpush1.bf16.xpose.msra.mxu0 0
        %2646 = vmatprep.subr.bf16.mxu0 0
        %2647 = vmatpush1.bf16.xpose.msra.mxu0 0
        %2648 = vmatprep.subr.bf16.mxu0 0
        %2649 = vmatpush1.bf16.xpose.msra.mxu0 0
        %2650 = vmatprep.subr.bf16.mxu0 0
        %2651 = vmatpush1.bf16.xpose.msra.mxu0 0
        %2652 = vmatprep.subr.bf16.mxu0 0
        %2653 = vmatpush1.bf16.xpose.msra.mxu0 0
        %2654 = vmatprep.mubr.bf16.mxu0 0
        %2655 = vmatmul.mubr.bf16.gmra.mrb[0].mxu0 %v2617
        %v2656 = vpop.f32.mrb[0].mxu0
        %v2657 = vadd.f32 0.0, %v2656
        %v2658 = vpop.f32.mrb[0].mxu0
        %v2659 = vpop.f32.mrb[0].mxu0
        %v2660 = vadd.f32 0.0, %v2659
        %v2661 = vpop.f32.mrb[0].mxu0
        %2662 = vdwg.mxu0
        %2664 = vrot.lane.b32.xlu0 %v1667, 96
        %v2665 = vpop.permute.xlu0 %2664
        %v2667 = vsel %vm1715, %v1667, 0
        %v2670 = vsel %vm1715, %v2665, 0
        %2672 = vmatprep.subr.bf16.mxu0 0
        %2673 = vmatpush1.bf16.xpose.msra.mxu0 %v2670
        %2674 = vmatprep.subr.bf16.mxu0 0
        %2675 = vmatpush1.bf16.xpose.msra.mxu0 0
        %2676 = vmatprep.subr.bf16.mxu0 0
        %2677 = vmatpush1.bf16.xpose.msra.mxu0 0
        %2678 = vmatprep.subr.bf16.mxu0 0
        %2679 = vmatpush1.bf16.xpose.msra.mxu0 0
        %2680 = vmatprep.subr.bf16.mxu0 0
        %2681 = vmatpush1.bf16.xpose.msra.mxu0 0
        %2682 = vmatprep.subr.bf16.mxu0 0
        %2683 = vmatpush1.bf16.xpose.msra.mxu0 0
        %2684 = vmatprep.subr.bf16.mxu0 0
        %2685 = vmatpush1.bf16.xpose.msra.mxu0 0
        %2686 = vmatprep.subr.bf16.mxu0 0
        %2687 = vmatpush1.bf16.xpose.msra.mxu0 0
        %2688 = vmatprep.subr.bf16.mxu0 0
        %2689 = vmatpush1.bf16.xpose.msra.mxu0 0
        %2690 = vmatprep.subr.bf16.mxu0 0
        %2691 = vmatpush1.bf16.xpose.msra.mxu0 0
        %2692 = vmatprep.subr.bf16.mxu0 0
        %2693 = vmatpush1.bf16.xpose.msra.mxu0 0
        %2694 = vmatprep.subr.bf16.mxu0 0
        %2695 = vmatpush1.bf16.xpose.msra.mxu0 0
        %2696 = vmatprep.subr.bf16.mxu0 0
        %2697 = vmatpush1.bf16.xpose.msra.mxu0 0
        %2698 = vmatprep.subr.bf16.mxu0 0
        %2699 = vmatpush1.bf16.xpose.msra.mxu0 0
        %2700 = vmatprep.subr.bf16.mxu0 0
        %2701 = vmatpush1.bf16.xpose.msra.mxu0 0
        %2702 = vmatprep.subr.bf16.mxu0 0
        %2703 = vmatpush1.bf16.xpose.msra.mxu0 0
        %2704 = vmatprep.mubr.bf16.mxu0 0
        %2705 = vmatmul.mubr.bf16.gmra.mrb[0].mxu0 %v2667
        %v2706 = vpop.f32.mrb[0].mxu0
        %v2707 = vadd.f32 0.0, %v2706
        %v2708 = vpop.f32.mrb[0].mxu0
        %v2709 = vpop.f32.mrb[0].mxu0
        %v2710 = vadd.f32 0.0, %v2709
        %v2711 = vpop.f32.mrb[0].mxu0
        %2712 = vdwg.mxu0
        %2714 = vrot.lane.b32.xlu0 %v1668, 96
        %v2715 = vpop.permute.xlu0 %2714
        %v2717 = vsel %vm1715, %v1668, 0
        %v2720 = vsel %vm1715, %v2715, 0
        %2722 = vmatprep.subr.bf16.mxu0 0
        %2723 = vmatpush1.bf16.xpose.msra.mxu0 %v2720
        %2724 = vmatprep.subr.bf16.mxu0 0
        %2725 = vmatpush1.bf16.xpose.msra.mxu0 0
        %2726 = vmatprep.subr.bf16.mxu0 0
        %2727 = vmatpush1.bf16.xpose.msra.mxu0 0
        %2728 = vmatprep.subr.bf16.mxu0 0
        %2729 = vmatpush1.bf16.xpose.msra.mxu0 0
        %2730 = vmatprep.subr.bf16.mxu0 0
        %2731 = vmatpush1.bf16.xpose.msra.mxu0 0
        %2732 = vmatprep.subr.bf16.mxu0 0
        %2733 = vmatpush1.bf16.xpose.msra.mxu0 0
        %2734 = vmatprep.subr.bf16.mxu0 0
        %2735 = vmatpush1.bf16.xpose.msra.mxu0 0
        %2736 = vmatprep.subr.bf16.mxu0 0
        %2737 = vmatpush1.bf16.xpose.msra.mxu0 0
        %2738 = vmatprep.subr.bf16.mxu0 0
        %2739 = vmatpush1.bf16.xpose.msra.mxu0 0
        %2740 = vmatprep.subr.bf16.mxu0 0
        %2741 = vmatpush1.bf16.xpose.msra.mxu0 0
        %2742 = vmatprep.subr.bf16.mxu0 0
        %2743 = vmatpush1.bf16.xpose.msra.mxu0 0
        %2744 = vmatprep.subr.bf16.mxu0 0
        %2745 = vmatpush1.bf16.xpose.msra.mxu0 0
        %2746 = vmatprep.subr.bf16.mxu0 0
        %2747 = vmatpush1.bf16.xpose.msra.mxu0 0
        %2748 = vmatprep.subr.bf16.mxu0 0
        %2749 = vmatpush1.bf16.xpose.msra.mxu0 0
        %2750 = vmatprep.subr.bf16.mxu0 0
        %2751 = vmatpush1.bf16.xpose.msra.mxu0 0
        %2752 = vmatprep.subr.bf16.mxu0 0
        %2753 = vmatpush1.bf16.xpose.msra.mxu0 0
        %2754 = vmatprep.mubr.bf16.mxu0 0
        %2755 = vmatmul.mubr.bf16.gmra.mrb[0].mxu0 %v2717
        %v2756 = vpop.f32.mrb[0].mxu0
        %v2757 = vadd.f32 0.0, %v2756
        %v2758 = vpop.f32.mrb[0].mxu0
        %v2759 = vpop.f32.mrb[0].mxu0
        %v2760 = vadd.f32 0.0, %v2759
        %v2761 = vpop.f32.mrb[0].mxu0
        %2762 = vdwg.mxu0
        %2764 = vrot.lane.b32.xlu0 %v1669, 96
        %v2765 = vpop.permute.xlu0 %2764
        %v2767 = vsel %vm1715, %v1669, 0
        %v2770 = vsel %vm1715, %v2765, 0
        %2772 = vmatprep.subr.bf16.mxu0 0
        %2773 = vmatpush1.bf16.xpose.msra.mxu0 %v2770
        %2774 = vmatprep.subr.bf16.mxu0 0
        %2775 = vmatpush1.bf16.xpose.msra.mxu0 0
        %2776 = vmatprep.subr.bf16.mxu0 0
        %2777 = vmatpush1.bf16.xpose.msra.mxu0 0
        %2778 = vmatprep.subr.bf16.mxu0 0
        %2779 = vmatpush1.bf16.xpose.msra.mxu0 0
        %2780 = vmatprep.subr.bf16.mxu0 0
        %2781 = vmatpush1.bf16.xpose.msra.mxu0 0
        %2782 = vmatprep.subr.bf16.mxu0 0
        %2783 = vmatpush1.bf16.xpose.msra.mxu0 0
        %2784 = vmatprep.subr.bf16.mxu0 0
        %2785 = vmatpush1.bf16.xpose.msra.mxu0 0
        %2786 = vmatprep.subr.bf16.mxu0 0
        %2787 = vmatpush1.bf16.xpose.msra.mxu0 0
        %2788 = vmatprep.subr.bf16.mxu0 0
        %2789 = vmatpush1.bf16.xpose.msra.mxu0 0
        %2790 = vmatprep.subr.bf16.mxu0 0
        %2791 = vmatpush1.bf16.xpose.msra.mxu0 0
        %2792 = vmatprep.subr.bf16.mxu0 0
        %2793 = vmatpush1.bf16.xpose.msra.mxu0 0
        %2794 = vmatprep.subr.bf16.mxu0 0
        %2795 = vmatpush1.bf16.xpose.msra.mxu0 0
        %2796 = vmatprep.subr.bf16.mxu0 0
        %2797 = vmatpush1.bf16.xpose.msra.mxu0 0
        %2798 = vmatprep.subr.bf16.mxu0 0
        %2799 = vmatpush1.bf16.xpose.msra.mxu0 0
        %2800 = vmatprep.subr.bf16.mxu0 0
        %2801 = vmatpush1.bf16.xpose.msra.mxu0 0
        %2802 = vmatprep.subr.bf16.mxu0 0
        %2803 = vmatpush1.bf16.xpose.msra.mxu0 0
        %2804 = vmatprep.mubr.bf16.mxu0 0
        %2805 = vmatmul.mubr.bf16.gmra.mrb[0].mxu0 %v2767
        %v2806 = vpop.f32.mrb[0].mxu0
        %v2807 = vadd.f32 0.0, %v2806
        %v2808 = vpop.f32.mrb[0].mxu0
        %v2809 = vpop.f32.mrb[0].mxu0
        %v2810 = vadd.f32 0.0, %v2809
        %v2811 = vpop.f32.mrb[0].mxu0
        %2812 = vdwg.mxu0
        %2814 = vrot.lane.b32.xlu0 %v1670, 96
        %v2815 = vpop.permute.xlu0 %2814
        %v2817 = vsel %vm1715, %v1670, 0
        %v2820 = vsel %vm1715, %v2815, 0
        %2822 = vmatprep.subr.bf16.mxu0 0
        %2823 = vmatpush1.bf16.xpose.msra.mxu0 %v2820
        %2824 = vmatprep.subr.bf16.mxu0 0
        %2825 = vmatpush1.bf16.xpose.msra.mxu0 0
        %2826 = vmatprep.subr.bf16.mxu0 0
        %2827 = vmatpush1.bf16.xpose.msra.mxu0 0
        %2828 = vmatprep.subr.bf16.mxu0 0
        %2829 = vmatpush1.bf16.xpose.msra.mxu0 0
        %2830 = vmatprep.subr.bf16.mxu0 0
        %2831 = vmatpush1.bf16.xpose.msra.mxu0 0
        %2832 = vmatprep.subr.bf16.mxu0 0
        %2833 = vmatpush1.bf16.xpose.msra.mxu0 0
        %2834 = vmatprep.subr.bf16.mxu0 0
        %2835 = vmatpush1.bf16.xpose.msra.mxu0 0
        %2836 = vmatprep.subr.bf16.mxu0 0
        %2837 = vmatpush1.bf16.xpose.msra.mxu0 0
        %2838 = vmatprep.subr.bf16.mxu0 0
        %2839 = vmatpush1.bf16.xpose.msra.mxu0 0
        %2840 = vmatprep.subr.bf16.mxu0 0
        %2841 = vmatpush1.bf16.xpose.msra.mxu0 0
        %2842 = vmatprep.subr.bf16.mxu0 0
        %2843 = vmatpush1.bf16.xpose.msra.mxu0 0
        %2844 = vmatprep.subr.bf16.mxu0 0
        %2845 = vmatpush1.bf16.xpose.msra.mxu0 0
        %2846 = vmatprep.subr.bf16.mxu0 0
        %2847 = vmatpush1.bf16.xpose.msra.mxu0 0
        %2848 = vmatprep.subr.bf16.mxu0 0
        %2849 = vmatpush1.bf16.xpose.msra.mxu0 0
        %2850 = vmatprep.subr.bf16.mxu0 0
        %2851 = vmatpush1.bf16.xpose.msra.mxu0 0
        %2852 = vmatprep.subr.bf16.mxu0 0
        %2853 = vmatpush1.bf16.xpose.msra.mxu0 0
        %2854 = vmatprep.mubr.bf16.mxu0 0
        %2855 = vmatmul.mubr.bf16.gmra.mrb[0].mxu0 %v2817
        %v2856 = vpop.f32.mrb[0].mxu0
        %v2857 = vadd.f32 0.0, %v2856
        %v2858 = vpop.f32.mrb[0].mxu0
        %v2859 = vpop.f32.mrb[0].mxu0
        %v2860 = vadd.f32 0.0, %v2859
        %v2861 = vpop.f32.mrb[0].mxu0
        %2862 = vdwg.mxu0
        %2864 = vrot.lane.b32.xlu0 %v1671, 96
        %v2865 = vpop.permute.xlu0 %2864
        %v2867 = vsel %vm1715, %v1671, 0
        %v2870 = vsel %vm1715, %v2865, 0
        %2872 = vmatprep.subr.bf16.mxu0 0
        %2873 = vmatpush1.bf16.xpose.msra.mxu0 %v2870
        %2874 = vmatprep.subr.bf16.mxu0 0
        %2875 = vmatpush1.bf16.xpose.msra.mxu0 0
        %2876 = vmatprep.subr.bf16.mxu0 0
        %2877 = vmatpush1.bf16.xpose.msra.mxu0 0
        %2878 = vmatprep.subr.bf16.mxu0 0
        %2879 = vmatpush1.bf16.xpose.msra.mxu0 0
        %2880 = vmatprep.subr.bf16.mxu0 0
        %2881 = vmatpush1.bf16.xpose.msra.mxu0 0
        %2882 = vmatprep.subr.bf16.mxu0 0
        %2883 = vmatpush1.bf16.xpose.msra.mxu0 0
        %2884 = vmatprep.subr.bf16.mxu0 0
        %2885 = vmatpush1.bf16.xpose.msra.mxu0 0
        %2886 = vmatprep.subr.bf16.mxu0 0
        %2887 = vmatpush1.bf16.xpose.msra.mxu0 0
        %2888 = vmatprep.subr.bf16.mxu0 0
        %2889 = vmatpush1.bf16.xpose.msra.mxu0 0
        %2890 = vmatprep.subr.bf16.mxu0 0
        %2891 = vmatpush1.bf16.xpose.msra.mxu0 0
        %2892 = vmatprep.subr.bf16.mxu0 0
        %2893 = vmatpush1.bf16.xpose.msra.mxu0 0
        %2894 = vmatprep.subr.bf16.mxu0 0
        %2895 = vmatpush1.bf16.xpose.msra.mxu0 0
        %2896 = vmatprep.subr.bf16.mxu0 0
        %2897 = vmatpush1.bf16.xpose.msra.mxu0 0
        %2898 = vmatprep.subr.bf16.mxu0 0
        %2899 = vmatpush1.bf16.xpose.msra.mxu0 0
        %2900 = vmatprep.subr.bf16.mxu0 0
        %2901 = vmatpush1.bf16.xpose.msra.mxu0 0
        %2902 = vmatprep.subr.bf16.mxu0 0
        %2903 = vmatpush1.bf16.xpose.msra.mxu0 0
        %2904 = vmatprep.mubr.bf16.mxu0 0
        %2905 = vmatmul.mubr.bf16.gmra.mrb[0].mxu0 %v2867
        %v2906 = vpop.f32.mrb[0].mxu0
        %v2907 = vadd.f32 0.0, %v2906
        %v2908 = vpop.f32.mrb[0].mxu0
        %v2909 = vpop.f32.mrb[0].mxu0
        %v2910 = vadd.f32 0.0, %v2909
        %v2911 = vpop.f32.mrb[0].mxu0
        %2912 = vdwg.mxu0
        %2914 = vrot.lane.b32.xlu0 %v1672, 96
        %v2915 = vpop.permute.xlu0 %2914
        %v2917 = vsel %vm1715, %v1672, 0
        %v2920 = vsel %vm1715, %v2915, 0
        %2922 = vmatprep.subr.bf16.mxu0 0
        %2923 = vmatpush1.bf16.xpose.msra.mxu0 %v2920
        %2924 = vmatprep.subr.bf16.mxu0 0
        %2925 = vmatpush1.bf16.xpose.msra.mxu0 0
        %2926 = vmatprep.subr.bf16.mxu0 0
        %2927 = vmatpush1.bf16.xpose.msra.mxu0 0
        %2928 = vmatprep.subr.bf16.mxu0 0
        %2929 = vmatpush1.bf16.xpose.msra.mxu0 0
        %2930 = vmatprep.subr.bf16.mxu0 0
        %2931 = vmatpush1.bf16.xpose.msra.mxu0 0
        %2932 = vmatprep.subr.bf16.mxu0 0
        %2933 = vmatpush1.bf16.xpose.msra.mxu0 0
        %2934 = vmatprep.subr.bf16.mxu0 0
        %2935 = vmatpush1.bf16.xpose.msra.mxu0 0
        %2936 = vmatprep.subr.bf16.mxu0 0
        %2937 = vmatpush1.bf16.xpose.msra.mxu0 0
        %2938 = vmatprep.subr.bf16.mxu0 0
        %2939 = vmatpush1.bf16.xpose.msra.mxu0 0
        %2940 = vmatprep.subr.bf16.mxu0 0
        %2941 = vmatpush1.bf16.xpose.msra.mxu0 0
        %2942 = vmatprep.subr.bf16.mxu0 0
        %2943 = vmatpush1.bf16.xpose.msra.mxu0 0
        %2944 = vmatprep.subr.bf16.mxu0 0
        %2945 = vmatpush1.bf16.xpose.msra.mxu0 0
        %2946 = vmatprep.subr.bf16.mxu0 0
        %2947 = vmatpush1.bf16.xpose.msra.mxu0 0
        %2948 = vmatprep.subr.bf16.mxu0 0
        %2949 = vmatpush1.bf16.xpose.msra.mxu0 0
        %2950 = vmatprep.subr.bf16.mxu0 0
        %2951 = vmatpush1.bf16.xpose.msra.mxu0 0
        %2952 = vmatprep.subr.bf16.mxu0 0
        %2953 = vmatpush1.bf16.xpose.msra.mxu0 0
        %2954 = vmatprep.mubr.bf16.mxu0 0
        %2955 = vmatmul.mubr.bf16.gmra.mrb[0].mxu0 %v2917
        %v2956 = vpop.f32.mrb[0].mxu0
        %v2957 = vadd.f32 0.0, %v2956
        %v2958 = vpop.f32.mrb[0].mxu0
        %v2959 = vpop.f32.mrb[0].mxu0
        %v2960 = vadd.f32 0.0, %v2959
        %v2961 = vpop.f32.mrb[0].mxu0
        %2962 = vdwg.mxu0
        %2964 = vrot.lane.b32.xlu0 %v1673, 96
        %v2965 = vpop.permute.xlu0 %2964
        %v2967 = vsel %vm1715, %v1673, 0
        %v2970 = vsel %vm1715, %v2965, 0
        %2972 = vmatprep.subr.bf16.mxu0 0
        %2973 = vmatpush1.bf16.xpose.msra.mxu0 %v2970
        %2974 = vmatprep.subr.bf16.mxu0 0
        %2975 = vmatpush1.bf16.xpose.msra.mxu0 0
        %2976 = vmatprep.subr.bf16.mxu0 0
        %2977 = vmatpush1.bf16.xpose.msra.mxu0 0
        %2978 = vmatprep.subr.bf16.mxu0 0
        %2979 = vmatpush1.bf16.xpose.msra.mxu0 0
        %2980 = vmatprep.subr.bf16.mxu0 0
        %2981 = vmatpush1.bf16.xpose.msra.mxu0 0
        %2982 = vmatprep.subr.bf16.mxu0 0
        %2983 = vmatpush1.bf16.xpose.msra.mxu0 0
        %2984 = vmatprep.subr.bf16.mxu0 0
        %2985 = vmatpush1.bf16.xpose.msra.mxu0 0
        %2986 = vmatprep.subr.bf16.mxu0 0
        %2987 = vmatpush1.bf16.xpose.msra.mxu0 0
        %2988 = vmatprep.subr.bf16.mxu0 0
        %2989 = vmatpush1.bf16.xpose.msra.mxu0 0
        %2990 = vmatprep.subr.bf16.mxu0 0
        %2991 = vmatpush1.bf16.xpose.msra.mxu0 0
        %2992 = vmatprep.subr.bf16.mxu0 0
        %2993 = vmatpush1.bf16.xpose.msra.mxu0 0
        %2994 = vmatprep.subr.bf16.mxu0 0
        %2995 = vmatpush1.bf16.xpose.msra.mxu0 0
        %2996 = vmatprep.subr.bf16.mxu0 0
        %2997 = vmatpush1.bf16.xpose.msra.mxu0 0
        %2998 = vmatprep.subr.bf16.mxu0 0
        %2999 = vmatpush1.bf16.xpose.msra.mxu0 0
        %3000 = vmatprep.subr.bf16.mxu0 0
        %3001 = vmatpush1.bf16.xpose.msra.mxu0 0
        %3002 = vmatprep.subr.bf16.mxu0 0
        %3003 = vmatpush1.bf16.xpose.msra.mxu0 0
        %3004 = vmatprep.mubr.bf16.mxu0 0
        %3005 = vmatmul.mubr.bf16.gmra.mrb[0].mxu0 %v2967
        %v3006 = vpop.f32.mrb[0].mxu0
        %v3007 = vadd.f32 0.0, %v3006
        %v3008 = vpop.f32.mrb[0].mxu0
        %v3009 = vpop.f32.mrb[0].mxu0
        %v3010 = vadd.f32 0.0, %v3009
        %v3011 = vpop.f32.mrb[0].mxu0
        %3012 = vdwg.mxu0
        %3014 = vrot.lane.b32.xlu0 %v1674, 96
        %v3015 = vpop.permute.xlu0 %3014
        %v3017 = vsel %vm1715, %v1674, 0
        %v3020 = vsel %vm1715, %v3015, 0
        %3022 = vmatprep.subr.bf16.mxu0 0
        %3023 = vmatpush1.bf16.xpose.msra.mxu0 %v3020
        %3024 = vmatprep.subr.bf16.mxu0 0
        %3025 = vmatpush1.bf16.xpose.msra.mxu0 0
        %3026 = vmatprep.subr.bf16.mxu0 0
        %3027 = vmatpush1.bf16.xpose.msra.mxu0 0
        %3028 = vmatprep.subr.bf16.mxu0 0
        %3029 = vmatpush1.bf16.xpose.msra.mxu0 0
        %3030 = vmatprep.subr.bf16.mxu0 0
        %3031 = vmatpush1.bf16.xpose.msra.mxu0 0
        %3032 = vmatprep.subr.bf16.mxu0 0
        %3033 = vmatpush1.bf16.xpose.msra.mxu0 0
        %3034 = vmatprep.subr.bf16.mxu0 0
        %3035 = vmatpush1.bf16.xpose.msra.mxu0 0
        %3036 = vmatprep.subr.bf16.mxu0 0
        %3037 = vmatpush1.bf16.xpose.msra.mxu0 0
        %3038 = vmatprep.subr.bf16.mxu0 0
        %3039 = vmatpush1.bf16.xpose.msra.mxu0 0
        %3040 = vmatprep.subr.bf16.mxu0 0
        %3041 = vmatpush1.bf16.xpose.msra.mxu0 0
        %3042 = vmatprep.subr.bf16.mxu0 0
        %3043 = vmatpush1.bf16.xpose.msra.mxu0 0
        %3044 = vmatprep.subr.bf16.mxu0 0
        %3045 = vmatpush1.bf16.xpose.msra.mxu0 0
        %3046 = vmatprep.subr.bf16.mxu0 0
        %3047 = vmatpush1.bf16.xpose.msra.mxu0 0
        %3048 = vmatprep.subr.bf16.mxu0 0
        %3049 = vmatpush1.bf16.xpose.msra.mxu0 0
        %3050 = vmatprep.subr.bf16.mxu0 0
        %3051 = vmatpush1.bf16.xpose.msra.mxu0 0
        %3052 = vmatprep.subr.bf16.mxu0 0
        %3053 = vmatpush1.bf16.xpose.msra.mxu0 0
        %3054 = vmatprep.mubr.bf16.mxu0 0
        %3055 = vmatmul.mubr.bf16.gmra.mrb[0].mxu0 %v3017
        %v3056 = vpop.f32.mrb[0].mxu0
        %v3057 = vadd.f32 0.0, %v3056
        %v3058 = vpop.f32.mrb[0].mxu0
        %v3059 = vpop.f32.mrb[0].mxu0
        %v3060 = vadd.f32 0.0, %v3059
        %v3061 = vpop.f32.mrb[0].mxu0
        %3062 = vdwg.mxu0
        %3064 = vrot.lane.b32.xlu0 %v1675, 96
        %v3065 = vpop.permute.xlu0 %3064
        %v3067 = vsel %vm1715, %v1675, 0
        %v3070 = vsel %vm1715, %v3065, 0
        %3072 = vmatprep.subr.bf16.mxu0 0
        %3073 = vmatpush1.bf16.xpose.msra.mxu0 %v3070
        %3074 = vmatprep.subr.bf16.mxu0 0
        %3075 = vmatpush1.bf16.xpose.msra.mxu0 0
        %3076 = vmatprep.subr.bf16.mxu0 0
        %3077 = vmatpush1.bf16.xpose.msra.mxu0 0
        %3078 = vmatprep.subr.bf16.mxu0 0
        %3079 = vmatpush1.bf16.xpose.msra.mxu0 0
        %3080 = vmatprep.subr.bf16.mxu0 0
        %3081 = vmatpush1.bf16.xpose.msra.mxu0 0
        %3082 = vmatprep.subr.bf16.mxu0 0
        %3083 = vmatpush1.bf16.xpose.msra.mxu0 0
        %3084 = vmatprep.subr.bf16.mxu0 0
        %3085 = vmatpush1.bf16.xpose.msra.mxu0 0
        %3086 = vmatprep.subr.bf16.mxu0 0
        %3087 = vmatpush1.bf16.xpose.msra.mxu0 0
        %3088 = vmatprep.subr.bf16.mxu0 0
        %3089 = vmatpush1.bf16.xpose.msra.mxu0 0
        %3090 = vmatprep.subr.bf16.mxu0 0
        %3091 = vmatpush1.bf16.xpose.msra.mxu0 0
        %3092 = vmatprep.subr.bf16.mxu0 0
        %3093 = vmatpush1.bf16.xpose.msra.mxu0 0
        %3094 = vmatprep.subr.bf16.mxu0 0
        %3095 = vmatpush1.bf16.xpose.msra.mxu0 0
        %3096 = vmatprep.subr.bf16.mxu0 0
        %3097 = vmatpush1.bf16.xpose.msra.mxu0 0
        %3098 = vmatprep.subr.bf16.mxu0 0
        %3099 = vmatpush1.bf16.xpose.msra.mxu0 0
        %3100 = vmatprep.subr.bf16.mxu0 0
        %3101 = vmatpush1.bf16.xpose.msra.mxu0 0
        %3102 = vmatprep.subr.bf16.mxu0 0
        %3103 = vmatpush1.bf16.xpose.msra.mxu0 0
        %3104 = vmatprep.mubr.bf16.mxu0 0
        %3105 = vmatmul.mubr.bf16.gmra.mrb[0].mxu0 %v3067
        %v3106 = vpop.f32.mrb[0].mxu0
        %v3107 = vadd.f32 0.0, %v3106
        %v3108 = vpop.f32.mrb[0].mxu0
        %v3109 = vpop.f32.mrb[0].mxu0
        %v3110 = vadd.f32 0.0, %v3109
        %v3111 = vpop.f32.mrb[0].mxu0
        %3112 = vdwg.mxu0
        %3114 = vrot.lane.b32.xlu0 %v1676, 96
        %v3115 = vpop.permute.xlu0 %3114
        %v3117 = vsel %vm1715, %v1676, 0
        %v3120 = vsel %vm1715, %v3115, 0
        %3122 = vmatprep.subr.bf16.mxu0 0
        %3123 = vmatpush1.bf16.xpose.msra.mxu0 %v3120
        %3124 = vmatprep.subr.bf16.mxu0 0
        %3125 = vmatpush1.bf16.xpose.msra.mxu0 0
        %3126 = vmatprep.subr.bf16.mxu0 0
        %3127 = vmatpush1.bf16.xpose.msra.mxu0 0
        %3128 = vmatprep.subr.bf16.mxu0 0
        %3129 = vmatpush1.bf16.xpose.msra.mxu0 0
        %3130 = vmatprep.subr.bf16.mxu0 0
        %3131 = vmatpush1.bf16.xpose.msra.mxu0 0
        %3132 = vmatprep.subr.bf16.mxu0 0
        %3133 = vmatpush1.bf16.xpose.msra.mxu0 0
        %3134 = vmatprep.subr.bf16.mxu0 0
        %3135 = vmatpush1.bf16.xpose.msra.mxu0 0
        %3136 = vmatprep.subr.bf16.mxu0 0
        %3137 = vmatpush1.bf16.xpose.msra.mxu0 0
        %3138 = vmatprep.subr.bf16.mxu0 0
        %3139 = vmatpush1.bf16.xpose.msra.mxu0 0
        %3140 = vmatprep.subr.bf16.mxu0 0
        %3141 = vmatpush1.bf16.xpose.msra.mxu0 0
        %3142 = vmatprep.subr.bf16.mxu0 0
        %3143 = vmatpush1.bf16.xpose.msra.mxu0 0
        %3144 = vmatprep.subr.bf16.mxu0 0
        %3145 = vmatpush1.bf16.xpose.msra.mxu0 0
        %3146 = vmatprep.subr.bf16.mxu0 0
        %3147 = vmatpush1.bf16.xpose.msra.mxu0 0
        %3148 = vmatprep.subr.bf16.mxu0 0
        %3149 = vmatpush1.bf16.xpose.msra.mxu0 0
        %3150 = vmatprep.subr.bf16.mxu0 0
        %3151 = vmatpush1.bf16.xpose.msra.mxu0 0
        %3152 = vmatprep.subr.bf16.mxu0 0
        %3153 = vmatpush1.bf16.xpose.msra.mxu0 0
        %3154 = vmatprep.mubr.bf16.mxu0 0
        %3155 = vmatmul.mubr.bf16.gmra.mrb[0].mxu0 %v3117
        %v3156 = vpop.f32.mrb[0].mxu0
        %v3157 = vadd.f32 0.0, %v3156
        %v3158 = vpop.f32.mrb[0].mxu0
        %v3159 = vpop.f32.mrb[0].mxu0
        %v3160 = vadd.f32 0.0, %v3159
        %v3161 = vpop.f32.mrb[0].mxu0
        %3162 = vdwg.mxu0
        %3164 = vrot.lane.b32.xlu0 %v1677, 96
        %v3165 = vpop.permute.xlu0 %3164
        %v3167 = vsel %vm1715, %v1677, 0
        %v3170 = vsel %vm1715, %v3165, 0
        %3172 = vmatprep.subr.bf16.mxu0 0
        %3173 = vmatpush1.bf16.xpose.msra.mxu0 %v3170
        %3174 = vmatprep.subr.bf16.mxu0 0
        %3175 = vmatpush1.bf16.xpose.msra.mxu0 0
        %3176 = vmatprep.subr.bf16.mxu0 0
        %3177 = vmatpush1.bf16.xpose.msra.mxu0 0
        %3178 = vmatprep.subr.bf16.mxu0 0
        %3179 = vmatpush1.bf16.xpose.msra.mxu0 0
        %3180 = vmatprep.subr.bf16.mxu0 0
        %3181 = vmatpush1.bf16.xpose.msra.mxu0 0
        %3182 = vmatprep.subr.bf16.mxu0 0
        %3183 = vmatpush1.bf16.xpose.msra.mxu0 0
        %3184 = vmatprep.subr.bf16.mxu0 0
        %3185 = vmatpush1.bf16.xpose.msra.mxu0 0
        %3186 = vmatprep.subr.bf16.mxu0 0
        %3187 = vmatpush1.bf16.xpose.msra.mxu0 0
        %3188 = vmatprep.subr.bf16.mxu0 0
        %3189 = vmatpush1.bf16.xpose.msra.mxu0 0
        %3190 = vmatprep.subr.bf16.mxu0 0
        %3191 = vmatpush1.bf16.xpose.msra.mxu0 0
        %3192 = vmatprep.subr.bf16.mxu0 0
        %3193 = vmatpush1.bf16.xpose.msra.mxu0 0
        %3194 = vmatprep.subr.bf16.mxu0 0
        %3195 = vmatpush1.bf16.xpose.msra.mxu0 0
        %3196 = vmatprep.subr.bf16.mxu0 0
        %3197 = vmatpush1.bf16.xpose.msra.mxu0 0
        %3198 = vmatprep.subr.bf16.mxu0 0
        %3199 = vmatpush1.bf16.xpose.msra.mxu0 0
        %3200 = vmatprep.subr.bf16.mxu0 0
        %3201 = vmatpush1.bf16.xpose.msra.mxu0 0
        %3202 = vmatprep.subr.bf16.mxu0 0
        %3203 = vmatpush1.bf16.xpose.msra.mxu0 0
        %3204 = vmatprep.mubr.bf16.mxu0 0
        %3205 = vmatmul.mubr.bf16.gmra.mrb[0].mxu0 %v3167
        %v3206 = vpop.f32.mrb[0].mxu0
        %v3207 = vadd.f32 0.0, %v3206
        %v3208 = vpop.f32.mrb[0].mxu0
        %v3209 = vpop.f32.mrb[0].mxu0
        %v3210 = vadd.f32 0.0, %v3209
        %v3211 = vpop.f32.mrb[0].mxu0
        %3212 = vdwg.mxu0
        %3214 = vrot.lane.b32.xlu0 %v1678, 96
        %v3215 = vpop.permute.xlu0 %3214
        %v3217 = vsel %vm1715, %v1678, 0
        %v3220 = vsel %vm1715, %v3215, 0
        %3222 = vmatprep.subr.bf16.mxu0 0
        %3223 = vmatpush1.bf16.xpose.msra.mxu0 %v3220
        %3224 = vmatprep.subr.bf16.mxu0 0
        %3225 = vmatpush1.bf16.xpose.msra.mxu0 0
        %3226 = vmatprep.subr.bf16.mxu0 0
        %3227 = vmatpush1.bf16.xpose.msra.mxu0 0
        %3228 = vmatprep.subr.bf16.mxu0 0
        %3229 = vmatpush1.bf16.xpose.msra.mxu0 0
        %3230 = vmatprep.subr.bf16.mxu0 0
        %3231 = vmatpush1.bf16.xpose.msra.mxu0 0
        %3232 = vmatprep.subr.bf16.mxu0 0
        %3233 = vmatpush1.bf16.xpose.msra.mxu0 0
        %3234 = vmatprep.subr.bf16.mxu0 0
        %3235 = vmatpush1.bf16.xpose.msra.mxu0 0
        %3236 = vmatprep.subr.bf16.mxu0 0
        %3237 = vmatpush1.bf16.xpose.msra.mxu0 0
        %3238 = vmatprep.subr.bf16.mxu0 0
        %3239 = vmatpush1.bf16.xpose.msra.mxu0 0
        %3240 = vmatprep.subr.bf16.mxu0 0
        %3241 = vmatpush1.bf16.xpose.msra.mxu0 0
        %3242 = vmatprep.subr.bf16.mxu0 0
        %3243 = vmatpush1.bf16.xpose.msra.mxu0 0
        %3244 = vmatprep.subr.bf16.mxu0 0
        %3245 = vmatpush1.bf16.xpose.msra.mxu0 0
        %3246 = vmatprep.subr.bf16.mxu0 0
        %3247 = vmatpush1.bf16.xpose.msra.mxu0 0
        %3248 = vmatprep.subr.bf16.mxu0 0
        %3249 = vmatpush1.bf16.xpose.msra.mxu0 0
        %3250 = vmatprep.subr.bf16.mxu0 0
        %3251 = vmatpush1.bf16.xpose.msra.mxu0 0
        %3252 = vmatprep.subr.bf16.mxu0 0
        %3253 = vmatpush1.bf16.xpose.msra.mxu0 0
        %3254 = vmatprep.mubr.bf16.mxu0 0
        %3255 = vmatmul.mubr.bf16.gmra.mrb[0].mxu0 %v3217
        %v3256 = vpop.f32.mrb[0].mxu0
        %v3257 = vadd.f32 0.0, %v3256
        %v3258 = vpop.f32.mrb[0].mxu0
        %v3259 = vpop.f32.mrb[0].mxu0
        %v3260 = vadd.f32 0.0, %v3259
        %v3261 = vpop.f32.mrb[0].mxu0
        %3262 = vdwg.mxu0
        %3264 = vrot.lane.b32.xlu0 %v1679, 96
        %v3265 = vpop.permute.xlu0 %3264
        %v3267 = vsel %vm1715, %v1679, 0
        %v3270 = vsel %vm1715, %v3265, 0
        %3272 = vmatprep.subr.bf16.mxu0 0
        %3273 = vmatpush1.bf16.xpose.msra.mxu0 %v3270
        %3274 = vmatprep.subr.bf16.mxu0 0
        %3275 = vmatpush1.bf16.xpose.msra.mxu0 0
        %3276 = vmatprep.subr.bf16.mxu0 0
        %3277 = vmatpush1.bf16.xpose.msra.mxu0 0
        %3278 = vmatprep.subr.bf16.mxu0 0
        %3279 = vmatpush1.bf16.xpose.msra.mxu0 0
        %3280 = vmatprep.subr.bf16.mxu0 0
        %3281 = vmatpush1.bf16.xpose.msra.mxu0 0
        %3282 = vmatprep.subr.bf16.mxu0 0
        %3283 = vmatpush1.bf16.xpose.msra.mxu0 0
        %3284 = vmatprep.subr.bf16.mxu0 0
        %3285 = vmatpush1.bf16.xpose.msra.mxu0 0
        %3286 = vmatprep.subr.bf16.mxu0 0
        %3287 = vmatpush1.bf16.xpose.msra.mxu0 0
        %3288 = vmatprep.subr.bf16.mxu0 0
        %3289 = vmatpush1.bf16.xpose.msra.mxu0 0
        %3290 = vmatprep.subr.bf16.mxu0 0
        %3291 = vmatpush1.bf16.xpose.msra.mxu0 0
        %3292 = vmatprep.subr.bf16.mxu0 0
        %3293 = vmatpush1.bf16.xpose.msra.mxu0 0
        %3294 = vmatprep.subr.bf16.mxu0 0
        %3295 = vmatpush1.bf16.xpose.msra.mxu0 0
        %3296 = vmatprep.subr.bf16.mxu0 0
        %3297 = vmatpush1.bf16.xpose.msra.mxu0 0
        %3298 = vmatprep.subr.bf16.mxu0 0
        %3299 = vmatpush1.bf16.xpose.msra.mxu0 0
        %3300 = vmatprep.subr.bf16.mxu0 0
        %3301 = vmatpush1.bf16.xpose.msra.mxu0 0
        %3302 = vmatprep.subr.bf16.mxu0 0
        %3303 = vmatpush1.bf16.xpose.msra.mxu0 0
        %3304 = vmatprep.mubr.bf16.mxu0 0
        %3305 = vmatmul.mubr.bf16.gmra.mrb[0].mxu0 %v3267
        %v3306 = vpop.f32.mrb[0].mxu0
        %v3307 = vadd.f32 0.0, %v3306
        %v3308 = vpop.f32.mrb[0].mxu0
        %v3309 = vpop.f32.mrb[0].mxu0
        %v3310 = vadd.f32 0.0, %v3309
        %v3311 = vpop.f32.mrb[0].mxu0
        %3312 = vdwg.mxu0
        %3314 = vrot.lane.b32.xlu0 %v1680, 96
        %v3315 = vpop.permute.xlu0 %3314
        %v3317 = vsel %vm1715, %v1680, 0
        %v3320 = vsel %vm1715, %v3315, 0
        %3322 = vmatprep.subr.bf16.mxu0 0
        %3323 = vmatpush1.bf16.xpose.msra.mxu0 %v3320
        %3324 = vmatprep.subr.bf16.mxu0 0
        %3325 = vmatpush1.bf16.xpose.msra.mxu0 0
        %3326 = vmatprep.subr.bf16.mxu0 0
        %3327 = vmatpush1.bf16.xpose.msra.mxu0 0
        %3328 = vmatprep.subr.bf16.mxu0 0
        %3329 = vmatpush1.bf16.xpose.msra.mxu0 0
        %3330 = vmatprep.subr.bf16.mxu0 0
        %3331 = vmatpush1.bf16.xpose.msra.mxu0 0
        %3332 = vmatprep.subr.bf16.mxu0 0
        %3333 = vmatpush1.bf16.xpose.msra.mxu0 0
        %3334 = vmatprep.subr.bf16.mxu0 0
        %3335 = vmatpush1.bf16.xpose.msra.mxu0 0
        %3336 = vmatprep.subr.bf16.mxu0 0
        %3337 = vmatpush1.bf16.xpose.msra.mxu0 0
        %3338 = vmatprep.subr.bf16.mxu0 0
        %3339 = vmatpush1.bf16.xpose.msra.mxu0 0
        %3340 = vmatprep.subr.bf16.mxu0 0
        %3341 = vmatpush1.bf16.xpose.msra.mxu0 0
        %3342 = vmatprep.subr.bf16.mxu0 0
        %3343 = vmatpush1.bf16.xpose.msra.mxu0 0
        %3344 = vmatprep.subr.bf16.mxu0 0
        %3345 = vmatpush1.bf16.xpose.msra.mxu0 0
        %3346 = vmatprep.subr.bf16.mxu0 0
        %3347 = vmatpush1.bf16.xpose.msra.mxu0 0
        %3348 = vmatprep.subr.bf16.mxu0 0
        %3349 = vmatpush1.bf16.xpose.msra.mxu0 0
        %3350 = vmatprep.subr.bf16.mxu0 0
        %3351 = vmatpush1.bf16.xpose.msra.mxu0 0
        %3352 = vmatprep.subr.bf16.mxu0 0
        %3353 = vmatpush1.bf16.xpose.msra.mxu0 0
        %3354 = vmatprep.mubr.bf16.mxu0 0
        %3355 = vmatmul.mubr.bf16.gmra.mrb[0].mxu0 %v3317
        %v3356 = vpop.f32.mrb[0].mxu0
        %v3357 = vadd.f32 0.0, %v3356
        %v3358 = vpop.f32.mrb[0].mxu0
        %v3359 = vpop.f32.mrb[0].mxu0
        %v3360 = vadd.f32 0.0, %v3359
        %v3361 = vpop.f32.mrb[0].mxu0
        %3362 = vdwg.mxu0
        %3364 = vrot.lane.b32.xlu0 %v1681, 96
        %v3365 = vpop.permute.xlu0 %3364
        %v3367 = vsel %vm1715, %v1681, 0
        %v3370 = vsel %vm1715, %v3365, 0
        %3372 = vmatprep.subr.bf16.mxu0 0
        %3373 = vmatpush1.bf16.xpose.msra.mxu0 %v3370
        %3374 = vmatprep.subr.bf16.mxu0 0
        %3375 = vmatpush1.bf16.xpose.msra.mxu0 0
        %3376 = vmatprep.subr.bf16.mxu0 0
        %3377 = vmatpush1.bf16.xpose.msra.mxu0 0
        %3378 = vmatprep.subr.bf16.mxu0 0
        %3379 = vmatpush1.bf16.xpose.msra.mxu0 0
        %3380 = vmatprep.subr.bf16.mxu0 0
        %3381 = vmatpush1.bf16.xpose.msra.mxu0 0
        %3382 = vmatprep.subr.bf16.mxu0 0
        %3383 = vmatpush1.bf16.xpose.msra.mxu0 0
        %3384 = vmatprep.subr.bf16.mxu0 0
        %3385 = vmatpush1.bf16.xpose.msra.mxu0 0
        %3386 = vmatprep.subr.bf16.mxu0 0
        %3387 = vmatpush1.bf16.xpose.msra.mxu0 0
        %3388 = vmatprep.subr.bf16.mxu0 0
        %3389 = vmatpush1.bf16.xpose.msra.mxu0 0
        %3390 = vmatprep.subr.bf16.mxu0 0
        %3391 = vmatpush1.bf16.xpose.msra.mxu0 0
        %3392 = vmatprep.subr.bf16.mxu0 0
        %3393 = vmatpush1.bf16.xpose.msra.mxu0 0
        %3394 = vmatprep.subr.bf16.mxu0 0
        %3395 = vmatpush1.bf16.xpose.msra.mxu0 0
        %3396 = vmatprep.subr.bf16.mxu0 0
        %3397 = vmatpush1.bf16.xpose.msra.mxu0 0
        %3398 = vmatprep.subr.bf16.mxu0 0
        %3399 = vmatpush1.bf16.xpose.msra.mxu0 0
        %3400 = vmatprep.subr.bf16.mxu0 0
        %3401 = vmatpush1.bf16.xpose.msra.mxu0 0
        %3402 = vmatprep.subr.bf16.mxu0 0
        %3403 = vmatpush1.bf16.xpose.msra.mxu0 0
        %3404 = vmatprep.mubr.bf16.mxu0 0
        %3405 = vmatmul.mubr.bf16.gmra.mrb[0].mxu0 %v3367
        %v3406 = vpop.f32.mrb[0].mxu0
        %v3407 = vadd.f32 0.0, %v3406
        %v3408 = vpop.f32.mrb[0].mxu0
        %v3409 = vpop.f32.mrb[0].mxu0
        %v3410 = vadd.f32 0.0, %v3409
        %v3411 = vpop.f32.mrb[0].mxu0
        %3412 = vdwg.mxu0
        %3414 = vrot.lane.b32.xlu0 %v1682, 96
        %v3415 = vpop.permute.xlu0 %3414
        %v3417 = vsel %vm1715, %v1682, 0
        %v3420 = vsel %vm1715, %v3415, 0
        %3422 = vmatprep.subr.bf16.mxu0 0
        %3423 = vmatpush1.bf16.xpose.msra.mxu0 %v3420
        %3424 = vmatprep.subr.bf16.mxu0 0
        %3425 = vmatpush1.bf16.xpose.msra.mxu0 0
        %3426 = vmatprep.subr.bf16.mxu0 0
        %3427 = vmatpush1.bf16.xpose.msra.mxu0 0
        %3428 = vmatprep.subr.bf16.mxu0 0
        %3429 = vmatpush1.bf16.xpose.msra.mxu0 0
        %3430 = vmatprep.subr.bf16.mxu0 0
        %3431 = vmatpush1.bf16.xpose.msra.mxu0 0
        %3432 = vmatprep.subr.bf16.mxu0 0
        %3433 = vmatpush1.bf16.xpose.msra.mxu0 0
        %3434 = vmatprep.subr.bf16.mxu0 0
        %3435 = vmatpush1.bf16.xpose.msra.mxu0 0
        %3436 = vmatprep.subr.bf16.mxu0 0
        %3437 = vmatpush1.bf16.xpose.msra.mxu0 0
        %3438 = vmatprep.subr.bf16.mxu0 0
        %3439 = vmatpush1.bf16.xpose.msra.mxu0 0
        %3440 = vmatprep.subr.bf16.mxu0 0
        %3441 = vmatpush1.bf16.xpose.msra.mxu0 0
        %3442 = vmatprep.subr.bf16.mxu0 0
        %3443 = vmatpush1.bf16.xpose.msra.mxu0 0
        %3444 = vmatprep.subr.bf16.mxu0 0
        %3445 = vmatpush1.bf16.xpose.msra.mxu0 0
        %3446 = vmatprep.subr.bf16.mxu0 0
        %3447 = vmatpush1.bf16.xpose.msra.mxu0 0
        %3448 = vmatprep.subr.bf16.mxu0 0
        %3449 = vmatpush1.bf16.xpose.msra.mxu0 0
        %3450 = vmatprep.subr.bf16.mxu0 0
        %3451 = vmatpush1.bf16.xpose.msra.mxu0 0
        %3452 = vmatprep.subr.bf16.mxu0 0
        %3453 = vmatpush1.bf16.xpose.msra.mxu0 0
        %3454 = vmatprep.mubr.bf16.mxu0 0
        %3455 = vmatmul.mubr.bf16.gmra.mrb[0].mxu0 %v3417
        %v3456 = vpop.f32.mrb[0].mxu0
        %v3457 = vadd.f32 0.0, %v3456
        %v3458 = vpop.f32.mrb[0].mxu0
        %v3459 = vpop.f32.mrb[0].mxu0
        %v3460 = vadd.f32 0.0, %v3459
        %v3461 = vpop.f32.mrb[0].mxu0
        %3462 = vdwg.mxu0
        %3464 = vrot.lane.b32.xlu0 %v1683, 96
        %v3465 = vpop.permute.xlu0 %3464
        %v3467 = vsel %vm1715, %v1683, 0
        %v3470 = vsel %vm1715, %v3465, 0
        %3472 = vmatprep.subr.bf16.mxu0 0
        %3473 = vmatpush1.bf16.xpose.msra.mxu0 %v3470
        %3474 = vmatprep.subr.bf16.mxu0 0
        %3475 = vmatpush1.bf16.xpose.msra.mxu0 0
        %3476 = vmatprep.subr.bf16.mxu0 0
        %3477 = vmatpush1.bf16.xpose.msra.mxu0 0
        %3478 = vmatprep.subr.bf16.mxu0 0
        %3479 = vmatpush1.bf16.xpose.msra.mxu0 0
        %3480 = vmatprep.subr.bf16.mxu0 0
        %3481 = vmatpush1.bf16.xpose.msra.mxu0 0
        %3482 = vmatprep.subr.bf16.mxu0 0
        %3483 = vmatpush1.bf16.xpose.msra.mxu0 0
        %3484 = vmatprep.subr.bf16.mxu0 0
        %3485 = vmatpush1.bf16.xpose.msra.mxu0 0
        %3486 = vmatprep.subr.bf16.mxu0 0
        %3487 = vmatpush1.bf16.xpose.msra.mxu0 0
        %3488 = vmatprep.subr.bf16.mxu0 0
        %3489 = vmatpush1.bf16.xpose.msra.mxu0 0
        %3490 = vmatprep.subr.bf16.mxu0 0
        %3491 = vmatpush1.bf16.xpose.msra.mxu0 0
        %3492 = vmatprep.subr.bf16.mxu0 0
        %3493 = vmatpush1.bf16.xpose.msra.mxu0 0
        %3494 = vmatprep.subr.bf16.mxu0 0
        %3495 = vmatpush1.bf16.xpose.msra.mxu0 0
        %3496 = vmatprep.subr.bf16.mxu0 0
        %3497 = vmatpush1.bf16.xpose.msra.mxu0 0
        %3498 = vmatprep.subr.bf16.mxu0 0
        %3499 = vmatpush1.bf16.xpose.msra.mxu0 0
        %3500 = vmatprep.subr.bf16.mxu0 0
        %3501 = vmatpush1.bf16.xpose.msra.mxu0 0
        %3502 = vmatprep.subr.bf16.mxu0 0
        %3503 = vmatpush1.bf16.xpose.msra.mxu0 0
        %3504 = vmatprep.mubr.bf16.mxu0 0
        %3505 = vmatmul.mubr.bf16.gmra.mrb[0].mxu0 %v3467
        %v3506 = vpop.f32.mrb[0].mxu0
        %v3507 = vadd.f32 0.0, %v3506
        %v3508 = vpop.f32.mrb[0].mxu0
        %v3509 = vpop.f32.mrb[0].mxu0
        %v3510 = vadd.f32 0.0, %v3509
        %v3511 = vpop.f32.mrb[0].mxu0
        %3512 = vdwg.mxu0
        %3514 = vrot.lane.b32.xlu0 %v1684, 96
        %v3515 = vpop.permute.xlu0 %3514
        %v3517 = vsel %vm1715, %v1684, 0
        %v3520 = vsel %vm1715, %v3515, 0
        %3522 = vmatprep.subr.bf16.mxu0 0
        %3523 = vmatpush1.bf16.xpose.msra.mxu0 %v3520
        %3524 = vmatprep.subr.bf16.mxu0 0
        %3525 = vmatpush1.bf16.xpose.msra.mxu0 0
        %3526 = vmatprep.subr.bf16.mxu0 0
        %3527 = vmatpush1.bf16.xpose.msra.mxu0 0
        %3528 = vmatprep.subr.bf16.mxu0 0
        %3529 = vmatpush1.bf16.xpose.msra.mxu0 0
        %3530 = vmatprep.subr.bf16.mxu0 0
        %3531 = vmatpush1.bf16.xpose.msra.mxu0 0
        %3532 = vmatprep.subr.bf16.mxu0 0
        %3533 = vmatpush1.bf16.xpose.msra.mxu0 0
        %3534 = vmatprep.subr.bf16.mxu0 0
        %3535 = vmatpush1.bf16.xpose.msra.mxu0 0
        %3536 = vmatprep.subr.bf16.mxu0 0
        %3537 = vmatpush1.bf16.xpose.msra.mxu0 0
        %3538 = vmatprep.subr.bf16.mxu0 0
        %3539 = vmatpush1.bf16.xpose.msra.mxu0 0
        %3540 = vmatprep.subr.bf16.mxu0 0
        %3541 = vmatpush1.bf16.xpose.msra.mxu0 0
        %3542 = vmatprep.subr.bf16.mxu0 0
        %3543 = vmatpush1.bf16.xpose.msra.mxu0 0
        %3544 = vmatprep.subr.bf16.mxu0 0
        %3545 = vmatpush1.bf16.xpose.msra.mxu0 0
        %3546 = vmatprep.subr.bf16.mxu0 0
        %3547 = vmatpush1.bf16.xpose.msra.mxu0 0
        %3548 = vmatprep.subr.bf16.mxu0 0
        %3549 = vmatpush1.bf16.xpose.msra.mxu0 0
        %3550 = vmatprep.subr.bf16.mxu0 0
        %3551 = vmatpush1.bf16.xpose.msra.mxu0 0
        %3552 = vmatprep.subr.bf16.mxu0 0
        %3553 = vmatpush1.bf16.xpose.msra.mxu0 0
        %3554 = vmatprep.mubr.bf16.mxu0 0
        %3555 = vmatmul.mubr.bf16.gmra.mrb[0].mxu0 %v3517
        %v3556 = vpop.f32.mrb[0].mxu0
        %v3557 = vadd.f32 0.0, %v3556
        %v3558 = vpop.f32.mrb[0].mxu0
        %v3559 = vpop.f32.mrb[0].mxu0
        %v3560 = vadd.f32 0.0, %v3559
        %v3561 = vpop.f32.mrb[0].mxu0
        %3562 = vdwg.mxu0
        %3564 = vrot.lane.b32.xlu0 %v1685, 96
        %v3565 = vpop.permute.xlu0 %3564
        %v3567 = vsel %vm1715, %v1685, 0
        %v3570 = vsel %vm1715, %v3565, 0
        %3572 = vmatprep.subr.bf16.mxu0 0
        %3573 = vmatpush1.bf16.xpose.msra.mxu0 %v3570
        %3574 = vmatprep.subr.bf16.mxu0 0
        %3575 = vmatpush1.bf16.xpose.msra.mxu0 0
        %3576 = vmatprep.subr.bf16.mxu0 0
        %3577 = vmatpush1.bf16.xpose.msra.mxu0 0
        %3578 = vmatprep.subr.bf16.mxu0 0
        %3579 = vmatpush1.bf16.xpose.msra.mxu0 0
        %3580 = vmatprep.subr.bf16.mxu0 0
        %3581 = vmatpush1.bf16.xpose.msra.mxu0 0
        %3582 = vmatprep.subr.bf16.mxu0 0
        %3583 = vmatpush1.bf16.xpose.msra.mxu0 0
        %3584 = vmatprep.subr.bf16.mxu0 0
        %3585 = vmatpush1.bf16.xpose.msra.mxu0 0
        %3586 = vmatprep.subr.bf16.mxu0 0
        %3587 = vmatpush1.bf16.xpose.msra.mxu0 0
        %3588 = vmatprep.subr.bf16.mxu0 0
        %3589 = vmatpush1.bf16.xpose.msra.mxu0 0
        %3590 = vmatprep.subr.bf16.mxu0 0
        %3591 = vmatpush1.bf16.xpose.msra.mxu0 0
        %3592 = vmatprep.subr.bf16.mxu0 0
        %3593 = vmatpush1.bf16.xpose.msra.mxu0 0
        %3594 = vmatprep.subr.bf16.mxu0 0
        %3595 = vmatpush1.bf16.xpose.msra.mxu0 0
        %3596 = vmatprep.subr.bf16.mxu0 0
        %3597 = vmatpush1.bf16.xpose.msra.mxu0 0
        %3598 = vmatprep.subr.bf16.mxu0 0
        %3599 = vmatpush1.bf16.xpose.msra.mxu0 0
        %3600 = vmatprep.subr.bf16.mxu0 0
        %3601 = vmatpush1.bf16.xpose.msra.mxu0 0
        %3602 = vmatprep.subr.bf16.mxu0 0
        %3603 = vmatpush1.bf16.xpose.msra.mxu0 0
        %3604 = vmatprep.mubr.bf16.mxu0 0
        %3605 = vmatmul.mubr.bf16.gmra.mrb[0].mxu0 %v3567
        %v3606 = vpop.f32.mrb[0].mxu0
        %v3607 = vadd.f32 0.0, %v3606
        %v3608 = vpop.f32.mrb[0].mxu0
        %v3609 = vpop.f32.mrb[0].mxu0
        %v3610 = vadd.f32 0.0, %v3609
        %v3611 = vpop.f32.mrb[0].mxu0
        %3612 = vdwg.mxu0
        %3614 = vrot.lane.b32.xlu0 %v1686, 96
        %v3615 = vpop.permute.xlu0 %3614
        %v3617 = vsel %vm1715, %v1686, 0
        %v3620 = vsel %vm1715, %v3615, 0
        %3622 = vmatprep.subr.bf16.mxu0 0
        %3623 = vmatpush1.bf16.xpose.msra.mxu0 %v3620
        %3624 = vmatprep.subr.bf16.mxu0 0
        %3625 = vmatpush1.bf16.xpose.msra.mxu0 0
        %3626 = vmatprep.subr.bf16.mxu0 0
        %3627 = vmatpush1.bf16.xpose.msra.mxu0 0
        %3628 = vmatprep.subr.bf16.mxu0 0
        %3629 = vmatpush1.bf16.xpose.msra.mxu0 0
        %3630 = vmatprep.subr.bf16.mxu0 0
        %3631 = vmatpush1.bf16.xpose.msra.mxu0 0
        %3632 = vmatprep.subr.bf16.mxu0 0
        %3633 = vmatpush1.bf16.xpose.msra.mxu0 0
        %3634 = vmatprep.subr.bf16.mxu0 0
        %3635 = vmatpush1.bf16.xpose.msra.mxu0 0
        %3636 = vmatprep.subr.bf16.mxu0 0
        %3637 = vmatpush1.bf16.xpose.msra.mxu0 0
        %3638 = vmatprep.subr.bf16.mxu0 0
        %3639 = vmatpush1.bf16.xpose.msra.mxu0 0
        %3640 = vmatprep.subr.bf16.mxu0 0
        %3641 = vmatpush1.bf16.xpose.msra.mxu0 0
        %3642 = vmatprep.subr.bf16.mxu0 0
        %3643 = vmatpush1.bf16.xpose.msra.mxu0 0
        %3644 = vmatprep.subr.bf16.mxu0 0
        %3645 = vmatpush1.bf16.xpose.msra.mxu0 0
        %3646 = vmatprep.subr.bf16.mxu0 0
        %3647 = vmatpush1.bf16.xpose.msra.mxu0 0
        %3648 = vmatprep.subr.bf16.mxu0 0
        %3649 = vmatpush1.bf16.xpose.msra.mxu0 0
        %3650 = vmatprep.subr.bf16.mxu0 0
        %3651 = vmatpush1.bf16.xpose.msra.mxu0 0
        %3652 = vmatprep.subr.bf16.mxu0 0
        %3653 = vmatpush1.bf16.xpose.msra.mxu0 0
        %3654 = vmatprep.mubr.bf16.mxu0 0
        %3655 = vmatmul.mubr.bf16.gmra.mrb[0].mxu0 %v3617
        %v3656 = vpop.f32.mrb[0].mxu0
        %v3657 = vadd.f32 0.0, %v3656
        %v3658 = vpop.f32.mrb[0].mxu0
        %v3659 = vpop.f32.mrb[0].mxu0
        %v3660 = vadd.f32 0.0, %v3659
        %v3661 = vpop.f32.mrb[0].mxu0
        %3662 = vdwg.mxu0
        %3664 = vrot.lane.b32.xlu0 %v1687, 96
        %v3665 = vpop.permute.xlu0 %3664
        %v3667 = vsel %vm1715, %v1687, 0
        %v3670 = vsel %vm1715, %v3665, 0
        %3672 = vmatprep.subr.bf16.mxu0 0
        %3673 = vmatpush1.bf16.xpose.msra.mxu0 %v3670
        %3674 = vmatprep.subr.bf16.mxu0 0
        %3675 = vmatpush1.bf16.xpose.msra.mxu0 0
        %3676 = vmatprep.subr.bf16.mxu0 0
        %3677 = vmatpush1.bf16.xpose.msra.mxu0 0
        %3678 = vmatprep.subr.bf16.mxu0 0
        %3679 = vmatpush1.bf16.xpose.msra.mxu0 0
        %3680 = vmatprep.subr.bf16.mxu0 0
        %3681 = vmatpush1.bf16.xpose.msra.mxu0 0
        %3682 = vmatprep.subr.bf16.mxu0 0
        %3683 = vmatpush1.bf16.xpose.msra.mxu0 0
        %3684 = vmatprep.subr.bf16.mxu0 0
        %3685 = vmatpush1.bf16.xpose.msra.mxu0 0
        %3686 = vmatprep.subr.bf16.mxu0 0
        %3687 = vmatpush1.bf16.xpose.msra.mxu0 0
        %3688 = vmatprep.subr.bf16.mxu0 0
        %3689 = vmatpush1.bf16.xpose.msra.mxu0 0
        %3690 = vmatprep.subr.bf16.mxu0 0
        %3691 = vmatpush1.bf16.xpose.msra.mxu0 0
        %3692 = vmatprep.subr.bf16.mxu0 0
        %3693 = vmatpush1.bf16.xpose.msra.mxu0 0
        %3694 = vmatprep.subr.bf16.mxu0 0
        %3695 = vmatpush1.bf16.xpose.msra.mxu0 0
        %3696 = vmatprep.subr.bf16.mxu0 0
        %3697 = vmatpush1.bf16.xpose.msra.mxu0 0
        %3698 = vmatprep.subr.bf16.mxu0 0
        %3699 = vmatpush1.bf16.xpose.msra.mxu0 0
        %3700 = vmatprep.subr.bf16.mxu0 0
        %3701 = vmatpush1.bf16.xpose.msra.mxu0 0
        %3702 = vmatprep.subr.bf16.mxu0 0
        %3703 = vmatpush1.bf16.xpose.msra.mxu0 0
        %3704 = vmatprep.mubr.bf16.mxu0 0
        %3705 = vmatmul.mubr.bf16.gmra.mrb[0].mxu0 %v3667
        %v3706 = vpop.f32.mrb[0].mxu0
        %v3707 = vadd.f32 0.0, %v3706
        %v3708 = vpop.f32.mrb[0].mxu0
        %v3709 = vpop.f32.mrb[0].mxu0
        %v3710 = vadd.f32 0.0, %v3709
        %v3711 = vpop.f32.mrb[0].mxu0
        %3712 = vdwg.mxu0
        %3714 = vrot.lane.b32.xlu0 %v1688, 96
        %v3715 = vpop.permute.xlu0 %3714
        %v3717 = vsel %vm1715, %v1688, 0
        %v3720 = vsel %vm1715, %v3715, 0
        %3722 = vmatprep.subr.bf16.mxu0 0
        %3723 = vmatpush1.bf16.xpose.msra.mxu0 %v3720
        %3724 = vmatprep.subr.bf16.mxu0 0
        %3725 = vmatpush1.bf16.xpose.msra.mxu0 0
        %3726 = vmatprep.subr.bf16.mxu0 0
        %3727 = vmatpush1.bf16.xpose.msra.mxu0 0
        %3728 = vmatprep.subr.bf16.mxu0 0
        %3729 = vmatpush1.bf16.xpose.msra.mxu0 0
        %3730 = vmatprep.subr.bf16.mxu0 0
        %3731 = vmatpush1.bf16.xpose.msra.mxu0 0
        %3732 = vmatprep.subr.bf16.mxu0 0
        %3733 = vmatpush1.bf16.xpose.msra.mxu0 0
        %3734 = vmatprep.subr.bf16.mxu0 0
        %3735 = vmatpush1.bf16.xpose.msra.mxu0 0
        %3736 = vmatprep.subr.bf16.mxu0 0
        %3737 = vmatpush1.bf16.xpose.msra.mxu0 0
        %3738 = vmatprep.subr.bf16.mxu0 0
        %3739 = vmatpush1.bf16.xpose.msra.mxu0 0
        %3740 = vmatprep.subr.bf16.mxu0 0
        %3741 = vmatpush1.bf16.xpose.msra.mxu0 0
        %3742 = vmatprep.subr.bf16.mxu0 0
        %3743 = vmatpush1.bf16.xpose.msra.mxu0 0
        %3744 = vmatprep.subr.bf16.mxu0 0
        %3745 = vmatpush1.bf16.xpose.msra.mxu0 0
        %3746 = vmatprep.subr.bf16.mxu0 0
        %3747 = vmatpush1.bf16.xpose.msra.mxu0 0
        %3748 = vmatprep.subr.bf16.mxu0 0
        %3749 = vmatpush1.bf16.xpose.msra.mxu0 0
        %3750 = vmatprep.subr.bf16.mxu0 0
        %3751 = vmatpush1.bf16.xpose.msra.mxu0 0
        %3752 = vmatprep.subr.bf16.mxu0 0
        %3753 = vmatpush1.bf16.xpose.msra.mxu0 0
        %3754 = vmatprep.mubr.bf16.mxu0 0
        %3755 = vmatmul.mubr.bf16.gmra.mrb[0].mxu0 %v3717
        %v3756 = vpop.f32.mrb[0].mxu0
        %v3757 = vadd.f32 0.0, %v3756
        %v3758 = vpop.f32.mrb[0].mxu0
        %v3759 = vpop.f32.mrb[0].mxu0
        %v3760 = vadd.f32 0.0, %v3759
        %v3761 = vpop.f32.mrb[0].mxu0
        %3762 = vdwg.mxu0
        %3764 = vrot.lane.b32.xlu0 %v1689, 96
        %v3765 = vpop.permute.xlu0 %3764
        %v3767 = vsel %vm1715, %v1689, 0
        %v3770 = vsel %vm1715, %v3765, 0
        %3772 = vmatprep.subr.bf16.mxu0 0
        %3773 = vmatpush1.bf16.xpose.msra.mxu0 %v3770
        %3774 = vmatprep.subr.bf16.mxu0 0
        %3775 = vmatpush1.bf16.xpose.msra.mxu0 0
        %3776 = vmatprep.subr.bf16.mxu0 0
        %3777 = vmatpush1.bf16.xpose.msra.mxu0 0
        %3778 = vmatprep.subr.bf16.mxu0 0
        %3779 = vmatpush1.bf16.xpose.msra.mxu0 0
        %3780 = vmatprep.subr.bf16.mxu0 0
        %3781 = vmatpush1.bf16.xpose.msra.mxu0 0
        %3782 = vmatprep.subr.bf16.mxu0 0
        %3783 = vmatpush1.bf16.xpose.msra.mxu0 0
        %3784 = vmatprep.subr.bf16.mxu0 0
        %3785 = vmatpush1.bf16.xpose.msra.mxu0 0
        %3786 = vmatprep.subr.bf16.mxu0 0
        %3787 = vmatpush1.bf16.xpose.msra.mxu0 0
        %3788 = vmatprep.subr.bf16.mxu0 0
        %3789 = vmatpush1.bf16.xpose.msra.mxu0 0
        %3790 = vmatprep.subr.bf16.mxu0 0
        %3791 = vmatpush1.bf16.xpose.msra.mxu0 0
        %3792 = vmatprep.subr.bf16.mxu0 0
        %3793 = vmatpush1.bf16.xpose.msra.mxu0 0
        %3794 = vmatprep.subr.bf16.mxu0 0
        %3795 = vmatpush1.bf16.xpose.msra.mxu0 0
        %3796 = vmatprep.subr.bf16.mxu0 0
        %3797 = vmatpush1.bf16.xpose.msra.mxu0 0
        %3798 = vmatprep.subr.bf16.mxu0 0
        %3799 = vmatpush1.bf16.xpose.msra.mxu0 0
        %3800 = vmatprep.subr.bf16.mxu0 0
        %3801 = vmatpush1.bf16.xpose.msra.mxu0 0
        %3802 = vmatprep.subr.bf16.mxu0 0
        %3803 = vmatpush1.bf16.xpose.msra.mxu0 0
        %3804 = vmatprep.mubr.bf16.mxu0 0
        %3805 = vmatmul.mubr.bf16.gmra.mrb[0].mxu0 %v3767
        %v3806 = vpop.f32.mrb[0].mxu0
        %v3807 = vadd.f32 0.0, %v3806
        %v3808 = vpop.f32.mrb[0].mxu0
        %v3809 = vpop.f32.mrb[0].mxu0
        %v3810 = vadd.f32 0.0, %v3809
        %v3811 = vpop.f32.mrb[0].mxu0
        %3812 = vdwg.mxu0
        %3814 = vrot.lane.b32.xlu0 %v1690, 96
        %v3815 = vpop.permute.xlu0 %3814
        %v3817 = vsel %vm1715, %v1690, 0
        %v3820 = vsel %vm1715, %v3815, 0
        %3822 = vmatprep.subr.bf16.mxu0 0
        %3823 = vmatpush1.bf16.xpose.msra.mxu0 %v3820
        %3824 = vmatprep.subr.bf16.mxu0 0
        %3825 = vmatpush1.bf16.xpose.msra.mxu0 0
        %3826 = vmatprep.subr.bf16.mxu0 0
        %3827 = vmatpush1.bf16.xpose.msra.mxu0 0
        %3828 = vmatprep.subr.bf16.mxu0 0
        %3829 = vmatpush1.bf16.xpose.msra.mxu0 0
        %3830 = vmatprep.subr.bf16.mxu0 0
        %3831 = vmatpush1.bf16.xpose.msra.mxu0 0
        %3832 = vmatprep.subr.bf16.mxu0 0
        %3833 = vmatpush1.bf16.xpose.msra.mxu0 0
        %3834 = vmatprep.subr.bf16.mxu0 0
        %3835 = vmatpush1.bf16.xpose.msra.mxu0 0
        %3836 = vmatprep.subr.bf16.mxu0 0
        %3837 = vmatpush1.bf16.xpose.msra.mxu0 0
        %3838 = vmatprep.subr.bf16.mxu0 0
        %3839 = vmatpush1.bf16.xpose.msra.mxu0 0
        %3840 = vmatprep.subr.bf16.mxu0 0
        %3841 = vmatpush1.bf16.xpose.msra.mxu0 0
        %3842 = vmatprep.subr.bf16.mxu0 0
        %3843 = vmatpush1.bf16.xpose.msra.mxu0 0
        %3844 = vmatprep.subr.bf16.mxu0 0
        %3845 = vmatpush1.bf16.xpose.msra.mxu0 0
        %3846 = vmatprep.subr.bf16.mxu0 0
        %3847 = vmatpush1.bf16.xpose.msra.mxu0 0
        %3848 = vmatprep.subr.bf16.mxu0 0
        %3849 = vmatpush1.bf16.xpose.msra.mxu0 0
        %3850 = vmatprep.subr.bf16.mxu0 0
        %3851 = vmatpush1.bf16.xpose.msra.mxu0 0
        %3852 = vmatprep.subr.bf16.mxu0 0
        %3853 = vmatpush1.bf16.xpose.msra.mxu0 0
        %3854 = vmatprep.mubr.bf16.mxu0 0
        %3855 = vmatmul.mubr.bf16.gmra.mrb[0].mxu0 %v3817
        %v3856 = vpop.f32.mrb[0].mxu0
        %v3857 = vadd.f32 0.0, %v3856
        %v3858 = vpop.f32.mrb[0].mxu0
        %v3859 = vpop.f32.mrb[0].mxu0
        %v3860 = vadd.f32 0.0, %v3859
        %v3861 = vpop.f32.mrb[0].mxu0
        %3862 = vdwg.mxu0
        %3864 = vrot.lane.b32.xlu0 %v1691, 96
        %v3865 = vpop.permute.xlu0 %3864
        %v3867 = vsel %vm1715, %v1691, 0
        %v3870 = vsel %vm1715, %v3865, 0
        %3872 = vmatprep.subr.bf16.mxu0 0
        %3873 = vmatpush1.bf16.xpose.msra.mxu0 %v3870
        %3874 = vmatprep.subr.bf16.mxu0 0
        %3875 = vmatpush1.bf16.xpose.msra.mxu0 0
        %3876 = vmatprep.subr.bf16.mxu0 0
        %3877 = vmatpush1.bf16.xpose.msra.mxu0 0
        %3878 = vmatprep.subr.bf16.mxu0 0
        %3879 = vmatpush1.bf16.xpose.msra.mxu0 0
        %3880 = vmatprep.subr.bf16.mxu0 0
        %3881 = vmatpush1.bf16.xpose.msra.mxu0 0
        %3882 = vmatprep.subr.bf16.mxu0 0
        %3883 = vmatpush1.bf16.xpose.msra.mxu0 0
        %3884 = vmatprep.subr.bf16.mxu0 0
        %3885 = vmatpush1.bf16.xpose.msra.mxu0 0
        %3886 = vmatprep.subr.bf16.mxu0 0
        %3887 = vmatpush1.bf16.xpose.msra.mxu0 0
        %3888 = vmatprep.subr.bf16.mxu0 0
        %3889 = vmatpush1.bf16.xpose.msra.mxu0 0
        %3890 = vmatprep.subr.bf16.mxu0 0
        %3891 = vmatpush1.bf16.xpose.msra.mxu0 0
        %3892 = vmatprep.subr.bf16.mxu0 0
        %3893 = vmatpush1.bf16.xpose.msra.mxu0 0
        %3894 = vmatprep.subr.bf16.mxu0 0
        %3895 = vmatpush1.bf16.xpose.msra.mxu0 0
        %3896 = vmatprep.subr.bf16.mxu0 0
        %3897 = vmatpush1.bf16.xpose.msra.mxu0 0
        %3898 = vmatprep.subr.bf16.mxu0 0
        %3899 = vmatpush1.bf16.xpose.msra.mxu0 0
        %3900 = vmatprep.subr.bf16.mxu0 0
        %3901 = vmatpush1.bf16.xpose.msra.mxu0 0
        %3902 = vmatprep.subr.bf16.mxu0 0
        %3903 = vmatpush1.bf16.xpose.msra.mxu0 0
        %3904 = vmatprep.mubr.bf16.mxu0 0
        %3905 = vmatmul.mubr.bf16.gmra.mrb[0].mxu0 %v3867
        %v3906 = vpop.f32.mrb[0].mxu0
        %v3907 = vadd.f32 0.0, %v3906
        %v3908 = vpop.f32.mrb[0].mxu0
        %v3909 = vpop.f32.mrb[0].mxu0
        %v3910 = vadd.f32 0.0, %v3909
        %v3911 = vpop.f32.mrb[0].mxu0
        %3912 = vdwg.mxu0
        %3914 = vrot.lane.b32.xlu0 %v1692, 96
        %v3915 = vpop.permute.xlu0 %3914
        %v3917 = vsel %vm1715, %v1692, 0
        %v3920 = vsel %vm1715, %v3915, 0
        %3922 = vmatprep.subr.bf16.mxu0 0
        %3923 = vmatpush1.bf16.xpose.msra.mxu0 %v3920
        %3924 = vmatprep.subr.bf16.mxu0 0
        %3925 = vmatpush1.bf16.xpose.msra.mxu0 0
        %3926 = vmatprep.subr.bf16.mxu0 0
        %3927 = vmatpush1.bf16.xpose.msra.mxu0 0
        %3928 = vmatprep.subr.bf16.mxu0 0
        %3929 = vmatpush1.bf16.xpose.msra.mxu0 0
        %3930 = vmatprep.subr.bf16.mxu0 0
        %3931 = vmatpush1.bf16.xpose.msra.mxu0 0
        %3932 = vmatprep.subr.bf16.mxu0 0
        %3933 = vmatpush1.bf16.xpose.msra.mxu0 0
        %3934 = vmatprep.subr.bf16.mxu0 0
        %3935 = vmatpush1.bf16.xpose.msra.mxu0 0
        %3936 = vmatprep.subr.bf16.mxu0 0
        %3937 = vmatpush1.bf16.xpose.msra.mxu0 0
        %3938 = vmatprep.subr.bf16.mxu0 0
        %3939 = vmatpush1.bf16.xpose.msra.mxu0 0
        %3940 = vmatprep.subr.bf16.mxu0 0
        %3941 = vmatpush1.bf16.xpose.msra.mxu0 0
        %3942 = vmatprep.subr.bf16.mxu0 0
        %3943 = vmatpush1.bf16.xpose.msra.mxu0 0
        %3944 = vmatprep.subr.bf16.mxu0 0
        %3945 = vmatpush1.bf16.xpose.msra.mxu0 0
        %3946 = vmatprep.subr.bf16.mxu0 0
        %3947 = vmatpush1.bf16.xpose.msra.mxu0 0
        %3948 = vmatprep.subr.bf16.mxu0 0
        %3949 = vmatpush1.bf16.xpose.msra.mxu0 0
        %3950 = vmatprep.subr.bf16.mxu0 0
        %3951 = vmatpush1.bf16.xpose.msra.mxu0 0
        %3952 = vmatprep.subr.bf16.mxu0 0
        %3953 = vmatpush1.bf16.xpose.msra.mxu0 0
        %3954 = vmatprep.mubr.bf16.mxu0 0
        %3955 = vmatmul.mubr.bf16.gmra.mrb[0].mxu0 %v3917
        %v3956 = vpop.f32.mrb[0].mxu0
        %v3957 = vadd.f32 0.0, %v3956
        %v3958 = vpop.f32.mrb[0].mxu0
        %v3959 = vpop.f32.mrb[0].mxu0
        %v3960 = vadd.f32 0.0, %v3959
        %v3961 = vpop.f32.mrb[0].mxu0
        %3962 = vdwg.mxu0
        %3964 = vrot.lane.b32.xlu0 %v1693, 96
        %v3965 = vpop.permute.xlu0 %3964
        %v3967 = vsel %vm1715, %v1693, 0
        %v3970 = vsel %vm1715, %v3965, 0
        %3972 = vmatprep.subr.bf16.mxu0 0
        %3973 = vmatpush1.bf16.xpose.msra.mxu0 %v3970
        %3974 = vmatprep.subr.bf16.mxu0 0
        %3975 = vmatpush1.bf16.xpose.msra.mxu0 0
        %3976 = vmatprep.subr.bf16.mxu0 0
        %3977 = vmatpush1.bf16.xpose.msra.mxu0 0
        %3978 = vmatprep.subr.bf16.mxu0 0
        %3979 = vmatpush1.bf16.xpose.msra.mxu0 0
        %3980 = vmatprep.subr.bf16.mxu0 0
        %3981 = vmatpush1.bf16.xpose.msra.mxu0 0
        %3982 = vmatprep.subr.bf16.mxu0 0
        %3983 = vmatpush1.bf16.xpose.msra.mxu0 0
        %3984 = vmatprep.subr.bf16.mxu0 0
        %3985 = vmatpush1.bf16.xpose.msra.mxu0 0
        %3986 = vmatprep.subr.bf16.mxu0 0
        %3987 = vmatpush1.bf16.xpose.msra.mxu0 0
        %3988 = vmatprep.subr.bf16.mxu0 0
        %3989 = vmatpush1.bf16.xpose.msra.mxu0 0
        %3990 = vmatprep.subr.bf16.mxu0 0
        %3991 = vmatpush1.bf16.xpose.msra.mxu0 0
        %3992 = vmatprep.subr.bf16.mxu0 0
        %3993 = vmatpush1.bf16.xpose.msra.mxu0 0
        %3994 = vmatprep.subr.bf16.mxu0 0
        %3995 = vmatpush1.bf16.xpose.msra.mxu0 0
        %3996 = vmatprep.subr.bf16.mxu0 0
        %3997 = vmatpush1.bf16.xpose.msra.mxu0 0
        %3998 = vmatprep.subr.bf16.mxu0 0
        %3999 = vmatpush1.bf16.xpose.msra.mxu0 0
        %4000 = vmatprep.subr.bf16.mxu0 0
        %4001 = vmatpush1.bf16.xpose.msra.mxu0 0
        %4002 = vmatprep.subr.bf16.mxu0 0
        %4003 = vmatpush1.bf16.xpose.msra.mxu0 0
        %4004 = vmatprep.mubr.bf16.mxu0 0
        %4005 = vmatmul.mubr.bf16.gmra.mrb[0].mxu0 %v3967
        %v4006 = vpop.f32.mrb[0].mxu0
        %v4007 = vadd.f32 0.0, %v4006
        %v4008 = vpop.f32.mrb[0].mxu0
        %v4009 = vpop.f32.mrb[0].mxu0
        %v4010 = vadd.f32 0.0, %v4009
        %v4011 = vpop.f32.mrb[0].mxu0
        %4012 = vdwg.mxu0
        %4014 = vrot.lane.b32.xlu0 %v1694, 96
        %v4015 = vpop.permute.xlu0 %4014
        %v4017 = vsel %vm1715, %v1694, 0
        %v4020 = vsel %vm1715, %v4015, 0
        %4022 = vmatprep.subr.bf16.mxu0 0
        %4023 = vmatpush1.bf16.xpose.msra.mxu0 %v4020
        %4024 = vmatprep.subr.bf16.mxu0 0
        %4025 = vmatpush1.bf16.xpose.msra.mxu0 0
        %4026 = vmatprep.subr.bf16.mxu0 0
        %4027 = vmatpush1.bf16.xpose.msra.mxu0 0
        %4028 = vmatprep.subr.bf16.mxu0 0
        %4029 = vmatpush1.bf16.xpose.msra.mxu0 0
        %4030 = vmatprep.subr.bf16.mxu0 0
        %4031 = vmatpush1.bf16.xpose.msra.mxu0 0
        %4032 = vmatprep.subr.bf16.mxu0 0
        %4033 = vmatpush1.bf16.xpose.msra.mxu0 0
        %4034 = vmatprep.subr.bf16.mxu0 0
        %4035 = vmatpush1.bf16.xpose.msra.mxu0 0
        %4036 = vmatprep.subr.bf16.mxu0 0
        %4037 = vmatpush1.bf16.xpose.msra.mxu0 0
        %4038 = vmatprep.subr.bf16.mxu0 0
        %4039 = vmatpush1.bf16.xpose.msra.mxu0 0
        %4040 = vmatprep.subr.bf16.mxu0 0
        %4041 = vmatpush1.bf16.xpose.msra.mxu0 0
        %4042 = vmatprep.subr.bf16.mxu0 0
        %4043 = vmatpush1.bf16.xpose.msra.mxu0 0
        %4044 = vmatprep.subr.bf16.mxu0 0
        %4045 = vmatpush1.bf16.xpose.msra.mxu0 0
        %4046 = vmatprep.subr.bf16.mxu0 0
        %4047 = vmatpush1.bf16.xpose.msra.mxu0 0
        %4048 = vmatprep.subr.bf16.mxu0 0
        %4049 = vmatpush1.bf16.xpose.msra.mxu0 0
        %4050 = vmatprep.subr.bf16.mxu0 0
        %4051 = vmatpush1.bf16.xpose.msra.mxu0 0
        %4052 = vmatprep.subr.bf16.mxu0 0
        %4053 = vmatpush1.bf16.xpose.msra.mxu0 0
        %4054 = vmatprep.mubr.bf16.mxu0 0
        %4055 = vmatmul.mubr.bf16.gmra.mrb[0].mxu0 %v4017
        %v4056 = vpop.f32.mrb[0].mxu0
        %v4057 = vadd.f32 0.0, %v4056
        %v4058 = vpop.f32.mrb[0].mxu0
        %v4059 = vpop.f32.mrb[0].mxu0
        %v4060 = vadd.f32 0.0, %v4059
        %v4061 = vpop.f32.mrb[0].mxu0
        %4062 = vdwg.mxu0
        %4064 = vrot.lane.b32.xlu0 %v1695, 96
        %v4065 = vpop.permute.xlu0 %4064
        %v4067 = vsel %vm1715, %v1695, 0
        %v4070 = vsel %vm1715, %v4065, 0
        %4072 = vmatprep.subr.bf16.mxu0 0
        %4073 = vmatpush1.bf16.xpose.msra.mxu0 %v4070
        %4074 = vmatprep.subr.bf16.mxu0 0
        %4075 = vmatpush1.bf16.xpose.msra.mxu0 0
        %4076 = vmatprep.subr.bf16.mxu0 0
        %4077 = vmatpush1.bf16.xpose.msra.mxu0 0
        %4078 = vmatprep.subr.bf16.mxu0 0
        %4079 = vmatpush1.bf16.xpose.msra.mxu0 0
        %4080 = vmatprep.subr.bf16.mxu0 0
        %4081 = vmatpush1.bf16.xpose.msra.mxu0 0
        %4082 = vmatprep.subr.bf16.mxu0 0
        %4083 = vmatpush1.bf16.xpose.msra.mxu0 0
        %4084 = vmatprep.subr.bf16.mxu0 0
        %4085 = vmatpush1.bf16.xpose.msra.mxu0 0
        %4086 = vmatprep.subr.bf16.mxu0 0
        %4087 = vmatpush1.bf16.xpose.msra.mxu0 0
        %4088 = vmatprep.subr.bf16.mxu0 0
        %4089 = vmatpush1.bf16.xpose.msra.mxu0 0
        %4090 = vmatprep.subr.bf16.mxu0 0
        %4091 = vmatpush1.bf16.xpose.msra.mxu0 0
        %4092 = vmatprep.subr.bf16.mxu0 0
        %4093 = vmatpush1.bf16.xpose.msra.mxu0 0
        %4094 = vmatprep.subr.bf16.mxu0 0
        %4095 = vmatpush1.bf16.xpose.msra.mxu0 0
        %4096 = vmatprep.subr.bf16.mxu0 0
        %4097 = vmatpush1.bf16.xpose.msra.mxu0 0
        %4098 = vmatprep.subr.bf16.mxu0 0
        %4099 = vmatpush1.bf16.xpose.msra.mxu0 0
        %4100 = vmatprep.subr.bf16.mxu0 0
        %4101 = vmatpush1.bf16.xpose.msra.mxu0 0
        %4102 = vmatprep.subr.bf16.mxu0 0
        %4103 = vmatpush1.bf16.xpose.msra.mxu0 0
        %4104 = vmatprep.mubr.bf16.mxu0 0
        %4105 = vmatmul.mubr.bf16.gmra.mrb[0].mxu0 %v4067
        %v4106 = vpop.f32.mrb[0].mxu0
        %v4107 = vadd.f32 0.0, %v4106
        %v4108 = vpop.f32.mrb[0].mxu0
        %v4109 = vpop.f32.mrb[0].mxu0
        %v4110 = vadd.f32 0.0, %v4109
        %v4111 = vpop.f32.mrb[0].mxu0
        %4112 = vdwg.mxu0
        %4114 = vrot.lane.b32.xlu0 %v1696, 96
        %v4115 = vpop.permute.xlu0 %4114
        %v4117 = vsel %vm1715, %v1696, 0
        %v4120 = vsel %vm1715, %v4115, 0
        %4122 = vmatprep.subr.bf16.mxu0 0
        %4123 = vmatpush1.bf16.xpose.msra.mxu0 %v4120
        %4124 = vmatprep.subr.bf16.mxu0 0
        %4125 = vmatpush1.bf16.xpose.msra.mxu0 0
        %4126 = vmatprep.subr.bf16.mxu0 0
        %4127 = vmatpush1.bf16.xpose.msra.mxu0 0
        %4128 = vmatprep.subr.bf16.mxu0 0
        %4129 = vmatpush1.bf16.xpose.msra.mxu0 0
        %4130 = vmatprep.subr.bf16.mxu0 0
        %4131 = vmatpush1.bf16.xpose.msra.mxu0 0
        %4132 = vmatprep.subr.bf16.mxu0 0
        %4133 = vmatpush1.bf16.xpose.msra.mxu0 0
        %4134 = vmatprep.subr.bf16.mxu0 0
        %4135 = vmatpush1.bf16.xpose.msra.mxu0 0
        %4136 = vmatprep.subr.bf16.mxu0 0
        %4137 = vmatpush1.bf16.xpose.msra.mxu0 0
        %4138 = vmatprep.subr.bf16.mxu0 0
        %4139 = vmatpush1.bf16.xpose.msra.mxu0 0
        %4140 = vmatprep.subr.bf16.mxu0 0
        %4141 = vmatpush1.bf16.xpose.msra.mxu0 0
        %4142 = vmatprep.subr.bf16.mxu0 0
        %4143 = vmatpush1.bf16.xpose.msra.mxu0 0
        %4144 = vmatprep.subr.bf16.mxu0 0
        %4145 = vmatpush1.bf16.xpose.msra.mxu0 0
        %4146 = vmatprep.subr.bf16.mxu0 0
        %4147 = vmatpush1.bf16.xpose.msra.mxu0 0
        %4148 = vmatprep.subr.bf16.mxu0 0
        %4149 = vmatpush1.bf16.xpose.msra.mxu0 0
        %4150 = vmatprep.subr.bf16.mxu0 0
        %4151 = vmatpush1.bf16.xpose.msra.mxu0 0
        %4152 = vmatprep.subr.bf16.mxu0 0
        %4153 = vmatpush1.bf16.xpose.msra.mxu0 0
        %4154 = vmatprep.mubr.bf16.mxu0 0
        %4155 = vmatmul.mubr.bf16.gmra.mrb[0].mxu0 %v4117
        %v4156 = vpop.f32.mrb[0].mxu0
        %v4157 = vadd.f32 0.0, %v4156
        %v4158 = vpop.f32.mrb[0].mxu0
        %v4159 = vpop.f32.mrb[0].mxu0
        %v4160 = vadd.f32 0.0, %v4159
        %v4161 = vpop.f32.mrb[0].mxu0
        %4162 = vdwg.mxu0
        %4164 = vrot.lane.b32.xlu0 %v1697, 96
        %v4165 = vpop.permute.xlu0 %4164
        %v4167 = vsel %vm1715, %v1697, 0
        %v4170 = vsel %vm1715, %v4165, 0
        %4172 = vmatprep.subr.bf16.mxu0 0
        %4173 = vmatpush1.bf16.xpose.msra.mxu0 %v4170
        %4174 = vmatprep.subr.bf16.mxu0 0
        %4175 = vmatpush1.bf16.xpose.msra.mxu0 0
        %4176 = vmatprep.subr.bf16.mxu0 0
        %4177 = vmatpush1.bf16.xpose.msra.mxu0 0
        %4178 = vmatprep.subr.bf16.mxu0 0
        %4179 = vmatpush1.bf16.xpose.msra.mxu0 0
        %4180 = vmatprep.subr.bf16.mxu0 0
        %4181 = vmatpush1.bf16.xpose.msra.mxu0 0
        %4182 = vmatprep.subr.bf16.mxu0 0
        %4183 = vmatpush1.bf16.xpose.msra.mxu0 0
        %4184 = vmatprep.subr.bf16.mxu0 0
        %4185 = vmatpush1.bf16.xpose.msra.mxu0 0
        %4186 = vmatprep.subr.bf16.mxu0 0
        %4187 = vmatpush1.bf16.xpose.msra.mxu0 0
        %4188 = vmatprep.subr.bf16.mxu0 0
        %4189 = vmatpush1.bf16.xpose.msra.mxu0 0
        %4190 = vmatprep.subr.bf16.mxu0 0
        %4191 = vmatpush1.bf16.xpose.msra.mxu0 0
        %4192 = vmatprep.subr.bf16.mxu0 0
        %4193 = vmatpush1.bf16.xpose.msra.mxu0 0
        %4194 = vmatprep.subr.bf16.mxu0 0
        %4195 = vmatpush1.bf16.xpose.msra.mxu0 0
        %4196 = vmatprep.subr.bf16.mxu0 0
        %4197 = vmatpush1.bf16.xpose.msra.mxu0 0
        %4198 = vmatprep.subr.bf16.mxu0 0
        %4199 = vmatpush1.bf16.xpose.msra.mxu0 0
        %4200 = vmatprep.subr.bf16.mxu0 0
        %4201 = vmatpush1.bf16.xpose.msra.mxu0 0
        %4202 = vmatprep.subr.bf16.mxu0 0
        %4203 = vmatpush1.bf16.xpose.msra.mxu0 0
        %4204 = vmatprep.mubr.bf16.mxu0 0
        %4205 = vmatmul.mubr.bf16.gmra.mrb[0].mxu0 %v4167
        %v4206 = vpop.f32.mrb[0].mxu0
        %v4207 = vadd.f32 0.0, %v4206
        %v4208 = vpop.f32.mrb[0].mxu0
        %v4209 = vpop.f32.mrb[0].mxu0
        %v4210 = vadd.f32 0.0, %v4209
        %v4211 = vpop.f32.mrb[0].mxu0
        %4212 = vdwg.mxu0
        %4214 = vrot.lane.b32.xlu0 %v1698, 96
        %v4215 = vpop.permute.xlu0 %4214
        %v4217 = vsel %vm1715, %v1698, 0
        %v4220 = vsel %vm1715, %v4215, 0
        %4222 = vmatprep.subr.bf16.mxu0 0
        %4223 = vmatpush1.bf16.xpose.msra.mxu0 %v4220
        %4224 = vmatprep.subr.bf16.mxu0 0
        %4225 = vmatpush1.bf16.xpose.msra.mxu0 0
        %4226 = vmatprep.subr.bf16.mxu0 0
        %4227 = vmatpush1.bf16.xpose.msra.mxu0 0
        %4228 = vmatprep.subr.bf16.mxu0 0
        %4229 = vmatpush1.bf16.xpose.msra.mxu0 0
        %4230 = vmatprep.subr.bf16.mxu0 0
        %4231 = vmatpush1.bf16.xpose.msra.mxu0 0
        %4232 = vmatprep.subr.bf16.mxu0 0
        %4233 = vmatpush1.bf16.xpose.msra.mxu0 0
        %4234 = vmatprep.subr.bf16.mxu0 0
        %4235 = vmatpush1.bf16.xpose.msra.mxu0 0
        %4236 = vmatprep.subr.bf16.mxu0 0
        %4237 = vmatpush1.bf16.xpose.msra.mxu0 0
        %4238 = vmatprep.subr.bf16.mxu0 0
        %4239 = vmatpush1.bf16.xpose.msra.mxu0 0
        %4240 = vmatprep.subr.bf16.mxu0 0
        %4241 = vmatpush1.bf16.xpose.msra.mxu0 0
        %4242 = vmatprep.subr.bf16.mxu0 0
        %4243 = vmatpush1.bf16.xpose.msra.mxu0 0
        %4244 = vmatprep.subr.bf16.mxu0 0
        %4245 = vmatpush1.bf16.xpose.msra.mxu0 0
        %4246 = vmatprep.subr.bf16.mxu0 0
        %4247 = vmatpush1.bf16.xpose.msra.mxu0 0
        %4248 = vmatprep.subr.bf16.mxu0 0
        %4249 = vmatpush1.bf16.xpose.msra.mxu0 0
        %4250 = vmatprep.subr.bf16.mxu0 0
        %4251 = vmatpush1.bf16.xpose.msra.mxu0 0
        %4252 = vmatprep.subr.bf16.mxu0 0
        %4253 = vmatpush1.bf16.xpose.msra.mxu0 0
        %4254 = vmatprep.mubr.bf16.mxu0 0
        %4255 = vmatmul.mubr.bf16.gmra.mrb[0].mxu0 %v4217
        %v4256 = vpop.f32.mrb[0].mxu0
        %v4257 = vadd.f32 0.0, %v4256
        %v4258 = vpop.f32.mrb[0].mxu0
        %v4259 = vpop.f32.mrb[0].mxu0
        %v4260 = vadd.f32 0.0, %v4259
        %v4261 = vpop.f32.mrb[0].mxu0
        %4262 = vdwg.mxu0
        %4264 = vrot.lane.b32.xlu0 %v1699, 96
        %v4265 = vpop.permute.xlu0 %4264
        %v4267 = vsel %vm1715, %v1699, 0
        %v4270 = vsel %vm1715, %v4265, 0
        %4272 = vmatprep.subr.bf16.mxu0 0
        %4273 = vmatpush1.bf16.xpose.msra.mxu0 %v4270
        %4274 = vmatprep.subr.bf16.mxu0 0
        %4275 = vmatpush1.bf16.xpose.msra.mxu0 0
        %4276 = vmatprep.subr.bf16.mxu0 0
        %4277 = vmatpush1.bf16.xpose.msra.mxu0 0
        %4278 = vmatprep.subr.bf16.mxu0 0
        %4279 = vmatpush1.bf16.xpose.msra.mxu0 0
        %4280 = vmatprep.subr.bf16.mxu0 0
        %4281 = vmatpush1.bf16.xpose.msra.mxu0 0
        %4282 = vmatprep.subr.bf16.mxu0 0
        %4283 = vmatpush1.bf16.xpose.msra.mxu0 0
        %4284 = vmatprep.subr.bf16.mxu0 0
        %4285 = vmatpush1.bf16.xpose.msra.mxu0 0
        %4286 = vmatprep.subr.bf16.mxu0 0
        %4287 = vmatpush1.bf16.xpose.msra.mxu0 0
        %4288 = vmatprep.subr.bf16.mxu0 0
        %4289 = vmatpush1.bf16.xpose.msra.mxu0 0
        %4290 = vmatprep.subr.bf16.mxu0 0
        %4291 = vmatpush1.bf16.xpose.msra.mxu0 0
        %4292 = vmatprep.subr.bf16.mxu0 0
        %4293 = vmatpush1.bf16.xpose.msra.mxu0 0
        %4294 = vmatprep.subr.bf16.mxu0 0
        %4295 = vmatpush1.bf16.xpose.msra.mxu0 0
        %4296 = vmatprep.subr.bf16.mxu0 0
        %4297 = vmatpush1.bf16.xpose.msra.mxu0 0
        %4298 = vmatprep.subr.bf16.mxu0 0
        %4299 = vmatpush1.bf16.xpose.msra.mxu0 0
        %4300 = vmatprep.subr.bf16.mxu0 0
        %4301 = vmatpush1.bf16.xpose.msra.mxu0 0
        %4302 = vmatprep.subr.bf16.mxu0 0
        %4303 = vmatpush1.bf16.xpose.msra.mxu0 0
        %4304 = vmatprep.mubr.bf16.mxu0 0
        %4305 = vmatmul.mubr.bf16.gmra.mrb[0].mxu0 %v4267
        %v4306 = vpop.f32.mrb[0].mxu0
        %v4307 = vadd.f32 0.0, %v4306
        %v4308 = vpop.f32.mrb[0].mxu0
        %v4309 = vpop.f32.mrb[0].mxu0
        %v4310 = vadd.f32 0.0, %v4309
        %v4311 = vpop.f32.mrb[0].mxu0
        %4312 = vdwg.mxu0
        %4314 = vrot.lane.b32.xlu0 %v1700, 96
        %v4315 = vpop.permute.xlu0 %4314
        %v4317 = vsel %vm1715, %v1700, 0
        %v4320 = vsel %vm1715, %v4315, 0
        %4322 = vmatprep.subr.bf16.mxu0 0
        %4323 = vmatpush1.bf16.xpose.msra.mxu0 %v4320
        %4324 = vmatprep.subr.bf16.mxu0 0
        %4325 = vmatpush1.bf16.xpose.msra.mxu0 0
        %4326 = vmatprep.subr.bf16.mxu0 0
        %4327 = vmatpush1.bf16.xpose.msra.mxu0 0
        %4328 = vmatprep.subr.bf16.mxu0 0
        %4329 = vmatpush1.bf16.xpose.msra.mxu0 0
        %4330 = vmatprep.subr.bf16.mxu0 0
        %4331 = vmatpush1.bf16.xpose.msra.mxu0 0
        %4332 = vmatprep.subr.bf16.mxu0 0
        %4333 = vmatpush1.bf16.xpose.msra.mxu0 0
        %4334 = vmatprep.subr.bf16.mxu0 0
        %4335 = vmatpush1.bf16.xpose.msra.mxu0 0
        %4336 = vmatprep.subr.bf16.mxu0 0
        %4337 = vmatpush1.bf16.xpose.msra.mxu0 0
        %4338 = vmatprep.subr.bf16.mxu0 0
        %4339 = vmatpush1.bf16.xpose.msra.mxu0 0
        %4340 = vmatprep.subr.bf16.mxu0 0
        %4341 = vmatpush1.bf16.xpose.msra.mxu0 0
        %4342 = vmatprep.subr.bf16.mxu0 0
        %4343 = vmatpush1.bf16.xpose.msra.mxu0 0
        %4344 = vmatprep.subr.bf16.mxu0 0
        %4345 = vmatpush1.bf16.xpose.msra.mxu0 0
        %4346 = vmatprep.subr.bf16.mxu0 0
        %4347 = vmatpush1.bf16.xpose.msra.mxu0 0
        %4348 = vmatprep.subr.bf16.mxu0 0
        %4349 = vmatpush1.bf16.xpose.msra.mxu0 0
        %4350 = vmatprep.subr.bf16.mxu0 0
        %4351 = vmatpush1.bf16.xpose.msra.mxu0 0
        %4352 = vmatprep.subr.bf16.mxu0 0
        %4353 = vmatpush1.bf16.xpose.msra.mxu0 0
        %4354 = vmatprep.mubr.bf16.mxu0 0
        %4355 = vmatmul.mubr.bf16.gmra.mrb[0].mxu0 %v4317
        %v4356 = vpop.f32.mrb[0].mxu0
        %v4357 = vadd.f32 0.0, %v4356
        %v4358 = vpop.f32.mrb[0].mxu0
        %v4359 = vpop.f32.mrb[0].mxu0
        %v4360 = vadd.f32 0.0, %v4359
        %v4361 = vpop.f32.mrb[0].mxu0
        %4362 = vdwg.mxu0
        %4364 = vrot.lane.b32.xlu0 %v1701, 96
        %v4365 = vpop.permute.xlu0 %4364
        %v4367 = vsel %vm1715, %v1701, 0
        %v4370 = vsel %vm1715, %v4365, 0
        %4372 = vmatprep.subr.bf16.mxu0 0
        %4373 = vmatpush1.bf16.xpose.msra.mxu0 %v4370
        %4374 = vmatprep.subr.bf16.mxu0 0
        %4375 = vmatpush1.bf16.xpose.msra.mxu0 0
        %4376 = vmatprep.subr.bf16.mxu0 0
        %4377 = vmatpush1.bf16.xpose.msra.mxu0 0
        %4378 = vmatprep.subr.bf16.mxu0 0
        %4379 = vmatpush1.bf16.xpose.msra.mxu0 0
        %4380 = vmatprep.subr.bf16.mxu0 0
        %4381 = vmatpush1.bf16.xpose.msra.mxu0 0
        %4382 = vmatprep.subr.bf16.mxu0 0
        %4383 = vmatpush1.bf16.xpose.msra.mxu0 0
        %4384 = vmatprep.subr.bf16.mxu0 0
        %4385 = vmatpush1.bf16.xpose.msra.mxu0 0
        %4386 = vmatprep.subr.bf16.mxu0 0
        %4387 = vmatpush1.bf16.xpose.msra.mxu0 0
        %4388 = vmatprep.subr.bf16.mxu0 0
        %4389 = vmatpush1.bf16.xpose.msra.mxu0 0
        %4390 = vmatprep.subr.bf16.mxu0 0
        %4391 = vmatpush1.bf16.xpose.msra.mxu0 0
        %4392 = vmatprep.subr.bf16.mxu0 0
        %4393 = vmatpush1.bf16.xpose.msra.mxu0 0
        %4394 = vmatprep.subr.bf16.mxu0 0
        %4395 = vmatpush1.bf16.xpose.msra.mxu0 0
        %4396 = vmatprep.subr.bf16.mxu0 0
        %4397 = vmatpush1.bf16.xpose.msra.mxu0 0
        %4398 = vmatprep.subr.bf16.mxu0 0
        %4399 = vmatpush1.bf16.xpose.msra.mxu0 0
        %4400 = vmatprep.subr.bf16.mxu0 0
        %4401 = vmatpush1.bf16.xpose.msra.mxu0 0
        %4402 = vmatprep.subr.bf16.mxu0 0
        %4403 = vmatpush1.bf16.xpose.msra.mxu0 0
        %4404 = vmatprep.mubr.bf16.mxu0 0
        %4405 = vmatmul.mubr.bf16.gmra.mrb[0].mxu0 %v4367
        %v4406 = vpop.f32.mrb[0].mxu0
        %v4407 = vadd.f32 0.0, %v4406
        %v4408 = vpop.f32.mrb[0].mxu0
        %v4409 = vpop.f32.mrb[0].mxu0
        %v4410 = vadd.f32 0.0, %v4409
        %v4411 = vpop.f32.mrb[0].mxu0
        %4412 = vdwg.mxu0
        %4414 = vrot.lane.b32.xlu0 %v1702, 96
        %v4415 = vpop.permute.xlu0 %4414
        %v4417 = vsel %vm1715, %v1702, 0
        %v4420 = vsel %vm1715, %v4415, 0
        %4422 = vmatprep.subr.bf16.mxu0 0
        %4423 = vmatpush1.bf16.xpose.msra.mxu0 %v4420
        %4424 = vmatprep.subr.bf16.mxu0 0
        %4425 = vmatpush1.bf16.xpose.msra.mxu0 0
        %4426 = vmatprep.subr.bf16.mxu0 0
        %4427 = vmatpush1.bf16.xpose.msra.mxu0 0
        %4428 = vmatprep.subr.bf16.mxu0 0
        %4429 = vmatpush1.bf16.xpose.msra.mxu0 0
        %4430 = vmatprep.subr.bf16.mxu0 0
        %4431 = vmatpush1.bf16.xpose.msra.mxu0 0
        %4432 = vmatprep.subr.bf16.mxu0 0
        %4433 = vmatpush1.bf16.xpose.msra.mxu0 0
        %4434 = vmatprep.subr.bf16.mxu0 0
        %4435 = vmatpush1.bf16.xpose.msra.mxu0 0
        %4436 = vmatprep.subr.bf16.mxu0 0
        %4437 = vmatpush1.bf16.xpose.msra.mxu0 0
        %4438 = vmatprep.subr.bf16.mxu0 0
        %4439 = vmatpush1.bf16.xpose.msra.mxu0 0
        %4440 = vmatprep.subr.bf16.mxu0 0
        %4441 = vmatpush1.bf16.xpose.msra.mxu0 0
        %4442 = vmatprep.subr.bf16.mxu0 0
        %4443 = vmatpush1.bf16.xpose.msra.mxu0 0
        %4444 = vmatprep.subr.bf16.mxu0 0
        %4445 = vmatpush1.bf16.xpose.msra.mxu0 0
        %4446 = vmatprep.subr.bf16.mxu0 0
        %4447 = vmatpush1.bf16.xpose.msra.mxu0 0
        %4448 = vmatprep.subr.bf16.mxu0 0
        %4449 = vmatpush1.bf16.xpose.msra.mxu0 0
        %4450 = vmatprep.subr.bf16.mxu0 0
        %4451 = vmatpush1.bf16.xpose.msra.mxu0 0
        %4452 = vmatprep.subr.bf16.mxu0 0
        %4453 = vmatpush1.bf16.xpose.msra.mxu0 0
        %4454 = vmatprep.mubr.bf16.mxu0 0
        %4455 = vmatmul.mubr.bf16.gmra.mrb[0].mxu0 %v4417
        %v4456 = vpop.f32.mrb[0].mxu0
        %v4457 = vadd.f32 0.0, %v4456
        %v4458 = vpop.f32.mrb[0].mxu0
        %v4459 = vpop.f32.mrb[0].mxu0
        %v4460 = vadd.f32 0.0, %v4459
        %v4461 = vpop.f32.mrb[0].mxu0
        %4462 = vdwg.mxu0
        %4464 = vrot.lane.b32.xlu0 %v1703, 96
        %v4465 = vpop.permute.xlu0 %4464
        %v4467 = vsel %vm1715, %v1703, 0
        %v4470 = vsel %vm1715, %v4465, 0
        %4472 = vmatprep.subr.bf16.mxu0 0
        %4473 = vmatpush1.bf16.xpose.msra.mxu0 %v4470
        %4474 = vmatprep.subr.bf16.mxu0 0
        %4475 = vmatpush1.bf16.xpose.msra.mxu0 0
        %4476 = vmatprep.subr.bf16.mxu0 0
        %4477 = vmatpush1.bf16.xpose.msra.mxu0 0
        %4478 = vmatprep.subr.bf16.mxu0 0
        %4479 = vmatpush1.bf16.xpose.msra.mxu0 0
        %4480 = vmatprep.subr.bf16.mxu0 0
        %4481 = vmatpush1.bf16.xpose.msra.mxu0 0
        %4482 = vmatprep.subr.bf16.mxu0 0
        %4483 = vmatpush1.bf16.xpose.msra.mxu0 0
        %4484 = vmatprep.subr.bf16.mxu0 0
        %4485 = vmatpush1.bf16.xpose.msra.mxu0 0
        %4486 = vmatprep.subr.bf16.mxu0 0
        %4487 = vmatpush1.bf16.xpose.msra.mxu0 0
        %4488 = vmatprep.subr.bf16.mxu0 0
        %4489 = vmatpush1.bf16.xpose.msra.mxu0 0
        %4490 = vmatprep.subr.bf16.mxu0 0
        %4491 = vmatpush1.bf16.xpose.msra.mxu0 0
        %4492 = vmatprep.subr.bf16.mxu0 0
        %4493 = vmatpush1.bf16.xpose.msra.mxu0 0
        %4494 = vmatprep.subr.bf16.mxu0 0
        %4495 = vmatpush1.bf16.xpose.msra.mxu0 0
        %4496 = vmatprep.subr.bf16.mxu0 0
        %4497 = vmatpush1.bf16.xpose.msra.mxu0 0
        %4498 = vmatprep.subr.bf16.mxu0 0
        %4499 = vmatpush1.bf16.xpose.msra.mxu0 0
        %4500 = vmatprep.subr.bf16.mxu0 0
        %4501 = vmatpush1.bf16.xpose.msra.mxu0 0
        %4502 = vmatprep.subr.bf16.mxu0 0
        %4503 = vmatpush1.bf16.xpose.msra.mxu0 0
        %4504 = vmatprep.mubr.bf16.mxu0 0
        %4505 = vmatmul.mubr.bf16.gmra.mrb[0].mxu0 %v4467
        %v4506 = vpop.f32.mrb[0].mxu0
        %v4507 = vadd.f32 0.0, %v4506
        %v4508 = vpop.f32.mrb[0].mxu0
        %v4509 = vpop.f32.mrb[0].mxu0
        %v4510 = vadd.f32 0.0, %v4509
        %v4511 = vpop.f32.mrb[0].mxu0
        %4512 = vdwg.mxu0
        %4514 = vrot.lane.b32.xlu0 %v1704, 96
        %v4515 = vpop.permute.xlu0 %4514
        %v4517 = vsel %vm1715, %v1704, 0
        %v4520 = vsel %vm1715, %v4515, 0
        %4522 = vmatprep.subr.bf16.mxu0 0
        %4523 = vmatpush1.bf16.xpose.msra.mxu0 %v4520
        %4524 = vmatprep.subr.bf16.mxu0 0
        %4525 = vmatpush1.bf16.xpose.msra.mxu0 0
        %4526 = vmatprep.subr.bf16.mxu0 0
        %4527 = vmatpush1.bf16.xpose.msra.mxu0 0
        %4528 = vmatprep.subr.bf16.mxu0 0
        %4529 = vmatpush1.bf16.xpose.msra.mxu0 0
        %4530 = vmatprep.subr.bf16.mxu0 0
        %4531 = vmatpush1.bf16.xpose.msra.mxu0 0
        %4532 = vmatprep.subr.bf16.mxu0 0
        %4533 = vmatpush1.bf16.xpose.msra.mxu0 0
        %4534 = vmatprep.subr.bf16.mxu0 0
        %4535 = vmatpush1.bf16.xpose.msra.mxu0 0
        %4536 = vmatprep.subr.bf16.mxu0 0
        %4537 = vmatpush1.bf16.xpose.msra.mxu0 0
        %4538 = vmatprep.subr.bf16.mxu0 0
        %4539 = vmatpush1.bf16.xpose.msra.mxu0 0
        %4540 = vmatprep.subr.bf16.mxu0 0
        %4541 = vmatpush1.bf16.xpose.msra.mxu0 0
        %4542 = vmatprep.subr.bf16.mxu0 0
        %4543 = vmatpush1.bf16.xpose.msra.mxu0 0
        %4544 = vmatprep.subr.bf16.mxu0 0
        %4545 = vmatpush1.bf16.xpose.msra.mxu0 0
        %4546 = vmatprep.subr.bf16.mxu0 0
        %4547 = vmatpush1.bf16.xpose.msra.mxu0 0
        %4548 = vmatprep.subr.bf16.mxu0 0
        %4549 = vmatpush1.bf16.xpose.msra.mxu0 0
        %4550 = vmatprep.subr.bf16.mxu0 0
        %4551 = vmatpush1.bf16.xpose.msra.mxu0 0
        %4552 = vmatprep.subr.bf16.mxu0 0
        %4553 = vmatpush1.bf16.xpose.msra.mxu0 0
        %4554 = vmatprep.mubr.bf16.mxu0 0
        %4555 = vmatmul.mubr.bf16.gmra.mrb[0].mxu0 %v4517
        %v4556 = vpop.f32.mrb[0].mxu0
        %v4557 = vadd.f32 0.0, %v4556
        %v4558 = vpop.f32.mrb[0].mxu0
        %v4559 = vpop.f32.mrb[0].mxu0
        %v4560 = vadd.f32 0.0, %v4559
        %v4561 = vpop.f32.mrb[0].mxu0
        %4562 = vdwg.mxu0
        %4564 = vrot.lane.b32.xlu0 %v1705, 96
        %v4565 = vpop.permute.xlu0 %4564
        %v4567 = vsel %vm1715, %v1705, 0
        %v4570 = vsel %vm1715, %v4565, 0
        %4572 = vmatprep.subr.bf16.mxu0 0
        %4573 = vmatpush1.bf16.xpose.msra.mxu0 %v4570
        %4574 = vmatprep.subr.bf16.mxu0 0
        %4575 = vmatpush1.bf16.xpose.msra.mxu0 0
        %4576 = vmatprep.subr.bf16.mxu0 0
        %4577 = vmatpush1.bf16.xpose.msra.mxu0 0
        %4578 = vmatprep.subr.bf16.mxu0 0
        %4579 = vmatpush1.bf16.xpose.msra.mxu0 0
        %4580 = vmatprep.subr.bf16.mxu0 0
        %4581 = vmatpush1.bf16.xpose.msra.mxu0 0
        %4582 = vmatprep.subr.bf16.mxu0 0
        %4583 = vmatpush1.bf16.xpose.msra.mxu0 0
        %4584 = vmatprep.subr.bf16.mxu0 0
        %4585 = vmatpush1.bf16.xpose.msra.mxu0 0
        %4586 = vmatprep.subr.bf16.mxu0 0
        %4587 = vmatpush1.bf16.xpose.msra.mxu0 0
        %4588 = vmatprep.subr.bf16.mxu0 0
        %4589 = vmatpush1.bf16.xpose.msra.mxu0 0
        %4590 = vmatprep.subr.bf16.mxu0 0
        %4591 = vmatpush1.bf16.xpose.msra.mxu0 0
        %4592 = vmatprep.subr.bf16.mxu0 0
        %4593 = vmatpush1.bf16.xpose.msra.mxu0 0
        %4594 = vmatprep.subr.bf16.mxu0 0
        %4595 = vmatpush1.bf16.xpose.msra.mxu0 0
        %4596 = vmatprep.subr.bf16.mxu0 0
        %4597 = vmatpush1.bf16.xpose.msra.mxu0 0
        %4598 = vmatprep.subr.bf16.mxu0 0
        %4599 = vmatpush1.bf16.xpose.msra.mxu0 0
        %4600 = vmatprep.subr.bf16.mxu0 0
        %4601 = vmatpush1.bf16.xpose.msra.mxu0 0
        %4602 = vmatprep.subr.bf16.mxu0 0
        %4603 = vmatpush1.bf16.xpose.msra.mxu0 0
        %4604 = vmatprep.mubr.bf16.mxu0 0
        %4605 = vmatmul.mubr.bf16.gmra.mrb[0].mxu0 %v4567
        %v4606 = vpop.f32.mrb[0].mxu0
        %v4607 = vadd.f32 0.0, %v4606
        %v4608 = vpop.f32.mrb[0].mxu0
        %v4609 = vpop.f32.mrb[0].mxu0
        %v4610 = vadd.f32 0.0, %v4609
        %v4611 = vpop.f32.mrb[0].mxu0
        %4612 = vdwg.mxu0
        %4614 = vrot.lane.b32.xlu0 %v1706, 96
        %v4615 = vpop.permute.xlu0 %4614
        %v4617 = vsel %vm1715, %v1706, 0
        %v4620 = vsel %vm1715, %v4615, 0
        %4622 = vmatprep.subr.bf16.mxu0 0
        %4623 = vmatpush1.bf16.xpose.msra.mxu0 %v4620
        %4624 = vmatprep.subr.bf16.mxu0 0
        %4625 = vmatpush1.bf16.xpose.msra.mxu0 0
        %4626 = vmatprep.subr.bf16.mxu0 0
        %4627 = vmatpush1.bf16.xpose.msra.mxu0 0
        %4628 = vmatprep.subr.bf16.mxu0 0
        %4629 = vmatpush1.bf16.xpose.msra.mxu0 0
        %4630 = vmatprep.subr.bf16.mxu0 0
        %4631 = vmatpush1.bf16.xpose.msra.mxu0 0
        %4632 = vmatprep.subr.bf16.mxu0 0
        %4633 = vmatpush1.bf16.xpose.msra.mxu0 0
        %4634 = vmatprep.subr.bf16.mxu0 0
        %4635 = vmatpush1.bf16.xpose.msra.mxu0 0
        %4636 = vmatprep.subr.bf16.mxu0 0
        %4637 = vmatpush1.bf16.xpose.msra.mxu0 0
        %4638 = vmatprep.subr.bf16.mxu0 0
        %4639 = vmatpush1.bf16.xpose.msra.mxu0 0
        %4640 = vmatprep.subr.bf16.mxu0 0
        %4641 = vmatpush1.bf16.xpose.msra.mxu0 0
        %4642 = vmatprep.subr.bf16.mxu0 0
        %4643 = vmatpush1.bf16.xpose.msra.mxu0 0
        %4644 = vmatprep.subr.bf16.mxu0 0
        %4645 = vmatpush1.bf16.xpose.msra.mxu0 0
        %4646 = vmatprep.subr.bf16.mxu0 0
        %4647 = vmatpush1.bf16.xpose.msra.mxu0 0
        %4648 = vmatprep.subr.bf16.mxu0 0
        %4649 = vmatpush1.bf16.xpose.msra.mxu0 0
        %4650 = vmatprep.subr.bf16.mxu0 0
        %4651 = vmatpush1.bf16.xpose.msra.mxu0 0
        %4652 = vmatprep.subr.bf16.mxu0 0
        %4653 = vmatpush1.bf16.xpose.msra.mxu0 0
        %4654 = vmatprep.mubr.bf16.mxu0 0
        %4655 = vmatmul.mubr.bf16.gmra.mrb[0].mxu0 %v4617
        %v4656 = vpop.f32.mrb[0].mxu0
        %v4657 = vadd.f32 0.0, %v4656
        %v4658 = vpop.f32.mrb[0].mxu0
        %v4659 = vpop.f32.mrb[0].mxu0
        %v4660 = vadd.f32 0.0, %v4659
        %v4661 = vpop.f32.mrb[0].mxu0
        %4662 = vdwg.mxu0
        %4664 = vrot.lane.b32.xlu0 %v1707, 96
        %v4665 = vpop.permute.xlu0 %4664
        %v4667 = vsel %vm1715, %v1707, 0
        %v4670 = vsel %vm1715, %v4665, 0
        %4672 = vmatprep.subr.bf16.mxu0 0
        %4673 = vmatpush1.bf16.xpose.msra.mxu0 %v4670
        %4674 = vmatprep.subr.bf16.mxu0 0
        %4675 = vmatpush1.bf16.xpose.msra.mxu0 0
        %4676 = vmatprep.subr.bf16.mxu0 0
        %4677 = vmatpush1.bf16.xpose.msra.mxu0 0
        %4678 = vmatprep.subr.bf16.mxu0 0
        %4679 = vmatpush1.bf16.xpose.msra.mxu0 0
        %4680 = vmatprep.subr.bf16.mxu0 0
        %4681 = vmatpush1.bf16.xpose.msra.mxu0 0
        %4682 = vmatprep.subr.bf16.mxu0 0
        %4683 = vmatpush1.bf16.xpose.msra.mxu0 0
        %4684 = vmatprep.subr.bf16.mxu0 0
        %4685 = vmatpush1.bf16.xpose.msra.mxu0 0
        %4686 = vmatprep.subr.bf16.mxu0 0
        %4687 = vmatpush1.bf16.xpose.msra.mxu0 0
        %4688 = vmatprep.subr.bf16.mxu0 0
        %4689 = vmatpush1.bf16.xpose.msra.mxu0 0
        %4690 = vmatprep.subr.bf16.mxu0 0
        %4691 = vmatpush1.bf16.xpose.msra.mxu0 0
        %4692 = vmatprep.subr.bf16.mxu0 0
        %4693 = vmatpush1.bf16.xpose.msra.mxu0 0
        %4694 = vmatprep.subr.bf16.mxu0 0
        %4695 = vmatpush1.bf16.xpose.msra.mxu0 0
        %4696 = vmatprep.subr.bf16.mxu0 0
        %4697 = vmatpush1.bf16.xpose.msra.mxu0 0
        %4698 = vmatprep.subr.bf16.mxu0 0
        %4699 = vmatpush1.bf16.xpose.msra.mxu0 0
        %4700 = vmatprep.subr.bf16.mxu0 0
        %4701 = vmatpush1.bf16.xpose.msra.mxu0 0
        %4702 = vmatprep.subr.bf16.mxu0 0
        %4703 = vmatpush1.bf16.xpose.msra.mxu0 0
        %4704 = vmatprep.mubr.bf16.mxu0 0
        %4705 = vmatmul.mubr.bf16.gmra.mrb[0].mxu0 %v4667
        %v4706 = vpop.f32.mrb[0].mxu0
        %v4707 = vadd.f32 0.0, %v4706
        %v4708 = vpop.f32.mrb[0].mxu0
        %v4709 = vpop.f32.mrb[0].mxu0
        %v4710 = vadd.f32 0.0, %v4709
        %v4711 = vpop.f32.mrb[0].mxu0
        %4712 = vdwg.mxu0
        %4714 = vrot.lane.b32.xlu0 %v1708, 96
        %v4715 = vpop.permute.xlu0 %4714
        %v4717 = vsel %vm1715, %v1708, 0
        %v4720 = vsel %vm1715, %v4715, 0
        %4722 = vmatprep.subr.bf16.mxu0 0
        %4723 = vmatpush1.bf16.xpose.msra.mxu0 %v4720
        %4724 = vmatprep.subr.bf16.mxu0 0
        %4725 = vmatpush1.bf16.xpose.msra.mxu0 0
        %4726 = vmatprep.subr.bf16.mxu0 0
        %4727 = vmatpush1.bf16.xpose.msra.mxu0 0
        %4728 = vmatprep.subr.bf16.mxu0 0
        %4729 = vmatpush1.bf16.xpose.msra.mxu0 0
        %4730 = vmatprep.subr.bf16.mxu0 0
        %4731 = vmatpush1.bf16.xpose.msra.mxu0 0
        %4732 = vmatprep.subr.bf16.mxu0 0
        %4733 = vmatpush1.bf16.xpose.msra.mxu0 0
        %4734 = vmatprep.subr.bf16.mxu0 0
        %4735 = vmatpush1.bf16.xpose.msra.mxu0 0
        %4736 = vmatprep.subr.bf16.mxu0 0
        %4737 = vmatpush1.bf16.xpose.msra.mxu0 0
        %4738 = vmatprep.subr.bf16.mxu0 0
        %4739 = vmatpush1.bf16.xpose.msra.mxu0 0
        %4740 = vmatprep.subr.bf16.mxu0 0
        %4741 = vmatpush1.bf16.xpose.msra.mxu0 0
        %4742 = vmatprep.subr.bf16.mxu0 0
        %4743 = vmatpush1.bf16.xpose.msra.mxu0 0
        %4744 = vmatprep.subr.bf16.mxu0 0
        %4745 = vmatpush1.bf16.xpose.msra.mxu0 0
        %4746 = vmatprep.subr.bf16.mxu0 0
        %4747 = vmatpush1.bf16.xpose.msra.mxu0 0
        %4748 = vmatprep.subr.bf16.mxu0 0
        %4749 = vmatpush1.bf16.xpose.msra.mxu0 0
        %4750 = vmatprep.subr.bf16.mxu0 0
        %4751 = vmatpush1.bf16.xpose.msra.mxu0 0
        %4752 = vmatprep.subr.bf16.mxu0 0
        %4753 = vmatpush1.bf16.xpose.msra.mxu0 0
        %4754 = vmatprep.mubr.bf16.mxu0 0
        %4755 = vmatmul.mubr.bf16.gmra.mrb[0].mxu0 %v4717
        %v4756 = vpop.f32.mrb[0].mxu0
        %v4757 = vadd.f32 0.0, %v4756
        %v4758 = vpop.f32.mrb[0].mxu0
        %v4759 = vpop.f32.mrb[0].mxu0
        %v4760 = vadd.f32 0.0, %v4759
        %v4761 = vpop.f32.mrb[0].mxu0
        %4762 = vdwg.mxu0
        %4764 = vrot.lane.b32.xlu0 %v1709, 96
        %v4765 = vpop.permute.xlu0 %4764
        %v4767 = vsel %vm1715, %v1709, 0
        %v4770 = vsel %vm1715, %v4765, 0
        %4772 = vmatprep.subr.bf16.mxu0 0
        %4773 = vmatpush1.bf16.xpose.msra.mxu0 %v4770
        %4774 = vmatprep.subr.bf16.mxu0 0
        %4775 = vmatpush1.bf16.xpose.msra.mxu0 0
        %4776 = vmatprep.subr.bf16.mxu0 0
        %4777 = vmatpush1.bf16.xpose.msra.mxu0 0
        %4778 = vmatprep.subr.bf16.mxu0 0
        %4779 = vmatpush1.bf16.xpose.msra.mxu0 0
        %4780 = vmatprep.subr.bf16.mxu0 0
        %4781 = vmatpush1.bf16.xpose.msra.mxu0 0
        %4782 = vmatprep.subr.bf16.mxu0 0
        %4783 = vmatpush1.bf16.xpose.msra.mxu0 0
        %4784 = vmatprep.subr.bf16.mxu0 0
        %4785 = vmatpush1.bf16.xpose.msra.mxu0 0
        %4786 = vmatprep.subr.bf16.mxu0 0
        %4787 = vmatpush1.bf16.xpose.msra.mxu0 0
        %4788 = vmatprep.subr.bf16.mxu0 0
        %4789 = vmatpush1.bf16.xpose.msra.mxu0 0
        %4790 = vmatprep.subr.bf16.mxu0 0
        %4791 = vmatpush1.bf16.xpose.msra.mxu0 0
        %4792 = vmatprep.subr.bf16.mxu0 0
        %4793 = vmatpush1.bf16.xpose.msra.mxu0 0
        %4794 = vmatprep.subr.bf16.mxu0 0
        %4795 = vmatpush1.bf16.xpose.msra.mxu0 0
        %4796 = vmatprep.subr.bf16.mxu0 0
        %4797 = vmatpush1.bf16.xpose.msra.mxu0 0
        %4798 = vmatprep.subr.bf16.mxu0 0
        %4799 = vmatpush1.bf16.xpose.msra.mxu0 0
        %4800 = vmatprep.subr.bf16.mxu0 0
        %4801 = vmatpush1.bf16.xpose.msra.mxu0 0
        %4802 = vmatprep.subr.bf16.mxu0 0
        %4803 = vmatpush1.bf16.xpose.msra.mxu0 0
        %4804 = vmatprep.mubr.bf16.mxu0 0
        %4805 = vmatmul.mubr.bf16.gmra.mrb[0].mxu0 %v4767
        %v4806 = vpop.f32.mrb[0].mxu0
        %v4807 = vadd.f32 0.0, %v4806
        %v4808 = vpop.f32.mrb[0].mxu0
        %v4809 = vpop.f32.mrb[0].mxu0
        %v4810 = vadd.f32 0.0, %v4809
        %v4811 = vpop.f32.mrb[0].mxu0
        %4812 = vdwg.mxu0
        %4814 = vrot.lane.b32.xlu0 %v1710, 96
        %v4815 = vpop.permute.xlu0 %4814
        %v4817 = vsel %vm1715, %v1710, 0
        %v4820 = vsel %vm1715, %v4815, 0
        %4822 = vmatprep.subr.bf16.mxu0 0
        %4823 = vmatpush1.bf16.xpose.msra.mxu0 %v4820
        %4824 = vmatprep.subr.bf16.mxu0 0
        %4825 = vmatpush1.bf16.xpose.msra.mxu0 0
        %4826 = vmatprep.subr.bf16.mxu0 0
        %4827 = vmatpush1.bf16.xpose.msra.mxu0 0
        %4828 = vmatprep.subr.bf16.mxu0 0
        %4829 = vmatpush1.bf16.xpose.msra.mxu0 0
        %4830 = vmatprep.subr.bf16.mxu0 0
        %4831 = vmatpush1.bf16.xpose.msra.mxu0 0
        %4832 = vmatprep.subr.bf16.mxu0 0
        %4833 = vmatpush1.bf16.xpose.msra.mxu0 0
        %4834 = vmatprep.subr.bf16.mxu0 0
        %4835 = vmatpush1.bf16.xpose.msra.mxu0 0
        %4836 = vmatprep.subr.bf16.mxu0 0
        %4837 = vmatpush1.bf16.xpose.msra.mxu0 0
        %4838 = vmatprep.subr.bf16.mxu0 0
        %4839 = vmatpush1.bf16.xpose.msra.mxu0 0
        %4840 = vmatprep.subr.bf16.mxu0 0
        %4841 = vmatpush1.bf16.xpose.msra.mxu0 0
        %4842 = vmatprep.subr.bf16.mxu0 0
        %4843 = vmatpush1.bf16.xpose.msra.mxu0 0
        %4844 = vmatprep.subr.bf16.mxu0 0
        %4845 = vmatpush1.bf16.xpose.msra.mxu0 0
        %4846 = vmatprep.subr.bf16.mxu0 0
        %4847 = vmatpush1.bf16.xpose.msra.mxu0 0
        %4848 = vmatprep.subr.bf16.mxu0 0
        %4849 = vmatpush1.bf16.xpose.msra.mxu0 0
        %4850 = vmatprep.subr.bf16.mxu0 0
        %4851 = vmatpush1.bf16.xpose.msra.mxu0 0
        %4852 = vmatprep.subr.bf16.mxu0 0
        %4853 = vmatpush1.bf16.xpose.msra.mxu0 0
        %4854 = vmatprep.mubr.bf16.mxu0 0
        %4855 = vmatmul.mubr.bf16.gmra.mrb[0].mxu0 %v4817
        %v4856 = vpop.f32.mrb[0].mxu0
        %v4857 = vadd.f32 0.0, %v4856
        %v4858 = vpop.f32.mrb[0].mxu0
        %v4859 = vpop.f32.mrb[0].mxu0
        %v4860 = vadd.f32 0.0, %v4859
        %v4861 = vpop.f32.mrb[0].mxu0
        %4862 = vdwg.mxu0
        %4864 = vrot.lane.b32.xlu0 %v1711, 96
        %v4865 = vpop.permute.xlu0 %4864
        %v4867 = vsel %vm1715, %v1711, 0
        %v4870 = vsel %vm1715, %v4865, 0
        %4872 = vmatprep.subr.bf16.mxu0 0
        %4873 = vmatpush1.bf16.xpose.msra.mxu0 %v4870
        %4874 = vmatprep.subr.bf16.mxu0 0
        %4875 = vmatpush1.bf16.xpose.msra.mxu0 0
        %4876 = vmatprep.subr.bf16.mxu0 0
        %4877 = vmatpush1.bf16.xpose.msra.mxu0 0
        %4878 = vmatprep.subr.bf16.mxu0 0
        %4879 = vmatpush1.bf16.xpose.msra.mxu0 0
        %4880 = vmatprep.subr.bf16.mxu0 0
        %4881 = vmatpush1.bf16.xpose.msra.mxu0 0
        %4882 = vmatprep.subr.bf16.mxu0 0
        %4883 = vmatpush1.bf16.xpose.msra.mxu0 0
        %4884 = vmatprep.subr.bf16.mxu0 0
        %4885 = vmatpush1.bf16.xpose.msra.mxu0 0
        %4886 = vmatprep.subr.bf16.mxu0 0
        %4887 = vmatpush1.bf16.xpose.msra.mxu0 0
        %4888 = vmatprep.subr.bf16.mxu0 0
        %4889 = vmatpush1.bf16.xpose.msra.mxu0 0
        %4890 = vmatprep.subr.bf16.mxu0 0
        %4891 = vmatpush1.bf16.xpose.msra.mxu0 0
        %4892 = vmatprep.subr.bf16.mxu0 0
        %4893 = vmatpush1.bf16.xpose.msra.mxu0 0
        %4894 = vmatprep.subr.bf16.mxu0 0
        %4895 = vmatpush1.bf16.xpose.msra.mxu0 0
        %4896 = vmatprep.subr.bf16.mxu0 0
        %4897 = vmatpush1.bf16.xpose.msra.mxu0 0
        %4898 = vmatprep.subr.bf16.mxu0 0
        %4899 = vmatpush1.bf16.xpose.msra.mxu0 0
        %4900 = vmatprep.subr.bf16.mxu0 0
        %4901 = vmatpush1.bf16.xpose.msra.mxu0 0
        %4902 = vmatprep.subr.bf16.mxu0 0
        %4903 = vmatpush1.bf16.xpose.msra.mxu0 0
        %4904 = vmatprep.mubr.bf16.mxu0 0
        %4905 = vmatmul.mubr.bf16.gmra.mrb[0].mxu0 %v4867
        %v4906 = vpop.f32.mrb[0].mxu0
        %v4907 = vadd.f32 0.0, %v4906
        %v4908 = vpop.f32.mrb[0].mxu0
        %v4909 = vpop.f32.mrb[0].mxu0
        %v4910 = vadd.f32 0.0, %v4909
        %v4911 = vpop.f32.mrb[0].mxu0
        %4912 = vdwg.mxu0
        %vm4913 = vcmask 130048
        %v4914 = vsel %vm4913, %v1757, -inf
        %4915 = vmax.xlane.f32.xlu0 %v4914
        %v4916 = vpop.xlane.xlu0 %4915
        %v4917 = vsel %vm4913, %v1760, -inf
        %4918 = vmax.xlane.f32.xlu0 %v4917
        %v4919 = vpop.xlane.xlu0 %4918
        %v4920 = vsel %vm4913, %v1807, -inf
        %4921 = vmax.xlane.f32.xlu0 %v4920
        %v4922 = vpop.xlane.xlu0 %4921
        %v4923 = vsel %vm4913, %v1810, -inf
        %4924 = vmax.xlane.f32.xlu0 %v4923
        %v4925 = vpop.xlane.xlu0 %4924
        %v4926 = vsel %vm4913, %v1857, -inf
        %4927 = vmax.xlane.f32.xlu0 %v4926
        %v4928 = vpop.xlane.xlu0 %4927
        %v4929 = vsel %vm4913, %v1860, -inf
        %4930 = vmax.xlane.f32.xlu0 %v4929
        %v4931 = vpop.xlane.xlu0 %4930
        %v4932 = vsel %vm4913, %v1907, -inf
        %4933 = vmax.xlane.f32.xlu0 %v4932
        %v4934 = vpop.xlane.xlu0 %4933
        %v4935 = vsel %vm4913, %v1910, -inf
        %4936 = vmax.xlane.f32.xlu0 %v4935
        %v4937 = vpop.xlane.xlu0 %4936
        %v4938 = vsel %vm4913, %v1957, -inf
        %4939 = vmax.xlane.f32.xlu0 %v4938
        %v4940 = vpop.xlane.xlu0 %4939
        %v4941 = vsel %vm4913, %v1960, -inf
        %4942 = vmax.xlane.f32.xlu0 %v4941
        %v4943 = vpop.xlane.xlu0 %4942
        %v4944 = vsel %vm4913, %v2007, -inf
        %4945 = vmax.xlane.f32.xlu0 %v4944
        %v4946 = vpop.xlane.xlu0 %4945
        %v4947 = vsel %vm4913, %v2010, -inf
        %4948 = vmax.xlane.f32.xlu0 %v4947
        %v4949 = vpop.xlane.xlu0 %4948
        %v4950 = vsel %vm4913, %v2057, -inf
        %4951 = vmax.xlane.f32.xlu0 %v4950
        %v4952 = vpop.xlane.xlu0 %4951
        %v4953 = vsel %vm4913, %v2060, -inf
        %4954 = vmax.xlane.f32.xlu0 %v4953
        %v4955 = vpop.xlane.xlu0 %4954
        %v4956 = vsel %vm4913, %v2107, -inf
        %4957 = vmax.xlane.f32.xlu0 %v4956
        %v4958 = vpop.xlane.xlu0 %4957
        %v4959 = vsel %vm4913, %v2110, -inf
        %4960 = vmax.xlane.f32.xlu0 %v4959
        %v4961 = vpop.xlane.xlu0 %4960
        %v4962 = vsel %vm4913, %v2157, -inf
        %4963 = vmax.xlane.f32.xlu0 %v4962
        %v4964 = vpop.xlane.xlu0 %4963
        %v4965 = vsel %vm4913, %v2160, -inf
        %4966 = vmax.xlane.f32.xlu0 %v4965
        %v4967 = vpop.xlane.xlu0 %4966
        %v4968 = vsel %vm4913, %v2207, -inf
        %4969 = vmax.xlane.f32.xlu0 %v4968
        %v4970 = vpop.xlane.xlu0 %4969
        %v4971 = vsel %vm4913, %v2210, -inf
        %4972 = vmax.xlane.f32.xlu0 %v4971
        %v4973 = vpop.xlane.xlu0 %4972
        %v4974 = vsel %vm4913, %v2257, -inf
        %4975 = vmax.xlane.f32.xlu0 %v4974
        %v4976 = vpop.xlane.xlu0 %4975
        %v4977 = vsel %vm4913, %v2260, -inf
        %4978 = vmax.xlane.f32.xlu0 %v4977
        %v4979 = vpop.xlane.xlu0 %4978
        %v4980 = vsel %vm4913, %v2307, -inf
        %4981 = vmax.xlane.f32.xlu0 %v4980
        %v4982 = vpop.xlane.xlu0 %4981
        %v4983 = vsel %vm4913, %v2310, -inf
        %4984 = vmax.xlane.f32.xlu0 %v4983
        %v4985 = vpop.xlane.xlu0 %4984
        %v4986 = vsel %vm4913, %v2357, -inf
        %4987 = vmax.xlane.f32.xlu0 %v4986
        %v4988 = vpop.xlane.xlu0 %4987
        %v4989 = vsel %vm4913, %v2360, -inf
        %4990 = vmax.xlane.f32.xlu0 %v4989
        %v4991 = vpop.xlane.xlu0 %4990
        %v4992 = vsel %vm4913, %v2407, -inf
        %4993 = vmax.xlane.f32.xlu0 %v4992
        %v4994 = vpop.xlane.xlu0 %4993
        %v4995 = vsel %vm4913, %v2410, -inf
        %4996 = vmax.xlane.f32.xlu0 %v4995
        %v4997 = vpop.xlane.xlu0 %4996
        %v4998 = vsel %vm4913, %v2457, -inf
        %4999 = vmax.xlane.f32.xlu0 %v4998
        %v5000 = vpop.xlane.xlu0 %4999
        %v5001 = vsel %vm4913, %v2460, -inf
        %5002 = vmax.xlane.f32.xlu0 %v5001
        %v5003 = vpop.xlane.xlu0 %5002
        %v5004 = vsel %vm4913, %v2507, -inf
        %5005 = vmax.xlane.f32.xlu0 %v5004
        %v5006 = vpop.xlane.xlu0 %5005
        %v5007 = vsel %vm4913, %v2510, -inf
        %5008 = vmax.xlane.f32.xlu0 %v5007
        %v5009 = vpop.xlane.xlu0 %5008
        %v5010 = vsel %vm4913, %v2557, -inf
        %5011 = vmax.xlane.f32.xlu0 %v5010
        %v5012 = vpop.xlane.xlu0 %5011
        %v5013 = vsel %vm4913, %v2560, -inf
        %5014 = vmax.xlane.f32.xlu0 %v5013
        %v5015 = vpop.xlane.xlu0 %5014
        %v5016 = vsel %vm4913, %v2607, -inf
        %5017 = vmax.xlane.f32.xlu0 %v5016
        %v5018 = vpop.xlane.xlu0 %5017
        %v5019 = vsel %vm4913, %v2610, -inf
        %5020 = vmax.xlane.f32.xlu0 %v5019
        %v5021 = vpop.xlane.xlu0 %5020
        %v5022 = vsel %vm4913, %v2657, -inf
        %5023 = vmax.xlane.f32.xlu0 %v5022
        %v5024 = vpop.xlane.xlu0 %5023
        %v5025 = vsel %vm4913, %v2660, -inf
        %5026 = vmax.xlane.f32.xlu0 %v5025
        %v5027 = vpop.xlane.xlu0 %5026
        %v5028 = vsel %vm4913, %v2707, -inf
        %5029 = vmax.xlane.f32.xlu0 %v5028
        %v5030 = vpop.xlane.xlu0 %5029
        %v5031 = vsel %vm4913, %v2710, -inf
        %5032 = vmax.xlane.f32.xlu0 %v5031
        %v5033 = vpop.xlane.xlu0 %5032
        %v5034 = vsel %vm4913, %v2757, -inf
        %5035 = vmax.xlane.f32.xlu0 %v5034
        %v5036 = vpop.xlane.xlu0 %5035
        %v5037 = vsel %vm4913, %v2760, -inf
        %5038 = vmax.xlane.f32.xlu0 %v5037
        %v5039 = vpop.xlane.xlu0 %5038
        %v5040 = vsel %vm4913, %v2807, -inf
        %5041 = vmax.xlane.f32.xlu0 %v5040
        %v5042 = vpop.xlane.xlu0 %5041
        %v5043 = vsel %vm4913, %v2810, -inf
        %5044 = vmax.xlane.f32.xlu0 %v5043
        %v5045 = vpop.xlane.xlu0 %5044
        %v5046 = vsel %vm4913, %v2857, -inf
        %5047 = vmax.xlane.f32.xlu0 %v5046
        %v5048 = vpop.xlane.xlu0 %5047
        %v5049 = vsel %vm4913, %v2860, -inf
        %5050 = vmax.xlane.f32.xlu0 %v5049
        %v5051 = vpop.xlane.xlu0 %5050
        %v5052 = vsel %vm4913, %v2907, -inf
        %5053 = vmax.xlane.f32.xlu0 %v5052
        %v5054 = vpop.xlane.xlu0 %5053
        %v5055 = vsel %vm4913, %v2910, -inf
        %5056 = vmax.xlane.f32.xlu0 %v5055
        %v5057 = vpop.xlane.xlu0 %5056
        %v5058 = vsel %vm4913, %v2957, -inf
        %5059 = vmax.xlane.f32.xlu0 %v5058
        %v5060 = vpop.xlane.xlu0 %5059
        %v5061 = vsel %vm4913, %v2960, -inf
        %5062 = vmax.xlane.f32.xlu0 %v5061
        %v5063 = vpop.xlane.xlu0 %5062
        %v5064 = vsel %vm4913, %v3007, -inf
        %5065 = vmax.xlane.f32.xlu0 %v5064
        %v5066 = vpop.xlane.xlu0 %5065
        %v5067 = vsel %vm4913, %v3010, -inf
        %5068 = vmax.xlane.f32.xlu0 %v5067
        %v5069 = vpop.xlane.xlu0 %5068
        %v5070 = vsel %vm4913, %v3057, -inf
        %5071 = vmax.xlane.f32.xlu0 %v5070
        %v5072 = vpop.xlane.xlu0 %5071
        %v5073 = vsel %vm4913, %v3060, -inf
        %5074 = vmax.xlane.f32.xlu0 %v5073
        %v5075 = vpop.xlane.xlu0 %5074
        %v5076 = vsel %vm4913, %v3107, -inf
        %5077 = vmax.xlane.f32.xlu0 %v5076
        %v5078 = vpop.xlane.xlu0 %5077
        %v5079 = vsel %vm4913, %v3110, -inf
        %5080 = vmax.xlane.f32.xlu0 %v5079
        %v5081 = vpop.xlane.xlu0 %5080
        %v5082 = vsel %vm4913, %v3157, -inf
        %5083 = vmax.xlane.f32.xlu0 %v5082
        %v5084 = vpop.xlane.xlu0 %5083
        %v5085 = vsel %vm4913, %v3160, -inf
        %5086 = vmax.xlane.f32.xlu0 %v5085
        %v5087 = vpop.xlane.xlu0 %5086
        %v5088 = vsel %vm4913, %v3207, -inf
        %5089 = vmax.xlane.f32.xlu0 %v5088
        %v5090 = vpop.xlane.xlu0 %5089
        %v5091 = vsel %vm4913, %v3210, -inf
        %5092 = vmax.xlane.f32.xlu0 %v5091
        %v5093 = vpop.xlane.xlu0 %5092
        %v5094 = vsel %vm4913, %v3257, -inf
        %5095 = vmax.xlane.f32.xlu0 %v5094
        %v5096 = vpop.xlane.xlu0 %5095
        %v5097 = vsel %vm4913, %v3260, -inf
        %5098 = vmax.xlane.f32.xlu0 %v5097
        %v5099 = vpop.xlane.xlu0 %5098
        %v5100 = vsel %vm4913, %v3307, -inf
        %5101 = vmax.xlane.f32.xlu0 %v5100
        %v5102 = vpop.xlane.xlu0 %5101
        %v5103 = vsel %vm4913, %v3310, -inf
        %5104 = vmax.xlane.f32.xlu0 %v5103
        %v5105 = vpop.xlane.xlu0 %5104
        %v5106 = vsel %vm4913, %v3357, -inf
        %5107 = vmax.xlane.f32.xlu0 %v5106
        %v5108 = vpop.xlane.xlu0 %5107
        %v5109 = vsel %vm4913, %v3360, -inf
        %5110 = vmax.xlane.f32.xlu0 %v5109
        %v5111 = vpop.xlane.xlu0 %5110
        %v5112 = vsel %vm4913, %v3407, -inf
        %5113 = vmax.xlane.f32.xlu0 %v5112
        %v5114 = vpop.xlane.xlu0 %5113
        %v5115 = vsel %vm4913, %v3410, -inf
        %5116 = vmax.xlane.f32.xlu0 %v5115
        %v5117 = vpop.xlane.xlu0 %5116
        %v5118 = vsel %vm4913, %v3457, -inf
        %5119 = vmax.xlane.f32.xlu0 %v5118
        %v5120 = vpop.xlane.xlu0 %5119
        %v5121 = vsel %vm4913, %v3460, -inf
        %5122 = vmax.xlane.f32.xlu0 %v5121
        %v5123 = vpop.xlane.xlu0 %5122
        %v5124 = vsel %vm4913, %v3507, -inf
        %5125 = vmax.xlane.f32.xlu0 %v5124
        %v5126 = vpop.xlane.xlu0 %5125
        %v5127 = vsel %vm4913, %v3510, -inf
        %5128 = vmax.xlane.f32.xlu0 %v5127
        %v5129 = vpop.xlane.xlu0 %5128
        %v5130 = vsel %vm4913, %v3557, -inf
        %5131 = vmax.xlane.f32.xlu0 %v5130
        %v5132 = vpop.xlane.xlu0 %5131
        %v5133 = vsel %vm4913, %v3560, -inf
        %5134 = vmax.xlane.f32.xlu0 %v5133
        %v5135 = vpop.xlane.xlu0 %5134
        %v5136 = vsel %vm4913, %v3607, -inf
        %5137 = vmax.xlane.f32.xlu0 %v5136
        %v5138 = vpop.xlane.xlu0 %5137
        %v5139 = vsel %vm4913, %v3610, -inf
        %5140 = vmax.xlane.f32.xlu0 %v5139
        %v5141 = vpop.xlane.xlu0 %5140
        %v5142 = vsel %vm4913, %v3657, -inf
        %5143 = vmax.xlane.f32.xlu0 %v5142
        %v5144 = vpop.xlane.xlu0 %5143
        %v5145 = vsel %vm4913, %v3660, -inf
        %5146 = vmax.xlane.f32.xlu0 %v5145
        %v5147 = vpop.xlane.xlu0 %5146
        %v5148 = vsel %vm4913, %v3707, -inf
        %5149 = vmax.xlane.f32.xlu0 %v5148
        %v5150 = vpop.xlane.xlu0 %5149
        %v5151 = vsel %vm4913, %v3710, -inf
        %5152 = vmax.xlane.f32.xlu0 %v5151
        %v5153 = vpop.xlane.xlu0 %5152
        %v5154 = vsel %vm4913, %v3757, -inf
        %5155 = vmax.xlane.f32.xlu0 %v5154
        %v5156 = vpop.xlane.xlu0 %5155
        %v5157 = vsel %vm4913, %v3760, -inf
        %5158 = vmax.xlane.f32.xlu0 %v5157
        %v5159 = vpop.xlane.xlu0 %5158
        %v5160 = vsel %vm4913, %v3807, -inf
        %5161 = vmax.xlane.f32.xlu0 %v5160
        %v5162 = vpop.xlane.xlu0 %5161
        %v5163 = vsel %vm4913, %v3810, -inf
        %5164 = vmax.xlane.f32.xlu0 %v5163
        %v5165 = vpop.xlane.xlu0 %5164
        %v5166 = vsel %vm4913, %v3857, -inf
        %5167 = vmax.xlane.f32.xlu0 %v5166
        %v5168 = vpop.xlane.xlu0 %5167
        %v5169 = vsel %vm4913, %v3860, -inf
        %5170 = vmax.xlane.f32.xlu0 %v5169
        %v5171 = vpop.xlane.xlu0 %5170
        %v5172 = vsel %vm4913, %v3907, -inf
        %5173 = vmax.xlane.f32.xlu0 %v5172
        %v5174 = vpop.xlane.xlu0 %5173
        %v5175 = vsel %vm4913, %v3910, -inf
        %5176 = vmax.xlane.f32.xlu0 %v5175
        %v5177 = vpop.xlane.xlu0 %5176
        %v5178 = vsel %vm4913, %v3957, -inf
        %5179 = vmax.xlane.f32.xlu0 %v5178
        %v5180 = vpop.xlane.xlu0 %5179
        %v5181 = vsel %vm4913, %v3960, -inf
        %5182 = vmax.xlane.f32.xlu0 %v5181
        %v5183 = vpop.xlane.xlu0 %5182
        %v5184 = vsel %vm4913, %v4007, -inf
        %5185 = vmax.xlane.f32.xlu0 %v5184
        %v5186 = vpop.xlane.xlu0 %5185
        %v5187 = vsel %vm4913, %v4010, -inf
        %5188 = vmax.xlane.f32.xlu0 %v5187
        %v5189 = vpop.xlane.xlu0 %5188
        %v5190 = vsel %vm4913, %v4057, -inf
        %5191 = vmax.xlane.f32.xlu0 %v5190
        %v5192 = vpop.xlane.xlu0 %5191
        %v5193 = vsel %vm4913, %v4060, -inf
        %5194 = vmax.xlane.f32.xlu0 %v5193
        %v5195 = vpop.xlane.xlu0 %5194
        %v5196 = vsel %vm4913, %v4107, -inf
        %5197 = vmax.xlane.f32.xlu0 %v5196
        %v5198 = vpop.xlane.xlu0 %5197
        %v5199 = vsel %vm4913, %v4110, -inf
        %5200 = vmax.xlane.f32.xlu0 %v5199
        %v5201 = vpop.xlane.xlu0 %5200
        %v5202 = vsel %vm4913, %v4157, -inf
        %5203 = vmax.xlane.f32.xlu0 %v5202
        %v5204 = vpop.xlane.xlu0 %5203
        %v5205 = vsel %vm4913, %v4160, -inf
        %5206 = vmax.xlane.f32.xlu0 %v5205
        %v5207 = vpop.xlane.xlu0 %5206
        %v5208 = vsel %vm4913, %v4207, -inf
        %5209 = vmax.xlane.f32.xlu0 %v5208
        %v5210 = vpop.xlane.xlu0 %5209
        %v5211 = vsel %vm4913, %v4210, -inf
        %5212 = vmax.xlane.f32.xlu0 %v5211
        %v5213 = vpop.xlane.xlu0 %5212
        %v5214 = vsel %vm4913, %v4257, -inf
        %5215 = vmax.xlane.f32.xlu0 %v5214
        %v5216 = vpop.xlane.xlu0 %5215
        %v5217 = vsel %vm4913, %v4260, -inf
        %5218 = vmax.xlane.f32.xlu0 %v5217
        %v5219 = vpop.xlane.xlu0 %5218
        %v5220 = vsel %vm4913, %v4307, -inf
        %5221 = vmax.xlane.f32.xlu0 %v5220
        %v5222 = vpop.xlane.xlu0 %5221
        %v5223 = vsel %vm4913, %v4310, -inf
        %5224 = vmax.xlane.f32.xlu0 %v5223
        %v5225 = vpop.xlane.xlu0 %5224
        %v5226 = vsel %vm4913, %v4357, -inf
        %5227 = vmax.xlane.f32.xlu0 %v5226
        %v5228 = vpop.xlane.xlu0 %5227
        %v5229 = vsel %vm4913, %v4360, -inf
        %5230 = vmax.xlane.f32.xlu0 %v5229
        %v5231 = vpop.xlane.xlu0 %5230
        %v5232 = vsel %vm4913, %v4407, -inf
        %5233 = vmax.xlane.f32.xlu0 %v5232
        %v5234 = vpop.xlane.xlu0 %5233
        %v5235 = vsel %vm4913, %v4410, -inf
        %5236 = vmax.xlane.f32.xlu0 %v5235
        %v5237 = vpop.xlane.xlu0 %5236
        %v5238 = vsel %vm4913, %v4457, -inf
        %5239 = vmax.xlane.f32.xlu0 %v5238
        %v5240 = vpop.xlane.xlu0 %5239
        %v5241 = vsel %vm4913, %v4460, -inf
        %5242 = vmax.xlane.f32.xlu0 %v5241
        %v5243 = vpop.xlane.xlu0 %5242
        %v5244 = vsel %vm4913, %v4507, -inf
        %5245 = vmax.xlane.f32.xlu0 %v5244
        %v5246 = vpop.xlane.xlu0 %5245
        %v5247 = vsel %vm4913, %v4510, -inf
        %5248 = vmax.xlane.f32.xlu0 %v5247
        %v5249 = vpop.xlane.xlu0 %5248
        %v5250 = vsel %vm4913, %v4557, -inf
        %5251 = vmax.xlane.f32.xlu0 %v5250
        %v5252 = vpop.xlane.xlu0 %5251
        %v5253 = vsel %vm4913, %v4560, -inf
        %5254 = vmax.xlane.f32.xlu0 %v5253
        %v5255 = vpop.xlane.xlu0 %5254
        %v5256 = vsel %vm4913, %v4607, -inf
        %5257 = vmax.xlane.f32.xlu0 %v5256
        %v5258 = vpop.xlane.xlu0 %5257
        %v5259 = vsel %vm4913, %v4610, -inf
        %5260 = vmax.xlane.f32.xlu0 %v5259
        %v5261 = vpop.xlane.xlu0 %5260
        %v5262 = vsel %vm4913, %v4657, -inf
        %5263 = vmax.xlane.f32.xlu0 %v5262
        %v5264 = vpop.xlane.xlu0 %5263
        %v5265 = vsel %vm4913, %v4660, -inf
        %5266 = vmax.xlane.f32.xlu0 %v5265
        %v5267 = vpop.xlane.xlu0 %5266
        %v5268 = vsel %vm4913, %v4707, -inf
        %5269 = vmax.xlane.f32.xlu0 %v5268
        %v5270 = vpop.xlane.xlu0 %5269
        %v5271 = vsel %vm4913, %v4710, -inf
        %5272 = vmax.xlane.f32.xlu0 %v5271
        %v5273 = vpop.xlane.xlu0 %5272
        %v5274 = vsel %vm4913, %v4757, -inf
        %5275 = vmax.xlane.f32.xlu0 %v5274
        %v5276 = vpop.xlane.xlu0 %5275
        %v5277 = vsel %vm4913, %v4760, -inf
        %5278 = vmax.xlane.f32.xlu0 %v5277
        %v5279 = vpop.xlane.xlu0 %5278
        %v5280 = vsel %vm4913, %v4807, -inf
        %5281 = vmax.xlane.f32.xlu0 %v5280
        %v5282 = vpop.xlane.xlu0 %5281
        %v5283 = vsel %vm4913, %v4810, -inf
        %5284 = vmax.xlane.f32.xlu0 %v5283
        %v5285 = vpop.xlane.xlu0 %5284
        %v5286 = vsel %vm4913, %v4857, -inf
        %5287 = vmax.xlane.f32.xlu0 %v5286
        %v5288 = vpop.xlane.xlu0 %5287
        %v5289 = vsel %vm4913, %v4860, -inf
        %5290 = vmax.xlane.f32.xlu0 %v5289
        %v5291 = vpop.xlane.xlu0 %5290
        %v5292 = vsel %vm4913, %v4907, -inf
        %5293 = vmax.xlane.f32.xlu0 %v5292
        %v5294 = vpop.xlane.xlu0 %5293
        %v5295 = vsel %vm4913, %v4910, -inf
        %5296 = vmax.xlane.f32.xlu0 %v5295
        %v5297 = vpop.xlane.xlu0 %5296
        %v5298 = vsub.f32 %v1757, %v4916
        %v5299 = vsub.f32 %v1760, %v4919
        %v5300 = vsub.f32 %v1807, %v4922
        %v5301 = vsub.f32 %v1810, %v4925
        %v5302 = vsub.f32 %v1857, %v4928
        %v5303 = vsub.f32 %v1860, %v4931
        %v5304 = vsub.f32 %v1907, %v4934
        %v5305 = vsub.f32 %v1910, %v4937
        %v5306 = vsub.f32 %v1957, %v4940
        %v5307 = vsub.f32 %v1960, %v4943
        %v5308 = vsub.f32 %v2007, %v4946
        %v5309 = vsub.f32 %v2010, %v4949
        %v5310 = vsub.f32 %v2057, %v4952
        %v5311 = vsub.f32 %v2060, %v4955
        %v5312 = vsub.f32 %v2107, %v4958
        %v5313 = vsub.f32 %v2110, %v4961
        %v5314 = vsub.f32 %v2157, %v4964
        %v5315 = vsub.f32 %v2160, %v4967
        %v5316 = vsub.f32 %v2207, %v4970
        %v5317 = vsub.f32 %v2210, %v4973
        %v5318 = vsub.f32 %v2257, %v4976
        %v5319 = vsub.f32 %v2260, %v4979
        %v5320 = vsub.f32 %v2307, %v4982
        %v5321 = vsub.f32 %v2310, %v4985
        %v5322 = vsub.f32 %v2357, %v4988
        %v5323 = vsub.f32 %v2360, %v4991
        %v5324 = vsub.f32 %v2407, %v4994
        %v5325 = vsub.f32 %v2410, %v4997
        %v5326 = vsub.f32 %v2457, %v5000
        %v5327 = vsub.f32 %v2460, %v5003
        %v5328 = vsub.f32 %v2507, %v5006
        %v5329 = vsub.f32 %v2510, %v5009
        %v5330 = vsub.f32 %v2557, %v5012
        %v5331 = vsub.f32 %v2560, %v5015
        %v5332 = vsub.f32 %v2607, %v5018
        %v5333 = vsub.f32 %v2610, %v5021
        %v5334 = vsub.f32 %v2657, %v5024
        %v5335 = vsub.f32 %v2660, %v5027
        %v5336 = vsub.f32 %v2707, %v5030
        %v5337 = vsub.f32 %v2710, %v5033
        %v5338 = vsub.f32 %v2757, %v5036
        %v5339 = vsub.f32 %v2760, %v5039
        %v5340 = vsub.f32 %v2807, %v5042
        %v5341 = vsub.f32 %v2810, %v5045
        %v5342 = vsub.f32 %v2857, %v5048
        %v5343 = vsub.f32 %v2860, %v5051
        %v5344 = vsub.f32 %v2907, %v5054
        %v5345 = vsub.f32 %v2910, %v5057
        %v5346 = vsub.f32 %v2957, %v5060
        %v5347 = vsub.f32 %v2960, %v5063
        %v5348 = vsub.f32 %v3007, %v5066
        %v5349 = vsub.f32 %v3010, %v5069
        %v5350 = vsub.f32 %v3057, %v5072
        %v5351 = vsub.f32 %v3060, %v5075
        %v5352 = vsub.f32 %v3107, %v5078
        %v5353 = vsub.f32 %v3110, %v5081
        %v5354 = vsub.f32 %v3157, %v5084
        %v5355 = vsub.f32 %v3160, %v5087
        %v5356 = vsub.f32 %v3207, %v5090
        %v5357 = vsub.f32 %v3210, %v5093
        %v5358 = vsub.f32 %v3257, %v5096
        %v5359 = vsub.f32 %v3260, %v5099
        %v5360 = vsub.f32 %v3307, %v5102
        %v5361 = vsub.f32 %v3310, %v5105
        %v5362 = vsub.f32 %v3357, %v5108
        %v5363 = vsub.f32 %v3360, %v5111
        %v5364 = vsub.f32 %v3407, %v5114
        %v5365 = vsub.f32 %v3410, %v5117
        %v5366 = vsub.f32 %v3457, %v5120
        %v5367 = vsub.f32 %v3460, %v5123
        %v5368 = vsub.f32 %v3507, %v5126
        %v5369 = vsub.f32 %v3510, %v5129
        %v5370 = vsub.f32 %v3557, %v5132
        %v5371 = vsub.f32 %v3560, %v5135
        %v5372 = vsub.f32 %v3607, %v5138
        %v5373 = vsub.f32 %v3610, %v5141
        %v5374 = vsub.f32 %v3657, %v5144
        %v5375 = vsub.f32 %v3660, %v5147
        %v5376 = vsub.f32 %v3707, %v5150
        %v5377 = vsub.f32 %v3710, %v5153
        %v5378 = vsub.f32 %v3757, %v5156
        %v5379 = vsub.f32 %v3760, %v5159
        %v5380 = vsub.f32 %v3807, %v5162
        %v5381 = vsub.f32 %v3810, %v5165
        %v5382 = vsub.f32 %v3857, %v5168
        %v5383 = vsub.f32 %v3860, %v5171
        %v5384 = vsub.f32 %v3907, %v5174
        %v5385 = vsub.f32 %v3910, %v5177
        %v5386 = vsub.f32 %v3957, %v5180
        %v5387 = vsub.f32 %v3960, %v5183
        %v5388 = vsub.f32 %v4007, %v5186
        %v5389 = vsub.f32 %v4010, %v5189
        %v5390 = vsub.f32 %v4057, %v5192
        %v5391 = vsub.f32 %v4060, %v5195
        %v5392 = vsub.f32 %v4107, %v5198
        %v5393 = vsub.f32 %v4110, %v5201
        %v5394 = vsub.f32 %v4157, %v5204
        %v5395 = vsub.f32 %v4160, %v5207
        %v5396 = vsub.f32 %v4207, %v5210
        %v5397 = vsub.f32 %v4210, %v5213
        %v5398 = vsub.f32 %v4257, %v5216
        %v5399 = vsub.f32 %v4260, %v5219
        %v5400 = vsub.f32 %v4307, %v5222
        %v5401 = vsub.f32 %v4310, %v5225
        %v5402 = vsub.f32 %v4357, %v5228
        %v5403 = vsub.f32 %v4360, %v5231
        %v5404 = vsub.f32 %v4407, %v5234
        %v5405 = vsub.f32 %v4410, %v5237
        %v5406 = vsub.f32 %v4457, %v5240
        %v5407 = vsub.f32 %v4460, %v5243
        %v5408 = vsub.f32 %v4507, %v5246
        %v5409 = vsub.f32 %v4510, %v5249
        %v5410 = vsub.f32 %v4557, %v5252
        %v5411 = vsub.f32 %v4560, %v5255
        %v5412 = vsub.f32 %v4607, %v5258
        %v5413 = vsub.f32 %v4610, %v5261
        %v5414 = vsub.f32 %v4657, %v5264
        %v5415 = vsub.f32 %v4660, %v5267
        %v5416 = vsub.f32 %v4707, %v5270
        %v5417 = vsub.f32 %v4710, %v5273
        %v5418 = vsub.f32 %v4757, %v5276
        %v5419 = vsub.f32 %v4760, %v5279
        %v5420 = vsub.f32 %v4807, %v5282
        %v5421 = vsub.f32 %v4810, %v5285
        %v5422 = vsub.f32 %v4857, %v5288
        %v5423 = vsub.f32 %v4860, %v5291
        %v5424 = vsub.f32 %v4907, %v5294
        %v5425 = vsub.f32 %v4910, %v5297
        %v5426 = vmul.f32 %v5298, 1.442695
        %v5427 = vpow.pop %v5426
        %v5428 = vmul.f32 %v5299, 1.442695
        %v5429 = vpow.pop %v5428
        %v5430 = vmul.f32 %v5300, 1.442695
        %v5431 = vpow.pop %v5430
        %v5432 = vmul.f32 %v5301, 1.442695
        %v5433 = vpow.pop %v5432
        %v5434 = vmul.f32 %v5302, 1.442695
        %v5435 = vpow.pop %v5434
        %v5436 = vmul.f32 %v5303, 1.442695
        %v5437 = vpow.pop %v5436
        %v5438 = vmul.f32 %v5304, 1.442695
        %v5439 = vpow.pop %v5438
        %v5440 = vmul.f32 %v5305, 1.442695
        %v5441 = vpow.pop %v5440
        %v5442 = vmul.f32 %v5306, 1.442695
        %v5443 = vpow.pop %v5442
        %v5444 = vmul.f32 %v5307, 1.442695
        %v5445 = vpow.pop %v5444
        %v5446 = vmul.f32 %v5308, 1.442695
        %v5447 = vpow.pop %v5446
        %v5448 = vmul.f32 %v5309, 1.442695
        %v5449 = vpow.pop %v5448
        %v5450 = vmul.f32 %v5310, 1.442695
        %v5451 = vpow.pop %v5450
        %v5452 = vmul.f32 %v5311, 1.442695
        %v5453 = vpow.pop %v5452
        %v5454 = vmul.f32 %v5312, 1.442695
        %v5455 = vpow.pop %v5454
        %v5456 = vmul.f32 %v5313, 1.442695
        %v5457 = vpow.pop %v5456
        %v5458 = vmul.f32 %v5314, 1.442695
        %v5459 = vpow.pop %v5458
        %v5460 = vmul.f32 %v5315, 1.442695
        %v5461 = vpow.pop %v5460
        %v5462 = vmul.f32 %v5316, 1.442695
        %v5463 = vpow.pop %v5462
        %v5464 = vmul.f32 %v5317, 1.442695
        %v5465 = vpow.pop %v5464
        %v5466 = vmul.f32 %v5318, 1.442695
        %v5467 = vpow.pop %v5466
        %v5468 = vmul.f32 %v5319, 1.442695
        %v5469 = vpow.pop %v5468
        %v5470 = vmul.f32 %v5320, 1.442695
        %v5471 = vpow.pop %v5470
        %v5472 = vmul.f32 %v5321, 1.442695
        %v5473 = vpow.pop %v5472
        %v5474 = vmul.f32 %v5322, 1.442695
        %v5475 = vpow.pop %v5474
        %v5476 = vmul.f32 %v5323, 1.442695
        %v5477 = vpow.pop %v5476
        %v5478 = vmul.f32 %v5324, 1.442695
        %v5479 = vpow.pop %v5478
        %v5480 = vmul.f32 %v5325, 1.442695
        %v5481 = vpow.pop %v5480
        %v5482 = vmul.f32 %v5326, 1.442695
        %v5483 = vpow.pop %v5482
        %v5484 = vmul.f32 %v5327, 1.442695
        %v5485 = vpow.pop %v5484
        %v5486 = vmul.f32 %v5328, 1.442695
        %v5487 = vpow.pop %v5486
        %v5488 = vmul.f32 %v5329, 1.442695
        %v5489 = vpow.pop %v5488
        %v5490 = vmul.f32 %v5330, 1.442695
        %v5491 = vpow.pop %v5490
        %v5492 = vmul.f32 %v5331, 1.442695
        %v5493 = vpow.pop %v5492
        %v5494 = vmul.f32 %v5332, 1.442695
        %v5495 = vpow.pop %v5494
        %v5496 = vmul.f32 %v5333, 1.442695
        %v5497 = vpow.pop %v5496
        %v5498 = vmul.f32 %v5334, 1.442695
        %v5499 = vpow.pop %v5498
        %v5500 = vmul.f32 %v5335, 1.442695
        %v5501 = vpow.pop %v5500
        %v5502 = vmul.f32 %v5336, 1.442695
        %v5503 = vpow.pop %v5502
        %v5504 = vmul.f32 %v5337, 1.442695
        %v5505 = vpow.pop %v5504
        %v5506 = vmul.f32 %v5338, 1.442695
        %v5507 = vpow.pop %v5506
        %v5508 = vmul.f32 %v5339, 1.442695
        %v5509 = vpow.pop %v5508
        %v5510 = vmul.f32 %v5340, 1.442695
        %v5511 = vpow.pop %v5510
        %v5512 = vmul.f32 %v5341, 1.442695
        %v5513 = vpow.pop %v5512
        %v5514 = vmul.f32 %v5342, 1.442695
        %v5515 = vpow.pop %v5514
        %v5516 = vmul.f32 %v5343, 1.442695
        %v5517 = vpow.pop %v5516
        %v5518 = vmul.f32 %v5344, 1.442695
        %v5519 = vpow.pop %v5518
        %v5520 = vmul.f32 %v5345, 1.442695
        %v5521 = vpow.pop %v5520
        %v5522 = vmul.f32 %v5346, 1.442695
        %v5523 = vpow.pop %v5522
        %v5524 = vmul.f32 %v5347, 1.442695
        %v5525 = vpow.pop %v5524
        %v5526 = vmul.f32 %v5348, 1.442695
        %v5527 = vpow.pop %v5526
        %v5528 = vmul.f32 %v5349, 1.442695
        %v5529 = vpow.pop %v5528
        %v5530 = vmul.f32 %v5350, 1.442695
        %v5531 = vpow.pop %v5530
        %v5532 = vmul.f32 %v5351, 1.442695
        %v5533 = vpow.pop %v5532
        %v5534 = vmul.f32 %v5352, 1.442695
        %v5535 = vpow.pop %v5534
        %v5536 = vmul.f32 %v5353, 1.442695
        %v5537 = vpow.pop %v5536
        %v5538 = vmul.f32 %v5354, 1.442695
        %v5539 = vpow.pop %v5538
        %v5540 = vmul.f32 %v5355, 1.442695
        %v5541 = vpow.pop %v5540
        %v5542 = vmul.f32 %v5356, 1.442695
        %v5543 = vpow.pop %v5542
        %v5544 = vmul.f32 %v5357, 1.442695
        %v5545 = vpow.pop %v5544
        %v5546 = vmul.f32 %v5358, 1.442695
        %v5547 = vpow.pop %v5546
        %v5548 = vmul.f32 %v5359, 1.442695
        %v5549 = vpow.pop %v5548
        %v5550 = vmul.f32 %v5360, 1.442695
        %v5551 = vpow.pop %v5550
        %v5552 = vmul.f32 %v5361, 1.442695
        %v5553 = vpow.pop %v5552
        %v5554 = vmul.f32 %v5362, 1.442695
        %v5555 = vpow.pop %v5554
        %v5556 = vmul.f32 %v5363, 1.442695
        %v5557 = vpow.pop %v5556
        %v5558 = vmul.f32 %v5364, 1.442695
        %v5559 = vpow.pop %v5558
        %v5560 = vmul.f32 %v5365, 1.442695
        %v5561 = vpow.pop %v5560
        %v5562 = vmul.f32 %v5366, 1.442695
        %v5563 = vpow.pop %v5562
        %v5564 = vmul.f32 %v5367, 1.442695
        %v5565 = vpow.pop %v5564
        %v5566 = vmul.f32 %v5368, 1.442695
        %v5567 = vpow.pop %v5566
        %v5568 = vmul.f32 %v5369, 1.442695
        %v5569 = vpow.pop %v5568
        %v5570 = vmul.f32 %v5370, 1.442695
        %v5571 = vpow.pop %v5570
        %v5572 = vmul.f32 %v5371, 1.442695
        %v5573 = vpow.pop %v5572
        %v5574 = vmul.f32 %v5372, 1.442695
        %v5575 = vpow.pop %v5574
        %v5576 = vmul.f32 %v5373, 1.442695
        %v5577 = vpow.pop %v5576
        %v5578 = vmul.f32 %v5374, 1.442695
        %v5579 = vpow.pop %v5578
        %v5580 = vmul.f32 %v5375, 1.442695
        %v5581 = vpow.pop %v5580
        %v5582 = vmul.f32 %v5376, 1.442695
        %v5583 = vpow.pop %v5582
        %v5584 = vmul.f32 %v5377, 1.442695
        %v5585 = vpow.pop %v5584
        %v5586 = vmul.f32 %v5378, 1.442695
        %v5587 = vpow.pop %v5586
        %v5588 = vmul.f32 %v5379, 1.442695
        %v5589 = vpow.pop %v5588
        %v5590 = vmul.f32 %v5380, 1.442695
        %v5591 = vpow.pop %v5590
        %v5592 = vmul.f32 %v5381, 1.442695
        %v5593 = vpow.pop %v5592
        %v5594 = vmul.f32 %v5382, 1.442695
        %v5595 = vpow.pop %v5594
        %v5596 = vmul.f32 %v5383, 1.442695
        %v5597 = vpow.pop %v5596
        %v5598 = vmul.f32 %v5384, 1.442695
        %v5599 = vpow.pop %v5598
        %v5600 = vmul.f32 %v5385, 1.442695
        %v5601 = vpow.pop %v5600
        %v5602 = vmul.f32 %v5386, 1.442695
        %v5603 = vpow.pop %v5602
        %v5604 = vmul.f32 %v5387, 1.442695
        %v5605 = vpow.pop %v5604
        %v5606 = vmul.f32 %v5388, 1.442695
        %v5607 = vpow.pop %v5606
        %v5608 = vmul.f32 %v5389, 1.442695
        %v5609 = vpow.pop %v5608
        %v5610 = vmul.f32 %v5390, 1.442695
        %v5611 = vpow.pop %v5610
        %v5612 = vmul.f32 %v5391, 1.442695
        %v5613 = vpow.pop %v5612
        %v5614 = vmul.f32 %v5392, 1.442695
        %v5615 = vpow.pop %v5614
        %v5616 = vmul.f32 %v5393, 1.442695
        %v5617 = vpow.pop %v5616
        %v5618 = vmul.f32 %v5394, 1.442695
        %v5619 = vpow.pop %v5618
        %v5620 = vmul.f32 %v5395, 1.442695
        %v5621 = vpow.pop %v5620
        %v5622 = vmul.f32 %v5396, 1.442695
        %v5623 = vpow.pop %v5622
        %v5624 = vmul.f32 %v5397, 1.442695
        %v5625 = vpow.pop %v5624
        %v5626 = vmul.f32 %v5398, 1.442695
        %v5627 = vpow.pop %v5626
        %v5628 = vmul.f32 %v5399, 1.442695
        %v5629 = vpow.pop %v5628
        %v5630 = vmul.f32 %v5400, 1.442695
        %v5631 = vpow.pop %v5630
        %v5632 = vmul.f32 %v5401, 1.442695
        %v5633 = vpow.pop %v5632
        %v5634 = vmul.f32 %v5402, 1.442695
        %v5635 = vpow.pop %v5634
        %v5636 = vmul.f32 %v5403, 1.442695
        %v5637 = vpow.pop %v5636
        %v5638 = vmul.f32 %v5404, 1.442695
        %v5639 = vpow.pop %v5638
        %v5640 = vmul.f32 %v5405, 1.442695
        %v5641 = vpow.pop %v5640
        %v5642 = vmul.f32 %v5406, 1.442695
        %v5643 = vpow.pop %v5642
        %v5644 = vmul.f32 %v5407, 1.442695
        %v5645 = vpow.pop %v5644
        %v5646 = vmul.f32 %v5408, 1.442695
        %v5647 = vpow.pop %v5646
        %v5648 = vmul.f32 %v5409, 1.442695
        %v5649 = vpow.pop %v5648
        %v5650 = vmul.f32 %v5410, 1.442695
        %v5651 = vpow.pop %v5650
        %v5652 = vmul.f32 %v5411, 1.442695
        %v5653 = vpow.pop %v5652
        %v5654 = vmul.f32 %v5412, 1.442695
        %v5655 = vpow.pop %v5654
        %v5656 = vmul.f32 %v5413, 1.442695
        %v5657 = vpow.pop %v5656
        %v5658 = vmul.f32 %v5414, 1.442695
        %v5659 = vpow.pop %v5658
        %v5660 = vmul.f32 %v5415, 1.442695
        %v5661 = vpow.pop %v5660
        %v5662 = vmul.f32 %v5416, 1.442695
        %v5663 = vpow.pop %v5662
        %v5664 = vmul.f32 %v5417, 1.442695
        %v5665 = vpow.pop %v5664
        %v5666 = vmul.f32 %v5418, 1.442695
        %v5667 = vpow.pop %v5666
        %v5668 = vmul.f32 %v5419, 1.442695
        %v5669 = vpow.pop %v5668
        %v5670 = vmul.f32 %v5420, 1.442695
        %v5671 = vpow.pop %v5670
        %v5672 = vmul.f32 %v5421, 1.442695
        %v5673 = vpow.pop %v5672
        %v5674 = vmul.f32 %v5422, 1.442695
        %v5675 = vpow.pop %v5674
        %v5676 = vmul.f32 %v5423, 1.442695
        %v5677 = vpow.pop %v5676
        %v5678 = vmul.f32 %v5424, 1.442695
        %v5679 = vpow.pop %v5678
        %v5680 = vmul.f32 %v5425, 1.442695
        %v5681 = vpow.pop %v5680
        %v5682 = vsel %vm4913, %v5427, 0.0
        %5683 = vadd.xlane.f32.xlu0 %v5682
        %v5684 = vpop.xlane.xlu0 %5683
        %v5685 = vsel %vm4913, %v5429, 0.0
        %5686 = vadd.xlane.f32.xlu0 %v5685
        %v5687 = vpop.xlane.xlu0 %5686
        %v5688 = vsel %vm4913, %v5431, 0.0
        %5689 = vadd.xlane.f32.xlu0 %v5688
        %v5690 = vpop.xlane.xlu0 %5689
        %v5691 = vsel %vm4913, %v5433, 0.0
        %5692 = vadd.xlane.f32.xlu0 %v5691
        %v5693 = vpop.xlane.xlu0 %5692
        %v5694 = vsel %vm4913, %v5435, 0.0
        %5695 = vadd.xlane.f32.xlu0 %v5694
        %v5696 = vpop.xlane.xlu0 %5695
        %v5697 = vsel %vm4913, %v5437, 0.0
        %5698 = vadd.xlane.f32.xlu0 %v5697
        %v5699 = vpop.xlane.xlu0 %5698
        %v5700 = vsel %vm4913, %v5439, 0.0
        %5701 = vadd.xlane.f32.xlu0 %v5700
        %v5702 = vpop.xlane.xlu0 %5701
        %v5703 = vsel %vm4913, %v5441, 0.0
        %5704 = vadd.xlane.f32.xlu0 %v5703
        %v5705 = vpop.xlane.xlu0 %5704
        %v5706 = vsel %vm4913, %v5443, 0.0
        %5707 = vadd.xlane.f32.xlu0 %v5706
        %v5708 = vpop.xlane.xlu0 %5707
        %v5709 = vsel %vm4913, %v5445, 0.0
        %5710 = vadd.xlane.f32.xlu0 %v5709
        %v5711 = vpop.xlane.xlu0 %5710
        %v5712 = vsel %vm4913, %v5447, 0.0
        %5713 = vadd.xlane.f32.xlu0 %v5712
        %v5714 = vpop.xlane.xlu0 %5713
        %v5715 = vsel %vm4913, %v5449, 0.0
        %5716 = vadd.xlane.f32.xlu0 %v5715
        %v5717 = vpop.xlane.xlu0 %5716
        %v5718 = vsel %vm4913, %v5451, 0.0
        %5719 = vadd.xlane.f32.xlu0 %v5718
        %v5720 = vpop.xlane.xlu0 %5719
        %v5721 = vsel %vm4913, %v5453, 0.0
        %5722 = vadd.xlane.f32.xlu0 %v5721
        %v5723 = vpop.xlane.xlu0 %5722
        %v5724 = vsel %vm4913, %v5455, 0.0
        %5725 = vadd.xlane.f32.xlu0 %v5724
        %v5726 = vpop.xlane.xlu0 %5725
        %v5727 = vsel %vm4913, %v5457, 0.0
        %5728 = vadd.xlane.f32.xlu0 %v5727
        %v5729 = vpop.xlane.xlu0 %5728
        %v5730 = vsel %vm4913, %v5459, 0.0
        %5731 = vadd.xlane.f32.xlu0 %v5730
        %v5732 = vpop.xlane.xlu0 %5731
        %v5733 = vsel %vm4913, %v5461, 0.0
        %5734 = vadd.xlane.f32.xlu0 %v5733
        %v5735 = vpop.xlane.xlu0 %5734
        %v5736 = vsel %vm4913, %v5463, 0.0
        %5737 = vadd.xlane.f32.xlu0 %v5736
        %v5738 = vpop.xlane.xlu0 %5737
        %v5739 = vsel %vm4913, %v5465, 0.0
        %5740 = vadd.xlane.f32.xlu0 %v5739
        %v5741 = vpop.xlane.xlu0 %5740
        %v5742 = vsel %vm4913, %v5467, 0.0
        %5743 = vadd.xlane.f32.xlu0 %v5742
        %v5744 = vpop.xlane.xlu0 %5743
        %v5745 = vsel %vm4913, %v5469, 0.0
        %5746 = vadd.xlane.f32.xlu0 %v5745
        %v5747 = vpop.xlane.xlu0 %5746
        %v5748 = vsel %vm4913, %v5471, 0.0
        %5749 = vadd.xlane.f32.xlu0 %v5748
        %v5750 = vpop.xlane.xlu0 %5749
        %v5751 = vsel %vm4913, %v5473, 0.0
        %5752 = vadd.xlane.f32.xlu0 %v5751
        %v5753 = vpop.xlane.xlu0 %5752
        %v5754 = vsel %vm4913, %v5475, 0.0
        %5755 = vadd.xlane.f32.xlu0 %v5754
        %v5756 = vpop.xlane.xlu0 %5755
        %v5757 = vsel %vm4913, %v5477, 0.0
        %5758 = vadd.xlane.f32.xlu0 %v5757
        %v5759 = vpop.xlane.xlu0 %5758
        %v5760 = vsel %vm4913, %v5479, 0.0
        %5761 = vadd.xlane.f32.xlu0 %v5760
        %v5762 = vpop.xlane.xlu0 %5761
        %v5763 = vsel %vm4913, %v5481, 0.0
        %5764 = vadd.xlane.f32.xlu0 %v5763
        %v5765 = vpop.xlane.xlu0 %5764
        %v5766 = vsel %vm4913, %v5483, 0.0
        %5767 = vadd.xlane.f32.xlu0 %v5766
        %v5768 = vpop.xlane.xlu0 %5767
        %v5769 = vsel %vm4913, %v5485, 0.0
        %5770 = vadd.xlane.f32.xlu0 %v5769
        %v5771 = vpop.xlane.xlu0 %5770
        %v5772 = vsel %vm4913, %v5487, 0.0
        %5773 = vadd.xlane.f32.xlu0 %v5772
        %v5774 = vpop.xlane.xlu0 %5773
        %v5775 = vsel %vm4913, %v5489, 0.0
        %5776 = vadd.xlane.f32.xlu0 %v5775
        %v5777 = vpop.xlane.xlu0 %5776
        %v5778 = vsel %vm4913, %v5491, 0.0
        %5779 = vadd.xlane.f32.xlu0 %v5778
        %v5780 = vpop.xlane.xlu0 %5779
        %v5781 = vsel %vm4913, %v5493, 0.0
        %5782 = vadd.xlane.f32.xlu0 %v5781
        %v5783 = vpop.xlane.xlu0 %5782
        %v5784 = vsel %vm4913, %v5495, 0.0
        %5785 = vadd.xlane.f32.xlu0 %v5784
        %v5786 = vpop.xlane.xlu0 %5785
        %v5787 = vsel %vm4913, %v5497, 0.0
        %5788 = vadd.xlane.f32.xlu0 %v5787
        %v5789 = vpop.xlane.xlu0 %5788
        %v5790 = vsel %vm4913, %v5499, 0.0
        %5791 = vadd.xlane.f32.xlu0 %v5790
        %v5792 = vpop.xlane.xlu0 %5791
        %v5793 = vsel %vm4913, %v5501, 0.0
        %5794 = vadd.xlane.f32.xlu0 %v5793
        %v5795 = vpop.xlane.xlu0 %5794
        %v5796 = vsel %vm4913, %v5503, 0.0
        %5797 = vadd.xlane.f32.xlu0 %v5796
        %v5798 = vpop.xlane.xlu0 %5797
        %v5799 = vsel %vm4913, %v5505, 0.0
        %5800 = vadd.xlane.f32.xlu0 %v5799
        %v5801 = vpop.xlane.xlu0 %5800
        %v5802 = vsel %vm4913, %v5507, 0.0
        %5803 = vadd.xlane.f32.xlu0 %v5802
        %v5804 = vpop.xlane.xlu0 %5803
        %v5805 = vsel %vm4913, %v5509, 0.0
        %5806 = vadd.xlane.f32.xlu0 %v5805
        %v5807 = vpop.xlane.xlu0 %5806
        %v5808 = vsel %vm4913, %v5511, 0.0
        %5809 = vadd.xlane.f32.xlu0 %v5808
        %v5810 = vpop.xlane.xlu0 %5809
        %v5811 = vsel %vm4913, %v5513, 0.0
        %5812 = vadd.xlane.f32.xlu0 %v5811
        %v5813 = vpop.xlane.xlu0 %5812
        %v5814 = vsel %vm4913, %v5515, 0.0
        %5815 = vadd.xlane.f32.xlu0 %v5814
        %v5816 = vpop.xlane.xlu0 %5815
        %v5817 = vsel %vm4913, %v5517, 0.0
        %5818 = vadd.xlane.f32.xlu0 %v5817
        %v5819 = vpop.xlane.xlu0 %5818
        %v5820 = vsel %vm4913, %v5519, 0.0
        %5821 = vadd.xlane.f32.xlu0 %v5820
        %v5822 = vpop.xlane.xlu0 %5821
        %v5823 = vsel %vm4913, %v5521, 0.0
        %5824 = vadd.xlane.f32.xlu0 %v5823
        %v5825 = vpop.xlane.xlu0 %5824
        %v5826 = vsel %vm4913, %v5523, 0.0
        %5827 = vadd.xlane.f32.xlu0 %v5826
        %v5828 = vpop.xlane.xlu0 %5827
        %v5829 = vsel %vm4913, %v5525, 0.0
        %5830 = vadd.xlane.f32.xlu0 %v5829
        %v5831 = vpop.xlane.xlu0 %5830
        %v5832 = vsel %vm4913, %v5527, 0.0
        %5833 = vadd.xlane.f32.xlu0 %v5832
        %v5834 = vpop.xlane.xlu0 %5833
        %v5835 = vsel %vm4913, %v5529, 0.0
        %5836 = vadd.xlane.f32.xlu0 %v5835
        %v5837 = vpop.xlane.xlu0 %5836
        %v5838 = vsel %vm4913, %v5531, 0.0
        %5839 = vadd.xlane.f32.xlu0 %v5838
        %v5840 = vpop.xlane.xlu0 %5839
        %v5841 = vsel %vm4913, %v5533, 0.0
        %5842 = vadd.xlane.f32.xlu0 %v5841
        %v5843 = vpop.xlane.xlu0 %5842
        %v5844 = vsel %vm4913, %v5535, 0.0
        %5845 = vadd.xlane.f32.xlu0 %v5844
        %v5846 = vpop.xlane.xlu0 %5845
        %v5847 = vsel %vm4913, %v5537, 0.0
        %5848 = vadd.xlane.f32.xlu0 %v5847
        %v5849 = vpop.xlane.xlu0 %5848
        %v5850 = vsel %vm4913, %v5539, 0.0
        %5851 = vadd.xlane.f32.xlu0 %v5850
        %v5852 = vpop.xlane.xlu0 %5851
        %v5853 = vsel %vm4913, %v5541, 0.0
        %5854 = vadd.xlane.f32.xlu0 %v5853
        %v5855 = vpop.xlane.xlu0 %5854
        %v5856 = vsel %vm4913, %v5543, 0.0
        %5857 = vadd.xlane.f32.xlu0 %v5856
        %v5858 = vpop.xlane.xlu0 %5857
        %v5859 = vsel %vm4913, %v5545, 0.0
        %5860 = vadd.xlane.f32.xlu0 %v5859
        %v5861 = vpop.xlane.xlu0 %5860
        %v5862 = vsel %vm4913, %v5547, 0.0
        %5863 = vadd.xlane.f32.xlu0 %v5862
        %v5864 = vpop.xlane.xlu0 %5863
        %v5865 = vsel %vm4913, %v5549, 0.0
        %5866 = vadd.xlane.f32.xlu0 %v5865
        %v5867 = vpop.xlane.xlu0 %5866
        %v5868 = vsel %vm4913, %v5551, 0.0
        %5869 = vadd.xlane.f32.xlu0 %v5868
        %v5870 = vpop.xlane.xlu0 %5869
        %v5871 = vsel %vm4913, %v5553, 0.0
        %5872 = vadd.xlane.f32.xlu0 %v5871
        %v5873 = vpop.xlane.xlu0 %5872
        %v5874 = vsel %vm4913, %v5555, 0.0
        %5875 = vadd.xlane.f32.xlu0 %v5874
        %v5876 = vpop.xlane.xlu0 %5875
        %v5877 = vsel %vm4913, %v5557, 0.0
        %5878 = vadd.xlane.f32.xlu0 %v5877
        %v5879 = vpop.xlane.xlu0 %5878
        %v5880 = vsel %vm4913, %v5559, 0.0
        %5881 = vadd.xlane.f32.xlu0 %v5880
        %v5882 = vpop.xlane.xlu0 %5881
        %v5883 = vsel %vm4913, %v5561, 0.0
        %5884 = vadd.xlane.f32.xlu0 %v5883
        %v5885 = vpop.xlane.xlu0 %5884
        %v5886 = vsel %vm4913, %v5563, 0.0
        %5887 = vadd.xlane.f32.xlu0 %v5886
        %v5888 = vpop.xlane.xlu0 %5887
        %v5889 = vsel %vm4913, %v5565, 0.0
        %5890 = vadd.xlane.f32.xlu0 %v5889
        %v5891 = vpop.xlane.xlu0 %5890
        %v5892 = vsel %vm4913, %v5567, 0.0
        %5893 = vadd.xlane.f32.xlu0 %v5892
        %v5894 = vpop.xlane.xlu0 %5893
        %v5895 = vsel %vm4913, %v5569, 0.0
        %5896 = vadd.xlane.f32.xlu0 %v5895
        %v5897 = vpop.xlane.xlu0 %5896
        %v5898 = vsel %vm4913, %v5571, 0.0
        %5899 = vadd.xlane.f32.xlu0 %v5898
        %v5900 = vpop.xlane.xlu0 %5899
        %v5901 = vsel %vm4913, %v5573, 0.0
        %5902 = vadd.xlane.f32.xlu0 %v5901
        %v5903 = vpop.xlane.xlu0 %5902
        %v5904 = vsel %vm4913, %v5575, 0.0
        %5905 = vadd.xlane.f32.xlu0 %v5904
        %v5906 = vpop.xlane.xlu0 %5905
        %v5907 = vsel %vm4913, %v5577, 0.0
        %5908 = vadd.xlane.f32.xlu0 %v5907
        %v5909 = vpop.xlane.xlu0 %5908
        %v5910 = vsel %vm4913, %v5579, 0.0
        %5911 = vadd.xlane.f32.xlu0 %v5910
        %v5912 = vpop.xlane.xlu0 %5911
        %v5913 = vsel %vm4913, %v5581, 0.0
        %5914 = vadd.xlane.f32.xlu0 %v5913
        %v5915 = vpop.xlane.xlu0 %5914
        %v5916 = vsel %vm4913, %v5583, 0.0
        %5917 = vadd.xlane.f32.xlu0 %v5916
        %v5918 = vpop.xlane.xlu0 %5917
        %v5919 = vsel %vm4913, %v5585, 0.0
        %5920 = vadd.xlane.f32.xlu0 %v5919
        %v5921 = vpop.xlane.xlu0 %5920
        %v5922 = vsel %vm4913, %v5587, 0.0
        %5923 = vadd.xlane.f32.xlu0 %v5922
        %v5924 = vpop.xlane.xlu0 %5923
        %v5925 = vsel %vm4913, %v5589, 0.0
        %5926 = vadd.xlane.f32.xlu0 %v5925
        %v5927 = vpop.xlane.xlu0 %5926
        %v5928 = vsel %vm4913, %v5591, 0.0
        %5929 = vadd.xlane.f32.xlu0 %v5928
        %v5930 = vpop.xlane.xlu0 %5929
        %v5931 = vsel %vm4913, %v5593, 0.0
        %5932 = vadd.xlane.f32.xlu0 %v5931
        %v5933 = vpop.xlane.xlu0 %5932
        %v5934 = vsel %vm4913, %v5595, 0.0
        %5935 = vadd.xlane.f32.xlu0 %v5934
        %v5936 = vpop.xlane.xlu0 %5935
        %v5937 = vsel %vm4913, %v5597, 0.0
        %5938 = vadd.xlane.f32.xlu0 %v5937
        %v5939 = vpop.xlane.xlu0 %5938
        %v5940 = vsel %vm4913, %v5599, 0.0
        %5941 = vadd.xlane.f32.xlu0 %v5940
        %v5942 = vpop.xlane.xlu0 %5941
        %v5943 = vsel %vm4913, %v5601, 0.0
        %5944 = vadd.xlane.f32.xlu0 %v5943
        %v5945 = vpop.xlane.xlu0 %5944
        %v5946 = vsel %vm4913, %v5603, 0.0
        %5947 = vadd.xlane.f32.xlu0 %v5946
        %v5948 = vpop.xlane.xlu0 %5947
        %v5949 = vsel %vm4913, %v5605, 0.0
        %5950 = vadd.xlane.f32.xlu0 %v5949
        %v5951 = vpop.xlane.xlu0 %5950
        %v5952 = vsel %vm4913, %v5607, 0.0
        %5953 = vadd.xlane.f32.xlu0 %v5952
        %v5954 = vpop.xlane.xlu0 %5953
        %v5955 = vsel %vm4913, %v5609, 0.0
        %5956 = vadd.xlane.f32.xlu0 %v5955
        %v5957 = vpop.xlane.xlu0 %5956
        %v5958 = vsel %vm4913, %v5611, 0.0
        %5959 = vadd.xlane.f32.xlu0 %v5958
        %v5960 = vpop.xlane.xlu0 %5959
        %v5961 = vsel %vm4913, %v5613, 0.0
        %5962 = vadd.xlane.f32.xlu0 %v5961
        %v5963 = vpop.xlane.xlu0 %5962
        %v5964 = vsel %vm4913, %v5615, 0.0
        %5965 = vadd.xlane.f32.xlu0 %v5964
        %v5966 = vpop.xlane.xlu0 %5965
        %v5967 = vsel %vm4913, %v5617, 0.0
        %5968 = vadd.xlane.f32.xlu0 %v5967
        %v5969 = vpop.xlane.xlu0 %5968
        %v5970 = vsel %vm4913, %v5619, 0.0
        %5971 = vadd.xlane.f32.xlu0 %v5970
        %v5972 = vpop.xlane.xlu0 %5971
        %v5973 = vsel %vm4913, %v5621, 0.0
        %5974 = vadd.xlane.f32.xlu0 %v5973
        %v5975 = vpop.xlane.xlu0 %5974
        %v5976 = vsel %vm4913, %v5623, 0.0
        %5977 = vadd.xlane.f32.xlu0 %v5976
        %v5978 = vpop.xlane.xlu0 %5977
        %v5979 = vsel %vm4913, %v5625, 0.0
        %5980 = vadd.xlane.f32.xlu0 %v5979
        %v5981 = vpop.xlane.xlu0 %5980
        %v5982 = vsel %vm4913, %v5627, 0.0
        %5983 = vadd.xlane.f32.xlu0 %v5982
        %v5984 = vpop.xlane.xlu0 %5983
        %v5985 = vsel %vm4913, %v5629, 0.0
        %5986 = vadd.xlane.f32.xlu0 %v5985
        %v5987 = vpop.xlane.xlu0 %5986
        %v5988 = vsel %vm4913, %v5631, 0.0
        %5989 = vadd.xlane.f32.xlu0 %v5988
        %v5990 = vpop.xlane.xlu0 %5989
        %v5991 = vsel %vm4913, %v5633, 0.0
        %5992 = vadd.xlane.f32.xlu0 %v5991
        %v5993 = vpop.xlane.xlu0 %5992
        %v5994 = vsel %vm4913, %v5635, 0.0
        %5995 = vadd.xlane.f32.xlu0 %v5994
        %v5996 = vpop.xlane.xlu0 %5995
        %v5997 = vsel %vm4913, %v5637, 0.0
        %5998 = vadd.xlane.f32.xlu0 %v5997
        %v5999 = vpop.xlane.xlu0 %5998
        %v6000 = vsel %vm4913, %v5639, 0.0
        %6001 = vadd.xlane.f32.xlu0 %v6000
        %v6002 = vpop.xlane.xlu0 %6001
        %v6003 = vsel %vm4913, %v5641, 0.0
        %6004 = vadd.xlane.f32.xlu0 %v6003
        %v6005 = vpop.xlane.xlu0 %6004
        %v6006 = vsel %vm4913, %v5643, 0.0
        %6007 = vadd.xlane.f32.xlu0 %v6006
        %v6008 = vpop.xlane.xlu0 %6007
        %v6009 = vsel %vm4913, %v5645, 0.0
        %6010 = vadd.xlane.f32.xlu0 %v6009
        %v6011 = vpop.xlane.xlu0 %6010
        %v6012 = vsel %vm4913, %v5647, 0.0
        %6013 = vadd.xlane.f32.xlu0 %v6012
        %v6014 = vpop.xlane.xlu0 %6013
        %v6015 = vsel %vm4913, %v5649, 0.0
        %6016 = vadd.xlane.f32.xlu0 %v6015
        %v6017 = vpop.xlane.xlu0 %6016
        %v6018 = vsel %vm4913, %v5651, 0.0
        %6019 = vadd.xlane.f32.xlu0 %v6018
        %v6020 = vpop.xlane.xlu0 %6019
        %v6021 = vsel %vm4913, %v5653, 0.0
        %6022 = vadd.xlane.f32.xlu0 %v6021
        %v6023 = vpop.xlane.xlu0 %6022
        %v6024 = vsel %vm4913, %v5655, 0.0
        %6025 = vadd.xlane.f32.xlu0 %v6024
        %v6026 = vpop.xlane.xlu0 %6025
        %v6027 = vsel %vm4913, %v5657, 0.0
        %6028 = vadd.xlane.f32.xlu0 %v6027
        %v6029 = vpop.xlane.xlu0 %6028
        %v6030 = vsel %vm4913, %v5659, 0.0
        %6031 = vadd.xlane.f32.xlu0 %v6030
        %v6032 = vpop.xlane.xlu0 %6031
        %v6033 = vsel %vm4913, %v5661, 0.0
        %6034 = vadd.xlane.f32.xlu0 %v6033
        %v6035 = vpop.xlane.xlu0 %6034
        %v6036 = vsel %vm4913, %v5663, 0.0
        %6037 = vadd.xlane.f32.xlu0 %v6036
        %v6038 = vpop.xlane.xlu0 %6037
        %v6039 = vsel %vm4913, %v5665, 0.0
        %6040 = vadd.xlane.f32.xlu0 %v6039
        %v6041 = vpop.xlane.xlu0 %6040
        %v6042 = vsel %vm4913, %v5667, 0.0
        %6043 = vadd.xlane.f32.xlu0 %v6042
        %v6044 = vpop.xlane.xlu0 %6043
        %v6045 = vsel %vm4913, %v5669, 0.0
        %6046 = vadd.xlane.f32.xlu0 %v6045
        %v6047 = vpop.xlane.xlu0 %6046
        %v6048 = vsel %vm4913, %v5671, 0.0
        %6049 = vadd.xlane.f32.xlu0 %v6048
        %v6050 = vpop.xlane.xlu0 %6049
        %v6051 = vsel %vm4913, %v5673, 0.0
        %6052 = vadd.xlane.f32.xlu0 %v6051
        %v6053 = vpop.xlane.xlu0 %6052
        %v6054 = vsel %vm4913, %v5675, 0.0
        %6055 = vadd.xlane.f32.xlu0 %v6054
        %v6056 = vpop.xlane.xlu0 %6055
        %v6057 = vsel %vm4913, %v5677, 0.0
        %6058 = vadd.xlane.f32.xlu0 %v6057
        %v6059 = vpop.xlane.xlu0 %6058
        %v6060 = vsel %vm4913, %v5679, 0.0
        %6061 = vadd.xlane.f32.xlu0 %v6060
        %v6062 = vpop.xlane.xlu0 %6061
        %v6063 = vsel %vm4913, %v5681, 0.0
        %6064 = vadd.xlane.f32.xlu0 %v6063
        %v6065 = vpop.xlane.xlu0 %6064
        %v6066 = vrcp.pop %v5684
        %v6067 = vrcp.pop %v5687
        %v6068 = vrcp.pop %v5690
        %v6069 = vrcp.pop %v5693
        %v6070 = vrcp.pop %v5696
        %v6071 = vrcp.pop %v5699
        %v6072 = vrcp.pop %v5702
        %v6073 = vrcp.pop %v5705
        %v6074 = vrcp.pop %v5708
        %v6075 = vrcp.pop %v5711
        %v6076 = vrcp.pop %v5714
        %v6077 = vrcp.pop %v5717
        %v6078 = vrcp.pop %v5720
        %v6079 = vrcp.pop %v5723
        %v6080 = vrcp.pop %v5726
        %v6081 = vrcp.pop %v5729
        %v6082 = vrcp.pop %v5732
        %v6083 = vrcp.pop %v5735
        %v6084 = vrcp.pop %v5738
        %v6085 = vrcp.pop %v5741
        %v6086 = vrcp.pop %v5744
        %v6087 = vrcp.pop %v5747
        %v6088 = vrcp.pop %v5750
        %v6089 = vrcp.pop %v5753
        %v6090 = vrcp.pop %v5756
        %v6091 = vrcp.pop %v5759
        %v6092 = vrcp.pop %v5762
        %v6093 = vrcp.pop %v5765
        %v6094 = vrcp.pop %v5768
        %v6095 = vrcp.pop %v5771
        %v6096 = vrcp.pop %v5774
        %v6097 = vrcp.pop %v5777
        %v6098 = vrcp.pop %v5780
        %v6099 = vrcp.pop %v5783
        %v6100 = vrcp.pop %v5786
        %v6101 = vrcp.pop %v5789
        %v6102 = vrcp.pop %v5792
        %v6103 = vrcp.pop %v5795
        %v6104 = vrcp.pop %v5798
        %v6105 = vrcp.pop %v5801
        %v6106 = vrcp.pop %v5804
        %v6107 = vrcp.pop %v5807
        %v6108 = vrcp.pop %v5810
        %v6109 = vrcp.pop %v5813
        %v6110 = vrcp.pop %v5816
        %v6111 = vrcp.pop %v5819
        %v6112 = vrcp.pop %v5822
        %v6113 = vrcp.pop %v5825
        %v6114 = vrcp.pop %v5828
        %v6115 = vrcp.pop %v5831
        %v6116 = vrcp.pop %v5834
        %v6117 = vrcp.pop %v5837
        %v6118 = vrcp.pop %v5840
        %v6119 = vrcp.pop %v5843
        %v6120 = vrcp.pop %v5846
        %v6121 = vrcp.pop %v5849
        %v6122 = vrcp.pop %v5852
        %v6123 = vrcp.pop %v5855
        %v6124 = vrcp.pop %v5858
        %v6125 = vrcp.pop %v5861
        %v6126 = vrcp.pop %v5864
        %v6127 = vrcp.pop %v5867
        %v6128 = vrcp.pop %v5870
        %v6129 = vrcp.pop %v5873
        %v6130 = vrcp.pop %v5876
        %v6131 = vrcp.pop %v5879
        %v6132 = vrcp.pop %v5882
        %v6133 = vrcp.pop %v5885
        %v6134 = vrcp.pop %v5888
        %v6135 = vrcp.pop %v5891
        %v6136 = vrcp.pop %v5894
        %v6137 = vrcp.pop %v5897
        %v6138 = vrcp.pop %v5900
        %v6139 = vrcp.pop %v5903
        %v6140 = vrcp.pop %v5906
        %v6141 = vrcp.pop %v5909
        %v6142 = vrcp.pop %v5912
        %v6143 = vrcp.pop %v5915
        %v6144 = vrcp.pop %v5918
        %v6145 = vrcp.pop %v5921
        %v6146 = vrcp.pop %v5924
        %v6147 = vrcp.pop %v5927
        %v6148 = vrcp.pop %v5930
        %v6149 = vrcp.pop %v5933
        %v6150 = vrcp.pop %v5936
        %v6151 = vrcp.pop %v5939
        %v6152 = vrcp.pop %v5942
        %v6153 = vrcp.pop %v5945
        %v6154 = vrcp.pop %v5948
        %v6155 = vrcp.pop %v5951
        %v6156 = vrcp.pop %v5954
        %v6157 = vrcp.pop %v5957
        %v6158 = vrcp.pop %v5960
        %v6159 = vrcp.pop %v5963
        %v6160 = vrcp.pop %v5966
        %v6161 = vrcp.pop %v5969
        %v6162 = vrcp.pop %v5972
        %v6163 = vrcp.pop %v5975
        %v6164 = vrcp.pop %v5978
        %v6165 = vrcp.pop %v5981
        %v6166 = vrcp.pop %v5984
        %v6167 = vrcp.pop %v5987
        %v6168 = vrcp.pop %v5990
        %v6169 = vrcp.pop %v5993
        %v6170 = vrcp.pop %v5996
        %v6171 = vrcp.pop %v5999
        %v6172 = vrcp.pop %v6002
        %v6173 = vrcp.pop %v6005
        %v6174 = vrcp.pop %v6008
        %v6175 = vrcp.pop %v6011
        %v6176 = vrcp.pop %v6014
        %v6177 = vrcp.pop %v6017
        %v6178 = vrcp.pop %v6020
        %v6179 = vrcp.pop %v6023
        %v6180 = vrcp.pop %v6026
        %v6181 = vrcp.pop %v6029
        %v6182 = vrcp.pop %v6032
        %v6183 = vrcp.pop %v6035
        %v6184 = vrcp.pop %v6038
        %v6185 = vrcp.pop %v6041
        %v6186 = vrcp.pop %v6044
        %v6187 = vrcp.pop %v6047
        %v6188 = vrcp.pop %v6050
        %v6189 = vrcp.pop %v6053
        %v6190 = vrcp.pop %v6056
        %v6191 = vrcp.pop %v6059
        %v6192 = vrcp.pop %v6062
        %v6193 = vrcp.pop %v6065
        %v6194 = vmul.f32 %v5427, %v6066
        %v6195 = vmul.f32 %v5429, %v6067
        %v6196 = vmul.f32 %v5431, %v6068
        %v6197 = vmul.f32 %v5433, %v6069
        %v6198 = vmul.f32 %v5435, %v6070
        %v6199 = vmul.f32 %v5437, %v6071
        %v6200 = vmul.f32 %v5439, %v6072
        %v6201 = vmul.f32 %v5441, %v6073
        %v6202 = vmul.f32 %v5443, %v6074
        %v6203 = vmul.f32 %v5445, %v6075
        %v6204 = vmul.f32 %v5447, %v6076
        %v6205 = vmul.f32 %v5449, %v6077
        %v6206 = vmul.f32 %v5451, %v6078
        %v6207 = vmul.f32 %v5453, %v6079
        %v6208 = vmul.f32 %v5455, %v6080
        %v6209 = vmul.f32 %v5457, %v6081
        %v6210 = vmul.f32 %v5459, %v6082
        %v6211 = vmul.f32 %v5461, %v6083
        %v6212 = vmul.f32 %v5463, %v6084
        %v6213 = vmul.f32 %v5465, %v6085
        %v6214 = vmul.f32 %v5467, %v6086
        %v6215 = vmul.f32 %v5469, %v6087
        %v6216 = vmul.f32 %v5471, %v6088
        %v6217 = vmul.f32 %v5473, %v6089
        %v6218 = vmul.f32 %v5475, %v6090
        %v6219 = vmul.f32 %v5477, %v6091
        %v6220 = vmul.f32 %v5479, %v6092
        %v6221 = vmul.f32 %v5481, %v6093
        %v6222 = vmul.f32 %v5483, %v6094
        %v6223 = vmul.f32 %v5485, %v6095
        %v6224 = vmul.f32 %v5487, %v6096
        %v6225 = vmul.f32 %v5489, %v6097
        %v6226 = vmul.f32 %v5491, %v6098
        %v6227 = vmul.f32 %v5493, %v6099
        %v6228 = vmul.f32 %v5495, %v6100
        %v6229 = vmul.f32 %v5497, %v6101
        %v6230 = vmul.f32 %v5499, %v6102
        %v6231 = vmul.f32 %v5501, %v6103
        %v6232 = vmul.f32 %v5503, %v6104
        %v6233 = vmul.f32 %v5505, %v6105
        %v6234 = vmul.f32 %v5507, %v6106
        %v6235 = vmul.f32 %v5509, %v6107
        %v6236 = vmul.f32 %v5511, %v6108
        %v6237 = vmul.f32 %v5513, %v6109
        %v6238 = vmul.f32 %v5515, %v6110
        %v6239 = vmul.f32 %v5517, %v6111
        %v6240 = vmul.f32 %v5519, %v6112
        %v6241 = vmul.f32 %v5521, %v6113
        %v6242 = vmul.f32 %v5523, %v6114
        %v6243 = vmul.f32 %v5525, %v6115
        %v6244 = vmul.f32 %v5527, %v6116
        %v6245 = vmul.f32 %v5529, %v6117
        %v6246 = vmul.f32 %v5531, %v6118
        %v6247 = vmul.f32 %v5533, %v6119
        %v6248 = vmul.f32 %v5535, %v6120
        %v6249 = vmul.f32 %v5537, %v6121
        %v6250 = vmul.f32 %v5539, %v6122
        %v6251 = vmul.f32 %v5541, %v6123
        %v6252 = vmul.f32 %v5543, %v6124
        %v6253 = vmul.f32 %v5545, %v6125
        %v6254 = vmul.f32 %v5547, %v6126
        %v6255 = vmul.f32 %v5549, %v6127
        %v6256 = vmul.f32 %v5551, %v6128
        %v6257 = vmul.f32 %v5553, %v6129
        %v6258 = vmul.f32 %v5555, %v6130
        %v6259 = vmul.f32 %v5557, %v6131
        %v6260 = vmul.f32 %v5559, %v6132
        %v6261 = vmul.f32 %v5561, %v6133
        %v6262 = vmul.f32 %v5563, %v6134
        %v6263 = vmul.f32 %v5565, %v6135
        %v6264 = vmul.f32 %v5567, %v6136
        %v6265 = vmul.f32 %v5569, %v6137
        %v6266 = vmul.f32 %v5571, %v6138
        %v6267 = vmul.f32 %v5573, %v6139
        %v6268 = vmul.f32 %v5575, %v6140
        %v6269 = vmul.f32 %v5577, %v6141
        %v6270 = vmul.f32 %v5579, %v6142
        %v6271 = vmul.f32 %v5581, %v6143
        %v6272 = vmul.f32 %v5583, %v6144
        %v6273 = vmul.f32 %v5585, %v6145
        %v6274 = vmul.f32 %v5587, %v6146
        %v6275 = vmul.f32 %v5589, %v6147
        %v6276 = vmul.f32 %v5591, %v6148
        %v6277 = vmul.f32 %v5593, %v6149
        %v6278 = vmul.f32 %v5595, %v6150
        %v6279 = vmul.f32 %v5597, %v6151
        %v6280 = vmul.f32 %v5599, %v6152
        %v6281 = vmul.f32 %v5601, %v6153
        %v6282 = vmul.f32 %v5603, %v6154
        %v6283 = vmul.f32 %v5605, %v6155
        %v6284 = vmul.f32 %v5607, %v6156
        %v6285 = vmul.f32 %v5609, %v6157
        %v6286 = vmul.f32 %v5611, %v6158
        %v6287 = vmul.f32 %v5613, %v6159
        %v6288 = vmul.f32 %v5615, %v6160
        %v6289 = vmul.f32 %v5617, %v6161
        %v6290 = vmul.f32 %v5619, %v6162
        %v6291 = vmul.f32 %v5621, %v6163
        %v6292 = vmul.f32 %v5623, %v6164
        %v6293 = vmul.f32 %v5625, %v6165
        %v6294 = vmul.f32 %v5627, %v6166
        %v6295 = vmul.f32 %v5629, %v6167
        %v6296 = vmul.f32 %v5631, %v6168
        %v6297 = vmul.f32 %v5633, %v6169
        %v6298 = vmul.f32 %v5635, %v6170
        %v6299 = vmul.f32 %v5637, %v6171
        %v6300 = vmul.f32 %v5639, %v6172
        %v6301 = vmul.f32 %v5641, %v6173
        %v6302 = vmul.f32 %v5643, %v6174
        %v6303 = vmul.f32 %v5645, %v6175
        %v6304 = vmul.f32 %v5647, %v6176
        %v6305 = vmul.f32 %v5649, %v6177
        %v6306 = vmul.f32 %v5651, %v6178
        %v6307 = vmul.f32 %v5653, %v6179
        %v6308 = vmul.f32 %v5655, %v6180
        %v6309 = vmul.f32 %v5657, %v6181
        %v6310 = vmul.f32 %v5659, %v6182
        %v6311 = vmul.f32 %v5661, %v6183
        %v6312 = vmul.f32 %v5663, %v6184
        %v6313 = vmul.f32 %v5665, %v6185
        %v6314 = vmul.f32 %v5667, %v6186
        %v6315 = vmul.f32 %v5669, %v6187
        %v6316 = vmul.f32 %v5671, %v6188
        %v6317 = vmul.f32 %v5673, %v6189
        %v6318 = vmul.f32 %v5675, %v6190
        %v6319 = vmul.f32 %v5677, %v6191
        %v6320 = vmul.f32 %v5679, %v6192
        %v6321 = vmul.f32 %v5681, %v6193
        %v6322 = vpack.c.bf16 %v6195, %v6194
        %v6323 = vpack.c.bf16 %v6197, %v6196
        %v6324 = vpack.c.bf16 %v6199, %v6198
        %v6325 = vpack.c.bf16 %v6201, %v6200
        %v6326 = vpack.c.bf16 %v6203, %v6202
        %v6327 = vpack.c.bf16 %v6205, %v6204
        %v6328 = vpack.c.bf16 %v6207, %v6206
        %v6329 = vpack.c.bf16 %v6209, %v6208
        %v6330 = vpack.c.bf16 %v6211, %v6210
        %v6331 = vpack.c.bf16 %v6213, %v6212
        %v6332 = vpack.c.bf16 %v6215, %v6214
        %v6333 = vpack.c.bf16 %v6217, %v6216
        %v6334 = vpack.c.bf16 %v6219, %v6218
        %v6335 = vpack.c.bf16 %v6221, %v6220
        %v6336 = vpack.c.bf16 %v6223, %v6222
        %v6337 = vpack.c.bf16 %v6225, %v6224
        %v6338 = vpack.c.bf16 %v6227, %v6226
        %v6339 = vpack.c.bf16 %v6229, %v6228
        %v6340 = vpack.c.bf16 %v6231, %v6230
        %v6341 = vpack.c.bf16 %v6233, %v6232
        %v6342 = vpack.c.bf16 %v6235, %v6234
        %v6343 = vpack.c.bf16 %v6237, %v6236
        %v6344 = vpack.c.bf16 %v6239, %v6238
        %v6345 = vpack.c.bf16 %v6241, %v6240
        %v6346 = vpack.c.bf16 %v6243, %v6242
        %v6347 = vpack.c.bf16 %v6245, %v6244
        %v6348 = vpack.c.bf16 %v6247, %v6246
        %v6349 = vpack.c.bf16 %v6249, %v6248
        %v6350 = vpack.c.bf16 %v6251, %v6250
        %v6351 = vpack.c.bf16 %v6253, %v6252
        %v6352 = vpack.c.bf16 %v6255, %v6254
        %v6353 = vpack.c.bf16 %v6257, %v6256
        %v6354 = vpack.c.bf16 %v6259, %v6258
        %v6355 = vpack.c.bf16 %v6261, %v6260
        %v6356 = vpack.c.bf16 %v6263, %v6262
        %v6357 = vpack.c.bf16 %v6265, %v6264
        %v6358 = vpack.c.bf16 %v6267, %v6266
        %v6359 = vpack.c.bf16 %v6269, %v6268
        %v6360 = vpack.c.bf16 %v6271, %v6270
        %v6361 = vpack.c.bf16 %v6273, %v6272
        %v6362 = vpack.c.bf16 %v6275, %v6274
        %v6363 = vpack.c.bf16 %v6277, %v6276
        %v6364 = vpack.c.bf16 %v6279, %v6278
        %v6365 = vpack.c.bf16 %v6281, %v6280
        %v6366 = vpack.c.bf16 %v6283, %v6282
        %v6367 = vpack.c.bf16 %v6285, %v6284
        %v6368 = vpack.c.bf16 %v6287, %v6286
        %v6369 = vpack.c.bf16 %v6289, %v6288
        %v6370 = vpack.c.bf16 %v6291, %v6290
        %v6371 = vpack.c.bf16 %v6293, %v6292
        %v6372 = vpack.c.bf16 %v6295, %v6294
        %v6373 = vpack.c.bf16 %v6297, %v6296
        %v6374 = vpack.c.bf16 %v6299, %v6298
        %v6375 = vpack.c.bf16 %v6301, %v6300
        %v6376 = vpack.c.bf16 %v6303, %v6302
        %v6377 = vpack.c.bf16 %v6305, %v6304
        %v6378 = vpack.c.bf16 %v6307, %v6306
        %v6379 = vpack.c.bf16 %v6309, %v6308
        %v6380 = vpack.c.bf16 %v6311, %v6310
        %v6381 = vpack.c.bf16 %v6313, %v6312
        %v6382 = vpack.c.bf16 %v6315, %v6314
        %v6383 = vpack.c.bf16 %v6317, %v6316
        %v6384 = vpack.c.bf16 %v6319, %v6318
        %v6385 = vpack.c.bf16 %v6321, %v6320
        %6386 = vrot.lane.b32.xlu0 %v1648, 64
        %v6387 = vpop.permute.xlu0 %6386
        %v6390 = vsel %vm4913, %v6322, 0
        %6392 = vmatprep.subr.bf16.mxu0 0
        %6393 = vmatpush1.bf16.msra.mxu0 %v6387
        %6394 = vmatprep.subr.bf16.mxu0 0
        %6395 = vmatpush1.bf16.msra.mxu0 0
        %6396 = vmatprep.subr.bf16.mxu0 0
        %6397 = vmatpush1.bf16.msra.mxu0 0
        %6398 = vmatprep.subr.bf16.mxu0 0
        %6399 = vmatpush1.bf16.msra.mxu0 0
        %6400 = vmatprep.subr.bf16.mxu0 0
        %6401 = vmatpush1.bf16.msra.mxu0 0
        %6402 = vmatprep.subr.bf16.mxu0 0
        %6403 = vmatpush1.bf16.msra.mxu0 0
        %6404 = vmatprep.subr.bf16.mxu0 0
        %6405 = vmatpush1.bf16.msra.mxu0 0
        %6406 = vmatprep.subr.bf16.mxu0 0
        %6407 = vmatpush1.bf16.msra.mxu0 0
        %6408 = vmatprep.subr.bf16.mxu0 0
        %6409 = vmatpush1.bf16.msra.mxu0 0
        %6410 = vmatprep.subr.bf16.mxu0 0
        %6411 = vmatpush1.bf16.msra.mxu0 0
        %6412 = vmatprep.subr.bf16.mxu0 0
        %6413 = vmatpush1.bf16.msra.mxu0 0
        %6414 = vmatprep.subr.bf16.mxu0 0
        %6415 = vmatpush1.bf16.msra.mxu0 0
        %6416 = vmatprep.subr.bf16.mxu0 0
        %6417 = vmatpush1.bf16.msra.mxu0 0
        %6418 = vmatprep.subr.bf16.mxu0 0
        %6419 = vmatpush1.bf16.msra.mxu0 0
        %6420 = vmatprep.subr.bf16.mxu0 0
        %6421 = vmatpush1.bf16.msra.mxu0 0
        %6422 = vmatprep.subr.bf16.mxu0 0
        %6423 = vmatpush1.bf16.msra.mxu0 0
        %6424 = vmatprep.mubr.bf16.mxu0 0
        %6425 = vmatmul.mubr.bf16.gmra.mrb[0].mxu0 %v6390
        %v6426 = vpop.f32.mrb[0].mxu0
        %v6427 = vadd.f32 0.0, %v6426
        %v6428 = vpop.f32.mrb[0].mxu0
        %v6429 = vpop.f32.mrb[0].mxu0
        %v6430 = vadd.f32 0.0, %v6429
        %v6431 = vpop.f32.mrb[0].mxu0
        %6432 = vdwg.mxu0
        %6433 = vrot.lane.b32.xlu0 %v1649, 64
        %v6434 = vpop.permute.xlu0 %6433
        %v6437 = vsel %vm4913, %v6323, 0
        %6439 = vmatprep.subr.bf16.mxu0 0
        %6440 = vmatpush1.bf16.msra.mxu0 %v6434
        %6441 = vmatprep.subr.bf16.mxu0 0
        %6442 = vmatpush1.bf16.msra.mxu0 0
        %6443 = vmatprep.subr.bf16.mxu0 0
        %6444 = vmatpush1.bf16.msra.mxu0 0
        %6445 = vmatprep.subr.bf16.mxu0 0
        %6446 = vmatpush1.bf16.msra.mxu0 0
        %6447 = vmatprep.subr.bf16.mxu0 0
        %6448 = vmatpush1.bf16.msra.mxu0 0
        %6449 = vmatprep.subr.bf16.mxu0 0
        %6450 = vmatpush1.bf16.msra.mxu0 0
        %6451 = vmatprep.subr.bf16.mxu0 0
        %6452 = vmatpush1.bf16.msra.mxu0 0
        %6453 = vmatprep.subr.bf16.mxu0 0
        %6454 = vmatpush1.bf16.msra.mxu0 0
        %6455 = vmatprep.subr.bf16.mxu0 0
        %6456 = vmatpush1.bf16.msra.mxu0 0
        %6457 = vmatprep.subr.bf16.mxu0 0
        %6458 = vmatpush1.bf16.msra.mxu0 0
        %6459 = vmatprep.subr.bf16.mxu0 0
        %6460 = vmatpush1.bf16.msra.mxu0 0
        %6461 = vmatprep.subr.bf16.mxu0 0
        %6462 = vmatpush1.bf16.msra.mxu0 0
        %6463 = vmatprep.subr.bf16.mxu0 0
        %6464 = vmatpush1.bf16.msra.mxu0 0
        %6465 = vmatprep.subr.bf16.mxu0 0
        %6466 = vmatpush1.bf16.msra.mxu0 0
        %6467 = vmatprep.subr.bf16.mxu0 0
        %6468 = vmatpush1.bf16.msra.mxu0 0
        %6469 = vmatprep.subr.bf16.mxu0 0
        %6470 = vmatpush1.bf16.msra.mxu0 0
        %6471 = vmatprep.mubr.bf16.mxu0 0
        %6472 = vmatmul.mubr.bf16.gmra.mrb[0].mxu0 %v6437
        %v6473 = vpop.f32.mrb[0].mxu0
        %v6474 = vadd.f32 0.0, %v6473
        %v6475 = vpop.f32.mrb[0].mxu0
        %v6476 = vpop.f32.mrb[0].mxu0
        %v6477 = vadd.f32 0.0, %v6476
        %v6478 = vpop.f32.mrb[0].mxu0
        %6479 = vdwg.mxu0
        %6480 = vrot.lane.b32.xlu0 %v1650, 64
        %v6481 = vpop.permute.xlu0 %6480
        %v6484 = vsel %vm4913, %v6324, 0
        %6486 = vmatprep.subr.bf16.mxu0 0
        %6487 = vmatpush1.bf16.msra.mxu0 %v6481
        %6488 = vmatprep.subr.bf16.mxu0 0
        %6489 = vmatpush1.bf16.msra.mxu0 0
        %6490 = vmatprep.subr.bf16.mxu0 0
        %6491 = vmatpush1.bf16.msra.mxu0 0
        %6492 = vmatprep.subr.bf16.mxu0 0
        %6493 = vmatpush1.bf16.msra.mxu0 0
        %6494 = vmatprep.subr.bf16.mxu0 0
        %6495 = vmatpush1.bf16.msra.mxu0 0
        %6496 = vmatprep.subr.bf16.mxu0 0
        %6497 = vmatpush1.bf16.msra.mxu0 0
        %6498 = vmatprep.subr.bf16.mxu0 0
        %6499 = vmatpush1.bf16.msra.mxu0 0
        %6500 = vmatprep.subr.bf16.mxu0 0
        %6501 = vmatpush1.bf16.msra.mxu0 0
        %6502 = vmatprep.subr.bf16.mxu0 0
        %6503 = vmatpush1.bf16.msra.mxu0 0
        %6504 = vmatprep.subr.bf16.mxu0 0
        %6505 = vmatpush1.bf16.msra.mxu0 0
        %6506 = vmatprep.subr.bf16.mxu0 0
        %6507 = vmatpush1.bf16.msra.mxu0 0
        %6508 = vmatprep.subr.bf16.mxu0 0
        %6509 = vmatpush1.bf16.msra.mxu0 0
        %6510 = vmatprep.subr.bf16.mxu0 0
        %6511 = vmatpush1.bf16.msra.mxu0 0
        %6512 = vmatprep.subr.bf16.mxu0 0
        %6513 = vmatpush1.bf16.msra.mxu0 0
        %6514 = vmatprep.subr.bf16.mxu0 0
        %6515 = vmatpush1.bf16.msra.mxu0 0
        %6516 = vmatprep.subr.bf16.mxu0 0
        %6517 = vmatpush1.bf16.msra.mxu0 0
        %6518 = vmatprep.mubr.bf16.mxu0 0
        %6519 = vmatmul.mubr.bf16.gmra.mrb[0].mxu0 %v6484
        %v6520 = vpop.f32.mrb[0].mxu0
        %v6521 = vadd.f32 0.0, %v6520
        %v6522 = vpop.f32.mrb[0].mxu0
        %v6523 = vpop.f32.mrb[0].mxu0
        %v6524 = vadd.f32 0.0, %v6523
        %v6525 = vpop.f32.mrb[0].mxu0
        %6526 = vdwg.mxu0
        %6527 = vrot.lane.b32.xlu0 %v1651, 64
        %v6528 = vpop.permute.xlu0 %6527
        %v6531 = vsel %vm4913, %v6325, 0
        %6533 = vmatprep.subr.bf16.mxu0 0
        %6534 = vmatpush1.bf16.msra.mxu0 %v6528
        %6535 = vmatprep.subr.bf16.mxu0 0
        %6536 = vmatpush1.bf16.msra.mxu0 0
        %6537 = vmatprep.subr.bf16.mxu0 0
        %6538 = vmatpush1.bf16.msra.mxu0 0
        %6539 = vmatprep.subr.bf16.mxu0 0
        %6540 = vmatpush1.bf16.msra.mxu0 0
        %6541 = vmatprep.subr.bf16.mxu0 0
        %6542 = vmatpush1.bf16.msra.mxu0 0
        %6543 = vmatprep.subr.bf16.mxu0 0
        %6544 = vmatpush1.bf16.msra.mxu0 0
        %6545 = vmatprep.subr.bf16.mxu0 0
        %6546 = vmatpush1.bf16.msra.mxu0 0
        %6547 = vmatprep.subr.bf16.mxu0 0
        %6548 = vmatpush1.bf16.msra.mxu0 0
        %6549 = vmatprep.subr.bf16.mxu0 0
        %6550 = vmatpush1.bf16.msra.mxu0 0
        %6551 = vmatprep.subr.bf16.mxu0 0
        %6552 = vmatpush1.bf16.msra.mxu0 0
        %6553 = vmatprep.subr.bf16.mxu0 0
        %6554 = vmatpush1.bf16.msra.mxu0 0
        %6555 = vmatprep.subr.bf16.mxu0 0
        %6556 = vmatpush1.bf16.msra.mxu0 0
        %6557 = vmatprep.subr.bf16.mxu0 0
        %6558 = vmatpush1.bf16.msra.mxu0 0
        %6559 = vmatprep.subr.bf16.mxu0 0
        %6560 = vmatpush1.bf16.msra.mxu0 0
        %6561 = vmatprep.subr.bf16.mxu0 0
        %6562 = vmatpush1.bf16.msra.mxu0 0
        %6563 = vmatprep.subr.bf16.mxu0 0
        %6564 = vmatpush1.bf16.msra.mxu0 0
        %6565 = vmatprep.mubr.bf16.mxu0 0
        %6566 = vmatmul.mubr.bf16.gmra.mrb[0].mxu0 %v6531
        %v6567 = vpop.f32.mrb[0].mxu0
        %v6568 = vadd.f32 0.0, %v6567
        %v6569 = vpop.f32.mrb[0].mxu0
        %v6570 = vpop.f32.mrb[0].mxu0
        %v6571 = vadd.f32 0.0, %v6570
        %v6572 = vpop.f32.mrb[0].mxu0
        %6573 = vdwg.mxu0
        %6574 = vrot.lane.b32.xlu0 %v1652, 64
        %v6575 = vpop.permute.xlu0 %6574
        %v6578 = vsel %vm4913, %v6326, 0
        %6580 = vmatprep.subr.bf16.mxu0 0
        %6581 = vmatpush1.bf16.msra.mxu0 %v6575
        %6582 = vmatprep.subr.bf16.mxu0 0
        %6583 = vmatpush1.bf16.msra.mxu0 0
        %6584 = vmatprep.subr.bf16.mxu0 0
        %6585 = vmatpush1.bf16.msra.mxu0 0
        %6586 = vmatprep.subr.bf16.mxu0 0
        %6587 = vmatpush1.bf16.msra.mxu0 0
        %6588 = vmatprep.subr.bf16.mxu0 0
        %6589 = vmatpush1.bf16.msra.mxu0 0
        %6590 = vmatprep.subr.bf16.mxu0 0
        %6591 = vmatpush1.bf16.msra.mxu0 0
        %6592 = vmatprep.subr.bf16.mxu0 0
        %6593 = vmatpush1.bf16.msra.mxu0 0
        %6594 = vmatprep.subr.bf16.mxu0 0
        %6595 = vmatpush1.bf16.msra.mxu0 0
        %6596 = vmatprep.subr.bf16.mxu0 0
        %6597 = vmatpush1.bf16.msra.mxu0 0
        %6598 = vmatprep.subr.bf16.mxu0 0
        %6599 = vmatpush1.bf16.msra.mxu0 0
        %6600 = vmatprep.subr.bf16.mxu0 0
        %6601 = vmatpush1.bf16.msra.mxu0 0
        %6602 = vmatprep.subr.bf16.mxu0 0
        %6603 = vmatpush1.bf16.msra.mxu0 0
        %6604 = vmatprep.subr.bf16.mxu0 0
        %6605 = vmatpush1.bf16.msra.mxu0 0
        %6606 = vmatprep.subr.bf16.mxu0 0
        %6607 = vmatpush1.bf16.msra.mxu0 0
        %6608 = vmatprep.subr.bf16.mxu0 0
        %6609 = vmatpush1.bf16.msra.mxu0 0
        %6610 = vmatprep.subr.bf16.mxu0 0
        %6611 = vmatpush1.bf16.msra.mxu0 0
        %6612 = vmatprep.mubr.bf16.mxu0 0
        %6613 = vmatmul.mubr.bf16.gmra.mrb[0].mxu0 %v6578
        %v6614 = vpop.f32.mrb[0].mxu0
        %v6615 = vadd.f32 0.0, %v6614
        %v6616 = vpop.f32.mrb[0].mxu0
        %v6617 = vpop.f32.mrb[0].mxu0
        %v6618 = vadd.f32 0.0, %v6617
        %v6619 = vpop.f32.mrb[0].mxu0
        %6620 = vdwg.mxu0
        %6621 = vrot.lane.b32.xlu0 %v1653, 64
        %v6622 = vpop.permute.xlu0 %6621
        %v6625 = vsel %vm4913, %v6327, 0
        %6627 = vmatprep.subr.bf16.mxu0 0
        %6628 = vmatpush1.bf16.msra.mxu0 %v6622
        %6629 = vmatprep.subr.bf16.mxu0 0
        %6630 = vmatpush1.bf16.msra.mxu0 0
        %6631 = vmatprep.subr.bf16.mxu0 0
        %6632 = vmatpush1.bf16.msra.mxu0 0
        %6633 = vmatprep.subr.bf16.mxu0 0
        %6634 = vmatpush1.bf16.msra.mxu0 0
        %6635 = vmatprep.subr.bf16.mxu0 0
        %6636 = vmatpush1.bf16.msra.mxu0 0
        %6637 = vmatprep.subr.bf16.mxu0 0
        %6638 = vmatpush1.bf16.msra.mxu0 0
        %6639 = vmatprep.subr.bf16.mxu0 0
        %6640 = vmatpush1.bf16.msra.mxu0 0
        %6641 = vmatprep.subr.bf16.mxu0 0
        %6642 = vmatpush1.bf16.msra.mxu0 0
        %6643 = vmatprep.subr.bf16.mxu0 0
        %6644 = vmatpush1.bf16.msra.mxu0 0
        %6645 = vmatprep.subr.bf16.mxu0 0
        %6646 = vmatpush1.bf16.msra.mxu0 0
        %6647 = vmatprep.subr.bf16.mxu0 0
        %6648 = vmatpush1.bf16.msra.mxu0 0
        %6649 = vmatprep.subr.bf16.mxu0 0
        %6650 = vmatpush1.bf16.msra.mxu0 0
        %6651 = vmatprep.subr.bf16.mxu0 0
        %6652 = vmatpush1.bf16.msra.mxu0 0
        %6653 = vmatprep.subr.bf16.mxu0 0
        %6654 = vmatpush1.bf16.msra.mxu0 0
        %6655 = vmatprep.subr.bf16.mxu0 0
        %6656 = vmatpush1.bf16.msra.mxu0 0
        %6657 = vmatprep.subr.bf16.mxu0 0
        %6658 = vmatpush1.bf16.msra.mxu0 0
        %6659 = vmatprep.mubr.bf16.mxu0 0
        %6660 = vmatmul.mubr.bf16.gmra.mrb[0].mxu0 %v6625
        %v6661 = vpop.f32.mrb[0].mxu0
        %v6662 = vadd.f32 0.0, %v6661
        %v6663 = vpop.f32.mrb[0].mxu0
        %v6664 = vpop.f32.mrb[0].mxu0
        %v6665 = vadd.f32 0.0, %v6664
        %v6666 = vpop.f32.mrb[0].mxu0
        %6667 = vdwg.mxu0
        %6668 = vrot.lane.b32.xlu0 %v1654, 64
        %v6669 = vpop.permute.xlu0 %6668
        %v6672 = vsel %vm4913, %v6328, 0
        %6674 = vmatprep.subr.bf16.mxu0 0
        %6675 = vmatpush1.bf16.msra.mxu0 %v6669
        %6676 = vmatprep.subr.bf16.mxu0 0
        %6677 = vmatpush1.bf16.msra.mxu0 0
        %6678 = vmatprep.subr.bf16.mxu0 0
        %6679 = vmatpush1.bf16.msra.mxu0 0
        %6680 = vmatprep.subr.bf16.mxu0 0
        %6681 = vmatpush1.bf16.msra.mxu0 0
        %6682 = vmatprep.subr.bf16.mxu0 0
        %6683 = vmatpush1.bf16.msra.mxu0 0
        %6684 = vmatprep.subr.bf16.mxu0 0
        %6685 = vmatpush1.bf16.msra.mxu0 0
        %6686 = vmatprep.subr.bf16.mxu0 0
        %6687 = vmatpush1.bf16.msra.mxu0 0
        %6688 = vmatprep.subr.bf16.mxu0 0
        %6689 = vmatpush1.bf16.msra.mxu0 0
        %6690 = vmatprep.subr.bf16.mxu0 0
        %6691 = vmatpush1.bf16.msra.mxu0 0
        %6692 = vmatprep.subr.bf16.mxu0 0
        %6693 = vmatpush1.bf16.msra.mxu0 0
        %6694 = vmatprep.subr.bf16.mxu0 0
        %6695 = vmatpush1.bf16.msra.mxu0 0
        %6696 = vmatprep.subr.bf16.mxu0 0
        %6697 = vmatpush1.bf16.msra.mxu0 0
        %6698 = vmatprep.subr.bf16.mxu0 0
        %6699 = vmatpush1.bf16.msra.mxu0 0
        %6700 = vmatprep.subr.bf16.mxu0 0
        %6701 = vmatpush1.bf16.msra.mxu0 0
        %6702 = vmatprep.subr.bf16.mxu0 0
        %6703 = vmatpush1.bf16.msra.mxu0 0
        %6704 = vmatprep.subr.bf16.mxu0 0
        %6705 = vmatpush1.bf16.msra.mxu0 0
        %6706 = vmatprep.mubr.bf16.mxu0 0
        %6707 = vmatmul.mubr.bf16.gmra.mrb[0].mxu0 %v6672
        %v6708 = vpop.f32.mrb[0].mxu0
        %v6709 = vadd.f32 0.0, %v6708
        %v6710 = vpop.f32.mrb[0].mxu0
        %v6711 = vpop.f32.mrb[0].mxu0
        %v6712 = vadd.f32 0.0, %v6711
        %v6713 = vpop.f32.mrb[0].mxu0
        %6714 = vdwg.mxu0
        %6715 = vrot.lane.b32.xlu0 %v1655, 64
        %v6716 = vpop.permute.xlu0 %6715
        %v6719 = vsel %vm4913, %v6329, 0
        %6721 = vmatprep.subr.bf16.mxu0 0
        %6722 = vmatpush1.bf16.msra.mxu0 %v6716
        %6723 = vmatprep.subr.bf16.mxu0 0
        %6724 = vmatpush1.bf16.msra.mxu0 0
        %6725 = vmatprep.subr.bf16.mxu0 0
        %6726 = vmatpush1.bf16.msra.mxu0 0
        %6727 = vmatprep.subr.bf16.mxu0 0
        %6728 = vmatpush1.bf16.msra.mxu0 0
        %6729 = vmatprep.subr.bf16.mxu0 0
        %6730 = vmatpush1.bf16.msra.mxu0 0
        %6731 = vmatprep.subr.bf16.mxu0 0
        %6732 = vmatpush1.bf16.msra.mxu0 0
        %6733 = vmatprep.subr.bf16.mxu0 0
        %6734 = vmatpush1.bf16.msra.mxu0 0
        %6735 = vmatprep.subr.bf16.mxu0 0
        %6736 = vmatpush1.bf16.msra.mxu0 0
        %6737 = vmatprep.subr.bf16.mxu0 0
        %6738 = vmatpush1.bf16.msra.mxu0 0
        %6739 = vmatprep.subr.bf16.mxu0 0
        %6740 = vmatpush1.bf16.msra.mxu0 0
        %6741 = vmatprep.subr.bf16.mxu0 0
        %6742 = vmatpush1.bf16.msra.mxu0 0
        %6743 = vmatprep.subr.bf16.mxu0 0
        %6744 = vmatpush1.bf16.msra.mxu0 0
        %6745 = vmatprep.subr.bf16.mxu0 0
        %6746 = vmatpush1.bf16.msra.mxu0 0
        %6747 = vmatprep.subr.bf16.mxu0 0
        %6748 = vmatpush1.bf16.msra.mxu0 0
        %6749 = vmatprep.subr.bf16.mxu0 0
        %6750 = vmatpush1.bf16.msra.mxu0 0
        %6751 = vmatprep.subr.bf16.mxu0 0
        %6752 = vmatpush1.bf16.msra.mxu0 0
        %6753 = vmatprep.mubr.bf16.mxu0 0
        %6754 = vmatmul.mubr.bf16.gmra.mrb[0].mxu0 %v6719
        %v6755 = vpop.f32.mrb[0].mxu0
        %v6756 = vadd.f32 0.0, %v6755
        %v6757 = vpop.f32.mrb[0].mxu0
        %v6758 = vpop.f32.mrb[0].mxu0
        %v6759 = vadd.f32 0.0, %v6758
        %v6760 = vpop.f32.mrb[0].mxu0
        %6761 = vdwg.mxu0
        %6762 = vrot.lane.b32.xlu0 %v1656, 64
        %v6763 = vpop.permute.xlu0 %6762
        %v6766 = vsel %vm4913, %v6330, 0
        %6768 = vmatprep.subr.bf16.mxu0 0
        %6769 = vmatpush1.bf16.msra.mxu0 %v6763
        %6770 = vmatprep.subr.bf16.mxu0 0
        %6771 = vmatpush1.bf16.msra.mxu0 0
        %6772 = vmatprep.subr.bf16.mxu0 0
        %6773 = vmatpush1.bf16.msra.mxu0 0
        %6774 = vmatprep.subr.bf16.mxu0 0
        %6775 = vmatpush1.bf16.msra.mxu0 0
        %6776 = vmatprep.subr.bf16.mxu0 0
        %6777 = vmatpush1.bf16.msra.mxu0 0
        %6778 = vmatprep.subr.bf16.mxu0 0
        %6779 = vmatpush1.bf16.msra.mxu0 0
        %6780 = vmatprep.subr.bf16.mxu0 0
        %6781 = vmatpush1.bf16.msra.mxu0 0
        %6782 = vmatprep.subr.bf16.mxu0 0
        %6783 = vmatpush1.bf16.msra.mxu0 0
        %6784 = vmatprep.subr.bf16.mxu0 0
        %6785 = vmatpush1.bf16.msra.mxu0 0
        %6786 = vmatprep.subr.bf16.mxu0 0
        %6787 = vmatpush1.bf16.msra.mxu0 0
        %6788 = vmatprep.subr.bf16.mxu0 0
        %6789 = vmatpush1.bf16.msra.mxu0 0
        %6790 = vmatprep.subr.bf16.mxu0 0
        %6791 = vmatpush1.bf16.msra.mxu0 0
        %6792 = vmatprep.subr.bf16.mxu0 0
        %6793 = vmatpush1.bf16.msra.mxu0 0
        %6794 = vmatprep.subr.bf16.mxu0 0
        %6795 = vmatpush1.bf16.msra.mxu0 0
        %6796 = vmatprep.subr.bf16.mxu0 0
        %6797 = vmatpush1.bf16.msra.mxu0 0
        %6798 = vmatprep.subr.bf16.mxu0 0
        %6799 = vmatpush1.bf16.msra.mxu0 0
        %6800 = vmatprep.mubr.bf16.mxu0 0
        %6801 = vmatmul.mubr.bf16.gmra.mrb[0].mxu0 %v6766
        %v6802 = vpop.f32.mrb[0].mxu0
        %v6803 = vadd.f32 0.0, %v6802
        %v6804 = vpop.f32.mrb[0].mxu0
        %v6805 = vpop.f32.mrb[0].mxu0
        %v6806 = vadd.f32 0.0, %v6805
        %v6807 = vpop.f32.mrb[0].mxu0
        %6808 = vdwg.mxu0
        %6809 = vrot.lane.b32.xlu0 %v1657, 64
        %v6810 = vpop.permute.xlu0 %6809
        %v6813 = vsel %vm4913, %v6331, 0
        %6815 = vmatprep.subr.bf16.mxu0 0
        %6816 = vmatpush1.bf16.msra.mxu0 %v6810
        %6817 = vmatprep.subr.bf16.mxu0 0
        %6818 = vmatpush1.bf16.msra.mxu0 0
        %6819 = vmatprep.subr.bf16.mxu0 0
        %6820 = vmatpush1.bf16.msra.mxu0 0
        %6821 = vmatprep.subr.bf16.mxu0 0
        %6822 = vmatpush1.bf16.msra.mxu0 0
        %6823 = vmatprep.subr.bf16.mxu0 0
        %6824 = vmatpush1.bf16.msra.mxu0 0
        %6825 = vmatprep.subr.bf16.mxu0 0
        %6826 = vmatpush1.bf16.msra.mxu0 0
        %6827 = vmatprep.subr.bf16.mxu0 0
        %6828 = vmatpush1.bf16.msra.mxu0 0
        %6829 = vmatprep.subr.bf16.mxu0 0
        %6830 = vmatpush1.bf16.msra.mxu0 0
        %6831 = vmatprep.subr.bf16.mxu0 0
        %6832 = vmatpush1.bf16.msra.mxu0 0
        %6833 = vmatprep.subr.bf16.mxu0 0
        %6834 = vmatpush1.bf16.msra.mxu0 0
        %6835 = vmatprep.subr.bf16.mxu0 0
        %6836 = vmatpush1.bf16.msra.mxu0 0
        %6837 = vmatprep.subr.bf16.mxu0 0
        %6838 = vmatpush1.bf16.msra.mxu0 0
        %6839 = vmatprep.subr.bf16.mxu0 0
        %6840 = vmatpush1.bf16.msra.mxu0 0
        %6841 = vmatprep.subr.bf16.mxu0 0
        %6842 = vmatpush1.bf16.msra.mxu0 0
        %6843 = vmatprep.subr.bf16.mxu0 0
        %6844 = vmatpush1.bf16.msra.mxu0 0
        %6845 = vmatprep.subr.bf16.mxu0 0
        %6846 = vmatpush1.bf16.msra.mxu0 0
        %6847 = vmatprep.mubr.bf16.mxu0 0
        %6848 = vmatmul.mubr.bf16.gmra.mrb[0].mxu0 %v6813
        %v6849 = vpop.f32.mrb[0].mxu0
        %v6850 = vadd.f32 0.0, %v6849
        %v6851 = vpop.f32.mrb[0].mxu0
        %v6852 = vpop.f32.mrb[0].mxu0
        %v6853 = vadd.f32 0.0, %v6852
        %v6854 = vpop.f32.mrb[0].mxu0
        %6855 = vdwg.mxu0
        %6856 = vrot.lane.b32.xlu0 %v1658, 64
        %v6857 = vpop.permute.xlu0 %6856
        %v6860 = vsel %vm4913, %v6332, 0
        %6862 = vmatprep.subr.bf16.mxu0 0
        %6863 = vmatpush1.bf16.msra.mxu0 %v6857
        %6864 = vmatprep.subr.bf16.mxu0 0
        %6865 = vmatpush1.bf16.msra.mxu0 0
        %6866 = vmatprep.subr.bf16.mxu0 0
        %6867 = vmatpush1.bf16.msra.mxu0 0
        %6868 = vmatprep.subr.bf16.mxu0 0
        %6869 = vmatpush1.bf16.msra.mxu0 0
        %6870 = vmatprep.subr.bf16.mxu0 0
        %6871 = vmatpush1.bf16.msra.mxu0 0
        %6872 = vmatprep.subr.bf16.mxu0 0
        %6873 = vmatpush1.bf16.msra.mxu0 0
        %6874 = vmatprep.subr.bf16.mxu0 0
        %6875 = vmatpush1.bf16.msra.mxu0 0
        %6876 = vmatprep.subr.bf16.mxu0 0
        %6877 = vmatpush1.bf16.msra.mxu0 0
        %6878 = vmatprep.subr.bf16.mxu0 0
        %6879 = vmatpush1.bf16.msra.mxu0 0
        %6880 = vmatprep.subr.bf16.mxu0 0
        %6881 = vmatpush1.bf16.msra.mxu0 0
        %6882 = vmatprep.subr.bf16.mxu0 0
        %6883 = vmatpush1.bf16.msra.mxu0 0
        %6884 = vmatprep.subr.bf16.mxu0 0
        %6885 = vmatpush1.bf16.msra.mxu0 0
        %6886 = vmatprep.subr.bf16.mxu0 0
        %6887 = vmatpush1.bf16.msra.mxu0 0
        %6888 = vmatprep.subr.bf16.mxu0 0
        %6889 = vmatpush1.bf16.msra.mxu0 0
        %6890 = vmatprep.subr.bf16.mxu0 0
        %6891 = vmatpush1.bf16.msra.mxu0 0
        %6892 = vmatprep.subr.bf16.mxu0 0
        %6893 = vmatpush1.bf16.msra.mxu0 0
        %6894 = vmatprep.mubr.bf16.mxu0 0
        %6895 = vmatmul.mubr.bf16.gmra.mrb[0].mxu0 %v6860
        %v6896 = vpop.f32.mrb[0].mxu0
        %v6897 = vadd.f32 0.0, %v6896
        %v6898 = vpop.f32.mrb[0].mxu0
        %v6899 = vpop.f32.mrb[0].mxu0
        %v6900 = vadd.f32 0.0, %v6899
        %v6901 = vpop.f32.mrb[0].mxu0
        %6902 = vdwg.mxu0
        %6903 = vrot.lane.b32.xlu0 %v1659, 64
        %v6904 = vpop.permute.xlu0 %6903
        %v6907 = vsel %vm4913, %v6333, 0
        %6909 = vmatprep.subr.bf16.mxu0 0
        %6910 = vmatpush1.bf16.msra.mxu0 %v6904
        %6911 = vmatprep.subr.bf16.mxu0 0
        %6912 = vmatpush1.bf16.msra.mxu0 0
        %6913 = vmatprep.subr.bf16.mxu0 0
        %6914 = vmatpush1.bf16.msra.mxu0 0
        %6915 = vmatprep.subr.bf16.mxu0 0
        %6916 = vmatpush1.bf16.msra.mxu0 0
        %6917 = vmatprep.subr.bf16.mxu0 0
        %6918 = vmatpush1.bf16.msra.mxu0 0
        %6919 = vmatprep.subr.bf16.mxu0 0
        %6920 = vmatpush1.bf16.msra.mxu0 0
        %6921 = vmatprep.subr.bf16.mxu0 0
        %6922 = vmatpush1.bf16.msra.mxu0 0
        %6923 = vmatprep.subr.bf16.mxu0 0
        %6924 = vmatpush1.bf16.msra.mxu0 0
        %6925 = vmatprep.subr.bf16.mxu0 0
        %6926 = vmatpush1.bf16.msra.mxu0 0
        %6927 = vmatprep.subr.bf16.mxu0 0
        %6928 = vmatpush1.bf16.msra.mxu0 0
        %6929 = vmatprep.subr.bf16.mxu0 0
        %6930 = vmatpush1.bf16.msra.mxu0 0
        %6931 = vmatprep.subr.bf16.mxu0 0
        %6932 = vmatpush1.bf16.msra.mxu0 0
        %6933 = vmatprep.subr.bf16.mxu0 0
        %6934 = vmatpush1.bf16.msra.mxu0 0
        %6935 = vmatprep.subr.bf16.mxu0 0
        %6936 = vmatpush1.bf16.msra.mxu0 0
        %6937 = vmatprep.subr.bf16.mxu0 0
        %6938 = vmatpush1.bf16.msra.mxu0 0
        %6939 = vmatprep.subr.bf16.mxu0 0
        %6940 = vmatpush1.bf16.msra.mxu0 0
        %6941 = vmatprep.mubr.bf16.mxu0 0
        %6942 = vmatmul.mubr.bf16.gmra.mrb[0].mxu0 %v6907
        %v6943 = vpop.f32.mrb[0].mxu0
        %v6944 = vadd.f32 0.0, %v6943
        %v6945 = vpop.f32.mrb[0].mxu0
        %v6946 = vpop.f32.mrb[0].mxu0
        %v6947 = vadd.f32 0.0, %v6946
        %v6948 = vpop.f32.mrb[0].mxu0
        %6949 = vdwg.mxu0
        %6950 = vrot.lane.b32.xlu0 %v1660, 64
        %v6951 = vpop.permute.xlu0 %6950
        %v6954 = vsel %vm4913, %v6334, 0
        %6956 = vmatprep.subr.bf16.mxu0 0
        %6957 = vmatpush1.bf16.msra.mxu0 %v6951
        %6958 = vmatprep.subr.bf16.mxu0 0
        %6959 = vmatpush1.bf16.msra.mxu0 0
        %6960 = vmatprep.subr.bf16.mxu0 0
        %6961 = vmatpush1.bf16.msra.mxu0 0
        %6962 = vmatprep.subr.bf16.mxu0 0
        %6963 = vmatpush1.bf16.msra.mxu0 0
        %6964 = vmatprep.subr.bf16.mxu0 0
        %6965 = vmatpush1.bf16.msra.mxu0 0
        %6966 = vmatprep.subr.bf16.mxu0 0
        %6967 = vmatpush1.bf16.msra.mxu0 0
        %6968 = vmatprep.subr.bf16.mxu0 0
        %6969 = vmatpush1.bf16.msra.mxu0 0
        %6970 = vmatprep.subr.bf16.mxu0 0
        %6971 = vmatpush1.bf16.msra.mxu0 0
        %6972 = vmatprep.subr.bf16.mxu0 0
        %6973 = vmatpush1.bf16.msra.mxu0 0
        %6974 = vmatprep.subr.bf16.mxu0 0
        %6975 = vmatpush1.bf16.msra.mxu0 0
        %6976 = vmatprep.subr.bf16.mxu0 0
        %6977 = vmatpush1.bf16.msra.mxu0 0
        %6978 = vmatprep.subr.bf16.mxu0 0
        %6979 = vmatpush1.bf16.msra.mxu0 0
        %6980 = vmatprep.subr.bf16.mxu0 0
        %6981 = vmatpush1.bf16.msra.mxu0 0
        %6982 = vmatprep.subr.bf16.mxu0 0
        %6983 = vmatpush1.bf16.msra.mxu0 0
        %6984 = vmatprep.subr.bf16.mxu0 0
        %6985 = vmatpush1.bf16.msra.mxu0 0
        %6986 = vmatprep.subr.bf16.mxu0 0
        %6987 = vmatpush1.bf16.msra.mxu0 0
        %6988 = vmatprep.mubr.bf16.mxu0 0
        %6989 = vmatmul.mubr.bf16.gmra.mrb[0].mxu0 %v6954
        %v6990 = vpop.f32.mrb[0].mxu0
        %v6991 = vadd.f32 0.0, %v6990
        %v6992 = vpop.f32.mrb[0].mxu0
        %v6993 = vpop.f32.mrb[0].mxu0
        %v6994 = vadd.f32 0.0, %v6993
        %v6995 = vpop.f32.mrb[0].mxu0
        %6996 = vdwg.mxu0
        %6997 = vrot.lane.b32.xlu0 %v1661, 64
        %v6998 = vpop.permute.xlu0 %6997
        %v7001 = vsel %vm4913, %v6335, 0
        %7003 = vmatprep.subr.bf16.mxu0 0
        %7004 = vmatpush1.bf16.msra.mxu0 %v6998
        %7005 = vmatprep.subr.bf16.mxu0 0
        %7006 = vmatpush1.bf16.msra.mxu0 0
        %7007 = vmatprep.subr.bf16.mxu0 0
        %7008 = vmatpush1.bf16.msra.mxu0 0
        %7009 = vmatprep.subr.bf16.mxu0 0
        %7010 = vmatpush1.bf16.msra.mxu0 0
        %7011 = vmatprep.subr.bf16.mxu0 0
        %7012 = vmatpush1.bf16.msra.mxu0 0
        %7013 = vmatprep.subr.bf16.mxu0 0
        %7014 = vmatpush1.bf16.msra.mxu0 0
        %7015 = vmatprep.subr.bf16.mxu0 0
        %7016 = vmatpush1.bf16.msra.mxu0 0
        %7017 = vmatprep.subr.bf16.mxu0 0
        %7018 = vmatpush1.bf16.msra.mxu0 0
        %7019 = vmatprep.subr.bf16.mxu0 0
        %7020 = vmatpush1.bf16.msra.mxu0 0
        %7021 = vmatprep.subr.bf16.mxu0 0
        %7022 = vmatpush1.bf16.msra.mxu0 0
        %7023 = vmatprep.subr.bf16.mxu0 0
        %7024 = vmatpush1.bf16.msra.mxu0 0
        %7025 = vmatprep.subr.bf16.mxu0 0
        %7026 = vmatpush1.bf16.msra.mxu0 0
        %7027 = vmatprep.subr.bf16.mxu0 0
        %7028 = vmatpush1.bf16.msra.mxu0 0
        %7029 = vmatprep.subr.bf16.mxu0 0
        %7030 = vmatpush1.bf16.msra.mxu0 0
        %7031 = vmatprep.subr.bf16.mxu0 0
        %7032 = vmatpush1.bf16.msra.mxu0 0
        %7033 = vmatprep.subr.bf16.mxu0 0
        %7034 = vmatpush1.bf16.msra.mxu0 0
        %7035 = vmatprep.mubr.bf16.mxu0 0
        %7036 = vmatmul.mubr.bf16.gmra.mrb[0].mxu0 %v7001
        %v7037 = vpop.f32.mrb[0].mxu0
        %v7038 = vadd.f32 0.0, %v7037
        %v7039 = vpop.f32.mrb[0].mxu0
        %v7040 = vpop.f32.mrb[0].mxu0
        %v7041 = vadd.f32 0.0, %v7040
        %v7042 = vpop.f32.mrb[0].mxu0
        %7043 = vdwg.mxu0
        %7044 = vrot.lane.b32.xlu0 %v1662, 64
        %v7045 = vpop.permute.xlu0 %7044
        %v7048 = vsel %vm4913, %v6336, 0
        %7050 = vmatprep.subr.bf16.mxu0 0
        %7051 = vmatpush1.bf16.msra.mxu0 %v7045
        %7052 = vmatprep.subr.bf16.mxu0 0
        %7053 = vmatpush1.bf16.msra.mxu0 0
        %7054 = vmatprep.subr.bf16.mxu0 0
        %7055 = vmatpush1.bf16.msra.mxu0 0
        %7056 = vmatprep.subr.bf16.mxu0 0
        %7057 = vmatpush1.bf16.msra.mxu0 0
        %7058 = vmatprep.subr.bf16.mxu0 0
        %7059 = vmatpush1.bf16.msra.mxu0 0
        %7060 = vmatprep.subr.bf16.mxu0 0
        %7061 = vmatpush1.bf16.msra.mxu0 0
        %7062 = vmatprep.subr.bf16.mxu0 0
        %7063 = vmatpush1.bf16.msra.mxu0 0
        %7064 = vmatprep.subr.bf16.mxu0 0
        %7065 = vmatpush1.bf16.msra.mxu0 0
        %7066 = vmatprep.subr.bf16.mxu0 0
        %7067 = vmatpush1.bf16.msra.mxu0 0
        %7068 = vmatprep.subr.bf16.mxu0 0
        %7069 = vmatpush1.bf16.msra.mxu0 0
        %7070 = vmatprep.subr.bf16.mxu0 0
        %7071 = vmatpush1.bf16.msra.mxu0 0
        %7072 = vmatprep.subr.bf16.mxu0 0
        %7073 = vmatpush1.bf16.msra.mxu0 0
        %7074 = vmatprep.subr.bf16.mxu0 0
        %7075 = vmatpush1.bf16.msra.mxu0 0
        %7076 = vmatprep.subr.bf16.mxu0 0
        %7077 = vmatpush1.bf16.msra.mxu0 0
        %7078 = vmatprep.subr.bf16.mxu0 0
        %7079 = vmatpush1.bf16.msra.mxu0 0
        %7080 = vmatprep.subr.bf16.mxu0 0
        %7081 = vmatpush1.bf16.msra.mxu0 0
        %7082 = vmatprep.mubr.bf16.mxu0 0
        %7083 = vmatmul.mubr.bf16.gmra.mrb[0].mxu0 %v7048
        %v7084 = vpop.f32.mrb[0].mxu0
        %v7085 = vadd.f32 0.0, %v7084
        %v7086 = vpop.f32.mrb[0].mxu0
        %v7087 = vpop.f32.mrb[0].mxu0
        %v7088 = vadd.f32 0.0, %v7087
        %v7089 = vpop.f32.mrb[0].mxu0
        %7090 = vdwg.mxu0
        %7091 = vrot.lane.b32.xlu0 %v1663, 64
        %v7092 = vpop.permute.xlu0 %7091
        %v7095 = vsel %vm4913, %v6337, 0
        %7097 = vmatprep.subr.bf16.mxu0 0
        %7098 = vmatpush1.bf16.msra.mxu0 %v7092
        %7099 = vmatprep.subr.bf16.mxu0 0
        %7100 = vmatpush1.bf16.msra.mxu0 0
        %7101 = vmatprep.subr.bf16.mxu0 0
        %7102 = vmatpush1.bf16.msra.mxu0 0
        %7103 = vmatprep.subr.bf16.mxu0 0
        %7104 = vmatpush1.bf16.msra.mxu0 0
        %7105 = vmatprep.subr.bf16.mxu0 0
        %7106 = vmatpush1.bf16.msra.mxu0 0
        %7107 = vmatprep.subr.bf16.mxu0 0
        %7108 = vmatpush1.bf16.msra.mxu0 0
        %7109 = vmatprep.subr.bf16.mxu0 0
        %7110 = vmatpush1.bf16.msra.mxu0 0
        %7111 = vmatprep.subr.bf16.mxu0 0
        %7112 = vmatpush1.bf16.msra.mxu0 0
        %7113 = vmatprep.subr.bf16.mxu0 0
        %7114 = vmatpush1.bf16.msra.mxu0 0
        %7115 = vmatprep.subr.bf16.mxu0 0
        %7116 = vmatpush1.bf16.msra.mxu0 0
        %7117 = vmatprep.subr.bf16.mxu0 0
        %7118 = vmatpush1.bf16.msra.mxu0 0
        %7119 = vmatprep.subr.bf16.mxu0 0
        %7120 = vmatpush1.bf16.msra.mxu0 0
        %7121 = vmatprep.subr.bf16.mxu0 0
        %7122 = vmatpush1.bf16.msra.mxu0 0
        %7123 = vmatprep.subr.bf16.mxu0 0
        %7124 = vmatpush1.bf16.msra.mxu0 0
        %7125 = vmatprep.subr.bf16.mxu0 0
        %7126 = vmatpush1.bf16.msra.mxu0 0
        %7127 = vmatprep.subr.bf16.mxu0 0
        %7128 = vmatpush1.bf16.msra.mxu0 0
        %7129 = vmatprep.mubr.bf16.mxu0 0
        %7130 = vmatmul.mubr.bf16.gmra.mrb[0].mxu0 %v7095
        %v7131 = vpop.f32.mrb[0].mxu0
        %v7132 = vadd.f32 0.0, %v7131
        %v7133 = vpop.f32.mrb[0].mxu0
        %v7134 = vpop.f32.mrb[0].mxu0
        %v7135 = vadd.f32 0.0, %v7134
        %v7136 = vpop.f32.mrb[0].mxu0
        %7137 = vdwg.mxu0
        %7138 = vrot.lane.b32.xlu0 %v1664, 64
        %v7139 = vpop.permute.xlu0 %7138
        %v7142 = vsel %vm4913, %v6338, 0
        %7144 = vmatprep.subr.bf16.mxu0 0
        %7145 = vmatpush1.bf16.msra.mxu0 %v7139
        %7146 = vmatprep.subr.bf16.mxu0 0
        %7147 = vmatpush1.bf16.msra.mxu0 0
        %7148 = vmatprep.subr.bf16.mxu0 0
        %7149 = vmatpush1.bf16.msra.mxu0 0
        %7150 = vmatprep.subr.bf16.mxu0 0
        %7151 = vmatpush1.bf16.msra.mxu0 0
        %7152 = vmatprep.subr.bf16.mxu0 0
        %7153 = vmatpush1.bf16.msra.mxu0 0
        %7154 = vmatprep.subr.bf16.mxu0 0
        %7155 = vmatpush1.bf16.msra.mxu0 0
        %7156 = vmatprep.subr.bf16.mxu0 0
        %7157 = vmatpush1.bf16.msra.mxu0 0
        %7158 = vmatprep.subr.bf16.mxu0 0
        %7159 = vmatpush1.bf16.msra.mxu0 0
        %7160 = vmatprep.subr.bf16.mxu0 0
        %7161 = vmatpush1.bf16.msra.mxu0 0
        %7162 = vmatprep.subr.bf16.mxu0 0
        %7163 = vmatpush1.bf16.msra.mxu0 0
        %7164 = vmatprep.subr.bf16.mxu0 0
        %7165 = vmatpush1.bf16.msra.mxu0 0
        %7166 = vmatprep.subr.bf16.mxu0 0
        %7167 = vmatpush1.bf16.msra.mxu0 0
        %7168 = vmatprep.subr.bf16.mxu0 0
        %7169 = vmatpush1.bf16.msra.mxu0 0
        %7170 = vmatprep.subr.bf16.mxu0 0
        %7171 = vmatpush1.bf16.msra.mxu0 0
        %7172 = vmatprep.subr.bf16.mxu0 0
        %7173 = vmatpush1.bf16.msra.mxu0 0
        %7174 = vmatprep.subr.bf16.mxu0 0
        %7175 = vmatpush1.bf16.msra.mxu0 0
        %7176 = vmatprep.mubr.bf16.mxu0 0
        %7177 = vmatmul.mubr.bf16.gmra.mrb[0].mxu0 %v7142
        %v7178 = vpop.f32.mrb[0].mxu0
        %v7179 = vadd.f32 0.0, %v7178
        %v7180 = vpop.f32.mrb[0].mxu0
        %v7181 = vpop.f32.mrb[0].mxu0
        %v7182 = vadd.f32 0.0, %v7181
        %v7183 = vpop.f32.mrb[0].mxu0
        %7184 = vdwg.mxu0
        %7185 = vrot.lane.b32.xlu0 %v1665, 64
        %v7186 = vpop.permute.xlu0 %7185
        %v7189 = vsel %vm4913, %v6339, 0
        %7191 = vmatprep.subr.bf16.mxu0 0
        %7192 = vmatpush1.bf16.msra.mxu0 %v7186
        %7193 = vmatprep.subr.bf16.mxu0 0
        %7194 = vmatpush1.bf16.msra.mxu0 0
        %7195 = vmatprep.subr.bf16.mxu0 0
        %7196 = vmatpush1.bf16.msra.mxu0 0
        %7197 = vmatprep.subr.bf16.mxu0 0
        %7198 = vmatpush1.bf16.msra.mxu0 0
        %7199 = vmatprep.subr.bf16.mxu0 0
        %7200 = vmatpush1.bf16.msra.mxu0 0
        %7201 = vmatprep.subr.bf16.mxu0 0
        %7202 = vmatpush1.bf16.msra.mxu0 0
        %7203 = vmatprep.subr.bf16.mxu0 0
        %7204 = vmatpush1.bf16.msra.mxu0 0
        %7205 = vmatprep.subr.bf16.mxu0 0
        %7206 = vmatpush1.bf16.msra.mxu0 0
        %7207 = vmatprep.subr.bf16.mxu0 0
        %7208 = vmatpush1.bf16.msra.mxu0 0
        %7209 = vmatprep.subr.bf16.mxu0 0
        %7210 = vmatpush1.bf16.msra.mxu0 0
        %7211 = vmatprep.subr.bf16.mxu0 0
        %7212 = vmatpush1.bf16.msra.mxu0 0
        %7213 = vmatprep.subr.bf16.mxu0 0
        %7214 = vmatpush1.bf16.msra.mxu0 0
        %7215 = vmatprep.subr.bf16.mxu0 0
        %7216 = vmatpush1.bf16.msra.mxu0 0
        %7217 = vmatprep.subr.bf16.mxu0 0
        %7218 = vmatpush1.bf16.msra.mxu0 0
        %7219 = vmatprep.subr.bf16.mxu0 0
        %7220 = vmatpush1.bf16.msra.mxu0 0
        %7221 = vmatprep.subr.bf16.mxu0 0
        %7222 = vmatpush1.bf16.msra.mxu0 0
        %7223 = vmatprep.mubr.bf16.mxu0 0
        %7224 = vmatmul.mubr.bf16.gmra.mrb[0].mxu0 %v7189
        %v7225 = vpop.f32.mrb[0].mxu0
        %v7226 = vadd.f32 0.0, %v7225
        %v7227 = vpop.f32.mrb[0].mxu0
        %v7228 = vpop.f32.mrb[0].mxu0
        %v7229 = vadd.f32 0.0, %v7228
        %v7230 = vpop.f32.mrb[0].mxu0
        %7231 = vdwg.mxu0
        %7232 = vrot.lane.b32.xlu0 %v1666, 64
        %v7233 = vpop.permute.xlu0 %7232
        %v7236 = vsel %vm4913, %v6340, 0
        %7238 = vmatprep.subr.bf16.mxu0 0
        %7239 = vmatpush1.bf16.msra.mxu0 %v7233
        %7240 = vmatprep.subr.bf16.mxu0 0
        %7241 = vmatpush1.bf16.msra.mxu0 0
        %7242 = vmatprep.subr.bf16.mxu0 0
        %7243 = vmatpush1.bf16.msra.mxu0 0
        %7244 = vmatprep.subr.bf16.mxu0 0
        %7245 = vmatpush1.bf16.msra.mxu0 0
        %7246 = vmatprep.subr.bf16.mxu0 0
        %7247 = vmatpush1.bf16.msra.mxu0 0
        %7248 = vmatprep.subr.bf16.mxu0 0
        %7249 = vmatpush1.bf16.msra.mxu0 0
        %7250 = vmatprep.subr.bf16.mxu0 0
        %7251 = vmatpush1.bf16.msra.mxu0 0
        %7252 = vmatprep.subr.bf16.mxu0 0
        %7253 = vmatpush1.bf16.msra.mxu0 0
        %7254 = vmatprep.subr.bf16.mxu0 0
        %7255 = vmatpush1.bf16.msra.mxu0 0
        %7256 = vmatprep.subr.bf16.mxu0 0
        %7257 = vmatpush1.bf16.msra.mxu0 0
        %7258 = vmatprep.subr.bf16.mxu0 0
        %7259 = vmatpush1.bf16.msra.mxu0 0
        %7260 = vmatprep.subr.bf16.mxu0 0
        %7261 = vmatpush1.bf16.msra.mxu0 0
        %7262 = vmatprep.subr.bf16.mxu0 0
        %7263 = vmatpush1.bf16.msra.mxu0 0
        %7264 = vmatprep.subr.bf16.mxu0 0
        %7265 = vmatpush1.bf16.msra.mxu0 0
        %7266 = vmatprep.subr.bf16.mxu0 0
        %7267 = vmatpush1.bf16.msra.mxu0 0
        %7268 = vmatprep.subr.bf16.mxu0 0
        %7269 = vmatpush1.bf16.msra.mxu0 0
        %7270 = vmatprep.mubr.bf16.mxu0 0
        %7271 = vmatmul.mubr.bf16.gmra.mrb[0].mxu0 %v7236
        %v7272 = vpop.f32.mrb[0].mxu0
        %v7273 = vadd.f32 0.0, %v7272
        %v7274 = vpop.f32.mrb[0].mxu0
        %v7275 = vpop.f32.mrb[0].mxu0
        %v7276 = vadd.f32 0.0, %v7275
        %v7277 = vpop.f32.mrb[0].mxu0
        %7278 = vdwg.mxu0
        %7279 = vrot.lane.b32.xlu0 %v1667, 64
        %v7280 = vpop.permute.xlu0 %7279
        %v7283 = vsel %vm4913, %v6341, 0
        %7285 = vmatprep.subr.bf16.mxu0 0
        %7286 = vmatpush1.bf16.msra.mxu0 %v7280
        %7287 = vmatprep.subr.bf16.mxu0 0
        %7288 = vmatpush1.bf16.msra.mxu0 0
        %7289 = vmatprep.subr.bf16.mxu0 0
        %7290 = vmatpush1.bf16.msra.mxu0 0
        %7291 = vmatprep.subr.bf16.mxu0 0
        %7292 = vmatpush1.bf16.msra.mxu0 0
        %7293 = vmatprep.subr.bf16.mxu0 0
        %7294 = vmatpush1.bf16.msra.mxu0 0
        %7295 = vmatprep.subr.bf16.mxu0 0
        %7296 = vmatpush1.bf16.msra.mxu0 0
        %7297 = vmatprep.subr.bf16.mxu0 0
        %7298 = vmatpush1.bf16.msra.mxu0 0
        %7299 = vmatprep.subr.bf16.mxu0 0
        %7300 = vmatpush1.bf16.msra.mxu0 0
        %7301 = vmatprep.subr.bf16.mxu0 0
        %7302 = vmatpush1.bf16.msra.mxu0 0
        %7303 = vmatprep.subr.bf16.mxu0 0
        %7304 = vmatpush1.bf16.msra.mxu0 0
        %7305 = vmatprep.subr.bf16.mxu0 0
        %7306 = vmatpush1.bf16.msra.mxu0 0
        %7307 = vmatprep.subr.bf16.mxu0 0
        %7308 = vmatpush1.bf16.msra.mxu0 0
        %7309 = vmatprep.subr.bf16.mxu0 0
        %7310 = vmatpush1.bf16.msra.mxu0 0
        %7311 = vmatprep.subr.bf16.mxu0 0
        %7312 = vmatpush1.bf16.msra.mxu0 0
        %7313 = vmatprep.subr.bf16.mxu0 0
        %7314 = vmatpush1.bf16.msra.mxu0 0
        %7315 = vmatprep.subr.bf16.mxu0 0
        %7316 = vmatpush1.bf16.msra.mxu0 0
        %7317 = vmatprep.mubr.bf16.mxu0 0
        %7318 = vmatmul.mubr.bf16.gmra.mrb[0].mxu0 %v7283
        %v7319 = vpop.f32.mrb[0].mxu0
        %v7320 = vadd.f32 0.0, %v7319
        %v7321 = vpop.f32.mrb[0].mxu0
        %v7322 = vpop.f32.mrb[0].mxu0
        %v7323 = vadd.f32 0.0, %v7322
        %v7324 = vpop.f32.mrb[0].mxu0
        %7325 = vdwg.mxu0
        %7326 = vrot.lane.b32.xlu0 %v1668, 64
        %v7327 = vpop.permute.xlu0 %7326
        %v7330 = vsel %vm4913, %v6342, 0
        %7332 = vmatprep.subr.bf16.mxu0 0
        %7333 = vmatpush1.bf16.msra.mxu0 %v7327
        %7334 = vmatprep.subr.bf16.mxu0 0
        %7335 = vmatpush1.bf16.msra.mxu0 0
        %7336 = vmatprep.subr.bf16.mxu0 0
        %7337 = vmatpush1.bf16.msra.mxu0 0
        %7338 = vmatprep.subr.bf16.mxu0 0
        %7339 = vmatpush1.bf16.msra.mxu0 0
        %7340 = vmatprep.subr.bf16.mxu0 0
        %7341 = vmatpush1.bf16.msra.mxu0 0
        %7342 = vmatprep.subr.bf16.mxu0 0
        %7343 = vmatpush1.bf16.msra.mxu0 0
        %7344 = vmatprep.subr.bf16.mxu0 0
        %7345 = vmatpush1.bf16.msra.mxu0 0
        %7346 = vmatprep.subr.bf16.mxu0 0
        %7347 = vmatpush1.bf16.msra.mxu0 0
        %7348 = vmatprep.subr.bf16.mxu0 0
        %7349 = vmatpush1.bf16.msra.mxu0 0
        %7350 = vmatprep.subr.bf16.mxu0 0
        %7351 = vmatpush1.bf16.msra.mxu0 0
        %7352 = vmatprep.subr.bf16.mxu0 0
        %7353 = vmatpush1.bf16.msra.mxu0 0
        %7354 = vmatprep.subr.bf16.mxu0 0
        %7355 = vmatpush1.bf16.msra.mxu0 0
        %7356 = vmatprep.subr.bf16.mxu0 0
        %7357 = vmatpush1.bf16.msra.mxu0 0
        %7358 = vmatprep.subr.bf16.mxu0 0
        %7359 = vmatpush1.bf16.msra.mxu0 0
        %7360 = vmatprep.subr.bf16.mxu0 0
        %7361 = vmatpush1.bf16.msra.mxu0 0
        %7362 = vmatprep.subr.bf16.mxu0 0
        %7363 = vmatpush1.bf16.msra.mxu0 0
        %7364 = vmatprep.mubr.bf16.mxu0 0
        %7365 = vmatmul.mubr.bf16.gmra.mrb[0].mxu0 %v7330
        %v7366 = vpop.f32.mrb[0].mxu0
        %v7367 = vadd.f32 0.0, %v7366
        %v7368 = vpop.f32.mrb[0].mxu0
        %v7369 = vpop.f32.mrb[0].mxu0
        %v7370 = vadd.f32 0.0, %v7369
        %v7371 = vpop.f32.mrb[0].mxu0
        %7372 = vdwg.mxu0
        %7373 = vrot.lane.b32.xlu0 %v1669, 64
        %v7374 = vpop.permute.xlu0 %7373
        %v7377 = vsel %vm4913, %v6343, 0
        %7379 = vmatprep.subr.bf16.mxu0 0
        %7380 = vmatpush1.bf16.msra.mxu0 %v7374
        %7381 = vmatprep.subr.bf16.mxu0 0
        %7382 = vmatpush1.bf16.msra.mxu0 0
        %7383 = vmatprep.subr.bf16.mxu0 0
        %7384 = vmatpush1.bf16.msra.mxu0 0
        %7385 = vmatprep.subr.bf16.mxu0 0
        %7386 = vmatpush1.bf16.msra.mxu0 0
        %7387 = vmatprep.subr.bf16.mxu0 0
        %7388 = vmatpush1.bf16.msra.mxu0 0
        %7389 = vmatprep.subr.bf16.mxu0 0
        %7390 = vmatpush1.bf16.msra.mxu0 0
        %7391 = vmatprep.subr.bf16.mxu0 0
        %7392 = vmatpush1.bf16.msra.mxu0 0
        %7393 = vmatprep.subr.bf16.mxu0 0
        %7394 = vmatpush1.bf16.msra.mxu0 0
        %7395 = vmatprep.subr.bf16.mxu0 0
        %7396 = vmatpush1.bf16.msra.mxu0 0
        %7397 = vmatprep.subr.bf16.mxu0 0
        %7398 = vmatpush1.bf16.msra.mxu0 0
        %7399 = vmatprep.subr.bf16.mxu0 0
        %7400 = vmatpush1.bf16.msra.mxu0 0
        %7401 = vmatprep.subr.bf16.mxu0 0
        %7402 = vmatpush1.bf16.msra.mxu0 0
        %7403 = vmatprep.subr.bf16.mxu0 0
        %7404 = vmatpush1.bf16.msra.mxu0 0
        %7405 = vmatprep.subr.bf16.mxu0 0
        %7406 = vmatpush1.bf16.msra.mxu0 0
        %7407 = vmatprep.subr.bf16.mxu0 0
        %7408 = vmatpush1.bf16.msra.mxu0 0
        %7409 = vmatprep.subr.bf16.mxu0 0
        %7410 = vmatpush1.bf16.msra.mxu0 0
        %7411 = vmatprep.mubr.bf16.mxu0 0
        %7412 = vmatmul.mubr.bf16.gmra.mrb[0].mxu0 %v7377
        %v7413 = vpop.f32.mrb[0].mxu0
        %v7414 = vadd.f32 0.0, %v7413
        %v7415 = vpop.f32.mrb[0].mxu0
        %v7416 = vpop.f32.mrb[0].mxu0
        %v7417 = vadd.f32 0.0, %v7416
        %v7418 = vpop.f32.mrb[0].mxu0
        %7419 = vdwg.mxu0
        %7420 = vrot.lane.b32.xlu0 %v1670, 64
        %v7421 = vpop.permute.xlu0 %7420
        %v7424 = vsel %vm4913, %v6344, 0
        %7426 = vmatprep.subr.bf16.mxu0 0
        %7427 = vmatpush1.bf16.msra.mxu0 %v7421
        %7428 = vmatprep.subr.bf16.mxu0 0
        %7429 = vmatpush1.bf16.msra.mxu0 0
        %7430 = vmatprep.subr.bf16.mxu0 0
        %7431 = vmatpush1.bf16.msra.mxu0 0
        %7432 = vmatprep.subr.bf16.mxu0 0
        %7433 = vmatpush1.bf16.msra.mxu0 0
        %7434 = vmatprep.subr.bf16.mxu0 0
        %7435 = vmatpush1.bf16.msra.mxu0 0
        %7436 = vmatprep.subr.bf16.mxu0 0
        %7437 = vmatpush1.bf16.msra.mxu0 0
        %7438 = vmatprep.subr.bf16.mxu0 0
        %7439 = vmatpush1.bf16.msra.mxu0 0
        %7440 = vmatprep.subr.bf16.mxu0 0
        %7441 = vmatpush1.bf16.msra.mxu0 0
        %7442 = vmatprep.subr.bf16.mxu0 0
        %7443 = vmatpush1.bf16.msra.mxu0 0
        %7444 = vmatprep.subr.bf16.mxu0 0
        %7445 = vmatpush1.bf16.msra.mxu0 0
        %7446 = vmatprep.subr.bf16.mxu0 0
        %7447 = vmatpush1.bf16.msra.mxu0 0
        %7448 = vmatprep.subr.bf16.mxu0 0
        %7449 = vmatpush1.bf16.msra.mxu0 0
        %7450 = vmatprep.subr.bf16.mxu0 0
        %7451 = vmatpush1.bf16.msra.mxu0 0
        %7452 = vmatprep.subr.bf16.mxu0 0
        %7453 = vmatpush1.bf16.msra.mxu0 0
        %7454 = vmatprep.subr.bf16.mxu0 0
        %7455 = vmatpush1.bf16.msra.mxu0 0
        %7456 = vmatprep.subr.bf16.mxu0 0
        %7457 = vmatpush1.bf16.msra.mxu0 0
        %7458 = vmatprep.mubr.bf16.mxu0 0
        %7459 = vmatmul.mubr.bf16.gmra.mrb[0].mxu0 %v7424
        %v7460 = vpop.f32.mrb[0].mxu0
        %v7461 = vadd.f32 0.0, %v7460
        %v7462 = vpop.f32.mrb[0].mxu0
        %v7463 = vpop.f32.mrb[0].mxu0
        %v7464 = vadd.f32 0.0, %v7463
        %v7465 = vpop.f32.mrb[0].mxu0
        %7466 = vdwg.mxu0
        %7467 = vrot.lane.b32.xlu0 %v1671, 64
        %v7468 = vpop.permute.xlu0 %7467
        %v7471 = vsel %vm4913, %v6345, 0
        %7473 = vmatprep.subr.bf16.mxu0 0
        %7474 = vmatpush1.bf16.msra.mxu0 %v7468
        %7475 = vmatprep.subr.bf16.mxu0 0
        %7476 = vmatpush1.bf16.msra.mxu0 0
        %7477 = vmatprep.subr.bf16.mxu0 0
        %7478 = vmatpush1.bf16.msra.mxu0 0
        %7479 = vmatprep.subr.bf16.mxu0 0
        %7480 = vmatpush1.bf16.msra.mxu0 0
        %7481 = vmatprep.subr.bf16.mxu0 0
        %7482 = vmatpush1.bf16.msra.mxu0 0
        %7483 = vmatprep.subr.bf16.mxu0 0
        %7484 = vmatpush1.bf16.msra.mxu0 0
        %7485 = vmatprep.subr.bf16.mxu0 0
        %7486 = vmatpush1.bf16.msra.mxu0 0
        %7487 = vmatprep.subr.bf16.mxu0 0
        %7488 = vmatpush1.bf16.msra.mxu0 0
        %7489 = vmatprep.subr.bf16.mxu0 0
        %7490 = vmatpush1.bf16.msra.mxu0 0
        %7491 = vmatprep.subr.bf16.mxu0 0
        %7492 = vmatpush1.bf16.msra.mxu0 0
        %7493 = vmatprep.subr.bf16.mxu0 0
        %7494 = vmatpush1.bf16.msra.mxu0 0
        %7495 = vmatprep.subr.bf16.mxu0 0
        %7496 = vmatpush1.bf16.msra.mxu0 0
        %7497 = vmatprep.subr.bf16.mxu0 0
        %7498 = vmatpush1.bf16.msra.mxu0 0
        %7499 = vmatprep.subr.bf16.mxu0 0
        %7500 = vmatpush1.bf16.msra.mxu0 0
        %7501 = vmatprep.subr.bf16.mxu0 0
        %7502 = vmatpush1.bf16.msra.mxu0 0
        %7503 = vmatprep.subr.bf16.mxu0 0
        %7504 = vmatpush1.bf16.msra.mxu0 0
        %7505 = vmatprep.mubr.bf16.mxu0 0
        %7506 = vmatmul.mubr.bf16.gmra.mrb[0].mxu0 %v7471
        %v7507 = vpop.f32.mrb[0].mxu0
        %v7508 = vadd.f32 0.0, %v7507
        %v7509 = vpop.f32.mrb[0].mxu0
        %v7510 = vpop.f32.mrb[0].mxu0
        %v7511 = vadd.f32 0.0, %v7510
        %v7512 = vpop.f32.mrb[0].mxu0
        %7513 = vdwg.mxu0
        %7514 = vrot.lane.b32.xlu0 %v1672, 64
        %v7515 = vpop.permute.xlu0 %7514
        %v7518 = vsel %vm4913, %v6346, 0
        %7520 = vmatprep.subr.bf16.mxu0 0
        %7521 = vmatpush1.bf16.msra.mxu0 %v7515
        %7522 = vmatprep.subr.bf16.mxu0 0
        %7523 = vmatpush1.bf16.msra.mxu0 0
        %7524 = vmatprep.subr.bf16.mxu0 0
        %7525 = vmatpush1.bf16.msra.mxu0 0
        %7526 = vmatprep.subr.bf16.mxu0 0
        %7527 = vmatpush1.bf16.msra.mxu0 0
        %7528 = vmatprep.subr.bf16.mxu0 0
        %7529 = vmatpush1.bf16.msra.mxu0 0
        %7530 = vmatprep.subr.bf16.mxu0 0
        %7531 = vmatpush1.bf16.msra.mxu0 0
        %7532 = vmatprep.subr.bf16.mxu0 0
        %7533 = vmatpush1.bf16.msra.mxu0 0
        %7534 = vmatprep.subr.bf16.mxu0 0
        %7535 = vmatpush1.bf16.msra.mxu0 0
        %7536 = vmatprep.subr.bf16.mxu0 0
        %7537 = vmatpush1.bf16.msra.mxu0 0
        %7538 = vmatprep.subr.bf16.mxu0 0
        %7539 = vmatpush1.bf16.msra.mxu0 0
        %7540 = vmatprep.subr.bf16.mxu0 0
        %7541 = vmatpush1.bf16.msra.mxu0 0
        %7542 = vmatprep.subr.bf16.mxu0 0
        %7543 = vmatpush1.bf16.msra.mxu0 0
        %7544 = vmatprep.subr.bf16.mxu0 0
        %7545 = vmatpush1.bf16.msra.mxu0 0
        %7546 = vmatprep.subr.bf16.mxu0 0
        %7547 = vmatpush1.bf16.msra.mxu0 0
        %7548 = vmatprep.subr.bf16.mxu0 0
        %7549 = vmatpush1.bf16.msra.mxu0 0
        %7550 = vmatprep.subr.bf16.mxu0 0
        %7551 = vmatpush1.bf16.msra.mxu0 0
        %7552 = vmatprep.mubr.bf16.mxu0 0
        %7553 = vmatmul.mubr.bf16.gmra.mrb[0].mxu0 %v7518
        %v7554 = vpop.f32.mrb[0].mxu0
        %v7555 = vadd.f32 0.0, %v7554
        %v7556 = vpop.f32.mrb[0].mxu0
        %v7557 = vpop.f32.mrb[0].mxu0
        %v7558 = vadd.f32 0.0, %v7557
        %v7559 = vpop.f32.mrb[0].mxu0
        %7560 = vdwg.mxu0
        %7561 = vrot.lane.b32.xlu0 %v1673, 64
        %v7562 = vpop.permute.xlu0 %7561
        %v7565 = vsel %vm4913, %v6347, 0
        %7567 = vmatprep.subr.bf16.mxu0 0
        %7568 = vmatpush1.bf16.msra.mxu0 %v7562
        %7569 = vmatprep.subr.bf16.mxu0 0
        %7570 = vmatpush1.bf16.msra.mxu0 0
        %7571 = vmatprep.subr.bf16.mxu0 0
        %7572 = vmatpush1.bf16.msra.mxu0 0
        %7573 = vmatprep.subr.bf16.mxu0 0
        %7574 = vmatpush1.bf16.msra.mxu0 0
        %7575 = vmatprep.subr.bf16.mxu0 0
        %7576 = vmatpush1.bf16.msra.mxu0 0
        %7577 = vmatprep.subr.bf16.mxu0 0
        %7578 = vmatpush1.bf16.msra.mxu0 0
        %7579 = vmatprep.subr.bf16.mxu0 0
        %7580 = vmatpush1.bf16.msra.mxu0 0
        %7581 = vmatprep.subr.bf16.mxu0 0
        %7582 = vmatpush1.bf16.msra.mxu0 0
        %7583 = vmatprep.subr.bf16.mxu0 0
        %7584 = vmatpush1.bf16.msra.mxu0 0
        %7585 = vmatprep.subr.bf16.mxu0 0
        %7586 = vmatpush1.bf16.msra.mxu0 0
        %7587 = vmatprep.subr.bf16.mxu0 0
        %7588 = vmatpush1.bf16.msra.mxu0 0
        %7589 = vmatprep.subr.bf16.mxu0 0
        %7590 = vmatpush1.bf16.msra.mxu0 0
        %7591 = vmatprep.subr.bf16.mxu0 0
        %7592 = vmatpush1.bf16.msra.mxu0 0
        %7593 = vmatprep.subr.bf16.mxu0 0
        %7594 = vmatpush1.bf16.msra.mxu0 0
        %7595 = vmatprep.subr.bf16.mxu0 0
        %7596 = vmatpush1.bf16.msra.mxu0 0
        %7597 = vmatprep.subr.bf16.mxu0 0
        %7598 = vmatpush1.bf16.msra.mxu0 0
        %7599 = vmatprep.mubr.bf16.mxu0 0
        %7600 = vmatmul.mubr.bf16.gmra.mrb[0].mxu0 %v7565
        %v7601 = vpop.f32.mrb[0].mxu0
        %v7602 = vadd.f32 0.0, %v7601
        %v7603 = vpop.f32.mrb[0].mxu0
        %v7604 = vpop.f32.mrb[0].mxu0
        %v7605 = vadd.f32 0.0, %v7604
        %v7606 = vpop.f32.mrb[0].mxu0
        %7607 = vdwg.mxu0
        %7608 = vrot.lane.b32.xlu0 %v1674, 64
        %v7609 = vpop.permute.xlu0 %7608
        %v7612 = vsel %vm4913, %v6348, 0
        %7614 = vmatprep.subr.bf16.mxu0 0
        %7615 = vmatpush1.bf16.msra.mxu0 %v7609
        %7616 = vmatprep.subr.bf16.mxu0 0
        %7617 = vmatpush1.bf16.msra.mxu0 0
        %7618 = vmatprep.subr.bf16.mxu0 0
        %7619 = vmatpush1.bf16.msra.mxu0 0
        %7620 = vmatprep.subr.bf16.mxu0 0
        %7621 = vmatpush1.bf16.msra.mxu0 0
        %7622 = vmatprep.subr.bf16.mxu0 0
        %7623 = vmatpush1.bf16.msra.mxu0 0
        %7624 = vmatprep.subr.bf16.mxu0 0
        %7625 = vmatpush1.bf16.msra.mxu0 0
        %7626 = vmatprep.subr.bf16.mxu0 0
        %7627 = vmatpush1.bf16.msra.mxu0 0
        %7628 = vmatprep.subr.bf16.mxu0 0
        %7629 = vmatpush1.bf16.msra.mxu0 0
        %7630 = vmatprep.subr.bf16.mxu0 0
        %7631 = vmatpush1.bf16.msra.mxu0 0
        %7632 = vmatprep.subr.bf16.mxu0 0
        %7633 = vmatpush1.bf16.msra.mxu0 0
        %7634 = vmatprep.subr.bf16.mxu0 0
        %7635 = vmatpush1.bf16.msra.mxu0 0
        %7636 = vmatprep.subr.bf16.mxu0 0
        %7637 = vmatpush1.bf16.msra.mxu0 0
        %7638 = vmatprep.subr.bf16.mxu0 0
        %7639 = vmatpush1.bf16.msra.mxu0 0
        %7640 = vmatprep.subr.bf16.mxu0 0
        %7641 = vmatpush1.bf16.msra.mxu0 0
        %7642 = vmatprep.subr.bf16.mxu0 0
        %7643 = vmatpush1.bf16.msra.mxu0 0
        %7644 = vmatprep.subr.bf16.mxu0 0
        %7645 = vmatpush1.bf16.msra.mxu0 0
        %7646 = vmatprep.mubr.bf16.mxu0 0
        %7647 = vmatmul.mubr.bf16.gmra.mrb[0].mxu0 %v7612
        %v7648 = vpop.f32.mrb[0].mxu0
        %v7649 = vadd.f32 0.0, %v7648
        %v7650 = vpop.f32.mrb[0].mxu0
        %v7651 = vpop.f32.mrb[0].mxu0
        %v7652 = vadd.f32 0.0, %v7651
        %v7653 = vpop.f32.mrb[0].mxu0
        %7654 = vdwg.mxu0
        %7655 = vrot.lane.b32.xlu0 %v1675, 64
        %v7656 = vpop.permute.xlu0 %7655
        %v7659 = vsel %vm4913, %v6349, 0
        %7661 = vmatprep.subr.bf16.mxu0 0
        %7662 = vmatpush1.bf16.msra.mxu0 %v7656
        %7663 = vmatprep.subr.bf16.mxu0 0
        %7664 = vmatpush1.bf16.msra.mxu0 0
        %7665 = vmatprep.subr.bf16.mxu0 0
        %7666 = vmatpush1.bf16.msra.mxu0 0
        %7667 = vmatprep.subr.bf16.mxu0 0
        %7668 = vmatpush1.bf16.msra.mxu0 0
        %7669 = vmatprep.subr.bf16.mxu0 0
        %7670 = vmatpush1.bf16.msra.mxu0 0
        %7671 = vmatprep.subr.bf16.mxu0 0
        %7672 = vmatpush1.bf16.msra.mxu0 0
        %7673 = vmatprep.subr.bf16.mxu0 0
        %7674 = vmatpush1.bf16.msra.mxu0 0
        %7675 = vmatprep.subr.bf16.mxu0 0
        %7676 = vmatpush1.bf16.msra.mxu0 0
        %7677 = vmatprep.subr.bf16.mxu0 0
        %7678 = vmatpush1.bf16.msra.mxu0 0
        %7679 = vmatprep.subr.bf16.mxu0 0
        %7680 = vmatpush1.bf16.msra.mxu0 0
        %7681 = vmatprep.subr.bf16.mxu0 0
        %7682 = vmatpush1.bf16.msra.mxu0 0
        %7683 = vmatprep.subr.bf16.mxu0 0
        %7684 = vmatpush1.bf16.msra.mxu0 0
        %7685 = vmatprep.subr.bf16.mxu0 0
        %7686 = vmatpush1.bf16.msra.mxu0 0
        %7687 = vmatprep.subr.bf16.mxu0 0
        %7688 = vmatpush1.bf16.msra.mxu0 0
        %7689 = vmatprep.subr.bf16.mxu0 0
        %7690 = vmatpush1.bf16.msra.mxu0 0
        %7691 = vmatprep.subr.bf16.mxu0 0
        %7692 = vmatpush1.bf16.msra.mxu0 0
        %7693 = vmatprep.mubr.bf16.mxu0 0
        %7694 = vmatmul.mubr.bf16.gmra.mrb[0].mxu0 %v7659
        %v7695 = vpop.f32.mrb[0].mxu0
        %v7696 = vadd.f32 0.0, %v7695
        %v7697 = vpop.f32.mrb[0].mxu0
        %v7698 = vpop.f32.mrb[0].mxu0
        %v7699 = vadd.f32 0.0, %v7698
        %v7700 = vpop.f32.mrb[0].mxu0
        %7701 = vdwg.mxu0
        %7702 = vrot.lane.b32.xlu0 %v1676, 64
        %v7703 = vpop.permute.xlu0 %7702
        %v7706 = vsel %vm4913, %v6350, 0
        %7708 = vmatprep.subr.bf16.mxu0 0
        %7709 = vmatpush1.bf16.msra.mxu0 %v7703
        %7710 = vmatprep.subr.bf16.mxu0 0
        %7711 = vmatpush1.bf16.msra.mxu0 0
        %7712 = vmatprep.subr.bf16.mxu0 0
        %7713 = vmatpush1.bf16.msra.mxu0 0
        %7714 = vmatprep.subr.bf16.mxu0 0
        %7715 = vmatpush1.bf16.msra.mxu0 0
        %7716 = vmatprep.subr.bf16.mxu0 0
        %7717 = vmatpush1.bf16.msra.mxu0 0
        %7718 = vmatprep.subr.bf16.mxu0 0
        %7719 = vmatpush1.bf16.msra.mxu0 0
        %7720 = vmatprep.subr.bf16.mxu0 0
        %7721 = vmatpush1.bf16.msra.mxu0 0
        %7722 = vmatprep.subr.bf16.mxu0 0
        %7723 = vmatpush1.bf16.msra.mxu0 0
        %7724 = vmatprep.subr.bf16.mxu0 0
        %7725 = vmatpush1.bf16.msra.mxu0 0
        %7726 = vmatprep.subr.bf16.mxu0 0
        %7727 = vmatpush1.bf16.msra.mxu0 0
        %7728 = vmatprep.subr.bf16.mxu0 0
        %7729 = vmatpush1.bf16.msra.mxu0 0
        %7730 = vmatprep.subr.bf16.mxu0 0
        %7731 = vmatpush1.bf16.msra.mxu0 0
        %7732 = vmatprep.subr.bf16.mxu0 0
        %7733 = vmatpush1.bf16.msra.mxu0 0
        %7734 = vmatprep.subr.bf16.mxu0 0
        %7735 = vmatpush1.bf16.msra.mxu0 0
        %7736 = vmatprep.subr.bf16.mxu0 0
        %7737 = vmatpush1.bf16.msra.mxu0 0
        %7738 = vmatprep.subr.bf16.mxu0 0
        %7739 = vmatpush1.bf16.msra.mxu0 0
        %7740 = vmatprep.mubr.bf16.mxu0 0
        %7741 = vmatmul.mubr.bf16.gmra.mrb[0].mxu0 %v7706
        %v7742 = vpop.f32.mrb[0].mxu0
        %v7743 = vadd.f32 0.0, %v7742
        %v7744 = vpop.f32.mrb[0].mxu0
        %v7745 = vpop.f32.mrb[0].mxu0
        %v7746 = vadd.f32 0.0, %v7745
        %v7747 = vpop.f32.mrb[0].mxu0
        %7748 = vdwg.mxu0
        %7749 = vrot.lane.b32.xlu0 %v1677, 64
        %v7750 = vpop.permute.xlu0 %7749
        %v7753 = vsel %vm4913, %v6351, 0
        %7755 = vmatprep.subr.bf16.mxu0 0
        %7756 = vmatpush1.bf16.msra.mxu0 %v7750
        %7757 = vmatprep.subr.bf16.mxu0 0
        %7758 = vmatpush1.bf16.msra.mxu0 0
        %7759 = vmatprep.subr.bf16.mxu0 0
        %7760 = vmatpush1.bf16.msra.mxu0 0
        %7761 = vmatprep.subr.bf16.mxu0 0
        %7762 = vmatpush1.bf16.msra.mxu0 0
        %7763 = vmatprep.subr.bf16.mxu0 0
        %7764 = vmatpush1.bf16.msra.mxu0 0
        %7765 = vmatprep.subr.bf16.mxu0 0
        %7766 = vmatpush1.bf16.msra.mxu0 0
        %7767 = vmatprep.subr.bf16.mxu0 0
        %7768 = vmatpush1.bf16.msra.mxu0 0
        %7769 = vmatprep.subr.bf16.mxu0 0
        %7770 = vmatpush1.bf16.msra.mxu0 0
        %7771 = vmatprep.subr.bf16.mxu0 0
        %7772 = vmatpush1.bf16.msra.mxu0 0
        %7773 = vmatprep.subr.bf16.mxu0 0
        %7774 = vmatpush1.bf16.msra.mxu0 0
        %7775 = vmatprep.subr.bf16.mxu0 0
        %7776 = vmatpush1.bf16.msra.mxu0 0
        %7777 = vmatprep.subr.bf16.mxu0 0
        %7778 = vmatpush1.bf16.msra.mxu0 0
        %7779 = vmatprep.subr.bf16.mxu0 0
        %7780 = vmatpush1.bf16.msra.mxu0 0
        %7781 = vmatprep.subr.bf16.mxu0 0
        %7782 = vmatpush1.bf16.msra.mxu0 0
        %7783 = vmatprep.subr.bf16.mxu0 0
        %7784 = vmatpush1.bf16.msra.mxu0 0
        %7785 = vmatprep.subr.bf16.mxu0 0
        %7786 = vmatpush1.bf16.msra.mxu0 0
        %7787 = vmatprep.mubr.bf16.mxu0 0
        %7788 = vmatmul.mubr.bf16.gmra.mrb[0].mxu0 %v7753
        %v7789 = vpop.f32.mrb[0].mxu0
        %v7790 = vadd.f32 0.0, %v7789
        %v7791 = vpop.f32.mrb[0].mxu0
        %v7792 = vpop.f32.mrb[0].mxu0
        %v7793 = vadd.f32 0.0, %v7792
        %v7794 = vpop.f32.mrb[0].mxu0
        %7795 = vdwg.mxu0
        %7796 = vrot.lane.b32.xlu0 %v1678, 64
        %v7797 = vpop.permute.xlu0 %7796
        %v7800 = vsel %vm4913, %v6352, 0
        %7802 = vmatprep.subr.bf16.mxu0 0
        %7803 = vmatpush1.bf16.msra.mxu0 %v7797
        %7804 = vmatprep.subr.bf16.mxu0 0
        %7805 = vmatpush1.bf16.msra.mxu0 0
        %7806 = vmatprep.subr.bf16.mxu0 0
        %7807 = vmatpush1.bf16.msra.mxu0 0
        %7808 = vmatprep.subr.bf16.mxu0 0
        %7809 = vmatpush1.bf16.msra.mxu0 0
        %7810 = vmatprep.subr.bf16.mxu0 0
        %7811 = vmatpush1.bf16.msra.mxu0 0
        %7812 = vmatprep.subr.bf16.mxu0 0
        %7813 = vmatpush1.bf16.msra.mxu0 0
        %7814 = vmatprep.subr.bf16.mxu0 0
        %7815 = vmatpush1.bf16.msra.mxu0 0
        %7816 = vmatprep.subr.bf16.mxu0 0
        %7817 = vmatpush1.bf16.msra.mxu0 0
        %7818 = vmatprep.subr.bf16.mxu0 0
        %7819 = vmatpush1.bf16.msra.mxu0 0
        %7820 = vmatprep.subr.bf16.mxu0 0
        %7821 = vmatpush1.bf16.msra.mxu0 0
        %7822 = vmatprep.subr.bf16.mxu0 0
        %7823 = vmatpush1.bf16.msra.mxu0 0
        %7824 = vmatprep.subr.bf16.mxu0 0
        %7825 = vmatpush1.bf16.msra.mxu0 0
        %7826 = vmatprep.subr.bf16.mxu0 0
        %7827 = vmatpush1.bf16.msra.mxu0 0
        %7828 = vmatprep.subr.bf16.mxu0 0
        %7829 = vmatpush1.bf16.msra.mxu0 0
        %7830 = vmatprep.subr.bf16.mxu0 0
        %7831 = vmatpush1.bf16.msra.mxu0 0
        %7832 = vmatprep.subr.bf16.mxu0 0
        %7833 = vmatpush1.bf16.msra.mxu0 0
        %7834 = vmatprep.mubr.bf16.mxu0 0
        %7835 = vmatmul.mubr.bf16.gmra.mrb[0].mxu0 %v7800
        %v7836 = vpop.f32.mrb[0].mxu0
        %v7837 = vadd.f32 0.0, %v7836
        %v7838 = vpop.f32.mrb[0].mxu0
        %v7839 = vpop.f32.mrb[0].mxu0
        %v7840 = vadd.f32 0.0, %v7839
        %v7841 = vpop.f32.mrb[0].mxu0
        %7842 = vdwg.mxu0
        %7843 = vrot.lane.b32.xlu0 %v1679, 64
        %v7844 = vpop.permute.xlu0 %7843
        %v7847 = vsel %vm4913, %v6353, 0
        %7849 = vmatprep.subr.bf16.mxu0 0
        %7850 = vmatpush1.bf16.msra.mxu0 %v7844
        %7851 = vmatprep.subr.bf16.mxu0 0
        %7852 = vmatpush1.bf16.msra.mxu0 0
        %7853 = vmatprep.subr.bf16.mxu0 0
        %7854 = vmatpush1.bf16.msra.mxu0 0
        %7855 = vmatprep.subr.bf16.mxu0 0
        %7856 = vmatpush1.bf16.msra.mxu0 0
        %7857 = vmatprep.subr.bf16.mxu0 0
        %7858 = vmatpush1.bf16.msra.mxu0 0
        %7859 = vmatprep.subr.bf16.mxu0 0
        %7860 = vmatpush1.bf16.msra.mxu0 0
        %7861 = vmatprep.subr.bf16.mxu0 0
        %7862 = vmatpush1.bf16.msra.mxu0 0
        %7863 = vmatprep.subr.bf16.mxu0 0
        %7864 = vmatpush1.bf16.msra.mxu0 0
        %7865 = vmatprep.subr.bf16.mxu0 0
        %7866 = vmatpush1.bf16.msra.mxu0 0
        %7867 = vmatprep.subr.bf16.mxu0 0
        %7868 = vmatpush1.bf16.msra.mxu0 0
        %7869 = vmatprep.subr.bf16.mxu0 0
        %7870 = vmatpush1.bf16.msra.mxu0 0
        %7871 = vmatprep.subr.bf16.mxu0 0
        %7872 = vmatpush1.bf16.msra.mxu0 0
        %7873 = vmatprep.subr.bf16.mxu0 0
        %7874 = vmatpush1.bf16.msra.mxu0 0
        %7875 = vmatprep.subr.bf16.mxu0 0
        %7876 = vmatpush1.bf16.msra.mxu0 0
        %7877 = vmatprep.subr.bf16.mxu0 0
        %7878 = vmatpush1.bf16.msra.mxu0 0
        %7879 = vmatprep.subr.bf16.mxu0 0
        %7880 = vmatpush1.bf16.msra.mxu0 0
        %7881 = vmatprep.mubr.bf16.mxu0 0
        %7882 = vmatmul.mubr.bf16.gmra.mrb[0].mxu0 %v7847
        %v7883 = vpop.f32.mrb[0].mxu0
        %v7884 = vadd.f32 0.0, %v7883
        %v7885 = vpop.f32.mrb[0].mxu0
        %v7886 = vpop.f32.mrb[0].mxu0
        %v7887 = vadd.f32 0.0, %v7886
        %v7888 = vpop.f32.mrb[0].mxu0
        %7889 = vdwg.mxu0
        %7890 = vrot.lane.b32.xlu0 %v1680, 64
        %v7891 = vpop.permute.xlu0 %7890
        %v7894 = vsel %vm4913, %v6354, 0
        %7896 = vmatprep.subr.bf16.mxu0 0
        %7897 = vmatpush1.bf16.msra.mxu0 %v7891
        %7898 = vmatprep.subr.bf16.mxu0 0
        %7899 = vmatpush1.bf16.msra.mxu0 0
        %7900 = vmatprep.subr.bf16.mxu0 0
        %7901 = vmatpush1.bf16.msra.mxu0 0
        %7902 = vmatprep.subr.bf16.mxu0 0
        %7903 = vmatpush1.bf16.msra.mxu0 0
        %7904 = vmatprep.subr.bf16.mxu0 0
        %7905 = vmatpush1.bf16.msra.mxu0 0
        %7906 = vmatprep.subr.bf16.mxu0 0
        %7907 = vmatpush1.bf16.msra.mxu0 0
        %7908 = vmatprep.subr.bf16.mxu0 0
        %7909 = vmatpush1.bf16.msra.mxu0 0
        %7910 = vmatprep.subr.bf16.mxu0 0
        %7911 = vmatpush1.bf16.msra.mxu0 0
        %7912 = vmatprep.subr.bf16.mxu0 0
        %7913 = vmatpush1.bf16.msra.mxu0 0
        %7914 = vmatprep.subr.bf16.mxu0 0
        %7915 = vmatpush1.bf16.msra.mxu0 0
        %7916 = vmatprep.subr.bf16.mxu0 0
        %7917 = vmatpush1.bf16.msra.mxu0 0
        %7918 = vmatprep.subr.bf16.mxu0 0
        %7919 = vmatpush1.bf16.msra.mxu0 0
        %7920 = vmatprep.subr.bf16.mxu0 0
        %7921 = vmatpush1.bf16.msra.mxu0 0
        %7922 = vmatprep.subr.bf16.mxu0 0
        %7923 = vmatpush1.bf16.msra.mxu0 0
        %7924 = vmatprep.subr.bf16.mxu0 0
        %7925 = vmatpush1.bf16.msra.mxu0 0
        %7926 = vmatprep.subr.bf16.mxu0 0
        %7927 = vmatpush1.bf16.msra.mxu0 0
        %7928 = vmatprep.mubr.bf16.mxu0 0
        %7929 = vmatmul.mubr.bf16.gmra.mrb[0].mxu0 %v7894
        %v7930 = vpop.f32.mrb[0].mxu0
        %v7931 = vadd.f32 0.0, %v7930
        %v7932 = vpop.f32.mrb[0].mxu0
        %v7933 = vpop.f32.mrb[0].mxu0
        %v7934 = vadd.f32 0.0, %v7933
        %v7935 = vpop.f32.mrb[0].mxu0
        %7936 = vdwg.mxu0
        %7937 = vrot.lane.b32.xlu0 %v1681, 64
        %v7938 = vpop.permute.xlu0 %7937
        %v7941 = vsel %vm4913, %v6355, 0
        %7943 = vmatprep.subr.bf16.mxu0 0
        %7944 = vmatpush1.bf16.msra.mxu0 %v7938
        %7945 = vmatprep.subr.bf16.mxu0 0
        %7946 = vmatpush1.bf16.msra.mxu0 0
        %7947 = vmatprep.subr.bf16.mxu0 0
        %7948 = vmatpush1.bf16.msra.mxu0 0
        %7949 = vmatprep.subr.bf16.mxu0 0
        %7950 = vmatpush1.bf16.msra.mxu0 0
        %7951 = vmatprep.subr.bf16.mxu0 0
        %7952 = vmatpush1.bf16.msra.mxu0 0
        %7953 = vmatprep.subr.bf16.mxu0 0
        %7954 = vmatpush1.bf16.msra.mxu0 0
        %7955 = vmatprep.subr.bf16.mxu0 0
        %7956 = vmatpush1.bf16.msra.mxu0 0
        %7957 = vmatprep.subr.bf16.mxu0 0
        %7958 = vmatpush1.bf16.msra.mxu0 0
        %7959 = vmatprep.subr.bf16.mxu0 0
        %7960 = vmatpush1.bf16.msra.mxu0 0
        %7961 = vmatprep.subr.bf16.mxu0 0
        %7962 = vmatpush1.bf16.msra.mxu0 0
        %7963 = vmatprep.subr.bf16.mxu0 0
        %7964 = vmatpush1.bf16.msra.mxu0 0
        %7965 = vmatprep.subr.bf16.mxu0 0
        %7966 = vmatpush1.bf16.msra.mxu0 0
        %7967 = vmatprep.subr.bf16.mxu0 0
        %7968 = vmatpush1.bf16.msra.mxu0 0
        %7969 = vmatprep.subr.bf16.mxu0 0
        %7970 = vmatpush1.bf16.msra.mxu0 0
        %7971 = vmatprep.subr.bf16.mxu0 0
        %7972 = vmatpush1.bf16.msra.mxu0 0
        %7973 = vmatprep.subr.bf16.mxu0 0
        %7974 = vmatpush1.bf16.msra.mxu0 0
        %7975 = vmatprep.mubr.bf16.mxu0 0
        %7976 = vmatmul.mubr.bf16.gmra.mrb[0].mxu0 %v7941
        %v7977 = vpop.f32.mrb[0].mxu0
        %v7978 = vadd.f32 0.0, %v7977
        %v7979 = vpop.f32.mrb[0].mxu0
        %v7980 = vpop.f32.mrb[0].mxu0
        %v7981 = vadd.f32 0.0, %v7980
        %v7982 = vpop.f32.mrb[0].mxu0
        %7983 = vdwg.mxu0
        %7984 = vrot.lane.b32.xlu0 %v1682, 64
        %v7985 = vpop.permute.xlu0 %7984
        %v7988 = vsel %vm4913, %v6356, 0
        %7990 = vmatprep.subr.bf16.mxu0 0
        %7991 = vmatpush1.bf16.msra.mxu0 %v7985
        %7992 = vmatprep.subr.bf16.mxu0 0
        %7993 = vmatpush1.bf16.msra.mxu0 0
        %7994 = vmatprep.subr.bf16.mxu0 0
        %7995 = vmatpush1.bf16.msra.mxu0 0
        %7996 = vmatprep.subr.bf16.mxu0 0
        %7997 = vmatpush1.bf16.msra.mxu0 0
        %7998 = vmatprep.subr.bf16.mxu0 0
        %7999 = vmatpush1.bf16.msra.mxu0 0
        %8000 = vmatprep.subr.bf16.mxu0 0
        %8001 = vmatpush1.bf16.msra.mxu0 0
        %8002 = vmatprep.subr.bf16.mxu0 0
        %8003 = vmatpush1.bf16.msra.mxu0 0
        %8004 = vmatprep.subr.bf16.mxu0 0
        %8005 = vmatpush1.bf16.msra.mxu0 0
        %8006 = vmatprep.subr.bf16.mxu0 0
        %8007 = vmatpush1.bf16.msra.mxu0 0
        %8008 = vmatprep.subr.bf16.mxu0 0
        %8009 = vmatpush1.bf16.msra.mxu0 0
        %8010 = vmatprep.subr.bf16.mxu0 0
        %8011 = vmatpush1.bf16.msra.mxu0 0
        %8012 = vmatprep.subr.bf16.mxu0 0
        %8013 = vmatpush1.bf16.msra.mxu0 0
        %8014 = vmatprep.subr.bf16.mxu0 0
        %8015 = vmatpush1.bf16.msra.mxu0 0
        %8016 = vmatprep.subr.bf16.mxu0 0
        %8017 = vmatpush1.bf16.msra.mxu0 0
        %8018 = vmatprep.subr.bf16.mxu0 0
        %8019 = vmatpush1.bf16.msra.mxu0 0
        %8020 = vmatprep.subr.bf16.mxu0 0
        %8021 = vmatpush1.bf16.msra.mxu0 0
        %8022 = vmatprep.mubr.bf16.mxu0 0
        %8023 = vmatmul.mubr.bf16.gmra.mrb[0].mxu0 %v7988
        %v8024 = vpop.f32.mrb[0].mxu0
        %v8025 = vadd.f32 0.0, %v8024
        %v8026 = vpop.f32.mrb[0].mxu0
        %v8027 = vpop.f32.mrb[0].mxu0
        %v8028 = vadd.f32 0.0, %v8027
        %v8029 = vpop.f32.mrb[0].mxu0
        %8030 = vdwg.mxu0
        %8031 = vrot.lane.b32.xlu0 %v1683, 64
        %v8032 = vpop.permute.xlu0 %8031
        %v8035 = vsel %vm4913, %v6357, 0
        %8037 = vmatprep.subr.bf16.mxu0 0
        %8038 = vmatpush1.bf16.msra.mxu0 %v8032
        %8039 = vmatprep.subr.bf16.mxu0 0
        %8040 = vmatpush1.bf16.msra.mxu0 0
        %8041 = vmatprep.subr.bf16.mxu0 0
        %8042 = vmatpush1.bf16.msra.mxu0 0
        %8043 = vmatprep.subr.bf16.mxu0 0
        %8044 = vmatpush1.bf16.msra.mxu0 0
        %8045 = vmatprep.subr.bf16.mxu0 0
        %8046 = vmatpush1.bf16.msra.mxu0 0
        %8047 = vmatprep.subr.bf16.mxu0 0
        %8048 = vmatpush1.bf16.msra.mxu0 0
        %8049 = vmatprep.subr.bf16.mxu0 0
        %8050 = vmatpush1.bf16.msra.mxu0 0
        %8051 = vmatprep.subr.bf16.mxu0 0
        %8052 = vmatpush1.bf16.msra.mxu0 0
        %8053 = vmatprep.subr.bf16.mxu0 0
        %8054 = vmatpush1.bf16.msra.mxu0 0
        %8055 = vmatprep.subr.bf16.mxu0 0
        %8056 = vmatpush1.bf16.msra.mxu0 0
        %8057 = vmatprep.subr.bf16.mxu0 0
        %8058 = vmatpush1.bf16.msra.mxu0 0
        %8059 = vmatprep.subr.bf16.mxu0 0
        %8060 = vmatpush1.bf16.msra.mxu0 0
        %8061 = vmatprep.subr.bf16.mxu0 0
        %8062 = vmatpush1.bf16.msra.mxu0 0
        %8063 = vmatprep.subr.bf16.mxu0 0
        %8064 = vmatpush1.bf16.msra.mxu0 0
        %8065 = vmatprep.subr.bf16.mxu0 0
        %8066 = vmatpush1.bf16.msra.mxu0 0
        %8067 = vmatprep.subr.bf16.mxu0 0
        %8068 = vmatpush1.bf16.msra.mxu0 0
        %8069 = vmatprep.mubr.bf16.mxu0 0
        %8070 = vmatmul.mubr.bf16.gmra.mrb[0].mxu0 %v8035
        %v8071 = vpop.f32.mrb[0].mxu0
        %v8072 = vadd.f32 0.0, %v8071
        %v8073 = vpop.f32.mrb[0].mxu0
        %v8074 = vpop.f32.mrb[0].mxu0
        %v8075 = vadd.f32 0.0, %v8074
        %v8076 = vpop.f32.mrb[0].mxu0
        %8077 = vdwg.mxu0
        %8078 = vrot.lane.b32.xlu0 %v1684, 64
        %v8079 = vpop.permute.xlu0 %8078
        %v8082 = vsel %vm4913, %v6358, 0
        %8084 = vmatprep.subr.bf16.mxu0 0
        %8085 = vmatpush1.bf16.msra.mxu0 %v8079
        %8086 = vmatprep.subr.bf16.mxu0 0
        %8087 = vmatpush1.bf16.msra.mxu0 0
        %8088 = vmatprep.subr.bf16.mxu0 0
        %8089 = vmatpush1.bf16.msra.mxu0 0
        %8090 = vmatprep.subr.bf16.mxu0 0
        %8091 = vmatpush1.bf16.msra.mxu0 0
        %8092 = vmatprep.subr.bf16.mxu0 0
        %8093 = vmatpush1.bf16.msra.mxu0 0
        %8094 = vmatprep.subr.bf16.mxu0 0
        %8095 = vmatpush1.bf16.msra.mxu0 0
        %8096 = vmatprep.subr.bf16.mxu0 0
        %8097 = vmatpush1.bf16.msra.mxu0 0
        %8098 = vmatprep.subr.bf16.mxu0 0
        %8099 = vmatpush1.bf16.msra.mxu0 0
        %8100 = vmatprep.subr.bf16.mxu0 0
        %8101 = vmatpush1.bf16.msra.mxu0 0
        %8102 = vmatprep.subr.bf16.mxu0 0
        %8103 = vmatpush1.bf16.msra.mxu0 0
        %8104 = vmatprep.subr.bf16.mxu0 0
        %8105 = vmatpush1.bf16.msra.mxu0 0
        %8106 = vmatprep.subr.bf16.mxu0 0
        %8107 = vmatpush1.bf16.msra.mxu0 0
        %8108 = vmatprep.subr.bf16.mxu0 0
        %8109 = vmatpush1.bf16.msra.mxu0 0
        %8110 = vmatprep.subr.bf16.mxu0 0
        %8111 = vmatpush1.bf16.msra.mxu0 0
        %8112 = vmatprep.subr.bf16.mxu0 0
        %8113 = vmatpush1.bf16.msra.mxu0 0
        %8114 = vmatprep.subr.bf16.mxu0 0
        %8115 = vmatpush1.bf16.msra.mxu0 0
        %8116 = vmatprep.mubr.bf16.mxu0 0
        %8117 = vmatmul.mubr.bf16.gmra.mrb[0].mxu0 %v8082
        %v8118 = vpop.f32.mrb[0].mxu0
        %v8119 = vadd.f32 0.0, %v8118
        %v8120 = vpop.f32.mrb[0].mxu0
        %v8121 = vpop.f32.mrb[0].mxu0
        %v8122 = vadd.f32 0.0, %v8121
        %v8123 = vpop.f32.mrb[0].mxu0
        %8124 = vdwg.mxu0
        %8125 = vrot.lane.b32.xlu0 %v1685, 64
        %v8126 = vpop.permute.xlu0 %8125
        %v8129 = vsel %vm4913, %v6359, 0
        %8131 = vmatprep.subr.bf16.mxu0 0
        %8132 = vmatpush1.bf16.msra.mxu0 %v8126
        %8133 = vmatprep.subr.bf16.mxu0 0
        %8134 = vmatpush1.bf16.msra.mxu0 0
        %8135 = vmatprep.subr.bf16.mxu0 0
        %8136 = vmatpush1.bf16.msra.mxu0 0
        %8137 = vmatprep.subr.bf16.mxu0 0
        %8138 = vmatpush1.bf16.msra.mxu0 0
        %8139 = vmatprep.subr.bf16.mxu0 0
        %8140 = vmatpush1.bf16.msra.mxu0 0
        %8141 = vmatprep.subr.bf16.mxu0 0
        %8142 = vmatpush1.bf16.msra.mxu0 0
        %8143 = vmatprep.subr.bf16.mxu0 0
        %8144 = vmatpush1.bf16.msra.mxu0 0
        %8145 = vmatprep.subr.bf16.mxu0 0
        %8146 = vmatpush1.bf16.msra.mxu0 0
        %8147 = vmatprep.subr.bf16.mxu0 0
        %8148 = vmatpush1.bf16.msra.mxu0 0
        %8149 = vmatprep.subr.bf16.mxu0 0
        %8150 = vmatpush1.bf16.msra.mxu0 0
        %8151 = vmatprep.subr.bf16.mxu0 0
        %8152 = vmatpush1.bf16.msra.mxu0 0
        %8153 = vmatprep.subr.bf16.mxu0 0
        %8154 = vmatpush1.bf16.msra.mxu0 0
        %8155 = vmatprep.subr.bf16.mxu0 0
        %8156 = vmatpush1.bf16.msra.mxu0 0
        %8157 = vmatprep.subr.bf16.mxu0 0
        %8158 = vmatpush1.bf16.msra.mxu0 0
        %8159 = vmatprep.subr.bf16.mxu0 0
        %8160 = vmatpush1.bf16.msra.mxu0 0
        %8161 = vmatprep.subr.bf16.mxu0 0
        %8162 = vmatpush1.bf16.msra.mxu0 0
        %8163 = vmatprep.mubr.bf16.mxu0 0
        %8164 = vmatmul.mubr.bf16.gmra.mrb[0].mxu0 %v8129
        %v8165 = vpop.f32.mrb[0].mxu0
        %v8166 = vadd.f32 0.0, %v8165
        %v8167 = vpop.f32.mrb[0].mxu0
        %v8168 = vpop.f32.mrb[0].mxu0
        %v8169 = vadd.f32 0.0, %v8168
        %v8170 = vpop.f32.mrb[0].mxu0
        %8171 = vdwg.mxu0
        %8172 = vrot.lane.b32.xlu0 %v1686, 64
        %v8173 = vpop.permute.xlu0 %8172
        %v8176 = vsel %vm4913, %v6360, 0
        %8178 = vmatprep.subr.bf16.mxu0 0
        %8179 = vmatpush1.bf16.msra.mxu0 %v8173
        %8180 = vmatprep.subr.bf16.mxu0 0
        %8181 = vmatpush1.bf16.msra.mxu0 0
        %8182 = vmatprep.subr.bf16.mxu0 0
        %8183 = vmatpush1.bf16.msra.mxu0 0
        %8184 = vmatprep.subr.bf16.mxu0 0
        %8185 = vmatpush1.bf16.msra.mxu0 0
        %8186 = vmatprep.subr.bf16.mxu0 0
        %8187 = vmatpush1.bf16.msra.mxu0 0
        %8188 = vmatprep.subr.bf16.mxu0 0
        %8189 = vmatpush1.bf16.msra.mxu0 0
        %8190 = vmatprep.subr.bf16.mxu0 0
        %8191 = vmatpush1.bf16.msra.mxu0 0
        %8192 = vmatprep.subr.bf16.mxu0 0
        %8193 = vmatpush1.bf16.msra.mxu0 0
        %8194 = vmatprep.subr.bf16.mxu0 0
        %8195 = vmatpush1.bf16.msra.mxu0 0
        %8196 = vmatprep.subr.bf16.mxu0 0
        %8197 = vmatpush1.bf16.msra.mxu0 0
        %8198 = vmatprep.subr.bf16.mxu0 0
        %8199 = vmatpush1.bf16.msra.mxu0 0
        %8200 = vmatprep.subr.bf16.mxu0 0
        %8201 = vmatpush1.bf16.msra.mxu0 0
        %8202 = vmatprep.subr.bf16.mxu0 0
        %8203 = vmatpush1.bf16.msra.mxu0 0
        %8204 = vmatprep.subr.bf16.mxu0 0
        %8205 = vmatpush1.bf16.msra.mxu0 0
        %8206 = vmatprep.subr.bf16.mxu0 0
        %8207 = vmatpush1.bf16.msra.mxu0 0
        %8208 = vmatprep.subr.bf16.mxu0 0
        %8209 = vmatpush1.bf16.msra.mxu0 0
        %8210 = vmatprep.mubr.bf16.mxu0 0
        %8211 = vmatmul.mubr.bf16.gmra.mrb[0].mxu0 %v8176
        %v8212 = vpop.f32.mrb[0].mxu0
        %v8213 = vadd.f32 0.0, %v8212
        %v8214 = vpop.f32.mrb[0].mxu0
        %v8215 = vpop.f32.mrb[0].mxu0
        %v8216 = vadd.f32 0.0, %v8215
        %v8217 = vpop.f32.mrb[0].mxu0
        %8218 = vdwg.mxu0
        %8219 = vrot.lane.b32.xlu0 %v1687, 64
        %v8220 = vpop.permute.xlu0 %8219
        %v8223 = vsel %vm4913, %v6361, 0
        %8225 = vmatprep.subr.bf16.mxu0 0
        %8226 = vmatpush1.bf16.msra.mxu0 %v8220
        %8227 = vmatprep.subr.bf16.mxu0 0
        %8228 = vmatpush1.bf16.msra.mxu0 0
        %8229 = vmatprep.subr.bf16.mxu0 0
        %8230 = vmatpush1.bf16.msra.mxu0 0
        %8231 = vmatprep.subr.bf16.mxu0 0
        %8232 = vmatpush1.bf16.msra.mxu0 0
        %8233 = vmatprep.subr.bf16.mxu0 0
        %8234 = vmatpush1.bf16.msra.mxu0 0
        %8235 = vmatprep.subr.bf16.mxu0 0
        %8236 = vmatpush1.bf16.msra.mxu0 0
        %8237 = vmatprep.subr.bf16.mxu0 0
        %8238 = vmatpush1.bf16.msra.mxu0 0
        %8239 = vmatprep.subr.bf16.mxu0 0
        %8240 = vmatpush1.bf16.msra.mxu0 0
        %8241 = vmatprep.subr.bf16.mxu0 0
        %8242 = vmatpush1.bf16.msra.mxu0 0
        %8243 = vmatprep.subr.bf16.mxu0 0
        %8244 = vmatpush1.bf16.msra.mxu0 0
        %8245 = vmatprep.subr.bf16.mxu0 0
        %8246 = vmatpush1.bf16.msra.mxu0 0
        %8247 = vmatprep.subr.bf16.mxu0 0
        %8248 = vmatpush1.bf16.msra.mxu0 0
        %8249 = vmatprep.subr.bf16.mxu0 0
        %8250 = vmatpush1.bf16.msra.mxu0 0
        %8251 = vmatprep.subr.bf16.mxu0 0
        %8252 = vmatpush1.bf16.msra.mxu0 0
        %8253 = vmatprep.subr.bf16.mxu0 0
        %8254 = vmatpush1.bf16.msra.mxu0 0
        %8255 = vmatprep.subr.bf16.mxu0 0
        %8256 = vmatpush1.bf16.msra.mxu0 0
        %8257 = vmatprep.mubr.bf16.mxu0 0
        %8258 = vmatmul.mubr.bf16.gmra.mrb[0].mxu0 %v8223
        %v8259 = vpop.f32.mrb[0].mxu0
        %v8260 = vadd.f32 0.0, %v8259
        %v8261 = vpop.f32.mrb[0].mxu0
        %v8262 = vpop.f32.mrb[0].mxu0
        %v8263 = vadd.f32 0.0, %v8262
        %v8264 = vpop.f32.mrb[0].mxu0
        %8265 = vdwg.mxu0
        %8266 = vrot.lane.b32.xlu0 %v1688, 64
        %v8267 = vpop.permute.xlu0 %8266
        %v8270 = vsel %vm4913, %v6362, 0
        %8272 = vmatprep.subr.bf16.mxu0 0
        %8273 = vmatpush1.bf16.msra.mxu0 %v8267
        %8274 = vmatprep.subr.bf16.mxu0 0
        %8275 = vmatpush1.bf16.msra.mxu0 0
        %8276 = vmatprep.subr.bf16.mxu0 0
        %8277 = vmatpush1.bf16.msra.mxu0 0
        %8278 = vmatprep.subr.bf16.mxu0 0
        %8279 = vmatpush1.bf16.msra.mxu0 0
        %8280 = vmatprep.subr.bf16.mxu0 0
        %8281 = vmatpush1.bf16.msra.mxu0 0
        %8282 = vmatprep.subr.bf16.mxu0 0
        %8283 = vmatpush1.bf16.msra.mxu0 0
        %8284 = vmatprep.subr.bf16.mxu0 0
        %8285 = vmatpush1.bf16.msra.mxu0 0
        %8286 = vmatprep.subr.bf16.mxu0 0
        %8287 = vmatpush1.bf16.msra.mxu0 0
        %8288 = vmatprep.subr.bf16.mxu0 0
        %8289 = vmatpush1.bf16.msra.mxu0 0
        %8290 = vmatprep.subr.bf16.mxu0 0
        %8291 = vmatpush1.bf16.msra.mxu0 0
        %8292 = vmatprep.subr.bf16.mxu0 0
        %8293 = vmatpush1.bf16.msra.mxu0 0
        %8294 = vmatprep.subr.bf16.mxu0 0
        %8295 = vmatpush1.bf16.msra.mxu0 0
        %8296 = vmatprep.subr.bf16.mxu0 0
        %8297 = vmatpush1.bf16.msra.mxu0 0
        %8298 = vmatprep.subr.bf16.mxu0 0
        %8299 = vmatpush1.bf16.msra.mxu0 0
        %8300 = vmatprep.subr.bf16.mxu0 0
        %8301 = vmatpush1.bf16.msra.mxu0 0
        %8302 = vmatprep.subr.bf16.mxu0 0
        %8303 = vmatpush1.bf16.msra.mxu0 0
        %8304 = vmatprep.mubr.bf16.mxu0 0
        %8305 = vmatmul.mubr.bf16.gmra.mrb[0].mxu0 %v8270
        %v8306 = vpop.f32.mrb[0].mxu0
        %v8307 = vadd.f32 0.0, %v8306
        %v8308 = vpop.f32.mrb[0].mxu0
        %v8309 = vpop.f32.mrb[0].mxu0
        %v8310 = vadd.f32 0.0, %v8309
        %v8311 = vpop.f32.mrb[0].mxu0
        %8312 = vdwg.mxu0
        %8313 = vrot.lane.b32.xlu0 %v1689, 64
        %v8314 = vpop.permute.xlu0 %8313
        %v8317 = vsel %vm4913, %v6363, 0
        %8319 = vmatprep.subr.bf16.mxu0 0
        %8320 = vmatpush1.bf16.msra.mxu0 %v8314
        %8321 = vmatprep.subr.bf16.mxu0 0
        %8322 = vmatpush1.bf16.msra.mxu0 0
        %8323 = vmatprep.subr.bf16.mxu0 0
        %8324 = vmatpush1.bf16.msra.mxu0 0
        %8325 = vmatprep.subr.bf16.mxu0 0
        %8326 = vmatpush1.bf16.msra.mxu0 0
        %8327 = vmatprep.subr.bf16.mxu0 0
        %8328 = vmatpush1.bf16.msra.mxu0 0
        %8329 = vmatprep.subr.bf16.mxu0 0
        %8330 = vmatpush1.bf16.msra.mxu0 0
        %8331 = vmatprep.subr.bf16.mxu0 0
        %8332 = vmatpush1.bf16.msra.mxu0 0
        %8333 = vmatprep.subr.bf16.mxu0 0
        %8334 = vmatpush1.bf16.msra.mxu0 0
        %8335 = vmatprep.subr.bf16.mxu0 0
        %8336 = vmatpush1.bf16.msra.mxu0 0
        %8337 = vmatprep.subr.bf16.mxu0 0
        %8338 = vmatpush1.bf16.msra.mxu0 0
        %8339 = vmatprep.subr.bf16.mxu0 0
        %8340 = vmatpush1.bf16.msra.mxu0 0
        %8341 = vmatprep.subr.bf16.mxu0 0
        %8342 = vmatpush1.bf16.msra.mxu0 0
        %8343 = vmatprep.subr.bf16.mxu0 0
        %8344 = vmatpush1.bf16.msra.mxu0 0
        %8345 = vmatprep.subr.bf16.mxu0 0
        %8346 = vmatpush1.bf16.msra.mxu0 0
        %8347 = vmatprep.subr.bf16.mxu0 0
        %8348 = vmatpush1.bf16.msra.mxu0 0
        %8349 = vmatprep.subr.bf16.mxu0 0
        %8350 = vmatpush1.bf16.msra.mxu0 0
        %8351 = vmatprep.mubr.bf16.mxu0 0
        %8352 = vmatmul.mubr.bf16.gmra.mrb[0].mxu0 %v8317
        %v8353 = vpop.f32.mrb[0].mxu0
        %v8354 = vadd.f32 0.0, %v8353
        %v8355 = vpop.f32.mrb[0].mxu0
        %v8356 = vpop.f32.mrb[0].mxu0
        %v8357 = vadd.f32 0.0, %v8356
        %v8358 = vpop.f32.mrb[0].mxu0
        %8359 = vdwg.mxu0
        %8360 = vrot.lane.b32.xlu0 %v1690, 64
        %v8361 = vpop.permute.xlu0 %8360
        %v8364 = vsel %vm4913, %v6364, 0
        %8366 = vmatprep.subr.bf16.mxu0 0
        %8367 = vmatpush1.bf16.msra.mxu0 %v8361
        %8368 = vmatprep.subr.bf16.mxu0 0
        %8369 = vmatpush1.bf16.msra.mxu0 0
        %8370 = vmatprep.subr.bf16.mxu0 0
        %8371 = vmatpush1.bf16.msra.mxu0 0
        %8372 = vmatprep.subr.bf16.mxu0 0
        %8373 = vmatpush1.bf16.msra.mxu0 0
        %8374 = vmatprep.subr.bf16.mxu0 0
        %8375 = vmatpush1.bf16.msra.mxu0 0
        %8376 = vmatprep.subr.bf16.mxu0 0
        %8377 = vmatpush1.bf16.msra.mxu0 0
        %8378 = vmatprep.subr.bf16.mxu0 0
        %8379 = vmatpush1.bf16.msra.mxu0 0
        %8380 = vmatprep.subr.bf16.mxu0 0
        %8381 = vmatpush1.bf16.msra.mxu0 0
        %8382 = vmatprep.subr.bf16.mxu0 0
        %8383 = vmatpush1.bf16.msra.mxu0 0
        %8384 = vmatprep.subr.bf16.mxu0 0
        %8385 = vmatpush1.bf16.msra.mxu0 0
        %8386 = vmatprep.subr.bf16.mxu0 0
        %8387 = vmatpush1.bf16.msra.mxu0 0
        %8388 = vmatprep.subr.bf16.mxu0 0
        %8389 = vmatpush1.bf16.msra.mxu0 0
        %8390 = vmatprep.subr.bf16.mxu0 0
        %8391 = vmatpush1.bf16.msra.mxu0 0
        %8392 = vmatprep.subr.bf16.mxu0 0
        %8393 = vmatpush1.bf16.msra.mxu0 0
        %8394 = vmatprep.subr.bf16.mxu0 0
        %8395 = vmatpush1.bf16.msra.mxu0 0
        %8396 = vmatprep.subr.bf16.mxu0 0
        %8397 = vmatpush1.bf16.msra.mxu0 0
        %8398 = vmatprep.mubr.bf16.mxu0 0
        %8399 = vmatmul.mubr.bf16.gmra.mrb[0].mxu0 %v8364
        %v8400 = vpop.f32.mrb[0].mxu0
        %v8401 = vadd.f32 0.0, %v8400
        %v8402 = vpop.f32.mrb[0].mxu0
        %v8403 = vpop.f32.mrb[0].mxu0
        %v8404 = vadd.f32 0.0, %v8403
        %v8405 = vpop.f32.mrb[0].mxu0
        %8406 = vdwg.mxu0
        %8407 = vrot.lane.b32.xlu0 %v1691, 64
        %v8408 = vpop.permute.xlu0 %8407
        %v8411 = vsel %vm4913, %v6365, 0
        %8413 = vmatprep.subr.bf16.mxu0 0
        %8414 = vmatpush1.bf16.msra.mxu0 %v8408
        %8415 = vmatprep.subr.bf16.mxu0 0
        %8416 = vmatpush1.bf16.msra.mxu0 0
        %8417 = vmatprep.subr.bf16.mxu0 0
        %8418 = vmatpush1.bf16.msra.mxu0 0
        %8419 = vmatprep.subr.bf16.mxu0 0
        %8420 = vmatpush1.bf16.msra.mxu0 0
        %8421 = vmatprep.subr.bf16.mxu0 0
        %8422 = vmatpush1.bf16.msra.mxu0 0
        %8423 = vmatprep.subr.bf16.mxu0 0
        %8424 = vmatpush1.bf16.msra.mxu0 0
        %8425 = vmatprep.subr.bf16.mxu0 0
        %8426 = vmatpush1.bf16.msra.mxu0 0
        %8427 = vmatprep.subr.bf16.mxu0 0
        %8428 = vmatpush1.bf16.msra.mxu0 0
        %8429 = vmatprep.subr.bf16.mxu0 0
        %8430 = vmatpush1.bf16.msra.mxu0 0
        %8431 = vmatprep.subr.bf16.mxu0 0
        %8432 = vmatpush1.bf16.msra.mxu0 0
        %8433 = vmatprep.subr.bf16.mxu0 0
        %8434 = vmatpush1.bf16.msra.mxu0 0
        %8435 = vmatprep.subr.bf16.mxu0 0
        %8436 = vmatpush1.bf16.msra.mxu0 0
        %8437 = vmatprep.subr.bf16.mxu0 0
        %8438 = vmatpush1.bf16.msra.mxu0 0
        %8439 = vmatprep.subr.bf16.mxu0 0
        %8440 = vmatpush1.bf16.msra.mxu0 0
        %8441 = vmatprep.subr.bf16.mxu0 0
        %8442 = vmatpush1.bf16.msra.mxu0 0
        %8443 = vmatprep.subr.bf16.mxu0 0
        %8444 = vmatpush1.bf16.msra.mxu0 0
        %8445 = vmatprep.mubr.bf16.mxu0 0
        %8446 = vmatmul.mubr.bf16.gmra.mrb[0].mxu0 %v8411
        %v8447 = vpop.f32.mrb[0].mxu0
        %v8448 = vadd.f32 0.0, %v8447
        %v8449 = vpop.f32.mrb[0].mxu0
        %v8450 = vpop.f32.mrb[0].mxu0
        %v8451 = vadd.f32 0.0, %v8450
        %v8452 = vpop.f32.mrb[0].mxu0
        %8453 = vdwg.mxu0
        %8454 = vrot.lane.b32.xlu0 %v1692, 64
        %v8455 = vpop.permute.xlu0 %8454
        %v8458 = vsel %vm4913, %v6366, 0
        %8460 = vmatprep.subr.bf16.mxu0 0
        %8461 = vmatpush1.bf16.msra.mxu0 %v8455
        %8462 = vmatprep.subr.bf16.mxu0 0
        %8463 = vmatpush1.bf16.msra.mxu0 0
        %8464 = vmatprep.subr.bf16.mxu0 0
        %8465 = vmatpush1.bf16.msra.mxu0 0
        %8466 = vmatprep.subr.bf16.mxu0 0
        %8467 = vmatpush1.bf16.msra.mxu0 0
        %8468 = vmatprep.subr.bf16.mxu0 0
        %8469 = vmatpush1.bf16.msra.mxu0 0
        %8470 = vmatprep.subr.bf16.mxu0 0
        %8471 = vmatpush1.bf16.msra.mxu0 0
        %8472 = vmatprep.subr.bf16.mxu0 0
        %8473 = vmatpush1.bf16.msra.mxu0 0
        %8474 = vmatprep.subr.bf16.mxu0 0
        %8475 = vmatpush1.bf16.msra.mxu0 0
        %8476 = vmatprep.subr.bf16.mxu0 0
        %8477 = vmatpush1.bf16.msra.mxu0 0
        %8478 = vmatprep.subr.bf16.mxu0 0
        %8479 = vmatpush1.bf16.msra.mxu0 0
        %8480 = vmatprep.subr.bf16.mxu0 0
        %8481 = vmatpush1.bf16.msra.mxu0 0
        %8482 = vmatprep.subr.bf16.mxu0 0
        %8483 = vmatpush1.bf16.msra.mxu0 0
        %8484 = vmatprep.subr.bf16.mxu0 0
        %8485 = vmatpush1.bf16.msra.mxu0 0
        %8486 = vmatprep.subr.bf16.mxu0 0
        %8487 = vmatpush1.bf16.msra.mxu0 0
        %8488 = vmatprep.subr.bf16.mxu0 0
        %8489 = vmatpush1.bf16.msra.mxu0 0
        %8490 = vmatprep.subr.bf16.mxu0 0
        %8491 = vmatpush1.bf16.msra.mxu0 0
        %8492 = vmatprep.mubr.bf16.mxu0 0
        %8493 = vmatmul.mubr.bf16.gmra.mrb[0].mxu0 %v8458
        %v8494 = vpop.f32.mrb[0].mxu0
        %v8495 = vadd.f32 0.0, %v8494
        %v8496 = vpop.f32.mrb[0].mxu0
        %v8497 = vpop.f32.mrb[0].mxu0
        %v8498 = vadd.f32 0.0, %v8497
        %v8499 = vpop.f32.mrb[0].mxu0
        %8500 = vdwg.mxu0
        %8501 = vrot.lane.b32.xlu0 %v1693, 64
        %v8502 = vpop.permute.xlu0 %8501
        %v8505 = vsel %vm4913, %v6367, 0
        %8507 = vmatprep.subr.bf16.mxu0 0
        %8508 = vmatpush1.bf16.msra.mxu0 %v8502
        %8509 = vmatprep.subr.bf16.mxu0 0
        %8510 = vmatpush1.bf16.msra.mxu0 0
        %8511 = vmatprep.subr.bf16.mxu0 0
        %8512 = vmatpush1.bf16.msra.mxu0 0
        %8513 = vmatprep.subr.bf16.mxu0 0
        %8514 = vmatpush1.bf16.msra.mxu0 0
        %8515 = vmatprep.subr.bf16.mxu0 0
        %8516 = vmatpush1.bf16.msra.mxu0 0
        %8517 = vmatprep.subr.bf16.mxu0 0
        %8518 = vmatpush1.bf16.msra.mxu0 0
        %8519 = vmatprep.subr.bf16.mxu0 0
        %8520 = vmatpush1.bf16.msra.mxu0 0
        %8521 = vmatprep.subr.bf16.mxu0 0
        %8522 = vmatpush1.bf16.msra.mxu0 0
        %8523 = vmatprep.subr.bf16.mxu0 0
        %8524 = vmatpush1.bf16.msra.mxu0 0
        %8525 = vmatprep.subr.bf16.mxu0 0
        %8526 = vmatpush1.bf16.msra.mxu0 0
        %8527 = vmatprep.subr.bf16.mxu0 0
        %8528 = vmatpush1.bf16.msra.mxu0 0
        %8529 = vmatprep.subr.bf16.mxu0 0
        %8530 = vmatpush1.bf16.msra.mxu0 0
        %8531 = vmatprep.subr.bf16.mxu0 0
        %8532 = vmatpush1.bf16.msra.mxu0 0
        %8533 = vmatprep.subr.bf16.mxu0 0
        %8534 = vmatpush1.bf16.msra.mxu0 0
        %8535 = vmatprep.subr.bf16.mxu0 0
        %8536 = vmatpush1.bf16.msra.mxu0 0
        %8537 = vmatprep.subr.bf16.mxu0 0
        %8538 = vmatpush1.bf16.msra.mxu0 0
        %8539 = vmatprep.mubr.bf16.mxu0 0
        %8540 = vmatmul.mubr.bf16.gmra.mrb[0].mxu0 %v8505
        %v8541 = vpop.f32.mrb[0].mxu0
        %v8542 = vadd.f32 0.0, %v8541
        %v8543 = vpop.f32.mrb[0].mxu0
        %v8544 = vpop.f32.mrb[0].mxu0
        %v8545 = vadd.f32 0.0, %v8544
        %v8546 = vpop.f32.mrb[0].mxu0
        %8547 = vdwg.mxu0
        %8548 = vrot.lane.b32.xlu0 %v1694, 64
        %v8549 = vpop.permute.xlu0 %8548
        %v8552 = vsel %vm4913, %v6368, 0
        %8554 = vmatprep.subr.bf16.mxu0 0
        %8555 = vmatpush1.bf16.msra.mxu0 %v8549
        %8556 = vmatprep.subr.bf16.mxu0 0
        %8557 = vmatpush1.bf16.msra.mxu0 0
        %8558 = vmatprep.subr.bf16.mxu0 0
        %8559 = vmatpush1.bf16.msra.mxu0 0
        %8560 = vmatprep.subr.bf16.mxu0 0
        %8561 = vmatpush1.bf16.msra.mxu0 0
        %8562 = vmatprep.subr.bf16.mxu0 0
        %8563 = vmatpush1.bf16.msra.mxu0 0
        %8564 = vmatprep.subr.bf16.mxu0 0
        %8565 = vmatpush1.bf16.msra.mxu0 0
        %8566 = vmatprep.subr.bf16.mxu0 0
        %8567 = vmatpush1.bf16.msra.mxu0 0
        %8568 = vmatprep.subr.bf16.mxu0 0
        %8569 = vmatpush1.bf16.msra.mxu0 0
        %8570 = vmatprep.subr.bf16.mxu0 0
        %8571 = vmatpush1.bf16.msra.mxu0 0
        %8572 = vmatprep.subr.bf16.mxu0 0
        %8573 = vmatpush1.bf16.msra.mxu0 0
        %8574 = vmatprep.subr.bf16.mxu0 0
        %8575 = vmatpush1.bf16.msra.mxu0 0
        %8576 = vmatprep.subr.bf16.mxu0 0
        %8577 = vmatpush1.bf16.msra.mxu0 0
        %8578 = vmatprep.subr.bf16.mxu0 0
        %8579 = vmatpush1.bf16.msra.mxu0 0
        %8580 = vmatprep.subr.bf16.mxu0 0
        %8581 = vmatpush1.bf16.msra.mxu0 0
        %8582 = vmatprep.subr.bf16.mxu0 0
        %8583 = vmatpush1.bf16.msra.mxu0 0
        %8584 = vmatprep.subr.bf16.mxu0 0
        %8585 = vmatpush1.bf16.msra.mxu0 0
        %8586 = vmatprep.mubr.bf16.mxu0 0
        %8587 = vmatmul.mubr.bf16.gmra.mrb[0].mxu0 %v8552
        %v8588 = vpop.f32.mrb[0].mxu0
        %v8589 = vadd.f32 0.0, %v8588
        %v8590 = vpop.f32.mrb[0].mxu0
        %v8591 = vpop.f32.mrb[0].mxu0
        %v8592 = vadd.f32 0.0, %v8591
        %v8593 = vpop.f32.mrb[0].mxu0
        %8594 = vdwg.mxu0
        %8595 = vrot.lane.b32.xlu0 %v1695, 64
        %v8596 = vpop.permute.xlu0 %8595
        %v8599 = vsel %vm4913, %v6369, 0
        %8601 = vmatprep.subr.bf16.mxu0 0
        %8602 = vmatpush1.bf16.msra.mxu0 %v8596
        %8603 = vmatprep.subr.bf16.mxu0 0
        %8604 = vmatpush1.bf16.msra.mxu0 0
        %8605 = vmatprep.subr.bf16.mxu0 0
        %8606 = vmatpush1.bf16.msra.mxu0 0
        %8607 = vmatprep.subr.bf16.mxu0 0
        %8608 = vmatpush1.bf16.msra.mxu0 0
        %8609 = vmatprep.subr.bf16.mxu0 0
        %8610 = vmatpush1.bf16.msra.mxu0 0
        %8611 = vmatprep.subr.bf16.mxu0 0
        %8612 = vmatpush1.bf16.msra.mxu0 0
        %8613 = vmatprep.subr.bf16.mxu0 0
        %8614 = vmatpush1.bf16.msra.mxu0 0
        %8615 = vmatprep.subr.bf16.mxu0 0
        %8616 = vmatpush1.bf16.msra.mxu0 0
        %8617 = vmatprep.subr.bf16.mxu0 0
        %8618 = vmatpush1.bf16.msra.mxu0 0
        %8619 = vmatprep.subr.bf16.mxu0 0
        %8620 = vmatpush1.bf16.msra.mxu0 0
        %8621 = vmatprep.subr.bf16.mxu0 0
        %8622 = vmatpush1.bf16.msra.mxu0 0
        %8623 = vmatprep.subr.bf16.mxu0 0
        %8624 = vmatpush1.bf16.msra.mxu0 0
        %8625 = vmatprep.subr.bf16.mxu0 0
        %8626 = vmatpush1.bf16.msra.mxu0 0
        %8627 = vmatprep.subr.bf16.mxu0 0
        %8628 = vmatpush1.bf16.msra.mxu0 0
        %8629 = vmatprep.subr.bf16.mxu0 0
        %8630 = vmatpush1.bf16.msra.mxu0 0
        %8631 = vmatprep.subr.bf16.mxu0 0
        %8632 = vmatpush1.bf16.msra.mxu0 0
        %8633 = vmatprep.mubr.bf16.mxu0 0
        %8634 = vmatmul.mubr.bf16.gmra.mrb[0].mxu0 %v8599
        %v8635 = vpop.f32.mrb[0].mxu0
        %v8636 = vadd.f32 0.0, %v8635
        %v8637 = vpop.f32.mrb[0].mxu0
        %v8638 = vpop.f32.mrb[0].mxu0
        %v8639 = vadd.f32 0.0, %v8638
        %v8640 = vpop.f32.mrb[0].mxu0
        %8641 = vdwg.mxu0
        %8642 = vrot.lane.b32.xlu0 %v1696, 64
        %v8643 = vpop.permute.xlu0 %8642
        %v8646 = vsel %vm4913, %v6370, 0
        %8648 = vmatprep.subr.bf16.mxu0 0
        %8649 = vmatpush1.bf16.msra.mxu0 %v8643
        %8650 = vmatprep.subr.bf16.mxu0 0
        %8651 = vmatpush1.bf16.msra.mxu0 0
        %8652 = vmatprep.subr.bf16.mxu0 0
        %8653 = vmatpush1.bf16.msra.mxu0 0
        %8654 = vmatprep.subr.bf16.mxu0 0
        %8655 = vmatpush1.bf16.msra.mxu0 0
        %8656 = vmatprep.subr.bf16.mxu0 0
        %8657 = vmatpush1.bf16.msra.mxu0 0
        %8658 = vmatprep.subr.bf16.mxu0 0
        %8659 = vmatpush1.bf16.msra.mxu0 0
        %8660 = vmatprep.subr.bf16.mxu0 0
        %8661 = vmatpush1.bf16.msra.mxu0 0
        %8662 = vmatprep.subr.bf16.mxu0 0
        %8663 = vmatpush1.bf16.msra.mxu0 0
        %8664 = vmatprep.subr.bf16.mxu0 0
        %8665 = vmatpush1.bf16.msra.mxu0 0
        %8666 = vmatprep.subr.bf16.mxu0 0
        %8667 = vmatpush1.bf16.msra.mxu0 0
        %8668 = vmatprep.subr.bf16.mxu0 0
        %8669 = vmatpush1.bf16.msra.mxu0 0
        %8670 = vmatprep.subr.bf16.mxu0 0
        %8671 = vmatpush1.bf16.msra.mxu0 0
        %8672 = vmatprep.subr.bf16.mxu0 0
        %8673 = vmatpush1.bf16.msra.mxu0 0
        %8674 = vmatprep.subr.bf16.mxu0 0
        %8675 = vmatpush1.bf16.msra.mxu0 0
        %8676 = vmatprep.subr.bf16.mxu0 0
        %8677 = vmatpush1.bf16.msra.mxu0 0
        %8678 = vmatprep.subr.bf16.mxu0 0
        %8679 = vmatpush1.bf16.msra.mxu0 0
        %8680 = vmatprep.mubr.bf16.mxu0 0
        %8681 = vmatmul.mubr.bf16.gmra.mrb[0].mxu0 %v8646
        %v8682 = vpop.f32.mrb[0].mxu0
        %v8683 = vadd.f32 0.0, %v8682
        %v8684 = vpop.f32.mrb[0].mxu0
        %v8685 = vpop.f32.mrb[0].mxu0
        %v8686 = vadd.f32 0.0, %v8685
        %v8687 = vpop.f32.mrb[0].mxu0
        %8688 = vdwg.mxu0
        %8689 = vrot.lane.b32.xlu0 %v1697, 64
        %v8690 = vpop.permute.xlu0 %8689
        %v8693 = vsel %vm4913, %v6371, 0
        %8695 = vmatprep.subr.bf16.mxu0 0
        %8696 = vmatpush1.bf16.msra.mxu0 %v8690
        %8697 = vmatprep.subr.bf16.mxu0 0
        %8698 = vmatpush1.bf16.msra.mxu0 0
        %8699 = vmatprep.subr.bf16.mxu0 0
        %8700 = vmatpush1.bf16.msra.mxu0 0
        %8701 = vmatprep.subr.bf16.mxu0 0
        %8702 = vmatpush1.bf16.msra.mxu0 0
        %8703 = vmatprep.subr.bf16.mxu0 0
        %8704 = vmatpush1.bf16.msra.mxu0 0
        %8705 = vmatprep.subr.bf16.mxu0 0
        %8706 = vmatpush1.bf16.msra.mxu0 0
        %8707 = vmatprep.subr.bf16.mxu0 0
        %8708 = vmatpush1.bf16.msra.mxu0 0
        %8709 = vmatprep.subr.bf16.mxu0 0
        %8710 = vmatpush1.bf16.msra.mxu0 0
        %8711 = vmatprep.subr.bf16.mxu0 0
        %8712 = vmatpush1.bf16.msra.mxu0 0
        %8713 = vmatprep.subr.bf16.mxu0 0
        %8714 = vmatpush1.bf16.msra.mxu0 0
        %8715 = vmatprep.subr.bf16.mxu0 0
        %8716 = vmatpush1.bf16.msra.mxu0 0
        %8717 = vmatprep.subr.bf16.mxu0 0
        %8718 = vmatpush1.bf16.msra.mxu0 0
        %8719 = vmatprep.subr.bf16.mxu0 0
        %8720 = vmatpush1.bf16.msra.mxu0 0
        %8721 = vmatprep.subr.bf16.mxu0 0
        %8722 = vmatpush1.bf16.msra.mxu0 0
        %8723 = vmatprep.subr.bf16.mxu0 0
        %8724 = vmatpush1.bf16.msra.mxu0 0
        %8725 = vmatprep.subr.bf16.mxu0 0
        %8726 = vmatpush1.bf16.msra.mxu0 0
        %8727 = vmatprep.mubr.bf16.mxu0 0
        %8728 = vmatmul.mubr.bf16.gmra.mrb[0].mxu0 %v8693
        %v8729 = vpop.f32.mrb[0].mxu0
        %v8730 = vadd.f32 0.0, %v8729
        %v8731 = vpop.f32.mrb[0].mxu0
        %v8732 = vpop.f32.mrb[0].mxu0
        %v8733 = vadd.f32 0.0, %v8732
        %v8734 = vpop.f32.mrb[0].mxu0
        %8735 = vdwg.mxu0
        %8736 = vrot.lane.b32.xlu0 %v1698, 64
        %v8737 = vpop.permute.xlu0 %8736
        %v8740 = vsel %vm4913, %v6372, 0
        %8742 = vmatprep.subr.bf16.mxu0 0
        %8743 = vmatpush1.bf16.msra.mxu0 %v8737
        %8744 = vmatprep.subr.bf16.mxu0 0
        %8745 = vmatpush1.bf16.msra.mxu0 0
        %8746 = vmatprep.subr.bf16.mxu0 0
        %8747 = vmatpush1.bf16.msra.mxu0 0
        %8748 = vmatprep.subr.bf16.mxu0 0
        %8749 = vmatpush1.bf16.msra.mxu0 0
        %8750 = vmatprep.subr.bf16.mxu0 0
        %8751 = vmatpush1.bf16.msra.mxu0 0
        %8752 = vmatprep.subr.bf16.mxu0 0
        %8753 = vmatpush1.bf16.msra.mxu0 0
        %8754 = vmatprep.subr.bf16.mxu0 0
        %8755 = vmatpush1.bf16.msra.mxu0 0
        %8756 = vmatprep.subr.bf16.mxu0 0
        %8757 = vmatpush1.bf16.msra.mxu0 0
        %8758 = vmatprep.subr.bf16.mxu0 0
        %8759 = vmatpush1.bf16.msra.mxu0 0
        %8760 = vmatprep.subr.bf16.mxu0 0
        %8761 = vmatpush1.bf16.msra.mxu0 0
        %8762 = vmatprep.subr.bf16.mxu0 0
        %8763 = vmatpush1.bf16.msra.mxu0 0
        %8764 = vmatprep.subr.bf16.mxu0 0
        %8765 = vmatpush1.bf16.msra.mxu0 0
        %8766 = vmatprep.subr.bf16.mxu0 0
        %8767 = vmatpush1.bf16.msra.mxu0 0
        %8768 = vmatprep.subr.bf16.mxu0 0
        %8769 = vmatpush1.bf16.msra.mxu0 0
        %8770 = vmatprep.subr.bf16.mxu0 0
        %8771 = vmatpush1.bf16.msra.mxu0 0
        %8772 = vmatprep.subr.bf16.mxu0 0
        %8773 = vmatpush1.bf16.msra.mxu0 0
        %8774 = vmatprep.mubr.bf16.mxu0 0
        %8775 = vmatmul.mubr.bf16.gmra.mrb[0].mxu0 %v8740
        %v8776 = vpop.f32.mrb[0].mxu0
        %v8777 = vadd.f32 0.0, %v8776
        %v8778 = vpop.f32.mrb[0].mxu0
        %v8779 = vpop.f32.mrb[0].mxu0
        %v8780 = vadd.f32 0.0, %v8779
        %v8781 = vpop.f32.mrb[0].mxu0
        %8782 = vdwg.mxu0
        %8783 = vrot.lane.b32.xlu0 %v1699, 64
        %v8784 = vpop.permute.xlu0 %8783
        %v8787 = vsel %vm4913, %v6373, 0
        %8789 = vmatprep.subr.bf16.mxu0 0
        %8790 = vmatpush1.bf16.msra.mxu0 %v8784
        %8791 = vmatprep.subr.bf16.mxu0 0
        %8792 = vmatpush1.bf16.msra.mxu0 0
        %8793 = vmatprep.subr.bf16.mxu0 0
        %8794 = vmatpush1.bf16.msra.mxu0 0
        %8795 = vmatprep.subr.bf16.mxu0 0
        %8796 = vmatpush1.bf16.msra.mxu0 0
        %8797 = vmatprep.subr.bf16.mxu0 0
        %8798 = vmatpush1.bf16.msra.mxu0 0
        %8799 = vmatprep.subr.bf16.mxu0 0
        %8800 = vmatpush1.bf16.msra.mxu0 0
        %8801 = vmatprep.subr.bf16.mxu0 0
        %8802 = vmatpush1.bf16.msra.mxu0 0
        %8803 = vmatprep.subr.bf16.mxu0 0
        %8804 = vmatpush1.bf16.msra.mxu0 0
        %8805 = vmatprep.subr.bf16.mxu0 0
        %8806 = vmatpush1.bf16.msra.mxu0 0
        %8807 = vmatprep.subr.bf16.mxu0 0
        %8808 = vmatpush1.bf16.msra.mxu0 0
        %8809 = vmatprep.subr.bf16.mxu0 0
        %8810 = vmatpush1.bf16.msra.mxu0 0
        %8811 = vmatprep.subr.bf16.mxu0 0
        %8812 = vmatpush1.bf16.msra.mxu0 0
        %8813 = vmatprep.subr.bf16.mxu0 0
        %8814 = vmatpush1.bf16.msra.mxu0 0
        %8815 = vmatprep.subr.bf16.mxu0 0
        %8816 = vmatpush1.bf16.msra.mxu0 0
        %8817 = vmatprep.subr.bf16.mxu0 0
        %8818 = vmatpush1.bf16.msra.mxu0 0
        %8819 = vmatprep.subr.bf16.mxu0 0
        %8820 = vmatpush1.bf16.msra.mxu0 0
        %8821 = vmatprep.mubr.bf16.mxu0 0
        %8822 = vmatmul.mubr.bf16.gmra.mrb[0].mxu0 %v8787
        %v8823 = vpop.f32.mrb[0].mxu0
        %v8824 = vadd.f32 0.0, %v8823
        %v8825 = vpop.f32.mrb[0].mxu0
        %v8826 = vpop.f32.mrb[0].mxu0
        %v8827 = vadd.f32 0.0, %v8826
        %v8828 = vpop.f32.mrb[0].mxu0
        %8829 = vdwg.mxu0
        %8830 = vrot.lane.b32.xlu0 %v1700, 64
        %v8831 = vpop.permute.xlu0 %8830
        %v8834 = vsel %vm4913, %v6374, 0
        %8836 = vmatprep.subr.bf16.mxu0 0
        %8837 = vmatpush1.bf16.msra.mxu0 %v8831
        %8838 = vmatprep.subr.bf16.mxu0 0
        %8839 = vmatpush1.bf16.msra.mxu0 0
        %8840 = vmatprep.subr.bf16.mxu0 0
        %8841 = vmatpush1.bf16.msra.mxu0 0
        %8842 = vmatprep.subr.bf16.mxu0 0
        %8843 = vmatpush1.bf16.msra.mxu0 0
        %8844 = vmatprep.subr.bf16.mxu0 0
        %8845 = vmatpush1.bf16.msra.mxu0 0
        %8846 = vmatprep.subr.bf16.mxu0 0
        %8847 = vmatpush1.bf16.msra.mxu0 0
        %8848 = vmatprep.subr.bf16.mxu0 0
        %8849 = vmatpush1.bf16.msra.mxu0 0
        %8850 = vmatprep.subr.bf16.mxu0 0
        %8851 = vmatpush1.bf16.msra.mxu0 0
        %8852 = vmatprep.subr.bf16.mxu0 0
        %8853 = vmatpush1.bf16.msra.mxu0 0
        %8854 = vmatprep.subr.bf16.mxu0 0
        %8855 = vmatpush1.bf16.msra.mxu0 0
        %8856 = vmatprep.subr.bf16.mxu0 0
        %8857 = vmatpush1.bf16.msra.mxu0 0
        %8858 = vmatprep.subr.bf16.mxu0 0
        %8859 = vmatpush1.bf16.msra.mxu0 0
        %8860 = vmatprep.subr.bf16.mxu0 0
        %8861 = vmatpush1.bf16.msra.mxu0 0
        %8862 = vmatprep.subr.bf16.mxu0 0
        %8863 = vmatpush1.bf16.msra.mxu0 0
        %8864 = vmatprep.subr.bf16.mxu0 0
        %8865 = vmatpush1.bf16.msra.mxu0 0
        %8866 = vmatprep.subr.bf16.mxu0 0
        %8867 = vmatpush1.bf16.msra.mxu0 0
        %8868 = vmatprep.mubr.bf16.mxu0 0
        %8869 = vmatmul.mubr.bf16.gmra.mrb[0].mxu0 %v8834
        %v8870 = vpop.f32.mrb[0].mxu0
        %v8871 = vadd.f32 0.0, %v8870
        %v8872 = vpop.f32.mrb[0].mxu0
        %v8873 = vpop.f32.mrb[0].mxu0
        %v8874 = vadd.f32 0.0, %v8873
        %v8875 = vpop.f32.mrb[0].mxu0
        %8876 = vdwg.mxu0
        %8877 = vrot.lane.b32.xlu0 %v1701, 64
        %v8878 = vpop.permute.xlu0 %8877
        %v8881 = vsel %vm4913, %v6375, 0
        %8883 = vmatprep.subr.bf16.mxu0 0
        %8884 = vmatpush1.bf16.msra.mxu0 %v8878
        %8885 = vmatprep.subr.bf16.mxu0 0
        %8886 = vmatpush1.bf16.msra.mxu0 0
        %8887 = vmatprep.subr.bf16.mxu0 0
        %8888 = vmatpush1.bf16.msra.mxu0 0
        %8889 = vmatprep.subr.bf16.mxu0 0
        %8890 = vmatpush1.bf16.msra.mxu0 0
        %8891 = vmatprep.subr.bf16.mxu0 0
        %8892 = vmatpush1.bf16.msra.mxu0 0
        %8893 = vmatprep.subr.bf16.mxu0 0
        %8894 = vmatpush1.bf16.msra.mxu0 0
        %8895 = vmatprep.subr.bf16.mxu0 0
        %8896 = vmatpush1.bf16.msra.mxu0 0
        %8897 = vmatprep.subr.bf16.mxu0 0
        %8898 = vmatpush1.bf16.msra.mxu0 0
        %8899 = vmatprep.subr.bf16.mxu0 0
        %8900 = vmatpush1.bf16.msra.mxu0 0
        %8901 = vmatprep.subr.bf16.mxu0 0
        %8902 = vmatpush1.bf16.msra.mxu0 0
        %8903 = vmatprep.subr.bf16.mxu0 0
        %8904 = vmatpush1.bf16.msra.mxu0 0
        %8905 = vmatprep.subr.bf16.mxu0 0
        %8906 = vmatpush1.bf16.msra.mxu0 0
        %8907 = vmatprep.subr.bf16.mxu0 0
        %8908 = vmatpush1.bf16.msra.mxu0 0
        %8909 = vmatprep.subr.bf16.mxu0 0
        %8910 = vmatpush1.bf16.msra.mxu0 0
        %8911 = vmatprep.subr.bf16.mxu0 0
        %8912 = vmatpush1.bf16.msra.mxu0 0
        %8913 = vmatprep.subr.bf16.mxu0 0
        %8914 = vmatpush1.bf16.msra.mxu0 0
        %8915 = vmatprep.mubr.bf16.mxu0 0
        %8916 = vmatmul.mubr.bf16.gmra.mrb[0].mxu0 %v8881
        %v8917 = vpop.f32.mrb[0].mxu0
        %v8918 = vadd.f32 0.0, %v8917
        %v8919 = vpop.f32.mrb[0].mxu0
        %v8920 = vpop.f32.mrb[0].mxu0
        %v8921 = vadd.f32 0.0, %v8920
        %v8922 = vpop.f32.mrb[0].mxu0
        %8923 = vdwg.mxu0
        %8924 = vrot.lane.b32.xlu0 %v1702, 64
        %v8925 = vpop.permute.xlu0 %8924
        %v8928 = vsel %vm4913, %v6376, 0
        %8930 = vmatprep.subr.bf16.mxu0 0
        %8931 = vmatpush1.bf16.msra.mxu0 %v8925
        %8932 = vmatprep.subr.bf16.mxu0 0
        %8933 = vmatpush1.bf16.msra.mxu0 0
        %8934 = vmatprep.subr.bf16.mxu0 0
        %8935 = vmatpush1.bf16.msra.mxu0 0
        %8936 = vmatprep.subr.bf16.mxu0 0
        %8937 = vmatpush1.bf16.msra.mxu0 0
        %8938 = vmatprep.subr.bf16.mxu0 0
        %8939 = vmatpush1.bf16.msra.mxu0 0
        %8940 = vmatprep.subr.bf16.mxu0 0
        %8941 = vmatpush1.bf16.msra.mxu0 0
        %8942 = vmatprep.subr.bf16.mxu0 0
        %8943 = vmatpush1.bf16.msra.mxu0 0
        %8944 = vmatprep.subr.bf16.mxu0 0
        %8945 = vmatpush1.bf16.msra.mxu0 0
        %8946 = vmatprep.subr.bf16.mxu0 0
        %8947 = vmatpush1.bf16.msra.mxu0 0
        %8948 = vmatprep.subr.bf16.mxu0 0
        %8949 = vmatpush1.bf16.msra.mxu0 0
        %8950 = vmatprep.subr.bf16.mxu0 0
        %8951 = vmatpush1.bf16.msra.mxu0 0
        %8952 = vmatprep.subr.bf16.mxu0 0
        %8953 = vmatpush1.bf16.msra.mxu0 0
        %8954 = vmatprep.subr.bf16.mxu0 0
        %8955 = vmatpush1.bf16.msra.mxu0 0
        %8956 = vmatprep.subr.bf16.mxu0 0
        %8957 = vmatpush1.bf16.msra.mxu0 0
        %8958 = vmatprep.subr.bf16.mxu0 0
        %8959 = vmatpush1.bf16.msra.mxu0 0
        %8960 = vmatprep.subr.bf16.mxu0 0
        %8961 = vmatpush1.bf16.msra.mxu0 0
        %8962 = vmatprep.mubr.bf16.mxu0 0
        %8963 = vmatmul.mubr.bf16.gmra.mrb[0].mxu0 %v8928
        %v8964 = vpop.f32.mrb[0].mxu0
        %v8965 = vadd.f32 0.0, %v8964
        %v8966 = vpop.f32.mrb[0].mxu0
        %v8967 = vpop.f32.mrb[0].mxu0
        %v8968 = vadd.f32 0.0, %v8967
        %v8969 = vpop.f32.mrb[0].mxu0
        %8970 = vdwg.mxu0
        %8971 = vrot.lane.b32.xlu0 %v1703, 64
        %v8972 = vpop.permute.xlu0 %8971
        %v8975 = vsel %vm4913, %v6377, 0
        %8977 = vmatprep.subr.bf16.mxu0 0
        %8978 = vmatpush1.bf16.msra.mxu0 %v8972
        %8979 = vmatprep.subr.bf16.mxu0 0
        %8980 = vmatpush1.bf16.msra.mxu0 0
        %8981 = vmatprep.subr.bf16.mxu0 0
        %8982 = vmatpush1.bf16.msra.mxu0 0
        %8983 = vmatprep.subr.bf16.mxu0 0
        %8984 = vmatpush1.bf16.msra.mxu0 0
        %8985 = vmatprep.subr.bf16.mxu0 0
        %8986 = vmatpush1.bf16.msra.mxu0 0
        %8987 = vmatprep.subr.bf16.mxu0 0
        %8988 = vmatpush1.bf16.msra.mxu0 0
        %8989 = vmatprep.subr.bf16.mxu0 0
        %8990 = vmatpush1.bf16.msra.mxu0 0
        %8991 = vmatprep.subr.bf16.mxu0 0
        %8992 = vmatpush1.bf16.msra.mxu0 0
        %8993 = vmatprep.subr.bf16.mxu0 0
        %8994 = vmatpush1.bf16.msra.mxu0 0
        %8995 = vmatprep.subr.bf16.mxu0 0
        %8996 = vmatpush1.bf16.msra.mxu0 0
        %8997 = vmatprep.subr.bf16.mxu0 0
        %8998 = vmatpush1.bf16.msra.mxu0 0
        %8999 = vmatprep.subr.bf16.mxu0 0
        %9000 = vmatpush1.bf16.msra.mxu0 0
        %9001 = vmatprep.subr.bf16.mxu0 0
        %9002 = vmatpush1.bf16.msra.mxu0 0
        %9003 = vmatprep.subr.bf16.mxu0 0
        %9004 = vmatpush1.bf16.msra.mxu0 0
        %9005 = vmatprep.subr.bf16.mxu0 0
        %9006 = vmatpush1.bf16.msra.mxu0 0
        %9007 = vmatprep.subr.bf16.mxu0 0
        %9008 = vmatpush1.bf16.msra.mxu0 0
        %9009 = vmatprep.mubr.bf16.mxu0 0
        %9010 = vmatmul.mubr.bf16.gmra.mrb[0].mxu0 %v8975
        %v9011 = vpop.f32.mrb[0].mxu0
        %v9012 = vadd.f32 0.0, %v9011
        %v9013 = vpop.f32.mrb[0].mxu0
        %v9014 = vpop.f32.mrb[0].mxu0
        %v9015 = vadd.f32 0.0, %v9014
        %v9016 = vpop.f32.mrb[0].mxu0
        %9017 = vdwg.mxu0
        %9018 = vrot.lane.b32.xlu0 %v1704, 64
        %v9019 = vpop.permute.xlu0 %9018
        %v9022 = vsel %vm4913, %v6378, 0
        %9024 = vmatprep.subr.bf16.mxu0 0
        %9025 = vmatpush1.bf16.msra.mxu0 %v9019
        %9026 = vmatprep.subr.bf16.mxu0 0
        %9027 = vmatpush1.bf16.msra.mxu0 0
        %9028 = vmatprep.subr.bf16.mxu0 0
        %9029 = vmatpush1.bf16.msra.mxu0 0
        %9030 = vmatprep.subr.bf16.mxu0 0
        %9031 = vmatpush1.bf16.msra.mxu0 0
        %9032 = vmatprep.subr.bf16.mxu0 0
        %9033 = vmatpush1.bf16.msra.mxu0 0
        %9034 = vmatprep.subr.bf16.mxu0 0
        %9035 = vmatpush1.bf16.msra.mxu0 0
        %9036 = vmatprep.subr.bf16.mxu0 0
        %9037 = vmatpush1.bf16.msra.mxu0 0
        %9038 = vmatprep.subr.bf16.mxu0 0
        %9039 = vmatpush1.bf16.msra.mxu0 0
        %9040 = vmatprep.subr.bf16.mxu0 0
        %9041 = vmatpush1.bf16.msra.mxu0 0
        %9042 = vmatprep.subr.bf16.mxu0 0
        %9043 = vmatpush1.bf16.msra.mxu0 0
        %9044 = vmatprep.subr.bf16.mxu0 0
        %9045 = vmatpush1.bf16.msra.mxu0 0
        %9046 = vmatprep.subr.bf16.mxu0 0
        %9047 = vmatpush1.bf16.msra.mxu0 0
        %9048 = vmatprep.subr.bf16.mxu0 0
        %9049 = vmatpush1.bf16.msra.mxu0 0
        %9050 = vmatprep.subr.bf16.mxu0 0
        %9051 = vmatpush1.bf16.msra.mxu0 0
        %9052 = vmatprep.subr.bf16.mxu0 0
        %9053 = vmatpush1.bf16.msra.mxu0 0
        %9054 = vmatprep.subr.bf16.mxu0 0
        %9055 = vmatpush1.bf16.msra.mxu0 0
        %9056 = vmatprep.mubr.bf16.mxu0 0
        %9057 = vmatmul.mubr.bf16.gmra.mrb[0].mxu0 %v9022
        %v9058 = vpop.f32.mrb[0].mxu0
        %v9059 = vadd.f32 0.0, %v9058
        %v9060 = vpop.f32.mrb[0].mxu0
        %v9061 = vpop.f32.mrb[0].mxu0
        %v9062 = vadd.f32 0.0, %v9061
        %v9063 = vpop.f32.mrb[0].mxu0
        %9064 = vdwg.mxu0
        %9065 = vrot.lane.b32.xlu0 %v1705, 64
        %v9066 = vpop.permute.xlu0 %9065
        %v9069 = vsel %vm4913, %v6379, 0
        %9071 = vmatprep.subr.bf16.mxu0 0
        %9072 = vmatpush1.bf16.msra.mxu0 %v9066
        %9073 = vmatprep.subr.bf16.mxu0 0
        %9074 = vmatpush1.bf16.msra.mxu0 0
        %9075 = vmatprep.subr.bf16.mxu0 0
        %9076 = vmatpush1.bf16.msra.mxu0 0
        %9077 = vmatprep.subr.bf16.mxu0 0
        %9078 = vmatpush1.bf16.msra.mxu0 0
        %9079 = vmatprep.subr.bf16.mxu0 0
        %9080 = vmatpush1.bf16.msra.mxu0 0
        %9081 = vmatprep.subr.bf16.mxu0 0
        %9082 = vmatpush1.bf16.msra.mxu0 0
        %9083 = vmatprep.subr.bf16.mxu0 0
        %9084 = vmatpush1.bf16.msra.mxu0 0
        %9085 = vmatprep.subr.bf16.mxu0 0
        %9086 = vmatpush1.bf16.msra.mxu0 0
        %9087 = vmatprep.subr.bf16.mxu0 0
        %9088 = vmatpush1.bf16.msra.mxu0 0
        %9089 = vmatprep.subr.bf16.mxu0 0
        %9090 = vmatpush1.bf16.msra.mxu0 0
        %9091 = vmatprep.subr.bf16.mxu0 0
        %9092 = vmatpush1.bf16.msra.mxu0 0
        %9093 = vmatprep.subr.bf16.mxu0 0
        %9094 = vmatpush1.bf16.msra.mxu0 0
        %9095 = vmatprep.subr.bf16.mxu0 0
        %9096 = vmatpush1.bf16.msra.mxu0 0
        %9097 = vmatprep.subr.bf16.mxu0 0
        %9098 = vmatpush1.bf16.msra.mxu0 0
        %9099 = vmatprep.subr.bf16.mxu0 0
        %9100 = vmatpush1.bf16.msra.mxu0 0
        %9101 = vmatprep.subr.bf16.mxu0 0
        %9102 = vmatpush1.bf16.msra.mxu0 0
        %9103 = vmatprep.mubr.bf16.mxu0 0
        %9104 = vmatmul.mubr.bf16.gmra.mrb[0].mxu0 %v9069
        %v9105 = vpop.f32.mrb[0].mxu0
        %v9106 = vadd.f32 0.0, %v9105
        %v9107 = vpop.f32.mrb[0].mxu0
        %v9108 = vpop.f32.mrb[0].mxu0
        %v9109 = vadd.f32 0.0, %v9108
        %v9110 = vpop.f32.mrb[0].mxu0
        %9111 = vdwg.mxu0
        %9112 = vrot.lane.b32.xlu0 %v1706, 64
        %v9113 = vpop.permute.xlu0 %9112
        %v9116 = vsel %vm4913, %v6380, 0
        %9118 = vmatprep.subr.bf16.mxu0 0
        %9119 = vmatpush1.bf16.msra.mxu0 %v9113
        %9120 = vmatprep.subr.bf16.mxu0 0
        %9121 = vmatpush1.bf16.msra.mxu0 0
        %9122 = vmatprep.subr.bf16.mxu0 0
        %9123 = vmatpush1.bf16.msra.mxu0 0
        %9124 = vmatprep.subr.bf16.mxu0 0
        %9125 = vmatpush1.bf16.msra.mxu0 0
        %9126 = vmatprep.subr.bf16.mxu0 0
        %9127 = vmatpush1.bf16.msra.mxu0 0
        %9128 = vmatprep.subr.bf16.mxu0 0
        %9129 = vmatpush1.bf16.msra.mxu0 0
        %9130 = vmatprep.subr.bf16.mxu0 0
        %9131 = vmatpush1.bf16.msra.mxu0 0
        %9132 = vmatprep.subr.bf16.mxu0 0
        %9133 = vmatpush1.bf16.msra.mxu0 0
        %9134 = vmatprep.subr.bf16.mxu0 0
        %9135 = vmatpush1.bf16.msra.mxu0 0
        %9136 = vmatprep.subr.bf16.mxu0 0
        %9137 = vmatpush1.bf16.msra.mxu0 0
        %9138 = vmatprep.subr.bf16.mxu0 0
        %9139 = vmatpush1.bf16.msra.mxu0 0
        %9140 = vmatprep.subr.bf16.mxu0 0
        %9141 = vmatpush1.bf16.msra.mxu0 0
        %9142 = vmatprep.subr.bf16.mxu0 0
        %9143 = vmatpush1.bf16.msra.mxu0 0
        %9144 = vmatprep.subr.bf16.mxu0 0
        %9145 = vmatpush1.bf16.msra.mxu0 0
        %9146 = vmatprep.subr.bf16.mxu0 0
        %9147 = vmatpush1.bf16.msra.mxu0 0
        %9148 = vmatprep.subr.bf16.mxu0 0
        %9149 = vmatpush1.bf16.msra.mxu0 0
        %9150 = vmatprep.mubr.bf16.mxu0 0
        %9151 = vmatmul.mubr.bf16.gmra.mrb[0].mxu0 %v9116
        %v9152 = vpop.f32.mrb[0].mxu0
        %v9153 = vadd.f32 0.0, %v9152
        %v9154 = vpop.f32.mrb[0].mxu0
        %v9155 = vpop.f32.mrb[0].mxu0
        %v9156 = vadd.f32 0.0, %v9155
        %v9157 = vpop.f32.mrb[0].mxu0
        %9158 = vdwg.mxu0
        %9159 = vrot.lane.b32.xlu0 %v1707, 64
        %v9160 = vpop.permute.xlu0 %9159
        %v9163 = vsel %vm4913, %v6381, 0
        %9165 = vmatprep.subr.bf16.mxu0 0
        %9166 = vmatpush1.bf16.msra.mxu0 %v9160
        %9167 = vmatprep.subr.bf16.mxu0 0
        %9168 = vmatpush1.bf16.msra.mxu0 0
        %9169 = vmatprep.subr.bf16.mxu0 0
        %9170 = vmatpush1.bf16.msra.mxu0 0
        %9171 = vmatprep.subr.bf16.mxu0 0
        %9172 = vmatpush1.bf16.msra.mxu0 0
        %9173 = vmatprep.subr.bf16.mxu0 0
        %9174 = vmatpush1.bf16.msra.mxu0 0
        %9175 = vmatprep.subr.bf16.mxu0 0
        %9176 = vmatpush1.bf16.msra.mxu0 0
        %9177 = vmatprep.subr.bf16.mxu0 0
        %9178 = vmatpush1.bf16.msra.mxu0 0
        %9179 = vmatprep.subr.bf16.mxu0 0
        %9180 = vmatpush1.bf16.msra.mxu0 0
        %9181 = vmatprep.subr.bf16.mxu0 0
        %9182 = vmatpush1.bf16.msra.mxu0 0
        %9183 = vmatprep.subr.bf16.mxu0 0
        %9184 = vmatpush1.bf16.msra.mxu0 0
        %9185 = vmatprep.subr.bf16.mxu0 0
        %9186 = vmatpush1.bf16.msra.mxu0 0
        %9187 = vmatprep.subr.bf16.mxu0 0
        %9188 = vmatpush1.bf16.msra.mxu0 0
        %9189 = vmatprep.subr.bf16.mxu0 0
        %9190 = vmatpush1.bf16.msra.mxu0 0
        %9191 = vmatprep.subr.bf16.mxu0 0
        %9192 = vmatpush1.bf16.msra.mxu0 0
        %9193 = vmatprep.subr.bf16.mxu0 0
        %9194 = vmatpush1.bf16.msra.mxu0 0
        %9195 = vmatprep.subr.bf16.mxu0 0
        %9196 = vmatpush1.bf16.msra.mxu0 0
        %9197 = vmatprep.mubr.bf16.mxu0 0
        %9198 = vmatmul.mubr.bf16.gmra.mrb[0].mxu0 %v9163
        %v9199 = vpop.f32.mrb[0].mxu0
        %v9200 = vadd.f32 0.0, %v9199
        %v9201 = vpop.f32.mrb[0].mxu0
        %v9202 = vpop.f32.mrb[0].mxu0
        %v9203 = vadd.f32 0.0, %v9202
        %v9204 = vpop.f32.mrb[0].mxu0
        %9205 = vdwg.mxu0
        %9206 = vrot.lane.b32.xlu0 %v1708, 64
        %v9207 = vpop.permute.xlu0 %9206
        %v9210 = vsel %vm4913, %v6382, 0
        %9212 = vmatprep.subr.bf16.mxu0 0
        %9213 = vmatpush1.bf16.msra.mxu0 %v9207
        %9214 = vmatprep.subr.bf16.mxu0 0
        %9215 = vmatpush1.bf16.msra.mxu0 0
        %9216 = vmatprep.subr.bf16.mxu0 0
        %9217 = vmatpush1.bf16.msra.mxu0 0
        %9218 = vmatprep.subr.bf16.mxu0 0
        %9219 = vmatpush1.bf16.msra.mxu0 0
        %9220 = vmatprep.subr.bf16.mxu0 0
        %9221 = vmatpush1.bf16.msra.mxu0 0
        %9222 = vmatprep.subr.bf16.mxu0 0
        %9223 = vmatpush1.bf16.msra.mxu0 0
        %9224 = vmatprep.subr.bf16.mxu0 0
        %9225 = vmatpush1.bf16.msra.mxu0 0
        %9226 = vmatprep.subr.bf16.mxu0 0
        %9227 = vmatpush1.bf16.msra.mxu0 0
        %9228 = vmatprep.subr.bf16.mxu0 0
        %9229 = vmatpush1.bf16.msra.mxu0 0
        %9230 = vmatprep.subr.bf16.mxu0 0
        %9231 = vmatpush1.bf16.msra.mxu0 0
        %9232 = vmatprep.subr.bf16.mxu0 0
        %9233 = vmatpush1.bf16.msra.mxu0 0
        %9234 = vmatprep.subr.bf16.mxu0 0
        %9235 = vmatpush1.bf16.msra.mxu0 0
        %9236 = vmatprep.subr.bf16.mxu0 0
        %9237 = vmatpush1.bf16.msra.mxu0 0
        %9238 = vmatprep.subr.bf16.mxu0 0
        %9239 = vmatpush1.bf16.msra.mxu0 0
        %9240 = vmatprep.subr.bf16.mxu0 0
        %9241 = vmatpush1.bf16.msra.mxu0 0
        %9242 = vmatprep.subr.bf16.mxu0 0
        %9243 = vmatpush1.bf16.msra.mxu0 0
        %9244 = vmatprep.mubr.bf16.mxu0 0
        %9245 = vmatmul.mubr.bf16.gmra.mrb[0].mxu0 %v9210
        %v9246 = vpop.f32.mrb[0].mxu0
        %v9247 = vadd.f32 0.0, %v9246
        %v9248 = vpop.f32.mrb[0].mxu0
        %v9249 = vpop.f32.mrb[0].mxu0
        %v9250 = vadd.f32 0.0, %v9249
        %v9251 = vpop.f32.mrb[0].mxu0
        %9252 = vdwg.mxu0
        %9253 = vrot.lane.b32.xlu0 %v1709, 64
        %v9254 = vpop.permute.xlu0 %9253
        %v9257 = vsel %vm4913, %v6383, 0
        %9259 = vmatprep.subr.bf16.mxu0 0
        %9260 = vmatpush1.bf16.msra.mxu0 %v9254
        %9261 = vmatprep.subr.bf16.mxu0 0
        %9262 = vmatpush1.bf16.msra.mxu0 0
        %9263 = vmatprep.subr.bf16.mxu0 0
        %9264 = vmatpush1.bf16.msra.mxu0 0
        %9265 = vmatprep.subr.bf16.mxu0 0
        %9266 = vmatpush1.bf16.msra.mxu0 0
        %9267 = vmatprep.subr.bf16.mxu0 0
        %9268 = vmatpush1.bf16.msra.mxu0 0
        %9269 = vmatprep.subr.bf16.mxu0 0
        %9270 = vmatpush1.bf16.msra.mxu0 0
        %9271 = vmatprep.subr.bf16.mxu0 0
        %9272 = vmatpush1.bf16.msra.mxu0 0
        %9273 = vmatprep.subr.bf16.mxu0 0
        %9274 = vmatpush1.bf16.msra.mxu0 0
        %9275 = vmatprep.subr.bf16.mxu0 0
        %9276 = vmatpush1.bf16.msra.mxu0 0
        %9277 = vmatprep.subr.bf16.mxu0 0
        %9278 = vmatpush1.bf16.msra.mxu0 0
        %9279 = vmatprep.subr.bf16.mxu0 0
        %9280 = vmatpush1.bf16.msra.mxu0 0
        %9281 = vmatprep.subr.bf16.mxu0 0
        %9282 = vmatpush1.bf16.msra.mxu0 0
        %9283 = vmatprep.subr.bf16.mxu0 0
        %9284 = vmatpush1.bf16.msra.mxu0 0
        %9285 = vmatprep.subr.bf16.mxu0 0
        %9286 = vmatpush1.bf16.msra.mxu0 0
        %9287 = vmatprep.subr.bf16.mxu0 0
        %9288 = vmatpush1.bf16.msra.mxu0 0
        %9289 = vmatprep.subr.bf16.mxu0 0
        %9290 = vmatpush1.bf16.msra.mxu0 0
        %9291 = vmatprep.mubr.bf16.mxu0 0
        %9292 = vmatmul.mubr.bf16.gmra.mrb[0].mxu0 %v9257
        %v9293 = vpop.f32.mrb[0].mxu0
        %v9294 = vadd.f32 0.0, %v9293
        %v9295 = vpop.f32.mrb[0].mxu0
        %v9296 = vpop.f32.mrb[0].mxu0
        %v9297 = vadd.f32 0.0, %v9296
        %v9298 = vpop.f32.mrb[0].mxu0
        %9299 = vdwg.mxu0
        %9300 = vrot.lane.b32.xlu0 %v1710, 64
        %v9301 = vpop.permute.xlu0 %9300
        %v9304 = vsel %vm4913, %v6384, 0
        %9306 = vmatprep.subr.bf16.mxu0 0
        %9307 = vmatpush1.bf16.msra.mxu0 %v9301
        %9308 = vmatprep.subr.bf16.mxu0 0
        %9309 = vmatpush1.bf16.msra.mxu0 0
        %9310 = vmatprep.subr.bf16.mxu0 0
        %9311 = vmatpush1.bf16.msra.mxu0 0
        %9312 = vmatprep.subr.bf16.mxu0 0
        %9313 = vmatpush1.bf16.msra.mxu0 0
        %9314 = vmatprep.subr.bf16.mxu0 0
        %9315 = vmatpush1.bf16.msra.mxu0 0
        %9316 = vmatprep.subr.bf16.mxu0 0
        %9317 = vmatpush1.bf16.msra.mxu0 0
        %9318 = vmatprep.subr.bf16.mxu0 0
        %9319 = vmatpush1.bf16.msra.mxu0 0
        %9320 = vmatprep.subr.bf16.mxu0 0
        %9321 = vmatpush1.bf16.msra.mxu0 0
        %9322 = vmatprep.subr.bf16.mxu0 0
        %9323 = vmatpush1.bf16.msra.mxu0 0
        %9324 = vmatprep.subr.bf16.mxu0 0
        %9325 = vmatpush1.bf16.msra.mxu0 0
        %9326 = vmatprep.subr.bf16.mxu0 0
        %9327 = vmatpush1.bf16.msra.mxu0 0
        %9328 = vmatprep.subr.bf16.mxu0 0
        %9329 = vmatpush1.bf16.msra.mxu0 0
        %9330 = vmatprep.subr.bf16.mxu0 0
        %9331 = vmatpush1.bf16.msra.mxu0 0
        %9332 = vmatprep.subr.bf16.mxu0 0
        %9333 = vmatpush1.bf16.msra.mxu0 0
        %9334 = vmatprep.subr.bf16.mxu0 0
        %9335 = vmatpush1.bf16.msra.mxu0 0
        %9336 = vmatprep.subr.bf16.mxu0 0
        %9337 = vmatpush1.bf16.msra.mxu0 0
        %9338 = vmatprep.mubr.bf16.mxu0 0
        %9339 = vmatmul.mubr.bf16.gmra.mrb[0].mxu0 %v9304
        %v9340 = vpop.f32.mrb[0].mxu0
        %v9341 = vadd.f32 0.0, %v9340
        %v9342 = vpop.f32.mrb[0].mxu0
        %v9343 = vpop.f32.mrb[0].mxu0
        %v9344 = vadd.f32 0.0, %v9343
        %v9345 = vpop.f32.mrb[0].mxu0
        %9346 = vdwg.mxu0
        %9347 = vrot.lane.b32.xlu0 %v1711, 64
        %v9348 = vpop.permute.xlu0 %9347
        %v9351 = vsel %vm4913, %v6385, 0
        %9353 = vmatprep.subr.bf16.mxu0 0
        %9354 = vmatpush1.bf16.msra.mxu0 %v9348
        %9355 = vmatprep.subr.bf16.mxu0 0
        %9356 = vmatpush1.bf16.msra.mxu0 0
        %9357 = vmatprep.subr.bf16.mxu0 0
        %9358 = vmatpush1.bf16.msra.mxu0 0
        %9359 = vmatprep.subr.bf16.mxu0 0
        %9360 = vmatpush1.bf16.msra.mxu0 0
        %9361 = vmatprep.subr.bf16.mxu0 0
        %9362 = vmatpush1.bf16.msra.mxu0 0
        %9363 = vmatprep.subr.bf16.mxu0 0
        %9364 = vmatpush1.bf16.msra.mxu0 0
        %9365 = vmatprep.subr.bf16.mxu0 0
        %9366 = vmatpush1.bf16.msra.mxu0 0
        %9367 = vmatprep.subr.bf16.mxu0 0
        %9368 = vmatpush1.bf16.msra.mxu0 0
        %9369 = vmatprep.subr.bf16.mxu0 0
        %9370 = vmatpush1.bf16.msra.mxu0 0
        %9371 = vmatprep.subr.bf16.mxu0 0
        %9372 = vmatpush1.bf16.msra.mxu0 0
        %9373 = vmatprep.subr.bf16.mxu0 0
        %9374 = vmatpush1.bf16.msra.mxu0 0
        %9375 = vmatprep.subr.bf16.mxu0 0
        %9376 = vmatpush1.bf16.msra.mxu0 0
        %9377 = vmatprep.subr.bf16.mxu0 0
        %9378 = vmatpush1.bf16.msra.mxu0 0
        %9379 = vmatprep.subr.bf16.mxu0 0
        %9380 = vmatpush1.bf16.msra.mxu0 0
        %9381 = vmatprep.subr.bf16.mxu0 0
        %9382 = vmatpush1.bf16.msra.mxu0 0
        %9383 = vmatprep.subr.bf16.mxu0 0
        %9384 = vmatpush1.bf16.msra.mxu0 0
        %9385 = vmatprep.mubr.bf16.mxu0 0
        %9386 = vmatmul.mubr.bf16.gmra.mrb[0].mxu0 %v9351
        %v9387 = vpop.f32.mrb[0].mxu0
        %v9388 = vadd.f32 0.0, %v9387
        %v9389 = vpop.f32.mrb[0].mxu0
        %v9390 = vpop.f32.mrb[0].mxu0
        %v9391 = vadd.f32 0.0, %v9390
        %v9392 = vpop.f32.mrb[0].mxu0
        %9393 = vdwg.mxu0
        %9426 = vrot.lane.b32.xlu0 %v7179, 8
        %v9427 = vpop.permute.xlu0 %9426
        %9428 = vrot.lane.b32.xlu0 %v7182, 8
        %v9429 = vpop.permute.xlu0 %9428
        %9430 = vrot.lane.b32.xlu0 %v7226, 8
        %v9431 = vpop.permute.xlu0 %9430
        %9432 = vrot.lane.b32.xlu0 %v7229, 8
        %v9433 = vpop.permute.xlu0 %9432
        %9434 = vrot.lane.b32.xlu0 %v7273, 8
        %v9435 = vpop.permute.xlu0 %9434
        %9436 = vrot.lane.b32.xlu0 %v7276, 8
        %v9437 = vpop.permute.xlu0 %9436
        %9438 = vrot.lane.b32.xlu0 %v7320, 8
        %v9439 = vpop.permute.xlu0 %9438
        %9440 = vrot.lane.b32.xlu0 %v7323, 8
        %v9441 = vpop.permute.xlu0 %9440
        %9442 = vrot.lane.b32.xlu0 %v7367, 8
        %v9443 = vpop.permute.xlu0 %9442
        %9444 = vrot.lane.b32.xlu0 %v7370, 8
        %v9445 = vpop.permute.xlu0 %9444
        %9446 = vrot.lane.b32.xlu0 %v7414, 8
        %v9447 = vpop.permute.xlu0 %9446
        %9448 = vrot.lane.b32.xlu0 %v7417, 8
        %v9449 = vpop.permute.xlu0 %9448
        %9450 = vrot.lane.b32.xlu0 %v7461, 8
        %v9451 = vpop.permute.xlu0 %9450
        %9452 = vrot.lane.b32.xlu0 %v7464, 8
        %v9453 = vpop.permute.xlu0 %9452
        %9454 = vrot.lane.b32.xlu0 %v7508, 8
        %v9455 = vpop.permute.xlu0 %9454
        %9456 = vrot.lane.b32.xlu0 %v7511, 8
        %v9457 = vpop.permute.xlu0 %9456
        %9458 = vrot.lane.b32.xlu0 %v7555, 8
        %v9459 = vpop.permute.xlu0 %9458
        %9460 = vrot.lane.b32.xlu0 %v7558, 8
        %v9461 = vpop.permute.xlu0 %9460
        %9462 = vrot.lane.b32.xlu0 %v7602, 8
        %v9463 = vpop.permute.xlu0 %9462
        %9464 = vrot.lane.b32.xlu0 %v7605, 8
        %v9465 = vpop.permute.xlu0 %9464
        %9466 = vrot.lane.b32.xlu0 %v7649, 8
        %v9467 = vpop.permute.xlu0 %9466
        %9468 = vrot.lane.b32.xlu0 %v7652, 8
        %v9469 = vpop.permute.xlu0 %9468
        %9470 = vrot.lane.b32.xlu0 %v7696, 8
        %v9471 = vpop.permute.xlu0 %9470
        %9472 = vrot.lane.b32.xlu0 %v7699, 8
        %v9473 = vpop.permute.xlu0 %9472
        %9474 = vrot.lane.b32.xlu0 %v7743, 8
        %v9475 = vpop.permute.xlu0 %9474
        %9476 = vrot.lane.b32.xlu0 %v7746, 8
        %v9477 = vpop.permute.xlu0 %9476
        %9478 = vrot.lane.b32.xlu0 %v7790, 8
        %v9479 = vpop.permute.xlu0 %9478
        %9480 = vrot.lane.b32.xlu0 %v7793, 8
        %v9481 = vpop.permute.xlu0 %9480
        %9482 = vrot.lane.b32.xlu0 %v7837, 8
        %v9483 = vpop.permute.xlu0 %9482
        %9484 = vrot.lane.b32.xlu0 %v7840, 8
        %v9485 = vpop.permute.xlu0 %9484
        %9486 = vrot.lane.b32.xlu0 %v7884, 8
        %v9487 = vpop.permute.xlu0 %9486
        %9488 = vrot.lane.b32.xlu0 %v7887, 8
        %v9489 = vpop.permute.xlu0 %9488
        %9554 = vrot.lane.b32.xlu0 %v7931, 16
        %v9555 = vpop.permute.xlu0 %9554
        %9556 = vrot.lane.b32.xlu0 %v7934, 16
        %v9557 = vpop.permute.xlu0 %9556
        %9558 = vrot.lane.b32.xlu0 %v7978, 16
        %v9559 = vpop.permute.xlu0 %9558
        %9560 = vrot.lane.b32.xlu0 %v7981, 16
        %v9561 = vpop.permute.xlu0 %9560
        %9562 = vrot.lane.b32.xlu0 %v8025, 16
        %v9563 = vpop.permute.xlu0 %9562
        %9564 = vrot.lane.b32.xlu0 %v8028, 16
        %v9565 = vpop.permute.xlu0 %9564
        %9566 = vrot.lane.b32.xlu0 %v8072, 16
        %v9567 = vpop.permute.xlu0 %9566
        %9568 = vrot.lane.b32.xlu0 %v8075, 16
        %v9569 = vpop.permute.xlu0 %9568
        %9570 = vrot.lane.b32.xlu0 %v8119, 16
        %v9571 = vpop.permute.xlu0 %9570
        %9572 = vrot.lane.b32.xlu0 %v8122, 16
        %v9573 = vpop.permute.xlu0 %9572
        %9574 = vrot.lane.b32.xlu0 %v8166, 16
        %v9575 = vpop.permute.xlu0 %9574
        %9576 = vrot.lane.b32.xlu0 %v8169, 16
        %v9577 = vpop.permute.xlu0 %9576
        %9578 = vrot.lane.b32.xlu0 %v8213, 16
        %v9579 = vpop.permute.xlu0 %9578
        %9580 = vrot.lane.b32.xlu0 %v8216, 16
        %v9581 = vpop.permute.xlu0 %9580
        %9582 = vrot.lane.b32.xlu0 %v8260, 16
        %v9583 = vpop.permute.xlu0 %9582
        %9584 = vrot.lane.b32.xlu0 %v8263, 16
        %v9585 = vpop.permute.xlu0 %9584
        %9586 = vrot.lane.b32.xlu0 %v8307, 16
        %v9587 = vpop.permute.xlu0 %9586
        %9588 = vrot.lane.b32.xlu0 %v8310, 16
        %v9589 = vpop.permute.xlu0 %9588
        %9590 = vrot.lane.b32.xlu0 %v8354, 16
        %v9591 = vpop.permute.xlu0 %9590
        %9592 = vrot.lane.b32.xlu0 %v8357, 16
        %v9593 = vpop.permute.xlu0 %9592
        %9594 = vrot.lane.b32.xlu0 %v8401, 16
        %v9595 = vpop.permute.xlu0 %9594
        %9596 = vrot.lane.b32.xlu0 %v8404, 16
        %v9597 = vpop.permute.xlu0 %9596
        %9598 = vrot.lane.b32.xlu0 %v8448, 16
        %v9599 = vpop.permute.xlu0 %9598
        %9600 = vrot.lane.b32.xlu0 %v8451, 16
        %v9601 = vpop.permute.xlu0 %9600
        %9602 = vrot.lane.b32.xlu0 %v8495, 16
        %v9603 = vpop.permute.xlu0 %9602
        %9604 = vrot.lane.b32.xlu0 %v8498, 16
        %v9605 = vpop.permute.xlu0 %9604
        %9606 = vrot.lane.b32.xlu0 %v8542, 16
        %v9607 = vpop.permute.xlu0 %9606
        %9608 = vrot.lane.b32.xlu0 %v8545, 16
        %v9609 = vpop.permute.xlu0 %9608
        %9610 = vrot.lane.b32.xlu0 %v8589, 16
        %v9611 = vpop.permute.xlu0 %9610
        %9612 = vrot.lane.b32.xlu0 %v8592, 16
        %v9613 = vpop.permute.xlu0 %9612
        %9614 = vrot.lane.b32.xlu0 %v8636, 16
        %v9615 = vpop.permute.xlu0 %9614
        %9616 = vrot.lane.b32.xlu0 %v8639, 16
        %v9617 = vpop.permute.xlu0 %9616
        %9682 = vrot.lane.b32.xlu0 %v8683, 24
        %v9683 = vpop.permute.xlu0 %9682
        %9684 = vrot.lane.b32.xlu0 %v8686, 24
        %v9685 = vpop.permute.xlu0 %9684
        %9686 = vrot.lane.b32.xlu0 %v8730, 24
        %v9687 = vpop.permute.xlu0 %9686
        %9688 = vrot.lane.b32.xlu0 %v8733, 24
        %v9689 = vpop.permute.xlu0 %9688
        %9690 = vrot.lane.b32.xlu0 %v8777, 24
        %v9691 = vpop.permute.xlu0 %9690
        %9692 = vrot.lane.b32.xlu0 %v8780, 24
        %v9693 = vpop.permute.xlu0 %9692
        %9694 = vrot.lane.b32.xlu0 %v8824, 24
        %v9695 = vpop.permute.xlu0 %9694
        %9696 = vrot.lane.b32.xlu0 %v8827, 24
        %v9697 = vpop.permute.xlu0 %9696
        %9698 = vrot.lane.b32.xlu0 %v8871, 24
        %v9699 = vpop.permute.xlu0 %9698
        %9700 = vrot.lane.b32.xlu0 %v8874, 24
        %v9701 = vpop.permute.xlu0 %9700
        %9702 = vrot.lane.b32.xlu0 %v8918, 24
        %v9703 = vpop.permute.xlu0 %9702
        %9704 = vrot.lane.b32.xlu0 %v8921, 24
        %v9705 = vpop.permute.xlu0 %9704
        %9706 = vrot.lane.b32.xlu0 %v8965, 24
        %v9707 = vpop.permute.xlu0 %9706
        %9708 = vrot.lane.b32.xlu0 %v8968, 24
        %v9709 = vpop.permute.xlu0 %9708
        %9710 = vrot.lane.b32.xlu0 %v9012, 24
        %v9711 = vpop.permute.xlu0 %9710
        %9712 = vrot.lane.b32.xlu0 %v9015, 24
        %v9713 = vpop.permute.xlu0 %9712
        %9714 = vrot.lane.b32.xlu0 %v9059, 24
        %v9715 = vpop.permute.xlu0 %9714
        %9716 = vrot.lane.b32.xlu0 %v9062, 24
        %v9717 = vpop.permute.xlu0 %9716
        %9718 = vrot.lane.b32.xlu0 %v9106, 24
        %v9719 = vpop.permute.xlu0 %9718
        %9720 = vrot.lane.b32.xlu0 %v9109, 24
        %v9721 = vpop.permute.xlu0 %9720
        %9722 = vrot.lane.b32.xlu0 %v9153, 24
        %v9723 = vpop.permute.xlu0 %9722
        %9724 = vrot.lane.b32.xlu0 %v9156, 24
        %v9725 = vpop.permute.xlu0 %9724
        %9726 = vrot.lane.b32.xlu0 %v9200, 24
        %v9727 = vpop.permute.xlu0 %9726
        %9728 = vrot.lane.b32.xlu0 %v9203, 24
        %v9729 = vpop.permute.xlu0 %9728
        %9730 = vrot.lane.b32.xlu0 %v9247, 24
        %v9731 = vpop.permute.xlu0 %9730
        %9732 = vrot.lane.b32.xlu0 %v9250, 24
        %v9733 = vpop.permute.xlu0 %9732
        %9734 = vrot.lane.b32.xlu0 %v9294, 24
        %v9735 = vpop.permute.xlu0 %9734
        %9736 = vrot.lane.b32.xlu0 %v9297, 24
        %v9737 = vpop.permute.xlu0 %9736
        %9738 = vrot.lane.b32.xlu0 %v9341, 24
        %v9739 = vpop.permute.xlu0 %9738
        %9740 = vrot.lane.b32.xlu0 %v9344, 24
        %v9741 = vpop.permute.xlu0 %9740
        %9742 = vrot.lane.b32.xlu0 %v9388, 24
        %v9743 = vpop.permute.xlu0 %9742
        %9744 = vrot.lane.b32.xlu0 %v9391, 24
        %v9745 = vpop.permute.xlu0 %9744
        %v9778 = vsel %vm1715, %v6427, %v9427
        %v9779 = vsel %vm1715, %v6430, %v9429
        %v9780 = vsel %vm1715, %v6474, %v9431
        %v9781 = vsel %vm1715, %v6477, %v9433
        %v9782 = vsel %vm1715, %v6521, %v9435
        %v9783 = vsel %vm1715, %v6524, %v9437
        %v9784 = vsel %vm1715, %v6568, %v9439
        %v9785 = vsel %vm1715, %v6571, %v9441
        %v9786 = vsel %vm1715, %v6615, %v9443
        %v9787 = vsel %vm1715, %v6618, %v9445
        %v9788 = vsel %vm1715, %v6662, %v9447
        %v9789 = vsel %vm1715, %v6665, %v9449
        %v9790 = vsel %vm1715, %v6709, %v9451
        %v9791 = vsel %vm1715, %v6712, %v9453
        %v9792 = vsel %vm1715, %v6756, %v9455
        %v9793 = vsel %vm1715, %v6759, %v9457
        %v9794 = vsel %vm1715, %v6803, %v9459
        %v9795 = vsel %vm1715, %v6806, %v9461
        %v9796 = vsel %vm1715, %v6850, %v9463
        %v9797 = vsel %vm1715, %v6853, %v9465
        %v9798 = vsel %vm1715, %v6897, %v9467
        %v9799 = vsel %vm1715, %v6900, %v9469
        %v9800 = vsel %vm1715, %v6944, %v9471
        %v9801 = vsel %vm1715, %v6947, %v9473
        %v9802 = vsel %vm1715, %v6991, %v9475
        %v9803 = vsel %vm1715, %v6994, %v9477
        %v9804 = vsel %vm1715, %v7038, %v9479
        %v9805 = vsel %vm1715, %v7041, %v9481
        %v9806 = vsel %vm1715, %v7085, %v9483
        %v9807 = vsel %vm1715, %v7088, %v9485
        %v9808 = vsel %vm1715, %v7132, %v9487
        %v9809 = vsel %vm1715, %v7135, %v9489
        %v9810 = vsel %vm4913, %v9778, %v9555
        %v9811 = vsel %vm4913, %v9779, %v9557
        %v9812 = vsel %vm4913, %v9780, %v9559
        %v9813 = vsel %vm4913, %v9781, %v9561
        %v9814 = vsel %vm4913, %v9782, %v9563
        %v9815 = vsel %vm4913, %v9783, %v9565
        %v9816 = vsel %vm4913, %v9784, %v9567
        %v9817 = vsel %vm4913, %v9785, %v9569
        %v9818 = vsel %vm4913, %v9786, %v9571
        %v9819 = vsel %vm4913, %v9787, %v9573
        %v9820 = vsel %vm4913, %v9788, %v9575
        %v9821 = vsel %vm4913, %v9789, %v9577
        %v9822 = vsel %vm4913, %v9790, %v9579
        %v9823 = vsel %vm4913, %v9791, %v9581
        %v9824 = vsel %vm4913, %v9792, %v9583
        %v9825 = vsel %vm4913, %v9793, %v9585
        %v9826 = vsel %vm4913, %v9794, %v9587
        %v9827 = vsel %vm4913, %v9795, %v9589
        %v9828 = vsel %vm4913, %v9796, %v9591
        %v9829 = vsel %vm4913, %v9797, %v9593
        %v9830 = vsel %vm4913, %v9798, %v9595
        %v9831 = vsel %vm4913, %v9799, %v9597
        %v9832 = vsel %vm4913, %v9800, %v9599
        %v9833 = vsel %vm4913, %v9801, %v9601
        %v9834 = vsel %vm4913, %v9802, %v9603
        %v9835 = vsel %vm4913, %v9803, %v9605
        %v9836 = vsel %vm4913, %v9804, %v9607
        %v9837 = vsel %vm4913, %v9805, %v9609
        %v9838 = vsel %vm4913, %v9806, %v9611
        %v9839 = vsel %vm4913, %v9807, %v9613
        %v9840 = vsel %vm4913, %v9808, %v9615
        %v9841 = vsel %vm4913, %v9809, %v9617
        %vm9842 = vcmask 195584
        %v9843 = vsel %vm9842, %v9810, %v9683
        %v9844 = vsel %vm9842, %v9811, %v9685
        %v9845 = vsel %vm9842, %v9812, %v9687
        %v9846 = vsel %vm9842, %v9813, %v9689
        %v9847 = vsel %vm9842, %v9814, %v9691
        %v9848 = vsel %vm9842, %v9815, %v9693
        %v9849 = vsel %vm9842, %v9816, %v9695
        %v9850 = vsel %vm9842, %v9817, %v9697
        %v9851 = vsel %vm9842, %v9818, %v9699
        %v9852 = vsel %vm9842, %v9819, %v9701
        %v9853 = vsel %vm9842, %v9820, %v9703
        %v9854 = vsel %vm9842, %v9821, %v9705
        %v9855 = vsel %vm9842, %v9822, %v9707
        %v9856 = vsel %vm9842, %v9823, %v9709
        %v9857 = vsel %vm9842, %v9824, %v9711
        %v9858 = vsel %vm9842, %v9825, %v9713
        %v9859 = vsel %vm9842, %v9826, %v9715
        %v9860 = vsel %vm9842, %v9827, %v9717
        %v9861 = vsel %vm9842, %v9828, %v9719
        %v9862 = vsel %vm9842, %v9829, %v9721
        %v9863 = vsel %vm9842, %v9830, %v9723
        %v9864 = vsel %vm9842, %v9831, %v9725
        %v9865 = vsel %vm9842, %v9832, %v9727
        %v9866 = vsel %vm9842, %v9833, %v9729
        %v9867 = vsel %vm9842, %v9834, %v9731
        %v9868 = vsel %vm9842, %v9835, %v9733
        %v9869 = vsel %vm9842, %v9836, %v9735
        %v9870 = vsel %vm9842, %v9837, %v9737
        %v9871 = vsel %vm9842, %v9838, %v9739
        %v9872 = vsel %vm9842, %v9839, %v9741
        %v9873 = vsel %vm9842, %v9840, %v9743
        %v9874 = vsel %vm9842, %v9841, %v9745
        %vm9875 = vcmask 261120
        %9876 = vst.msk [vmem:[%s166] sm:$0xff] %vm9875, %v9843
        %9877 = vst.msk [vmem:[%s166 + $0x8] sm:$0xff] %vm9875, %v9844
        %9878 = vst.msk [vmem:[%s166 + $0x10] sm:$0xff] %vm9875, %v9845
        %9879 = vst.msk [vmem:[%s166 + $0x18] sm:$0xff] %vm9875, %v9846
        %9880 = vst.msk [vmem:[%s166 + $0x20] sm:$0xff] %vm9875, %v9847
        %9881 = vst.msk [vmem:[%s166 + $0x28] sm:$0xff] %vm9875, %v9848
        %9882 = vst.msk [vmem:[%s166 + $0x30] sm:$0xff] %vm9875, %v9849
        %9883 = vst.msk [vmem:[%s166 + $0x38] sm:$0xff] %vm9875, %v9850
        %9884 = vst.msk [vmem:[%s166 + $0x40] sm:$0xff] %vm9875, %v9851
        %9885 = vst.msk [vmem:[%s166 + $0x48] sm:$0xff] %vm9875, %v9852
        %9886 = vst.msk [vmem:[%s166 + $0x50] sm:$0xff] %vm9875, %v9853
        %9887 = vst.msk [vmem:[%s166 + $0x58] sm:$0xff] %vm9875, %v9854
        %9888 = vst.msk [vmem:[%s166 + $0x60] sm:$0xff] %vm9875, %v9855
        %9889 = vst.msk [vmem:[%s166 + $0x68] sm:$0xff] %vm9875, %v9856
        %9890 = vst.msk [vmem:[%s166 + $0x70] sm:$0xff] %vm9875, %v9857
        %9891 = vst.msk [vmem:[%s166 + $0x78] sm:$0xff] %vm9875, %v9858
        %9892 = vst.msk [vmem:[%s166 + $0x80] sm:$0xff] %vm9875, %v9859
        %9893 = vst.msk [vmem:[%s166 + $0x88] sm:$0xff] %vm9875, %v9860
        %9894 = vst.msk [vmem:[%s166 + $0x90] sm:$0xff] %vm9875, %v9861
        %9895 = vst.msk [vmem:[%s166 + $0x98] sm:$0xff] %vm9875, %v9862
        %9896 = vst.msk [vmem:[%s166 + $0xa0] sm:$0xff] %vm9875, %v9863
        %9897 = vst.msk [vmem:[%s166 + $0xa8] sm:$0xff] %vm9875, %v9864
        %9898 = vst.msk [vmem:[%s166 + $0xb0] sm:$0xff] %vm9875, %v9865
        %9899 = vst.msk [vmem:[%s166 + $0xb8] sm:$0xff] %vm9875, %v9866
        %9900 = vst.msk [vmem:[%s166 + $0xc0] sm:$0xff] %vm9875, %v9867
        %9901 = vst.msk [vmem:[%s166 + $0xc8] sm:$0xff] %vm9875, %v9868
        %9902 = vst.msk [vmem:[%s166 + $0xd0] sm:$0xff] %vm9875, %v9869
        %9903 = vst.msk [vmem:[%s166 + $0xd8] sm:$0xff] %vm9875, %v9870
        %9904 = vst.msk [vmem:[%s166 + $0xe0] sm:$0xff] %vm9875, %v9871
        %9905 = vst.msk [vmem:[%s166 + $0xe8] sm:$0xff] %vm9875, %v9872
        %9906 = vst.msk [vmem:[%s166 + $0xf0] sm:$0xff] %vm9875, %v9873
        %9907 = vst.msk [vmem:[%s166 + $0xf8] sm:$0xff] %vm9875, %v9874
        %s9908 = sand.u32 %s93, 1
        %s9909 = scalar_lea.sflag [#allocation3], %s9908
        %s9910 = sand.u32 %s93, 1
        %s9911 = smul.addr %s9910, 256
        %s9912 = scalar_lea.vmem [#allocation2], %s9911
        // Predicated region
        $region33: #{tpu_custom_call.1} parent=31 // pred_check
          %p9913 = pneg %p103
        $region34: #{tpu_custom_call.1} parent=31 // pred_check_branch
          %9915 = sbr.rel (%p9913) target = $region36
        $region35: #{tpu_custom_call.1} parent=31 // pred_region
          %s9916 = smul.u32 16, %s17
          %s9918 = ssub.s32 4096, 4096
          %9919 = vsyncadd %s9909, %s9918
          %s9920 = smul.addr %s9916, 2
          %s9921 = smul.addr %s9920, 128
          %s9922 = scalar_lea.hbm %s3, %s9921
          %s9923 = sshll.u32 %s9912, 4
          %s9924 = int_to_ptr.vmem [resolvable:$true] %s9923
          %9929 = dma.vmem_to_hbm [thread:$0]  %s9924, 4096, %s9922, %s9909, 128, 128, 8
        $region36: #{tpu_custom_call.1} parent=31 // pred_fallthru
          _
      $region32: #{tpu_custom_call.1} parent=5 // pred_fallthru
        _
      %p9930 = scmp.le.s32.totalorder 2, %s12
      // Predicated region
      $region37: #{tpu_custom_call.1} parent=5 // pred_check
        %p9931 = pneg %p9930
      $region38: #{tpu_custom_call.1} parent=5 // pred_check_branch
        %9933 = sbr.rel (%p9931) target = $region40
      $region39: #{tpu_custom_call.1} parent=5 // pred_region
        %s9934 = ssub.s32 %s12, 2
        // Predicated region
        $region41: #{tpu_custom_call.1} parent=39 // pred_check
          %p9935 = pneg %p109
        $region42: #{tpu_custom_call.1} parent=39 // pred_check_branch
          %9937 = sbr.rel (%p9935) target = $region44
        $region43: #{tpu_custom_call.1} parent=39 // pred_region
          %s9938 = sand.u32 %s94, 1
          %s9939 = scalar_lea.sflag [#allocation3], %s9938
          %s9940 = sand.u32 %s94, 1
          %s9941 = smul.addr %s9940, 256
          %s9942 = scalar_lea.vmem [#allocation2], %s9941
          %9943 = dma.done %s9939, 4096
        $region44: #{tpu_custom_call.1} parent=39 // pred_fallthru
          _
      $region40: #{tpu_custom_call.1} parent=5 // pred_fallthru
        _
    $region6: #{tpu_custom_call.1} parent=1 // loop_footer
      %s16 = sadd.s32 1, %s12
    $region7: #{tpu_custom_call.1} parent=1 // loop_footer_branch
      %11 = sbr.rel target = $region3
    $region8: #{tpu_custom_call.1} parent=1 // loop_exit
      _
    %9944 = vsyncpa [#allocation3], 1
    %s9945 = scalar_lea.sflag [#allocation3], 1
    %9946 = vsyncpa %s9945, 1

</llo_original>
